<compile_context>
chip_gen: v7x
topology: tpu7x:2x2x1
jax: 0.10.0
libtpu: 0.0.40
codegen_flags: <defaults>
</compile_context>

<pallas_src>
import functools

import jax
import jax.numpy as jnp
from jax.experimental import pallas as pl
from jax.experimental.pallas import tpu as pltpu

BN_EPS = 1e-5
NEG_SLOPE = 0.2

# Static architecture hyper-parameters (kernel, stride, padding) — kept OUT of the
# jitted params pytree so Python `if` on them is legal at trace time.
ENC_SPEC = [(4, 2, 1)] * 6
DEC_SPEC = [(4, 1, 0), (4, 2, 1), (3, 1, 1), (4, 2, 1), (4, 2, 1), (4, 2, 1)]
FINAL_SPEC = (3, 1, 1)


# --------------------------------------------------------------------------
# Pallas kernel: fused matmul + bias + LeakyReLU + post-activation affine
# --------------------------------------------------------------------------
def _fused_matmul_kernel(x_ref, w_ref, p_ref, o_ref, *, slope):
    """o = (leaky_relu(x @ w + b)) * s2 + t2  with (b, s2, t2) packed in p_ref."""
    y = jnp.dot(x_ref[...], w_ref[...], preferred_element_type=jnp.float32)
    p = p_ref[...]                      # (3, N) f32: rows = bias, bn_scale, bn_shift
    y = y + p[0:1, :]
    if slope != 1.0:                    # static: skip activation when identity
        y = jnp.where(y >= 0, y, slope * y)
    y = y * p[1:2, :] + p[2:3, :]
    o_ref[...] = y.astype(o_ref.dtype)


def fused_matmul(x, w, b, s2, t2, slope, out_dtype=jnp.bfloat16):
    """x:(M,K) @ w:(K,N) in bf16 (f32 accumulate) with fused epilogue."""
    M, K = x.shape
    _, N = w.shape
    x = x.astype(jnp.bfloat16)
    w = w.astype(jnp.bfloat16)

    TM = 512
    if M > TM:
        m_pad = pl.cdiv(M, TM) * TM
        tm = TM
    else:
        m_pad = max(8, ((M + 7) // 8) * 8)
        tm = m_pad
    if m_pad != M:
        x = jnp.pad(x, ((0, m_pad - M), (0, 0)))

    params = jnp.stack([b, s2, t2]).astype(jnp.float32)        # (3, N), one DMA

    out = pl.pallas_call(
        functools.partial(_fused_matmul_kernel, slope=float(slope)),
        out_shape=jax.ShapeDtypeStruct((m_pad, N), out_dtype),
        grid=(m_pad // tm,),
        in_specs=[
            pl.BlockSpec((tm, K), lambda i: (i, 0)),
            pl.BlockSpec((K, N), lambda i: (0, 0)),
            pl.BlockSpec((3, N), lambda i: (0, 0)),
        ],
        out_specs=pl.BlockSpec((tm, N), lambda i: (i, 0)),
        compiler_params=pltpu.CompilerParams(dimension_semantics=("parallel",)),
    )(x, w, params)
    return out[:M] if m_pad != M else out


# --------------------------------------------------------------------------
# Conv / ConvTranspose lowered to im2col + fused Pallas matmul
# --------------------------------------------------------------------------
def _bn_affine(bn):
    scale = bn["gamma"] / jnp.sqrt(bn["var"] + BN_EPS)
    shift = bn["beta"] - bn["mean"] * scale
    return scale, shift


def _conv_matmul(x_padded, w_oihw, bias, s2, t2, slope, stride,
                 out_dtype=jnp.bfloat16):
    """Stride-`stride` valid conv on NHWC `x_padded`, weight (Cout, Cin, kh, kw)."""
    c_out, c_in, kh, kw = w_oihw.shape
    B, H, W, C = x_padded.shape
    ho = (H - kh) // stride + 1
    wo = (W - kw) // stride + 1
    cols = []
    for ki in range(kh):
        for kj in range(kw):
            cols.append(x_padded[:, ki:ki + stride * (ho - 1) + 1:stride,
                                 kj:kj + stride * (wo - 1) + 1:stride, :])
    patches = jnp.concatenate(cols, axis=-1).reshape(B * ho * wo, kh * kw * C)
    w_mat = jnp.transpose(w_oihw, (2, 3, 1, 0)).reshape(kh * kw * c_in, c_out)
    y = fused_matmul(patches, w_mat, bias, s2, t2, slope, out_dtype)
    return y.reshape(B, ho, wo, c_out)


def conv_block(x, p, k, stride, padding):
    """Conv2d -> LeakyReLU -> Dropout(identity) -> BatchNorm2d (eval)."""
    s2, t2 = _bn_affine(p["bn"])
    xp = jnp.pad(x, ((0, 0), (padding, padding), (padding, padding), (0, 0)))
    return _conv_matmul(xp, p["w"], p["b"], s2, t2, NEG_SLOPE, stride)


def convt_generic(x, w_torch, b, s2, t2, slope, k, stride, padding,
                  out_dtype=jnp.bfloat16):
    """ConvTranspose2d via zero-dilation + pad + flipped-kernel stride-1 conv."""
    B, H, W, C = x.shape
    if stride > 1:                       # static Python int -> legal under jit
        hd, wd = (H - 1) * stride + 1, (W - 1) * stride + 1
        z = jnp.zeros((B, hd, wd, C), x.dtype).at[:, ::stride, ::stride, :].set(x)
    else:
        z = x
    pad = k - 1 - padding
    zp = jnp.pad(z, ((0, 0), (pad, pad), (pad, pad), (0, 0)))
    w_eq = jnp.transpose(jnp.flip(w_torch, axis=(2, 3)), (1, 0, 2, 3))  # (Cout,Cin,k,k)
    return _conv_matmul(zp, w_eq, b, s2, t2, slope, 1, out_dtype)


def convt_subpixel_2x(x, w_torch, b, s2, t2, slope):
    """ConvTranspose2d(k=4, stride=2, padding=1) via sub-pixel decomposition.

    Output parity (ry, rx) selects a fixed 2x2 sub-kernel applied to the
    un-dilated input (75% of the dilated-conv work is structurally zero).
      parity 0: taps (ky=3, ky=1) on input rows (m-1, m)  -> pad before
      parity 1: taps (ky=2, ky=0) on input rows (m, m+1)  -> pad after
    """
    B, H, W, C = x.shape
    c_out = w_torch.shape[1]
    taps = {0: (3, 1), 1: (2, 0)}
    pads = {0: (1, 0), 1: (0, 1)}
    phases = []
    for ry in (0, 1):
        for rx in (0, 1):
            ky, kx = taps[ry], taps[rx]
            w_sub = jnp.stack(
                [jnp.stack([w_torch[:, :, ky[dy], kx[dx]] for dx in (0, 1)], axis=-1)
                 for dy in (0, 1)], axis=-2)                    # (Cin, Cout, 2, 2)
            w_sub = jnp.transpose(w_sub, (1, 0, 2, 3))          # OIHW
            xp = jnp.pad(x, ((0, 0), pads[ry], pads[rx], (0, 0)))
            phases.append(_conv_matmul(xp, w_sub, b, s2, t2, slope, 1))
    ph = jnp.stack(phases, axis=0).reshape(2, 2, B, H, W, c_out)
    return jnp.transpose(ph, (2, 3, 0, 4, 1, 5)).reshape(B, 2 * H, 2 * W, c_out)


# --------------------------------------------------------------------------
# Parameter init (deterministic, synthetic; eval-mode BN stats)
# --------------------------------------------------------------------------
def init_params(key, hid_dim, kof):
    keys = iter(jax.random.split(key, 64))

    def xavier(shape):
        if len(shape) == 4:
            rf = shape[2] * shape[3]
            fan_in, fan_out = shape[1] * rf, shape[0] * rf
        else:
            fan_out, fan_in = shape
        std = (2.0 / (fan_in + fan_out)) ** 0.5
        return std * jax.random.normal(next(keys), shape, jnp.float32)

    def bias(n):
        return 0.01 * jax.random.normal(next(keys), (n,), jnp.float32)

    def bn(n):
        return dict(gamma=jnp.ones((n,), jnp.float32),
                    beta=jnp.zeros((n,), jnp.float32),
                    mean=jnp.zeros((n,), jnp.float32),
                    var=jnp.ones((n,), jnp.float32))

    K = kof
    enc_ch = [(3, K), (K, 2 * K), (2 * K, 4 * K), (4 * K, 8 * K),
              (8 * K, 16 * K), (16 * K, 16 * K)]
    encoder = [dict(w=xavier((co, ci, 4, 4)), b=bias(co), bn=bn(co))
               for ci, co in enc_ch]

    fc1 = dict(w1=xavier((256, 16 * K)), b1=bias(256), bn1=bn(256),
               w2=xavier((hid_dim, 256)), b2=bias(hid_dim))
    fc2 = dict(w1=xavier((256, 16 * K)), b1=bias(256),
               w2=xavier((hid_dim, 256)), b2=bias(hid_dim))

    block00 = dict(w=xavier((hid_dim, hid_dim)), b=bias(hid_dim), bn=bn(hid_dim))

    dec_ch = [(hid_dim, 4 * K), (4 * K, 4 * K), (4 * K, 2 * K),
              (2 * K, 2 * K), (2 * K, K), (K, K)]
    decoder = [dict(w=xavier((ci, co, k, k)), b=bias(co), bn=bn(co))
               for (ci, co), (k, s, p) in zip(dec_ch, DEC_SPEC)]
    block07 = dict(w=xavier((K, 3, 3, 3)), b=bias(3))

    return dict(encoder=encoder, fc1=fc1, fc2=fc2, block00=block00,
                decoder=decoder, block07=block07)


# --------------------------------------------------------------------------
# VAE1 forward (eval mode)
# --------------------------------------------------------------------------
def vae1_forward(params, x_nchw, eps):
    x = jnp.transpose(x_nchw, (0, 2, 3, 1)).astype(jnp.bfloat16)   # NCHW -> NHWC
    B = x.shape[0]
    hid_dim = params["block00"]["w"].shape[0]

    # --- encoder: 6 conv blocks (k=4, s=2, p=1), 64 -> 1 spatial ---
    for blk, (k, s, p) in zip(params["encoder"], ENC_SPEC):
        x = conv_block(x, blk, k, s, p)
    h = x.reshape(B, -1)                                           # (B, 16*KOF), bf16

    # --- q(z|x): fc1 & fc2 fused (shared input h) ---
    p1, p2 = params["fc1"], params["fc2"]
    sc1, sh1 = _bn_affine(p1["bn1"])
    w1a = p1["w1"].T * sc1[None, :]          # fold BN1d into fc1's first linear
    b1a = p1["b1"] * sc1 + sh1
    W1 = jnp.concatenate([w1a, p2["w1"].T], axis=1)                # (16K, 512)
    B1 = jnp.concatenate([b1a, p2["b1"]])
    one512 = jnp.ones((512,), jnp.float32)
    zero512 = jnp.zeros((512,), jnp.float32)
    h12 = fused_matmul(h, W1, B1, one512, zero512, NEG_SLOPE)      # LeakyReLU for both

    Z = jnp.zeros((256, hid_dim), jnp.float32)                     # block-diag 2nd stage
    W2 = jnp.concatenate([jnp.concatenate([p1["w2"].T, Z], axis=1),
                          jnp.concatenate([Z, p2["w2"].T], axis=1)], axis=0)
    B2 = jnp.concatenate([p1["b2"], p2["b2"]])
    one2h = jnp.ones((2 * hid_dim,), jnp.float32)
    zero2h = jnp.zeros((2 * hid_dim,), jnp.float32)
    stats = fused_matmul(h12, W2, B2, one2h, zero2h, 1.0, out_dtype=jnp.float32)
    mu_z, logvar_z = stats[:, :hid_dim], stats[:, hid_dim:]

    # --- reparameterize (tiny: plain jnp, XLA fuses it) ---
    z_hat = mu_z + eps * jnp.exp(0.5 * logvar_z)

    # --- decoder ---
    p0 = params["block00"]
    s0, t0 = _bn_affine(p0["bn"])
    w0 = p0["w"].T * s0[None, :]             # fold BN1d into the linear
    b0 = p0["b"] * s0 + t0
    oneh = jnp.ones((hid_dim,), jnp.float32)
    zeroh = jnp.zeros((hid_dim,), jnp.float32)
    d = fused_matmul(z_hat, w0, b0, oneh, zeroh, NEG_SLOPE)        # Linear->BN->LeakyReLU
    d = d.reshape(B, 1, 1, hid_dim)                                # Reshape((-1,hid,1,1))

    for blk, (k, s, p) in zip(params["decoder"], DEC_SPEC):
        s2, t2 = _bn_affine(blk["bn"])
        if s == 2 and k == 4 and p == 1:
            d = convt_subpixel_2x(d, blk["w"], blk["b"], s2, t2, NEG_SLOPE)
        else:
            d = convt_generic(d, blk["w"], blk["b"], s2, t2, NEG_SLOPE, k, s, p)

    pf = params["block07"]
    k, s, p = FINAL_SPEC
    one3 = jnp.ones((3,), jnp.float32)
    zero3 = jnp.zeros((3,), jnp.float32)
    d = convt_generic(d, pf["w"], pf["b"], one3, zero3, 1.0, k, s, p,
                      out_dtype=jnp.float32)                       # plain ConvTranspose2d
    mu_x = jnp.transpose(d, (0, 3, 1, 2))                          # NHWC -> NCHW, f32

    # p_x applies the (deterministic, eval-mode) decoder twice to the same z.
    logvar_x = mu_x
    return mu_x, logvar_x, z_hat, mu_z, logvar_z


# TODO(synk): training-mode Dropout2d / batch-statistic BatchNorm are not
# implemented (eval-mode semantics are used).

if __name__ == "__main__":
    HID_DIM, KOF, BATCH = 16, 8, 2
    key = jax.random.PRNGKey(0)
    k_param, k_x, k_eps = jax.random.split(key, 3)

    params = init_params(k_param, HID_DIM, KOF)
    # CelebA-style input: spatial must be 64 so that 6 stride-2 convs reach 1x1
    # and the flattened features equal KOF*8*2 (= fc1/fc2 input dim).
    x = jax.random.normal(k_x, (BATCH, 3, 64, 64), jnp.float32)
    eps = jax.random.normal(k_eps, (BATCH, HID_DIM), jnp.float32)

    fwd = jax.jit(vae1_forward)
    outs = fwd(params, x, eps)
    jax.block_until_ready(outs)
    mu_x, logvar_x, z_hat, mu_z, logvar_z = outs

    assert mu_x.shape == (BATCH, 3, 64, 64)
    assert logvar_x.shape == (BATCH, 3, 64, 64)
    assert z_hat.shape == (BATCH, HID_DIM)
    assert mu_z.shape == (BATCH, HID_DIM) and logvar_z.shape == (BATCH, HID_DIM)
    assert bool(jnp.all(jnp.isfinite(mu_x)))
    print("KERNEL_OK")
</pallas_src>

<mosaic_0001>
module attributes {stable_mosaic.version = 11 : i64} {
  func.func @_fused_matmul_kernel(%arg0: i32, %arg1: memref<512x48xbf16, #tpu.memory_space<vmem>>, %arg2: memref<48x8xbf16, #tpu.memory_space<vmem>>, %arg3: memref<3x8xf32, #tpu.memory_space<vmem>>, %arg4: memref<512x8xbf16, #tpu.memory_space<vmem>>) attributes {dimension_semantics = [#tpu.dimension_semantics<parallel>], iteration_bounds = array<i64: 4>, scalar_prefetch = 0 : i64, scratch_operands = 0 : i64, tpu.core_type = #tpu.core_type<tc>, window_params = [{transform_indices = @transform_0, window_bounds = array<i64: 512, 48>}, {pipeline_mode = #tpu.pipeline_mode<synchronous>, transform_indices = @transform_1, window_bounds = array<i64: 48, 8>}, {pipeline_mode = #tpu.pipeline_mode<synchronous>, transform_indices = @transform_2, window_bounds = array<i64: 3, 8>}, {transform_indices = @transform_3, window_bounds = array<i64: 512, 8>}]} {
    %c0 = arith.constant 0 : index
    %c0_0 = arith.constant 0 : index
    %0 = vector.load %arg1[%c0, %c0_0] : memref<512x48xbf16, #tpu.memory_space<vmem>>, vector<512x48xbf16>
    %c0_1 = arith.constant 0 : index
    %c0_2 = arith.constant 0 : index
    %1 = vector.load %arg2[%c0_1, %c0_2] : memref<48x8xbf16, #tpu.memory_space<vmem>>, vector<48x8xbf16>
    %cst = arith.constant dense<0.000000e+00> : vector<512x8xf32>
    %2 = tpu.matmul %0, %1, %cst {dimension_numbers = #tpu.dot_dimension_numbers<[1], [0], [0], [1], [0, 0, 1, 1], [], []>} : vector<512x48xbf16>, vector<48x8xbf16>, vector<512x8xf32> -> vector<512x8xf32>
    %c0_3 = arith.constant 0 : index
    %c0_4 = arith.constant 0 : index
    %3 = vector.load %arg3[%c0_3, %c0_4] : memref<3x8xf32, #tpu.memory_space<vmem>>, vector<3x8xf32>
    %4 = vector.extract_strided_slice %3 {offsets = [0, 0], sizes = [1, 8], strides = [1, 1]} : vector<3x8xf32> to vector<1x8xf32>
    %5 = vector.broadcast %4 : vector<1x8xf32> to vector<512x8xf32>
    %6 = arith.addf %2, %5 : vector<512x8xf32>
    %cst_5 = arith.constant 0.000000e+00 : f32
    %7 = vector.broadcast %cst_5 : f32 to vector<512x8xf32>
    %8 = arith.cmpf oge, %6, %7 : vector<512x8xf32>
    %cst_6 = arith.constant 2.000000e-01 : f32
    %9 = vector.broadcast %cst_6 : f32 to vector<512x8xf32>
    %10 = arith.mulf %9, %6 : vector<512x8xf32>
    %11 = arith.select %8, %6, %10 : vector<512x8xi1>, vector<512x8xf32>
    %12 = vector.extract_strided_slice %3 {offsets = [1, 0], sizes = [1, 8], strides = [1, 1]} : vector<3x8xf32> to vector<1x8xf32>
    %13 = vector.broadcast %12 : vector<1x8xf32> to vector<512x8xf32>
    %14 = arith.mulf %11, %13 : vector<512x8xf32>
    %15 = vector.extract_strided_slice %3 {offsets = [2, 0], sizes = [1, 8], strides = [1, 1]} : vector<3x8xf32> to vector<1x8xf32>
    %16 = vector.broadcast %15 : vector<1x8xf32> to vector<512x8xf32>
    %17 = arith.addf %14, %16 : vector<512x8xf32>
    %18 = arith.truncf %17 : vector<512x8xf32> to vector<512x8xbf16>
    %c0_7 = arith.constant 0 : index
    %c0_8 = arith.constant 0 : index
    %19 = vector.load %arg4[%c0_7, %c0_8] : memref<512x8xbf16, #tpu.memory_space<vmem>>, vector<512x8xbf16>
    tpu.vector_store %arg4[%c0_7, %c0_8], %18 {strides = array<i32>} : memref<512x8xbf16, #tpu.memory_space<vmem>>, vector<512x8xbf16>,
    return
  }
  func.func @transform_0(%arg0: i32) -> (i32, i32) {
    %c0_i32 = arith.constant 0 : i32
    %c0_i32_0 = arith.constant 0 : i32
    return %arg0, %c0_i32 : i32, i32
  }
  func.func @transform_1(%arg0: i32) -> (i32, i32) {
    %c0_i32 = arith.constant 0 : i32
    %c0_i32_0 = arith.constant 0 : i32
    %c0_i32_1 = arith.constant 0 : i32
    return %c0_i32, %c0_i32_0 : i32, i32
  }
  func.func @transform_2(%arg0: i32) -> (i32, i32) {
    %c0_i32 = arith.constant 0 : i32
    %c0_i32_0 = arith.constant 0 : i32
    %c0_i32_1 = arith.constant 0 : i32
    return %c0_i32, %c0_i32_0 : i32, i32
  }
  func.func @transform_3(%arg0: i32) -> (i32, i32) {
    %c0_i32 = arith.constant 0 : i32
    %c0_i32_0 = arith.constant 0 : i32
    return %arg0, %c0_i32 : i32, i32
  }
}

module attributes {stable_mosaic.version = 11 : i64} {
  func.func @_fused_matmul_kernel(%arg0: i32, %arg1: memref<512x128xbf16, #tpu.memory_space<vmem>>, %arg2: memref<128x16xbf16, #tpu.memory_space<vmem>>, %arg3: memref<3x16xf32, #tpu.memory_space<vmem>>, %arg4: memref<512x16xbf16, #tpu.memory_space<vmem>>) attributes {dimension_semantics = [#tpu.dimension_semantics<parallel>], iteration_bounds = array<i64: 1>, scalar_prefetch = 0 : i64, scratch_operands = 0 : i64, tpu.core_type = #tpu.core_type<tc>, window_params = [{transform_indices = @transform_0, window_bounds = array<i64: 512, 128>}, {pipeline_mode = #tpu.pipeline_mode<synchronous>, transform_indices = @transform_1, window_bounds = array<i64: 128, 16>}, {pipeline_mode = #tpu.pipeline_mode<synchronous>, transform_indices = @transform_2, window_bounds = array<i64: 3, 16>}, {transform_indices = @transform_3, window_bounds = array<i64: 512, 16>}]} {
    %c0 = arith.constant 0 : index
    %c0_0 = arith.constant 0 : index
    %0 = vector.load %arg1[%c0, %c0_0] : memref<512x128xbf16, #tpu.memory_space<vmem>>, vector<512x128xbf16>
    %c0_1 = arith.constant 0 : index
    %c0_2 = arith.constant 0 : index
    %1 = vector.load %arg2[%c0_1, %c0_2] : memref<128x16xbf16, #tpu.memory_space<vmem>>, vector<128x16xbf16>
    %cst = arith.constant dense<0.000000e+00> : vector<512x16xf32>
    %2 = tpu.matmul %0, %1, %cst {dimension_numbers = #tpu.dot_dimension_numbers<[1], [0], [0], [1], [0, 0, 1, 1], [], []>} : vector<512x128xbf16>, vector<128x16xbf16>, vector<512x16xf32> -> vector<512x16xf32>
    %c0_3 = arith.constant 0 : index
    %c0_4 = arith.constant 0 : index
    %3 = vector.load %arg3[%c0_3, %c0_4] : memref<3x16xf32, #tpu.memory_space<vmem>>, vector<3x16xf32>
    %4 = vector.extract_strided_slice %3 {offsets = [0, 0], sizes = [1, 16], strides = [1, 1]} : vector<3x16xf32> to vector<1x16xf32>
    %5 = vector.broadcast %4 : vector<1x16xf32> to vector<512x16xf32>
    %6 = arith.addf %2, %5 : vector<512x16xf32>
    %cst_5 = arith.constant 0.000000e+00 : f32
    %7 = vector.broadcast %cst_5 : f32 to vector<512x16xf32>
    %8 = arith.cmpf oge, %6, %7 : vector<512x16xf32>
    %cst_6 = arith.constant 2.000000e-01 : f32
    %9 = vector.broadcast %cst_6 : f32 to vector<512x16xf32>
    %10 = arith.mulf %9, %6 : vector<512x16xf32>
    %11 = arith.select %8, %6, %10 : vector<512x16xi1>, vector<512x16xf32>
    %12 = vector.extract_strided_slice %3 {offsets = [1, 0], sizes = [1, 16], strides = [1, 1]} : vector<3x16xf32> to vector<1x16xf32>
    %13 = vector.broadcast %12 : vector<1x16xf32> to vector<512x16xf32>
    %14 = arith.mulf %11, %13 : vector<512x16xf32>
    %15 = vector.extract_strided_slice %3 {offsets = [2, 0], sizes = [1, 16], strides = [1, 1]} : vector<3x16xf32> to vector<1x16xf32>
    %16 = vector.broadcast %15 : vector<1x16xf32> to vector<512x16xf32>
    %17 = arith.addf %14, %16 : vector<512x16xf32>
    %18 = arith.truncf %17 : vector<512x16xf32> to vector<512x16xbf16>
    %c0_7 = arith.constant 0 : index
    %c0_8 = arith.constant 0 : index
    %19 = vector.load %arg4[%c0_7, %c0_8] : memref<512x16xbf16, #tpu.memory_space<vmem>>, vector<512x16xbf16>
    tpu.vector_store %arg4[%c0_7, %c0_8], %18 {strides = array<i32>} : memref<512x16xbf16, #tpu.memory_space<vmem>>, vector<512x16xbf16>,
    return
  }
  func.func @transform_0(%arg0: i32) -> (i32, i32) {
    %c0_i32 = arith.constant 0 : i32
    %c0_i32_0 = arith.constant 0 : i32
    return %arg0, %c0_i32 : i32, i32
  }
  func.func @transform_1(%arg0: i32) -> (i32, i32) {
    %c0_i32 = arith.constant 0 : i32
    %c0_i32_0 = arith.constant 0 : i32
    %c0_i32_1 = arith.constant 0 : i32
    return %c0_i32, %c0_i32_0 : i32, i32
  }
  func.func @transform_2(%arg0: i32) -> (i32, i32) {
    %c0_i32 = arith.constant 0 : i32
    %c0_i32_0 = arith.constant 0 : i32
    %c0_i32_1 = arith.constant 0 : i32
    return %c0_i32, %c0_i32_0 : i32, i32
  }
  func.func @transform_3(%arg0: i32) -> (i32, i32) {
    %c0_i32 = arith.constant 0 : i32
    %c0_i32_0 = arith.constant 0 : i32
    return %arg0, %c0_i32 : i32, i32
  }
}

module attributes {stable_mosaic.version = 11 : i64} {
  func.func @_fused_matmul_kernel(%arg0: i32, %arg1: memref<128x256xbf16, #tpu.memory_space<vmem>>, %arg2: memref<256x32xbf16, #tpu.memory_space<vmem>>, %arg3: memref<3x32xf32, #tpu.memory_space<vmem>>, %arg4: memref<128x32xbf16, #tpu.memory_space<vmem>>) attributes {dimension_semantics = [#tpu.dimension_semantics<parallel>], iteration_bounds = array<i64: 1>, scalar_prefetch = 0 : i64, scratch_operands = 0 : i64, tpu.core_type = #tpu.core_type<tc>, window_params = [{transform_indices = @transform_0, window_bounds = array<i64: 128, 256>}, {pipeline_mode = #tpu.pipeline_mode<synchronous>, transform_indices = @transform_1, window_bounds = array<i64: 256, 32>}, {pipeline_mode = #tpu.pipeline_mode<synchronous>, transform_indices = @transform_2, window_bounds = array<i64: 3, 32>}, {transform_indices = @transform_3, window_bounds = array<i64: 128, 32>}]} {
    %c0 = arith.constant 0 : index
    %c0_0 = arith.constant 0 : index
    %0 = vector.load %arg1[%c0, %c0_0] : memref<128x256xbf16, #tpu.memory_space<vmem>>, vector<128x256xbf16>
    %c0_1 = arith.constant 0 : index
    %c0_2 = arith.constant 0 : index
    %1 = vector.load %arg2[%c0_1, %c0_2] : memref<256x32xbf16, #tpu.memory_space<vmem>>, vector<256x32xbf16>
    %cst = arith.constant dense<0.000000e+00> : vector<128x32xf32>
    %2 = tpu.matmul %0, %1, %cst {dimension_numbers = #tpu.dot_dimension_numbers<[1], [0], [0], [1], [0, 0, 1, 1], [], []>} : vector<128x256xbf16>, vector<256x32xbf16>, vector<128x32xf32> -> vector<128x32xf32>
    %c0_3 = arith.constant 0 : index
    %c0_4 = arith.constant 0 : index
    %3 = vector.load %arg3[%c0_3, %c0_4] : memref<3x32xf32, #tpu.memory_space<vmem>>, vector<3x32xf32>
    %4 = vector.extract_strided_slice %3 {offsets = [0, 0], sizes = [1, 32], strides = [1, 1]} : vector<3x32xf32> to vector<1x32xf32>
    %5 = vector.broadcast %4 : vector<1x32xf32> to vector<128x32xf32>
    %6 = arith.addf %2, %5 : vector<128x32xf32>
    %cst_5 = arith.constant 0.000000e+00 : f32
    %7 = vector.broadcast %cst_5 : f32 to vector<128x32xf32>
    %8 = arith.cmpf oge, %6, %7 : vector<128x32xf32>
    %cst_6 = arith.constant 2.000000e-01 : f32
    %9 = vector.broadcast %cst_6 : f32 to vector<128x32xf32>
    %10 = arith.mulf %9, %6 : vector<128x32xf32>
    %11 = arith.select %8, %6, %10 : vector<128x32xi1>, vector<128x32xf32>
    %12 = vector.extract_strided_slice %3 {offsets = [1, 0], sizes = [1, 32], strides = [1, 1]} : vector<3x32xf32> to vector<1x32xf32>
    %13 = vector.broadcast %12 : vector<1x32xf32> to vector<128x32xf32>
    %14 = arith.mulf %11, %13 : vector<128x32xf32>
    %15 = vector.extract_strided_slice %3 {offsets = [2, 0], sizes = [1, 32], strides = [1, 1]} : vector<3x32xf32> to vector<1x32xf32>
    %16 = vector.broadcast %15 : vector<1x32xf32> to vector<128x32xf32>
    %17 = arith.addf %14, %16 : vector<128x32xf32>
    %18 = arith.truncf %17 : vector<128x32xf32> to vector<128x32xbf16>
    %c0_7 = arith.constant 0 : index
    %c0_8 = arith.constant 0 : index
    %19 = vector.load %arg4[%c0_7, %c0_8] : memref<128x32xbf16, #tpu.memory_space<vmem>>, vector<128x32xbf16>
    tpu.vector_store %arg4[%c0_7, %c0_8], %18 {strides = array<i32>} : memref<128x32xbf16, #tpu.memory_space<vmem>>, vector<128x32xbf16>,
    return
  }
  func.func @transform_0(%arg0: i32) -> (i32, i32) {
    %c0_i32 = arith.constant 0 : i32
    %c0_i32_0 = arith.constant 0 : i32
    return %arg0, %c0_i32 : i32, i32
  }
  func.func @transform_1(%arg0: i32) -> (i32, i32) {
    %c0_i32 = arith.constant 0 : i32
    %c0_i32_0 = arith.constant 0 : i32
    %c0_i32_1 = arith.constant 0 : i32
    return %c0_i32, %c0_i32_0 : i32, i32
  }
  func.func @transform_2(%arg0: i32) -> (i32, i32) {
    %c0_i32 = arith.constant 0 : i32
    %c0_i32_0 = arith.constant 0 : i32
    %c0_i32_1 = arith.constant 0 : i32
    return %c0_i32, %c0_i32_0 : i32, i32
  }
  func.func @transform_3(%arg0: i32) -> (i32, i32) {
    %c0_i32 = arith.constant 0 : i32
    %c0_i32_0 = arith.constant 0 : i32
    return %arg0, %c0_i32 : i32, i32
  }
}

module attributes {stable_mosaic.version = 11 : i64} {
  func.func @_fused_matmul_kernel(%arg0: i32, %arg1: memref<32x512xbf16, #tpu.memory_space<vmem>>, %arg2: memref<512x64xbf16, #tpu.memory_space<vmem>>, %arg3: memref<3x64xf32, #tpu.memory_space<vmem>>, %arg4: memref<32x64xbf16, #tpu.memory_space<vmem>>) attributes {dimension_semantics = [#tpu.dimension_semantics<parallel>], iteration_bounds = array<i64: 1>, scalar_prefetch = 0 : i64, scratch_operands = 0 : i64, tpu.core_type = #tpu.core_type<tc>, window_params = [{transform_indices = @transform_0, window_bounds = array<i64: 32, 512>}, {pipeline_mode = #tpu.pipeline_mode<synchronous>, transform_indices = @transform_1, window_bounds = array<i64: 512, 64>}, {pipeline_mode = #tpu.pipeline_mode<synchronous>, transform_indices = @transform_2, window_bounds = array<i64: 3, 64>}, {transform_indices = @transform_3, window_bounds = array<i64: 32, 64>}]} {
    %c0 = arith.constant 0 : index
    %c0_0 = arith.constant 0 : index
    %0 = vector.load %arg1[%c0, %c0_0] : memref<32x512xbf16, #tpu.memory_space<vmem>>, vector<32x512xbf16>
    %c0_1 = arith.constant 0 : index
    %c0_2 = arith.constant 0 : index
    %1 = vector.load %arg2[%c0_1, %c0_2] : memref<512x64xbf16, #tpu.memory_space<vmem>>, vector<512x64xbf16>
    %cst = arith.constant dense<0.000000e+00> : vector<32x64xf32>
    %2 = tpu.matmul %0, %1, %cst {dimension_numbers = #tpu.dot_dimension_numbers<[1], [0], [0], [1], [0, 0, 1, 1], [], []>} : vector<32x512xbf16>, vector<512x64xbf16>, vector<32x64xf32> -> vector<32x64xf32>
    %c0_3 = arith.constant 0 : index
    %c0_4 = arith.constant 0 : index
    %3 = vector.load %arg3[%c0_3, %c0_4] : memref<3x64xf32, #tpu.memory_space<vmem>>, vector<3x64xf32>
    %4 = vector.extract_strided_slice %3 {offsets = [0, 0], sizes = [1, 64], strides = [1, 1]} : vector<3x64xf32> to vector<1x64xf32>
    %5 = vector.broadcast %4 : vector<1x64xf32> to vector<32x64xf32>
    %6 = arith.addf %2, %5 : vector<32x64xf32>
    %cst_5 = arith.constant 0.000000e+00 : f32
    %7 = vector.broadcast %cst_5 : f32 to vector<32x64xf32>
    %8 = arith.cmpf oge, %6, %7 : vector<32x64xf32>
    %cst_6 = arith.constant 2.000000e-01 : f32
    %9 = vector.broadcast %cst_6 : f32 to vector<32x64xf32>
    %10 = arith.mulf %9, %6 : vector<32x64xf32>
    %11 = arith.select %8, %6, %10 : vector<32x64xi1>, vector<32x64xf32>
    %12 = vector.extract_strided_slice %3 {offsets = [1, 0], sizes = [1, 64], strides = [1, 1]} : vector<3x64xf32> to vector<1x64xf32>
    %13 = vector.broadcast %12 : vector<1x64xf32> to vector<32x64xf32>
    %14 = arith.mulf %11, %13 : vector<32x64xf32>
    %15 = vector.extract_strided_slice %3 {offsets = [2, 0], sizes = [1, 64], strides = [1, 1]} : vector<3x64xf32> to vector<1x64xf32>
    %16 = vector.broadcast %15 : vector<1x64xf32> to vector<32x64xf32>
    %17 = arith.addf %14, %16 : vector<32x64xf32>
    %18 = arith.truncf %17 : vector<32x64xf32> to vector<32x64xbf16>
    %c0_7 = arith.constant 0 : index
    %c0_8 = arith.constant 0 : index
    %19 = vector.load %arg4[%c0_7, %c0_8] : memref<32x64xbf16, #tpu.memory_space<vmem>>, vector<32x64xbf16>
    tpu.vector_store %arg4[%c0_7, %c0_8], %18 {strides = array<i32>} : memref<32x64xbf16, #tpu.memory_space<vmem>>, vector<32x64xbf16>,
    return
  }
  func.func @transform_0(%arg0: i32) -> (i32, i32) {
    %c0_i32 = arith.constant 0 : i32
    %c0_i32_0 = arith.constant 0 : i32
    return %arg0, %c0_i32 : i32, i32
  }
  func.func @transform_1(%arg0: i32) -> (i32, i32) {
    %c0_i32 = arith.constant 0 : i32
    %c0_i32_0 = arith.constant 0 : i32
    %c0_i32_1 = arith.constant 0 : i32
    return %c0_i32, %c0_i32_0 : i32, i32
  }
  func.func @transform_2(%arg0: i32) -> (i32, i32) {
    %c0_i32 = arith.constant 0 : i32
    %c0_i32_0 = arith.constant 0 : i32
    %c0_i32_1 = arith.constant 0 : i32
    return %c0_i32, %c0_i32_0 : i32, i32
  }
  func.func @transform_3(%arg0: i32) -> (i32, i32) {
    %c0_i32 = arith.constant 0 : i32
    %c0_i32_0 = arith.constant 0 : i32
    return %arg0, %c0_i32 : i32, i32
  }
}

module attributes {stable_mosaic.version = 11 : i64} {
  func.func @_fused_matmul_kernel(%arg0: i32, %arg1: memref<8x1024xbf16, #tpu.memory_space<vmem>>, %arg2: memref<1024x128xbf16, #tpu.memory_space<vmem>>, %arg3: memref<3x128xf32, #tpu.memory_space<vmem>>, %arg4: memref<8x128xbf16, #tpu.memory_space<vmem>>) attributes {dimension_semantics = [#tpu.dimension_semantics<parallel>], iteration_bounds = array<i64: 1>, scalar_prefetch = 0 : i64, scratch_operands = 0 : i64, tpu.core_type = #tpu.core_type<tc>, window_params = [{transform_indices = @transform_0, window_bounds = array<i64: 8, 1024>}, {pipeline_mode = #tpu.pipeline_mode<synchronous>, transform_indices = @transform_1, window_bounds = array<i64: 1024, 128>}, {pipeline_mode = #tpu.pipeline_mode<synchronous>, transform_indices = @transform_2, window_bounds = array<i64: 3, 128>}, {transform_indices = @transform_3, window_bounds = array<i64: 8, 128>}]} {
    %c0 = arith.constant 0 : index
    %c0_0 = arith.constant 0 : index
    %0 = vector.load %arg1[%c0, %c0_0] : memref<8x1024xbf16, #tpu.memory_space<vmem>>, vector<8x1024xbf16>
    %c0_1 = arith.constant 0 : index
    %c0_2 = arith.constant 0 : index
    %1 = vector.load %arg2[%c0_1, %c0_2] : memref<1024x128xbf16, #tpu.memory_space<vmem>>, vector<1024x128xbf16>
    %cst = arith.constant dense<0.000000e+00> : vector<8x128xf32>
    %2 = tpu.matmul %0, %1, %cst {dimension_numbers = #tpu.dot_dimension_numbers<[1], [0], [0], [1], [0, 0, 1, 1], [], []>} : vector<8x1024xbf16>, vector<1024x128xbf16>, vector<8x128xf32> -> vector<8x128xf32>
    %c0_3 = arith.constant 0 : index
    %c0_4 = arith.constant 0 : index
    %3 = vector.load %arg3[%c0_3, %c0_4] : memref<3x128xf32, #tpu.memory_space<vmem>>, vector<3x128xf32>
    %4 = vector.extract_strided_slice %3 {offsets = [0, 0], sizes = [1, 128], strides = [1, 1]} : vector<3x128xf32> to vector<1x128xf32>
    %5 = vector.broadcast %4 : vector<1x128xf32> to vector<8x128xf32>
    %6 = arith.addf %2, %5 : vector<8x128xf32>
    %cst_5 = arith.constant 0.000000e+00 : f32
    %7 = vector.broadcast %cst_5 : f32 to vector<8x128xf32>
    %8 = arith.cmpf oge, %6, %7 : vector<8x128xf32>
    %cst_6 = arith.constant 2.000000e-01 : f32
    %9 = vector.broadcast %cst_6 : f32 to vector<8x128xf32>
    %10 = arith.mulf %9, %6 : vector<8x128xf32>
    %11 = arith.select %8, %6, %10 : vector<8x128xi1>, vector<8x128xf32>
    %12 = vector.extract_strided_slice %3 {offsets = [1, 0], sizes = [1, 128], strides = [1, 1]} : vector<3x128xf32> to vector<1x128xf32>
    %13 = vector.broadcast %12 : vector<1x128xf32> to vector<8x128xf32>
    %14 = arith.mulf %11, %13 : vector<8x128xf32>
    %15 = vector.extract_strided_slice %3 {offsets = [2, 0], sizes = [1, 128], strides = [1, 1]} : vector<3x128xf32> to vector<1x128xf32>
    %16 = vector.broadcast %15 : vector<1x128xf32> to vector<8x128xf32>
    %17 = arith.addf %14, %16 : vector<8x128xf32>
    %18 = arith.truncf %17 : vector<8x128xf32> to vector<8x128xbf16>
    %c0_7 = arith.constant 0 : index
    %c0_8 = arith.constant 0 : index
    %19 = vector.load %arg4[%c0_7, %c0_8] : memref<8x128xbf16, #tpu.memory_space<vmem>>, vector<8x128xbf16>
    tpu.vector_store %arg4[%c0_7, %c0_8], %18 {strides = array<i32>} : memref<8x128xbf16, #tpu.memory_space<vmem>>, vector<8x128xbf16>,
    return
  }
  func.func @transform_0(%arg0: i32) -> (i32, i32) {
    %c0_i32 = arith.constant 0 : i32
    %c0_i32_0 = arith.constant 0 : i32
    return %arg0, %c0_i32 : i32, i32
  }
  func.func @transform_1(%arg0: i32) -> (i32, i32) {
    %c0_i32 = arith.constant 0 : i32
    %c0_i32_0 = arith.constant 0 : i32
    %c0_i32_1 = arith.constant 0 : i32
    return %c0_i32, %c0_i32_0 : i32, i32
  }
  func.func @transform_2(%arg0: i32) -> (i32, i32) {
    %c0_i32 = arith.constant 0 : i32
    %c0_i32_0 = arith.constant 0 : i32
    %c0_i32_1 = arith.constant 0 : i32
    return %c0_i32, %c0_i32_0 : i32, i32
  }
  func.func @transform_3(%arg0: i32) -> (i32, i32) {
    %c0_i32 = arith.constant 0 : i32
    %c0_i32_0 = arith.constant 0 : i32
    return %arg0, %c0_i32 : i32, i32
  }
}

module attributes {stable_mosaic.version = 11 : i64} {
  func.func @_fused_matmul_kernel(%arg0: i32, %arg1: memref<8x2048xbf16, #tpu.memory_space<vmem>>, %arg2: memref<2048x128xbf16, #tpu.memory_space<vmem>>, %arg3: memref<3x128xf32, #tpu.memory_space<vmem>>, %arg4: memref<8x128xbf16, #tpu.memory_space<vmem>>) attributes {dimension_semantics = [#tpu.dimension_semantics<parallel>], iteration_bounds = array<i64: 1>, scalar_prefetch = 0 : i64, scratch_operands = 0 : i64, tpu.core_type = #tpu.core_type<tc>, window_params = [{transform_indices = @transform_0, window_bounds = array<i64: 8, 2048>}, {pipeline_mode = #tpu.pipeline_mode<synchronous>, transform_indices = @transform_1, window_bounds = array<i64: 2048, 128>}, {pipeline_mode = #tpu.pipeline_mode<synchronous>, transform_indices = @transform_2, window_bounds = array<i64: 3, 128>}, {transform_indices = @transform_3, window_bounds = array<i64: 8, 128>}]} {
    %c0 = arith.constant 0 : index
    %c0_0 = arith.constant 0 : index
    %0 = vector.load %arg1[%c0, %c0_0] : memref<8x2048xbf16, #tpu.memory_space<vmem>>, vector<8x2048xbf16>
    %c0_1 = arith.constant 0 : index
    %c0_2 = arith.constant 0 : index
    %1 = vector.load %arg2[%c0_1, %c0_2] : memref<2048x128xbf16, #tpu.memory_space<vmem>>, vector<2048x128xbf16>
    %cst = arith.constant dense<0.000000e+00> : vector<8x128xf32>
    %2 = tpu.matmul %0, %1, %cst {dimension_numbers = #tpu.dot_dimension_numbers<[1], [0], [0], [1], [0, 0, 1, 1], [], []>} : vector<8x2048xbf16>, vector<2048x128xbf16>, vector<8x128xf32> -> vector<8x128xf32>
    %c0_3 = arith.constant 0 : index
    %c0_4 = arith.constant 0 : index
    %3 = vector.load %arg3[%c0_3, %c0_4] : memref<3x128xf32, #tpu.memory_space<vmem>>, vector<3x128xf32>
    %4 = vector.extract_strided_slice %3 {offsets = [0, 0], sizes = [1, 128], strides = [1, 1]} : vector<3x128xf32> to vector<1x128xf32>
    %5 = vector.broadcast %4 : vector<1x128xf32> to vector<8x128xf32>
    %6 = arith.addf %2, %5 : vector<8x128xf32>
    %cst_5 = arith.constant 0.000000e+00 : f32
    %7 = vector.broadcast %cst_5 : f32 to vector<8x128xf32>
    %8 = arith.cmpf oge, %6, %7 : vector<8x128xf32>
    %cst_6 = arith.constant 2.000000e-01 : f32
    %9 = vector.broadcast %cst_6 : f32 to vector<8x128xf32>
    %10 = arith.mulf %9, %6 : vector<8x128xf32>
    %11 = arith.select %8, %6, %10 : vector<8x128xi1>, vector<8x128xf32>
    %12 = vector.extract_strided_slice %3 {offsets = [1, 0], sizes = [1, 128], strides = [1, 1]} : vector<3x128xf32> to vector<1x128xf32>
    %13 = vector.broadcast %12 : vector<1x128xf32> to vector<8x128xf32>
    %14 = arith.mulf %11, %13 : vector<8x128xf32>
    %15 = vector.extract_strided_slice %3 {offsets = [2, 0], sizes = [1, 128], strides = [1, 1]} : vector<3x128xf32> to vector<1x128xf32>
    %16 = vector.broadcast %15 : vector<1x128xf32> to vector<8x128xf32>
    %17 = arith.addf %14, %16 : vector<8x128xf32>
    %18 = arith.truncf %17 : vector<8x128xf32> to vector<8x128xbf16>
    %c0_7 = arith.constant 0 : index
    %c0_8 = arith.constant 0 : index
    %19 = vector.load %arg4[%c0_7, %c0_8] : memref<8x128xbf16, #tpu.memory_space<vmem>>, vector<8x128xbf16>
    tpu.vector_store %arg4[%c0_7, %c0_8], %18 {strides = array<i32>} : memref<8x128xbf16, #tpu.memory_space<vmem>>, vector<8x128xbf16>,
    return
  }
  func.func @transform_0(%arg0: i32) -> (i32, i32) {
    %c0_i32 = arith.constant 0 : i32
    %c0_i32_0 = arith.constant 0 : i32
    return %arg0, %c0_i32 : i32, i32
  }
  func.func @transform_1(%arg0: i32) -> (i32, i32) {
    %c0_i32 = arith.constant 0 : i32
    %c0_i32_0 = arith.constant 0 : i32
    %c0_i32_1 = arith.constant 0 : i32
    return %c0_i32, %c0_i32_0 : i32, i32
  }
  func.func @transform_2(%arg0: i32) -> (i32, i32) {
    %c0_i32 = arith.constant 0 : i32
    %c0_i32_0 = arith.constant 0 : i32
    %c0_i32_1 = arith.constant 0 : i32
    return %c0_i32, %c0_i32_0 : i32, i32
  }
  func.func @transform_3(%arg0: i32) -> (i32, i32) {
    %c0_i32 = arith.constant 0 : i32
    %c0_i32_0 = arith.constant 0 : i32
    return %arg0, %c0_i32 : i32, i32
  }
}

module attributes {stable_mosaic.version = 11 : i64} {
  func.func @_fused_matmul_kernel(%arg0: i32, %arg1: memref<8x128xbf16, #tpu.memory_space<vmem>>, %arg2: memref<128x512xbf16, #tpu.memory_space<vmem>>, %arg3: memref<3x512xf32, #tpu.memory_space<vmem>>, %arg4: memref<8x512xbf16, #tpu.memory_space<vmem>>) attributes {dimension_semantics = [#tpu.dimension_semantics<parallel>], iteration_bounds = array<i64: 1>, scalar_prefetch = 0 : i64, scratch_operands = 0 : i64, tpu.core_type = #tpu.core_type<tc>, window_params = [{transform_indices = @transform_0, window_bounds = array<i64: 8, 128>}, {pipeline_mode = #tpu.pipeline_mode<synchronous>, transform_indices = @transform_1, window_bounds = array<i64: 128, 512>}, {pipeline_mode = #tpu.pipeline_mode<synchronous>, transform_indices = @transform_2, window_bounds = array<i64: 3, 512>}, {transform_indices = @transform_3, window_bounds = array<i64: 8, 512>}]} {
    %c0 = arith.constant 0 : index
    %c0_0 = arith.constant 0 : index
    %0 = vector.load %arg1[%c0, %c0_0] : memref<8x128xbf16, #tpu.memory_space<vmem>>, vector<8x128xbf16>
    %c0_1 = arith.constant 0 : index
    %c0_2 = arith.constant 0 : index
    %1 = vector.load %arg2[%c0_1, %c0_2] : memref<128x512xbf16, #tpu.memory_space<vmem>>, vector<128x512xbf16>
    %cst = arith.constant dense<0.000000e+00> : vector<8x512xf32>
    %2 = tpu.matmul %0, %1, %cst {dimension_numbers = #tpu.dot_dimension_numbers<[1], [0], [0], [1], [0, 0, 1, 1], [], []>} : vector<8x128xbf16>, vector<128x512xbf16>, vector<8x512xf32> -> vector<8x512xf32>
    %c0_3 = arith.constant 0 : index
    %c0_4 = arith.constant 0 : index
    %3 = vector.load %arg3[%c0_3, %c0_4] : memref<3x512xf32, #tpu.memory_space<vmem>>, vector<3x512xf32>
    %4 = vector.extract_strided_slice %3 {offsets = [0, 0], sizes = [1, 512], strides = [1, 1]} : vector<3x512xf32> to vector<1x512xf32>
    %5 = vector.broadcast %4 : vector<1x512xf32> to vector<8x512xf32>
    %6 = arith.addf %2, %5 : vector<8x512xf32>
    %cst_5 = arith.constant 0.000000e+00 : f32
    %7 = vector.broadcast %cst_5 : f32 to vector<8x512xf32>
    %8 = arith.cmpf oge, %6, %7 : vector<8x512xf32>
    %cst_6 = arith.constant 2.000000e-01 : f32
    %9 = vector.broadcast %cst_6 : f32 to vector<8x512xf32>
    %10 = arith.mulf %9, %6 : vector<8x512xf32>
    %11 = arith.select %8, %6, %10 : vector<8x512xi1>, vector<8x512xf32>
    %12 = vector.extract_strided_slice %3 {offsets = [1, 0], sizes = [1, 512], strides = [1, 1]} : vector<3x512xf32> to vector<1x512xf32>
    %13 = vector.broadcast %12 : vector<1x512xf32> to vector<8x512xf32>
    %14 = arith.mulf %11, %13 : vector<8x512xf32>
    %15 = vector.extract_strided_slice %3 {offsets = [2, 0], sizes = [1, 512], strides = [1, 1]} : vector<3x512xf32> to vector<1x512xf32>
    %16 = vector.broadcast %15 : vector<1x512xf32> to vector<8x512xf32>
    %17 = arith.addf %14, %16 : vector<8x512xf32>
    %18 = arith.truncf %17 : vector<8x512xf32> to vector<8x512xbf16>
    %c0_7 = arith.constant 0 : index
    %c0_8 = arith.constant 0 : index
    %19 = vector.load %arg4[%c0_7, %c0_8] : memref<8x512xbf16, #tpu.memory_space<vmem>>, vector<8x512xbf16>
    tpu.vector_store %arg4[%c0_7, %c0_8], %18 {strides = array<i32>} : memref<8x512xbf16, #tpu.memory_space<vmem>>, vector<8x512xbf16>,
    return
  }
  func.func @transform_0(%arg0: i32) -> (i32, i32) {
    %c0_i32 = arith.constant 0 : i32
    %c0_i32_0 = arith.constant 0 : i32
    return %arg0, %c0_i32 : i32, i32
  }
  func.func @transform_1(%arg0: i32) -> (i32, i32) {
    %c0_i32 = arith.constant 0 : i32
    %c0_i32_0 = arith.constant 0 : i32
    %c0_i32_1 = arith.constant 0 : i32
    return %c0_i32, %c0_i32_0 : i32, i32
  }
  func.func @transform_2(%arg0: i32) -> (i32, i32) {
    %c0_i32 = arith.constant 0 : i32
    %c0_i32_0 = arith.constant 0 : i32
    %c0_i32_1 = arith.constant 0 : i32
    return %c0_i32, %c0_i32_0 : i32, i32
  }
  func.func @transform_3(%arg0: i32) -> (i32, i32) {
    %c0_i32 = arith.constant 0 : i32
    %c0_i32_0 = arith.constant 0 : i32
    return %arg0, %c0_i32 : i32, i32
  }
}

module attributes {stable_mosaic.version = 11 : i64} {
  func.func @_fused_matmul_kernel(%arg0: i32, %arg1: memref<8x512xbf16, #tpu.memory_space<vmem>>, %arg2: memref<512x32xbf16, #tpu.memory_space<vmem>>, %arg3: memref<3x32xf32, #tpu.memory_space<vmem>>, %arg4: memref<8x32xf32, #tpu.memory_space<vmem>>) attributes {dimension_semantics = [#tpu.dimension_semantics<parallel>], iteration_bounds = array<i64: 1>, scalar_prefetch = 0 : i64, scratch_operands = 0 : i64, tpu.core_type = #tpu.core_type<tc>, window_params = [{transform_indices = @transform_0, window_bounds = array<i64: 8, 512>}, {pipeline_mode = #tpu.pipeline_mode<synchronous>, transform_indices = @transform_1, window_bounds = array<i64: 512, 32>}, {pipeline_mode = #tpu.pipeline_mode<synchronous>, transform_indices = @transform_2, window_bounds = array<i64: 3, 32>}, {transform_indices = @transform_3, window_bounds = array<i64: 8, 32>}]} {
    %c0 = arith.constant 0 : index
    %c0_0 = arith.constant 0 : index
    %0 = vector.load %arg1[%c0, %c0_0] : memref<8x512xbf16, #tpu.memory_space<vmem>>, vector<8x512xbf16>
    %c0_1 = arith.constant 0 : index
    %c0_2 = arith.constant 0 : index
    %1 = vector.load %arg2[%c0_1, %c0_2] : memref<512x32xbf16, #tpu.memory_space<vmem>>, vector<512x32xbf16>
    %cst = arith.constant dense<0.000000e+00> : vector<8x32xf32>
    %2 = tpu.matmul %0, %1, %cst {dimension_numbers = #tpu.dot_dimension_numbers<[1], [0], [0], [1], [0, 0, 1, 1], [], []>} : vector<8x512xbf16>, vector<512x32xbf16>, vector<8x32xf32> -> vector<8x32xf32>
    %c0_3 = arith.constant 0 : index
    %c0_4 = arith.constant 0 : index
    %3 = vector.load %arg3[%c0_3, %c0_4] : memref<3x32xf32, #tpu.memory_space<vmem>>, vector<3x32xf32>
    %4 = vector.extract_strided_slice %3 {offsets = [0, 0], sizes = [1, 32], strides = [1, 1]} : vector<3x32xf32> to vector<1x32xf32>
    %5 = vector.broadcast %4 : vector<1x32xf32> to vector<8x32xf32>
    %6 = arith.addf %2, %5 : vector<8x32xf32>
    %7 = vector.extract_strided_slice %3 {offsets = [1, 0], sizes = [1, 32], strides = [1, 1]} : vector<3x32xf32> to vector<1x32xf32>
    %8 = vector.broadcast %7 : vector<1x32xf32> to vector<8x32xf32>
    %9 = arith.mulf %6, %8 : vector<8x32xf32>
    %10 = vector.extract_strided_slice %3 {offsets = [2, 0], sizes = [1, 32], strides = [1, 1]} : vector<3x32xf32> to vector<1x32xf32>
    %11 = vector.broadcast %10 : vector<1x32xf32> to vector<8x32xf32>
    %12 = arith.addf %9, %11 : vector<8x32xf32>
    %c0_5 = arith.constant 0 : index
    %c0_6 = arith.constant 0 : index
    %13 = vector.load %arg4[%c0_5, %c0_6] : memref<8x32xf32, #tpu.memory_space<vmem>>, vector<8x32xf32>
    tpu.vector_store %arg4[%c0_5, %c0_6], %12 {strides = array<i32>} : memref<8x32xf32, #tpu.memory_space<vmem>>, vector<8x32xf32>,
    return
  }
  func.func @transform_0(%arg0: i32) -> (i32, i32) {
    %c0_i32 = arith.constant 0 : i32
    %c0_i32_0 = arith.constant 0 : i32
    return %arg0, %c0_i32 : i32, i32
  }
  func.func @transform_1(%arg0: i32) -> (i32, i32) {
    %c0_i32 = arith.constant 0 : i32
    %c0_i32_0 = arith.constant 0 : i32
    %c0_i32_1 = arith.constant 0 : i32
    return %c0_i32, %c0_i32_0 : i32, i32
  }
  func.func @transform_2(%arg0: i32) -> (i32, i32) {
    %c0_i32 = arith.constant 0 : i32
    %c0_i32_0 = arith.constant 0 : i32
    %c0_i32_1 = arith.constant 0 : i32
    return %c0_i32, %c0_i32_0 : i32, i32
  }
  func.func @transform_3(%arg0: i32) -> (i32, i32) {
    %c0_i32 = arith.constant 0 : i32
    %c0_i32_0 = arith.constant 0 : i32
    return %arg0, %c0_i32 : i32, i32
  }
}

module attributes {stable_mosaic.version = 11 : i64} {
  func.func @_fused_matmul_kernel(%arg0: i32, %arg1: memref<8x16xbf16, #tpu.memory_space<vmem>>, %arg2: memref<16x16xbf16, #tpu.memory_space<vmem>>, %arg3: memref<3x16xf32, #tpu.memory_space<vmem>>, %arg4: memref<8x16xbf16, #tpu.memory_space<vmem>>) attributes {dimension_semantics = [#tpu.dimension_semantics<parallel>], iteration_bounds = array<i64: 1>, scalar_prefetch = 0 : i64, scratch_operands = 0 : i64, tpu.core_type = #tpu.core_type<tc>, window_params = [{transform_indices = @transform_0, window_bounds = array<i64: 8, 16>}, {pipeline_mode = #tpu.pipeline_mode<synchronous>, transform_indices = @transform_1, window_bounds = array<i64: 16, 16>}, {pipeline_mode = #tpu.pipeline_mode<synchronous>, transform_indices = @transform_2, window_bounds = array<i64: 3, 16>}, {transform_indices = @transform_3, window_bounds = array<i64: 8, 16>}]} {
    %c0 = arith.constant 0 : index
    %c0_0 = arith.constant 0 : index
    %0 = vector.load %arg1[%c0, %c0_0] : memref<8x16xbf16, #tpu.memory_space<vmem>>, vector<8x16xbf16>
    %c0_1 = arith.constant 0 : index
    %c0_2 = arith.constant 0 : index
    %1 = vector.load %arg2[%c0_1, %c0_2] : memref<16x16xbf16, #tpu.memory_space<vmem>>, vector<16x16xbf16>
    %cst = arith.constant dense<0.000000e+00> : vector<8x16xf32>
    %2 = tpu.matmul %0, %1, %cst {dimension_numbers = #tpu.dot_dimension_numbers<[1], [0], [0], [1], [0, 0, 1, 1], [], []>} : vector<8x16xbf16>, vector<16x16xbf16>, vector<8x16xf32> -> vector<8x16xf32>
    %c0_3 = arith.constant 0 : index
    %c0_4 = arith.constant 0 : index
    %3 = vector.load %arg3[%c0_3, %c0_4] : memref<3x16xf32, #tpu.memory_space<vmem>>, vector<3x16xf32>
    %4 = vector.extract_strided_slice %3 {offsets = [0, 0], sizes = [1, 16], strides = [1, 1]} : vector<3x16xf32> to vector<1x16xf32>
    %5 = vector.broadcast %4 : vector<1x16xf32> to vector<8x16xf32>
    %6 = arith.addf %2, %5 : vector<8x16xf32>
    %cst_5 = arith.constant 0.000000e+00 : f32
    %7 = vector.broadcast %cst_5 : f32 to vector<8x16xf32>
    %8 = arith.cmpf oge, %6, %7 : vector<8x16xf32>
    %cst_6 = arith.constant 2.000000e-01 : f32
    %9 = vector.broadcast %cst_6 : f32 to vector<8x16xf32>
    %10 = arith.mulf %9, %6 : vector<8x16xf32>
    %11 = arith.select %8, %6, %10 : vector<8x16xi1>, vector<8x16xf32>
    %12 = vector.extract_strided_slice %3 {offsets = [1, 0], sizes = [1, 16], strides = [1, 1]} : vector<3x16xf32> to vector<1x16xf32>
    %13 = vector.broadcast %12 : vector<1x16xf32> to vector<8x16xf32>
    %14 = arith.mulf %11, %13 : vector<8x16xf32>
    %15 = vector.extract_strided_slice %3 {offsets = [2, 0], sizes = [1, 16], strides = [1, 1]} : vector<3x16xf32> to vector<1x16xf32>
    %16 = vector.broadcast %15 : vector<1x16xf32> to vector<8x16xf32>
    %17 = arith.addf %14, %16 : vector<8x16xf32>
    %18 = arith.truncf %17 : vector<8x16xf32> to vector<8x16xbf16>
    %c0_7 = arith.constant 0 : index
    %c0_8 = arith.constant 0 : index
    %19 = vector.load %arg4[%c0_7, %c0_8] : memref<8x16xbf16, #tpu.memory_space<vmem>>, vector<8x16xbf16>
    tpu.vector_store %arg4[%c0_7, %c0_8], %18 {strides = array<i32>} : memref<8x16xbf16, #tpu.memory_space<vmem>>, vector<8x16xbf16>,
    return
  }
  func.func @transform_0(%arg0: i32) -> (i32, i32) {
    %c0_i32 = arith.constant 0 : i32
    %c0_i32_0 = arith.constant 0 : i32
    return %arg0, %c0_i32 : i32, i32
  }
  func.func @transform_1(%arg0: i32) -> (i32, i32) {
    %c0_i32 = arith.constant 0 : i32
    %c0_i32_0 = arith.constant 0 : i32
    %c0_i32_1 = arith.constant 0 : i32
    return %c0_i32, %c0_i32_0 : i32, i32
  }
  func.func @transform_2(%arg0: i32) -> (i32, i32) {
    %c0_i32 = arith.constant 0 : i32
    %c0_i32_0 = arith.constant 0 : i32
    %c0_i32_1 = arith.constant 0 : i32
    return %c0_i32, %c0_i32_0 : i32, i32
  }
  func.func @transform_3(%arg0: i32) -> (i32, i32) {
    %c0_i32 = arith.constant 0 : i32
    %c0_i32_0 = arith.constant 0 : i32
    return %arg0, %c0_i32 : i32, i32
  }
}

module attributes {stable_mosaic.version = 11 : i64} {
  func.func @_fused_matmul_kernel(%arg0: i32, %arg1: memref<32x256xbf16, #tpu.memory_space<vmem>>, %arg2: memref<256x32xbf16, #tpu.memory_space<vmem>>, %arg3: memref<3x32xf32, #tpu.memory_space<vmem>>, %arg4: memref<32x32xbf16, #tpu.memory_space<vmem>>) attributes {dimension_semantics = [#tpu.dimension_semantics<parallel>], iteration_bounds = array<i64: 1>, scalar_prefetch = 0 : i64, scratch_operands = 0 : i64, tpu.core_type = #tpu.core_type<tc>, window_params = [{transform_indices = @transform_0, window_bounds = array<i64: 32, 256>}, {pipeline_mode = #tpu.pipeline_mode<synchronous>, transform_indices = @transform_1, window_bounds = array<i64: 256, 32>}, {pipeline_mode = #tpu.pipeline_mode<synchronous>, transform_indices = @transform_2, window_bounds = array<i64: 3, 32>}, {transform_indices = @transform_3, window_bounds = array<i64: 32, 32>}]} {
    %c0 = arith.constant 0 : index
    %c0_0 = arith.constant 0 : index
    %0 = vector.load %arg1[%c0, %c0_0] : memref<32x256xbf16, #tpu.memory_space<vmem>>, vector<32x256xbf16>
    %c0_1 = arith.constant 0 : index
    %c0_2 = arith.constant 0 : index
    %1 = vector.load %arg2[%c0_1, %c0_2] : memref<256x32xbf16, #tpu.memory_space<vmem>>, vector<256x32xbf16>
    %cst = arith.constant dense<0.000000e+00> : vector<32x32xf32>
    %2 = tpu.matmul %0, %1, %cst {dimension_numbers = #tpu.dot_dimension_numbers<[1], [0], [0], [1], [0, 0, 1, 1], [], []>} : vector<32x256xbf16>, vector<256x32xbf16>, vector<32x32xf32> -> vector<32x32xf32>
    %c0_3 = arith.constant 0 : index
    %c0_4 = arith.constant 0 : index
    %3 = vector.load %arg3[%c0_3, %c0_4] : memref<3x32xf32, #tpu.memory_space<vmem>>, vector<3x32xf32>
    %4 = vector.extract_strided_slice %3 {offsets = [0, 0], sizes = [1, 32], strides = [1, 1]} : vector<3x32xf32> to vector<1x32xf32>
    %5 = vector.broadcast %4 : vector<1x32xf32> to vector<32x32xf32>
    %6 = arith.addf %2, %5 : vector<32x32xf32>
    %cst_5 = arith.constant 0.000000e+00 : f32
    %7 = vector.broadcast %cst_5 : f32 to vector<32x32xf32>
    %8 = arith.cmpf oge, %6, %7 : vector<32x32xf32>
    %cst_6 = arith.constant 2.000000e-01 : f32
    %9 = vector.broadcast %cst_6 : f32 to vector<32x32xf32>
    %10 = arith.mulf %9, %6 : vector<32x32xf32>
    %11 = arith.select %8, %6, %10 : vector<32x32xi1>, vector<32x32xf32>
    %12 = vector.extract_strided_slice %3 {offsets = [1, 0], sizes = [1, 32], strides = [1, 1]} : vector<3x32xf32> to vector<1x32xf32>
    %13 = vector.broadcast %12 : vector<1x32xf32> to vector<32x32xf32>
    %14 = arith.mulf %11, %13 : vector<32x32xf32>
    %15 = vector.extract_strided_slice %3 {offsets = [2, 0], sizes = [1, 32], strides = [1, 1]} : vector<3x32xf32> to vector<1x32xf32>
    %16 = vector.broadcast %15 : vector<1x32xf32> to vector<32x32xf32>
    %17 = arith.addf %14, %16 : vector<32x32xf32>
    %18 = arith.truncf %17 : vector<32x32xf32> to vector<32x32xbf16>
    %c0_7 = arith.constant 0 : index
    %c0_8 = arith.constant 0 : index
    %19 = vector.load %arg4[%c0_7, %c0_8] : memref<32x32xbf16, #tpu.memory_space<vmem>>, vector<32x32xbf16>
    tpu.vector_store %arg4[%c0_7, %c0_8], %18 {strides = array<i32>} : memref<32x32xbf16, #tpu.memory_space<vmem>>, vector<32x32xbf16>,
    return
  }
  func.func @transform_0(%arg0: i32) -> (i32, i32) {
    %c0_i32 = arith.constant 0 : i32
    %c0_i32_0 = arith.constant 0 : i32
    return %arg0, %c0_i32 : i32, i32
  }
  func.func @transform_1(%arg0: i32) -> (i32, i32) {
    %c0_i32 = arith.constant 0 : i32
    %c0_i32_0 = arith.constant 0 : i32
    %c0_i32_1 = arith.constant 0 : i32
    return %c0_i32, %c0_i32_0 : i32, i32
  }
  func.func @transform_2(%arg0: i32) -> (i32, i32) {
    %c0_i32 = arith.constant 0 : i32
    %c0_i32_0 = arith.constant 0 : i32
    %c0_i32_1 = arith.constant 0 : i32
    return %c0_i32, %c0_i32_0 : i32, i32
  }
  func.func @transform_3(%arg0: i32) -> (i32, i32) {
    %c0_i32 = arith.constant 0 : i32
    %c0_i32_0 = arith.constant 0 : i32
    return %arg0, %c0_i32 : i32, i32
  }
}

module attributes {stable_mosaic.version = 11 : i64} {
  func.func @_fused_matmul_kernel(%arg0: i32, %arg1: memref<32x128xbf16, #tpu.memory_space<vmem>>, %arg2: memref<128x32xbf16, #tpu.memory_space<vmem>>, %arg3: memref<3x32xf32, #tpu.memory_space<vmem>>, %arg4: memref<32x32xbf16, #tpu.memory_space<vmem>>) attributes {dimension_semantics = [#tpu.dimension_semantics<parallel>], iteration_bounds = array<i64: 1>, scalar_prefetch = 0 : i64, scratch_operands = 0 : i64, tpu.core_type = #tpu.core_type<tc>, window_params = [{transform_indices = @transform_0, window_bounds = array<i64: 32, 128>}, {pipeline_mode = #tpu.pipeline_mode<synchronous>, transform_indices = @transform_1, window_bounds = array<i64: 128, 32>}, {pipeline_mode = #tpu.pipeline_mode<synchronous>, transform_indices = @transform_2, window_bounds = array<i64: 3, 32>}, {transform_indices = @transform_3, window_bounds = array<i64: 32, 32>}]} {
    %c0 = arith.constant 0 : index
    %c0_0 = arith.constant 0 : index
    %0 = vector.load %arg1[%c0, %c0_0] : memref<32x128xbf16, #tpu.memory_space<vmem>>, vector<32x128xbf16>
    %c0_1 = arith.constant 0 : index
    %c0_2 = arith.constant 0 : index
    %1 = vector.load %arg2[%c0_1, %c0_2] : memref<128x32xbf16, #tpu.memory_space<vmem>>, vector<128x32xbf16>
    %cst = arith.constant dense<0.000000e+00> : vector<32x32xf32>
    %2 = tpu.matmul %0, %1, %cst {dimension_numbers = #tpu.dot_dimension_numbers<[1], [0], [0], [1], [0, 0, 1, 1], [], []>} : vector<32x128xbf16>, vector<128x32xbf16>, vector<32x32xf32> -> vector<32x32xf32>
    %c0_3 = arith.constant 0 : index
    %c0_4 = arith.constant 0 : index
    %3 = vector.load %arg3[%c0_3, %c0_4] : memref<3x32xf32, #tpu.memory_space<vmem>>, vector<3x32xf32>
    %4 = vector.extract_strided_slice %3 {offsets = [0, 0], sizes = [1, 32], strides = [1, 1]} : vector<3x32xf32> to vector<1x32xf32>
    %5 = vector.broadcast %4 : vector<1x32xf32> to vector<32x32xf32>
    %6 = arith.addf %2, %5 : vector<32x32xf32>
    %cst_5 = arith.constant 0.000000e+00 : f32
    %7 = vector.broadcast %cst_5 : f32 to vector<32x32xf32>
    %8 = arith.cmpf oge, %6, %7 : vector<32x32xf32>
    %cst_6 = arith.constant 2.000000e-01 : f32
    %9 = vector.broadcast %cst_6 : f32 to vector<32x32xf32>
    %10 = arith.mulf %9, %6 : vector<32x32xf32>
    %11 = arith.select %8, %6, %10 : vector<32x32xi1>, vector<32x32xf32>
    %12 = vector.extract_strided_slice %3 {offsets = [1, 0], sizes = [1, 32], strides = [1, 1]} : vector<3x32xf32> to vector<1x32xf32>
    %13 = vector.broadcast %12 : vector<1x32xf32> to vector<32x32xf32>
    %14 = arith.mulf %11, %13 : vector<32x32xf32>
    %15 = vector.extract_strided_slice %3 {offsets = [2, 0], sizes = [1, 32], strides = [1, 1]} : vector<3x32xf32> to vector<1x32xf32>
    %16 = vector.broadcast %15 : vector<1x32xf32> to vector<32x32xf32>
    %17 = arith.addf %14, %16 : vector<32x32xf32>
    %18 = arith.truncf %17 : vector<32x32xf32> to vector<32x32xbf16>
    %c0_7 = arith.constant 0 : index
    %c0_8 = arith.constant 0 : index
    %19 = vector.load %arg4[%c0_7, %c0_8] : memref<32x32xbf16, #tpu.memory_space<vmem>>, vector<32x32xbf16>
    tpu.vector_store %arg4[%c0_7, %c0_8], %18 {strides = array<i32>} : memref<32x32xbf16, #tpu.memory_space<vmem>>, vector<32x32xbf16>,
    return
  }
  func.func @transform_0(%arg0: i32) -> (i32, i32) {
    %c0_i32 = arith.constant 0 : i32
    %c0_i32_0 = arith.constant 0 : i32
    return %arg0, %c0_i32 : i32, i32
  }
  func.func @transform_1(%arg0: i32) -> (i32, i32) {
    %c0_i32 = arith.constant 0 : i32
    %c0_i32_0 = arith.constant 0 : i32
    %c0_i32_1 = arith.constant 0 : i32
    return %c0_i32, %c0_i32_0 : i32, i32
  }
  func.func @transform_2(%arg0: i32) -> (i32, i32) {
    %c0_i32 = arith.constant 0 : i32
    %c0_i32_0 = arith.constant 0 : i32
    %c0_i32_1 = arith.constant 0 : i32
    return %c0_i32, %c0_i32_0 : i32, i32
  }
  func.func @transform_3(%arg0: i32) -> (i32, i32) {
    %c0_i32 = arith.constant 0 : i32
    %c0_i32_0 = arith.constant 0 : i32
    return %arg0, %c0_i32 : i32, i32
  }
}

module attributes {stable_mosaic.version = 11 : i64} {
  func.func @_fused_matmul_kernel(%arg0: i32, %arg1: memref<128x288xbf16, #tpu.memory_space<vmem>>, %arg2: memref<288x16xbf16, #tpu.memory_space<vmem>>, %arg3: memref<3x16xf32, #tpu.memory_space<vmem>>, %arg4: memref<128x16xbf16, #tpu.memory_space<vmem>>) attributes {dimension_semantics = [#tpu.dimension_semantics<parallel>], iteration_bounds = array<i64: 1>, scalar_prefetch = 0 : i64, scratch_operands = 0 : i64, tpu.core_type = #tpu.core_type<tc>, window_params = [{transform_indices = @transform_0, window_bounds = array<i64: 128, 288>}, {pipeline_mode = #tpu.pipeline_mode<synchronous>, transform_indices = @transform_1, window_bounds = array<i64: 288, 16>}, {pipeline_mode = #tpu.pipeline_mode<synchronous>, transform_indices = @transform_2, window_bounds = array<i64: 3, 16>}, {transform_indices = @transform_3, window_bounds = array<i64: 128, 16>}]} {
    %c0 = arith.constant 0 : index
    %c0_0 = arith.constant 0 : index
    %0 = vector.load %arg1[%c0, %c0_0] : memref<128x288xbf16, #tpu.memory_space<vmem>>, vector<128x288xbf16>
    %c0_1 = arith.constant 0 : index
    %c0_2 = arith.constant 0 : index
    %1 = vector.load %arg2[%c0_1, %c0_2] : memref<288x16xbf16, #tpu.memory_space<vmem>>, vector<288x16xbf16>
    %cst = arith.constant dense<0.000000e+00> : vector<128x16xf32>
    %2 = tpu.matmul %0, %1, %cst {dimension_numbers = #tpu.dot_dimension_numbers<[1], [0], [0], [1], [0, 0, 1, 1], [], []>} : vector<128x288xbf16>, vector<288x16xbf16>, vector<128x16xf32> -> vector<128x16xf32>
    %c0_3 = arith.constant 0 : index
    %c0_4 = arith.constant 0 : index
    %3 = vector.load %arg3[%c0_3, %c0_4] : memref<3x16xf32, #tpu.memory_space<vmem>>, vector<3x16xf32>
    %4 = vector.extract_strided_slice %3 {offsets = [0, 0], sizes = [1, 16], strides = [1, 1]} : vector<3x16xf32> to vector<1x16xf32>
    %5 = vector.broadcast %4 : vector<1x16xf32> to vector<128x16xf32>
    %6 = arith.addf %2, %5 : vector<128x16xf32>
    %cst_5 = arith.constant 0.000000e+00 : f32
    %7 = vector.broadcast %cst_5 : f32 to vector<128x16xf32>
    %8 = arith.cmpf oge, %6, %7 : vector<128x16xf32>
    %cst_6 = arith.constant 2.000000e-01 : f32
    %9 = vector.broadcast %cst_6 : f32 to vector<128x16xf32>
    %10 = arith.mulf %9, %6 : vector<128x16xf32>
    %11 = arith.select %8, %6, %10 : vector<128x16xi1>, vector<128x16xf32>
    %12 = vector.extract_strided_slice %3 {offsets = [1, 0], sizes = [1, 16], strides = [1, 1]} : vector<3x16xf32> to vector<1x16xf32>
    %13 = vector.broadcast %12 : vector<1x16xf32> to vector<128x16xf32>
    %14 = arith.mulf %11, %13 : vector<128x16xf32>
    %15 = vector.extract_strided_slice %3 {offsets = [2, 0], sizes = [1, 16], strides = [1, 1]} : vector<3x16xf32> to vector<1x16xf32>
    %16 = vector.broadcast %15 : vector<1x16xf32> to vector<128x16xf32>
    %17 = arith.addf %14, %16 : vector<128x16xf32>
    %18 = arith.truncf %17 : vector<128x16xf32> to vector<128x16xbf16>
    %c0_7 = arith.constant 0 : index
    %c0_8 = arith.constant 0 : index
    %19 = vector.load %arg4[%c0_7, %c0_8] : memref<128x16xbf16, #tpu.memory_space<vmem>>, vector<128x16xbf16>
    tpu.vector_store %arg4[%c0_7, %c0_8], %18 {strides = array<i32>} : memref<128x16xbf16, #tpu.memory_space<vmem>>, vector<128x16xbf16>,
    return
  }
  func.func @transform_0(%arg0: i32) -> (i32, i32) {
    %c0_i32 = arith.constant 0 : i32
    %c0_i32_0 = arith.constant 0 : i32
    return %arg0, %c0_i32 : i32, i32
  }
  func.func @transform_1(%arg0: i32) -> (i32, i32) {
    %c0_i32 = arith.constant 0 : i32
    %c0_i32_0 = arith.constant 0 : i32
    %c0_i32_1 = arith.constant 0 : i32
    return %c0_i32, %c0_i32_0 : i32, i32
  }
  func.func @transform_2(%arg0: i32) -> (i32, i32) {
    %c0_i32 = arith.constant 0 : i32
    %c0_i32_0 = arith.constant 0 : i32
    %c0_i32_1 = arith.constant 0 : i32
    return %c0_i32, %c0_i32_0 : i32, i32
  }
  func.func @transform_3(%arg0: i32) -> (i32, i32) {
    %c0_i32 = arith.constant 0 : i32
    %c0_i32_0 = arith.constant 0 : i32
    return %arg0, %c0_i32 : i32, i32
  }
}

module attributes {stable_mosaic.version = 11 : i64} {
  func.func @_fused_matmul_kernel(%arg0: i32, %arg1: memref<128x64xbf16, #tpu.memory_space<vmem>>, %arg2: memref<64x16xbf16, #tpu.memory_space<vmem>>, %arg3: memref<3x16xf32, #tpu.memory_space<vmem>>, %arg4: memref<128x16xbf16, #tpu.memory_space<vmem>>) attributes {dimension_semantics = [#tpu.dimension_semantics<parallel>], iteration_bounds = array<i64: 1>, scalar_prefetch = 0 : i64, scratch_operands = 0 : i64, tpu.core_type = #tpu.core_type<tc>, window_params = [{transform_indices = @transform_0, window_bounds = array<i64: 128, 64>}, {pipeline_mode = #tpu.pipeline_mode<synchronous>, transform_indices = @transform_1, window_bounds = array<i64: 64, 16>}, {pipeline_mode = #tpu.pipeline_mode<synchronous>, transform_indices = @transform_2, window_bounds = array<i64: 3, 16>}, {transform_indices = @transform_3, window_bounds = array<i64: 128, 16>}]} {
    %c0 = arith.constant 0 : index
    %c0_0 = arith.constant 0 : index
    %0 = vector.load %arg1[%c0, %c0_0] : memref<128x64xbf16, #tpu.memory_space<vmem>>, vector<128x64xbf16>
    %c0_1 = arith.constant 0 : index
    %c0_2 = arith.constant 0 : index
    %1 = vector.load %arg2[%c0_1, %c0_2] : memref<64x16xbf16, #tpu.memory_space<vmem>>, vector<64x16xbf16>
    %cst = arith.constant dense<0.000000e+00> : vector<128x16xf32>
    %2 = tpu.matmul %0, %1, %cst {dimension_numbers = #tpu.dot_dimension_numbers<[1], [0], [0], [1], [0, 0, 1, 1], [], []>} : vector<128x64xbf16>, vector<64x16xbf16>, vector<128x16xf32> -> vector<128x16xf32>
    %c0_3 = arith.constant 0 : index
    %c0_4 = arith.constant 0 : index
    %3 = vector.load %arg3[%c0_3, %c0_4] : memref<3x16xf32, #tpu.memory_space<vmem>>, vector<3x16xf32>
    %4 = vector.extract_strided_slice %3 {offsets = [0, 0], sizes = [1, 16], strides = [1, 1]} : vector<3x16xf32> to vector<1x16xf32>
    %5 = vector.broadcast %4 : vector<1x16xf32> to vector<128x16xf32>
    %6 = arith.addf %2, %5 : vector<128x16xf32>
    %cst_5 = arith.constant 0.000000e+00 : f32
    %7 = vector.broadcast %cst_5 : f32 to vector<128x16xf32>
    %8 = arith.cmpf oge, %6, %7 : vector<128x16xf32>
    %cst_6 = arith.constant 2.000000e-01 : f32
    %9 = vector.broadcast %cst_6 : f32 to vector<128x16xf32>
    %10 = arith.mulf %9, %6 : vector<128x16xf32>
    %11 = arith.select %8, %6, %10 : vector<128x16xi1>, vector<128x16xf32>
    %12 = vector.extract_strided_slice %3 {offsets = [1, 0], sizes = [1, 16], strides = [1, 1]} : vector<3x16xf32> to vector<1x16xf32>
    %13 = vector.broadcast %12 : vector<1x16xf32> to vector<128x16xf32>
    %14 = arith.mulf %11, %13 : vector<128x16xf32>
    %15 = vector.extract_strided_slice %3 {offsets = [2, 0], sizes = [1, 16], strides = [1, 1]} : vector<3x16xf32> to vector<1x16xf32>
    %16 = vector.broadcast %15 : vector<1x16xf32> to vector<128x16xf32>
    %17 = arith.addf %14, %16 : vector<128x16xf32>
    %18 = arith.truncf %17 : vector<128x16xf32> to vector<128x16xbf16>
    %c0_7 = arith.constant 0 : index
    %c0_8 = arith.constant 0 : index
    %19 = vector.load %arg4[%c0_7, %c0_8] : memref<128x16xbf16, #tpu.memory_space<vmem>>, vector<128x16xbf16>
    tpu.vector_store %arg4[%c0_7, %c0_8], %18 {strides = array<i32>} : memref<128x16xbf16, #tpu.memory_space<vmem>>, vector<128x16xbf16>,
    return
  }
  func.func @transform_0(%arg0: i32) -> (i32, i32) {
    %c0_i32 = arith.constant 0 : i32
    %c0_i32_0 = arith.constant 0 : i32
    return %arg0, %c0_i32 : i32, i32
  }
  func.func @transform_1(%arg0: i32) -> (i32, i32) {
    %c0_i32 = arith.constant 0 : i32
    %c0_i32_0 = arith.constant 0 : i32
    %c0_i32_1 = arith.constant 0 : i32
    return %c0_i32, %c0_i32_0 : i32, i32
  }
  func.func @transform_2(%arg0: i32) -> (i32, i32) {
    %c0_i32 = arith.constant 0 : i32
    %c0_i32_0 = arith.constant 0 : i32
    %c0_i32_1 = arith.constant 0 : i32
    return %c0_i32, %c0_i32_0 : i32, i32
  }
  func.func @transform_3(%arg0: i32) -> (i32, i32) {
    %c0_i32 = arith.constant 0 : i32
    %c0_i32_0 = arith.constant 0 : i32
    return %arg0, %c0_i32 : i32, i32
  }
}

module attributes {stable_mosaic.version = 11 : i64} {
  func.func @_fused_matmul_kernel(%arg0: i32, %arg1: memref<512x64xbf16, #tpu.memory_space<vmem>>, %arg2: memref<64x8xbf16, #tpu.memory_space<vmem>>, %arg3: memref<3x8xf32, #tpu.memory_space<vmem>>, %arg4: memref<512x8xbf16, #tpu.memory_space<vmem>>) attributes {dimension_semantics = [#tpu.dimension_semantics<parallel>], iteration_bounds = array<i64: 1>, scalar_prefetch = 0 : i64, scratch_operands = 0 : i64, tpu.core_type = #tpu.core_type<tc>, window_params = [{transform_indices = @transform_0, window_bounds = array<i64: 512, 64>}, {pipeline_mode = #tpu.pipeline_mode<synchronous>, transform_indices = @transform_1, window_bounds = array<i64: 64, 8>}, {pipeline_mode = #tpu.pipeline_mode<synchronous>, transform_indices = @transform_2, window_bounds = array<i64: 3, 8>}, {transform_indices = @transform_3, window_bounds = array<i64: 512, 8>}]} {
    %c0 = arith.constant 0 : index
    %c0_0 = arith.constant 0 : index
    %0 = vector.load %arg1[%c0, %c0_0] : memref<512x64xbf16, #tpu.memory_space<vmem>>, vector<512x64xbf16>
    %c0_1 = arith.constant 0 : index
    %c0_2 = arith.constant 0 : index
    %1 = vector.load %arg2[%c0_1, %c0_2] : memref<64x8xbf16, #tpu.memory_space<vmem>>, vector<64x8xbf16>
    %cst = arith.constant dense<0.000000e+00> : vector<512x8xf32>
    %2 = tpu.matmul %0, %1, %cst {dimension_numbers = #tpu.dot_dimension_numbers<[1], [0], [0], [1], [0, 0, 1, 1], [], []>} : vector<512x64xbf16>, vector<64x8xbf16>, vector<512x8xf32> -> vector<512x8xf32>
    %c0_3 = arith.constant 0 : index
    %c0_4 = arith.constant 0 : index
    %3 = vector.load %arg3[%c0_3, %c0_4] : memref<3x8xf32, #tpu.memory_space<vmem>>, vector<3x8xf32>
    %4 = vector.extract_strided_slice %3 {offsets = [0, 0], sizes = [1, 8], strides = [1, 1]} : vector<3x8xf32> to vector<1x8xf32>
    %5 = vector.broadcast %4 : vector<1x8xf32> to vector<512x8xf32>
    %6 = arith.addf %2, %5 : vector<512x8xf32>
    %cst_5 = arith.constant 0.000000e+00 : f32
    %7 = vector.broadcast %cst_5 : f32 to vector<512x8xf32>
    %8 = arith.cmpf oge, %6, %7 : vector<512x8xf32>
    %cst_6 = arith.constant 2.000000e-01 : f32
    %9 = vector.broadcast %cst_6 : f32 to vector<512x8xf32>
    %10 = arith.mulf %9, %6 : vector<512x8xf32>
    %11 = arith.select %8, %6, %10 : vector<512x8xi1>, vector<512x8xf32>
    %12 = vector.extract_strided_slice %3 {offsets = [1, 0], sizes = [1, 8], strides = [1, 1]} : vector<3x8xf32> to vector<1x8xf32>
    %13 = vector.broadcast %12 : vector<1x8xf32> to vector<512x8xf32>
    %14 = arith.mulf %11, %13 : vector<512x8xf32>
    %15 = vector.extract_strided_slice %3 {offsets = [2, 0], sizes = [1, 8], strides = [1, 1]} : vector<3x8xf32> to vector<1x8xf32>
    %16 = vector.broadcast %15 : vector<1x8xf32> to vector<512x8xf32>
    %17 = arith.addf %14, %16 : vector<512x8xf32>
    %18 = arith.truncf %17 : vector<512x8xf32> to vector<512x8xbf16>
    %c0_7 = arith.constant 0 : index
    %c0_8 = arith.constant 0 : index
    %19 = vector.load %arg4[%c0_7, %c0_8] : memref<512x8xbf16, #tpu.memory_space<vmem>>, vector<512x8xbf16>
    tpu.vector_store %arg4[%c0_7, %c0_8], %18 {strides = array<i32>} : memref<512x8xbf16, #tpu.memory_space<vmem>>, vector<512x8xbf16>,
    return
  }
  func.func @transform_0(%arg0: i32) -> (i32, i32) {
    %c0_i32 = arith.constant 0 : i32
    %c0_i32_0 = arith.constant 0 : i32
    return %arg0, %c0_i32 : i32, i32
  }
  func.func @transform_1(%arg0: i32) -> (i32, i32) {
    %c0_i32 = arith.constant 0 : i32
    %c0_i32_0 = arith.constant 0 : i32
    %c0_i32_1 = arith.constant 0 : i32
    return %c0_i32, %c0_i32_0 : i32, i32
  }
  func.func @transform_2(%arg0: i32) -> (i32, i32) {
    %c0_i32 = arith.constant 0 : i32
    %c0_i32_0 = arith.constant 0 : i32
    %c0_i32_1 = arith.constant 0 : i32
    return %c0_i32, %c0_i32_0 : i32, i32
  }
  func.func @transform_3(%arg0: i32) -> (i32, i32) {
    %c0_i32 = arith.constant 0 : i32
    %c0_i32_0 = arith.constant 0 : i32
    return %arg0, %c0_i32 : i32, i32
  }
}

module attributes {stable_mosaic.version = 11 : i64} {
  func.func @_fused_matmul_kernel(%arg0: i32, %arg1: memref<512x32xbf16, #tpu.memory_space<vmem>>, %arg2: memref<32x8xbf16, #tpu.memory_space<vmem>>, %arg3: memref<3x8xf32, #tpu.memory_space<vmem>>, %arg4: memref<512x8xbf16, #tpu.memory_space<vmem>>) attributes {dimension_semantics = [#tpu.dimension_semantics<parallel>], iteration_bounds = array<i64: 4>, scalar_prefetch = 0 : i64, scratch_operands = 0 : i64, tpu.core_type = #tpu.core_type<tc>, window_params = [{transform_indices = @transform_0, window_bounds = array<i64: 512, 32>}, {pipeline_mode = #tpu.pipeline_mode<synchronous>, transform_indices = @transform_1, window_bounds = array<i64: 32, 8>}, {pipeline_mode = #tpu.pipeline_mode<synchronous>, transform_indices = @transform_2, window_bounds = array<i64: 3, 8>}, {transform_indices = @transform_3, window_bounds = array<i64: 512, 8>}]} {
    %c0 = arith.constant 0 : index
    %c0_0 = arith.constant 0 : index
    %0 = vector.load %arg1[%c0, %c0_0] : memref<512x32xbf16, #tpu.memory_space<vmem>>, vector<512x32xbf16>
    %c0_1 = arith.constant 0 : index
    %c0_2 = arith.constant 0 : index
    %1 = vector.load %arg2[%c0_1, %c0_2] : memref<32x8xbf16, #tpu.memory_space<vmem>>, vector<32x8xbf16>
    %cst = arith.constant dense<0.000000e+00> : vector<512x8xf32>
    %2 = tpu.matmul %0, %1, %cst {dimension_numbers = #tpu.dot_dimension_numbers<[1], [0], [0], [1], [0, 0, 1, 1], [], []>} : vector<512x32xbf16>, vector<32x8xbf16>, vector<512x8xf32> -> vector<512x8xf32>
    %c0_3 = arith.constant 0 : index
    %c0_4 = arith.constant 0 : index
    %3 = vector.load %arg3[%c0_3, %c0_4] : memref<3x8xf32, #tpu.memory_space<vmem>>, vector<3x8xf32>
    %4 = vector.extract_strided_slice %3 {offsets = [0, 0], sizes = [1, 8], strides = [1, 1]} : vector<3x8xf32> to vector<1x8xf32>
    %5 = vector.broadcast %4 : vector<1x8xf32> to vector<512x8xf32>
    %6 = arith.addf %2, %5 : vector<512x8xf32>
    %cst_5 = arith.constant 0.000000e+00 : f32
    %7 = vector.broadcast %cst_5 : f32 to vector<512x8xf32>
    %8 = arith.cmpf oge, %6, %7 : vector<512x8xf32>
    %cst_6 = arith.constant 2.000000e-01 : f32
    %9 = vector.broadcast %cst_6 : f32 to vector<512x8xf32>
    %10 = arith.mulf %9, %6 : vector<512x8xf32>
    %11 = arith.select %8, %6, %10 : vector<512x8xi1>, vector<512x8xf32>
    %12 = vector.extract_strided_slice %3 {offsets = [1, 0], sizes = [1, 8], strides = [1, 1]} : vector<3x8xf32> to vector<1x8xf32>
    %13 = vector.broadcast %12 : vector<1x8xf32> to vector<512x8xf32>
    %14 = arith.mulf %11, %13 : vector<512x8xf32>
    %15 = vector.extract_strided_slice %3 {offsets = [2, 0], sizes = [1, 8], strides = [1, 1]} : vector<3x8xf32> to vector<1x8xf32>
    %16 = vector.broadcast %15 : vector<1x8xf32> to vector<512x8xf32>
    %17 = arith.addf %14, %16 : vector<512x8xf32>
    %18 = arith.truncf %17 : vector<512x8xf32> to vector<512x8xbf16>
    %c0_7 = arith.constant 0 : index
    %c0_8 = arith.constant 0 : index
    %19 = vector.load %arg4[%c0_7, %c0_8] : memref<512x8xbf16, #tpu.memory_space<vmem>>, vector<512x8xbf16>
    tpu.vector_store %arg4[%c0_7, %c0_8], %18 {strides = array<i32>} : memref<512x8xbf16, #tpu.memory_space<vmem>>, vector<512x8xbf16>,
    return
  }
  func.func @transform_0(%arg0: i32) -> (i32, i32) {
    %c0_i32 = arith.constant 0 : i32
    %c0_i32_0 = arith.constant 0 : i32
    return %arg0, %c0_i32 : i32, i32
  }
  func.func @transform_1(%arg0: i32) -> (i32, i32) {
    %c0_i32 = arith.constant 0 : i32
    %c0_i32_0 = arith.constant 0 : i32
    %c0_i32_1 = arith.constant 0 : i32
    return %c0_i32, %c0_i32_0 : i32, i32
  }
  func.func @transform_2(%arg0: i32) -> (i32, i32) {
    %c0_i32 = arith.constant 0 : i32
    %c0_i32_0 = arith.constant 0 : i32
    %c0_i32_1 = arith.constant 0 : i32
    return %c0_i32, %c0_i32_0 : i32, i32
  }
  func.func @transform_3(%arg0: i32) -> (i32, i32) {
    %c0_i32 = arith.constant 0 : i32
    %c0_i32_0 = arith.constant 0 : i32
    return %arg0, %c0_i32 : i32, i32
  }
}

module attributes {stable_mosaic.version = 11 : i64} {
  func.func @_fused_matmul_kernel(%arg0: i32, %arg1: memref<512x72xbf16, #tpu.memory_space<vmem>>, %arg2: memref<72x3xbf16, #tpu.memory_space<vmem>>, %arg3: memref<3x3xf32, #tpu.memory_space<vmem>>, %arg4: memref<512x3xf32, #tpu.memory_space<vmem>>) attributes {dimension_semantics = [#tpu.dimension_semantics<parallel>], iteration_bounds = array<i64: 16>, scalar_prefetch = 0 : i64, scratch_operands = 0 : i64, tpu.core_type = #tpu.core_type<tc>, window_params = [{transform_indices = @transform_0, window_bounds = array<i64: 512, 72>}, {pipeline_mode = #tpu.pipeline_mode<synchronous>, transform_indices = @transform_1, window_bounds = array<i64: 72, 3>}, {pipeline_mode = #tpu.pipeline_mode<synchronous>, transform_indices = @transform_2, window_bounds = array<i64: 3, 3>}, {transform_indices = @transform_3, window_bounds = array<i64: 512, 3>}]} {
    %c0 = arith.constant 0 : index
    %c0_0 = arith.constant 0 : index
    %0 = vector.load %arg1[%c0, %c0_0] : memref<512x72xbf16, #tpu.memory_space<vmem>>, vector<512x72xbf16>
    %c0_1 = arith.constant 0 : index
    %c0_2 = arith.constant 0 : index
    %1 = vector.load %arg2[%c0_1, %c0_2] : memref<72x3xbf16, #tpu.memory_space<vmem>>, vector<72x3xbf16>
    %cst = arith.constant dense<0.000000e+00> : vector<512x3xf32>
    %2 = tpu.matmul %0, %1, %cst {dimension_numbers = #tpu.dot_dimension_numbers<[1], [0], [0], [1], [0, 0, 1, 1], [], []>} : vector<512x72xbf16>, vector<72x3xbf16>, vector<512x3xf32> -> vector<512x3xf32>
    %c0_3 = arith.constant 0 : index
    %c0_4 = arith.constant 0 : index
    %3 = vector.load %arg3[%c0_3, %c0_4] : memref<3x3xf32, #tpu.memory_space<vmem>>, vector<3x3xf32>
    %4 = vector.extract_strided_slice %3 {offsets = [0, 0], sizes = [1, 3], strides = [1, 1]} : vector<3x3xf32> to vector<1x3xf32>
    %5 = vector.broadcast %4 : vector<1x3xf32> to vector<512x3xf32>
    %6 = arith.addf %2, %5 : vector<512x3xf32>
    %7 = vector.extract_strided_slice %3 {offsets = [1, 0], sizes = [1, 3], strides = [1, 1]} : vector<3x3xf32> to vector<1x3xf32>
    %8 = vector.broadcast %7 : vector<1x3xf32> to vector<512x3xf32>
    %9 = arith.mulf %6, %8 : vector<512x3xf32>
    %10 = vector.extract_strided_slice %3 {offsets = [2, 0], sizes = [1, 3], strides = [1, 1]} : vector<3x3xf32> to vector<1x3xf32>
    %11 = vector.broadcast %10 : vector<1x3xf32> to vector<512x3xf32>
    %12 = arith.addf %9, %11 : vector<512x3xf32>
    %c0_5 = arith.constant 0 : index
    %c0_6 = arith.constant 0 : index
    %13 = vector.load %arg4[%c0_5, %c0_6] : memref<512x3xf32, #tpu.memory_space<vmem>>, vector<512x3xf32>
    tpu.vector_store %arg4[%c0_5, %c0_6], %12 {strides = array<i32>} : memref<512x3xf32, #tpu.memory_space<vmem>>, vector<512x3xf32>,
    return
  }
  func.func @transform_0(%arg0: i32) -> (i32, i32) {
    %c0_i32 = arith.constant 0 : i32
    %c0_i32_0 = arith.constant 0 : i32
    return %arg0, %c0_i32 : i32, i32
  }
  func.func @transform_1(%arg0: i32) -> (i32, i32) {
    %c0_i32 = arith.constant 0 : i32
    %c0_i32_0 = arith.constant 0 : i32
    %c0_i32_1 = arith.constant 0 : i32
    return %c0_i32, %c0_i32_0 : i32, i32
  }
  func.func @transform_2(%arg0: i32) -> (i32, i32) {
    %c0_i32 = arith.constant 0 : i32
    %c0_i32_0 = arith.constant 0 : i32
    %c0_i32_1 = arith.constant 0 : i32
    return %c0_i32, %c0_i32_0 : i32, i32
  }
  func.func @transform_3(%arg0: i32) -> (i32, i32) {
    %c0_i32 = arith.constant 0 : i32
    %c0_i32_0 = arith.constant 0 : i32
    return %arg0, %c0_i32 : i32, i32
  }
}

</mosaic_0001>

<llo_original>
// kernel: vae1_forward.28
$region0: #{vae1_forward.28}
  #allocation0 [shape = 'u32[]', space=smem, size = 0x4, offset = 0x4, fixed_abs, tag = 'smem constant byte address 0x4 - core index']
  #allocation1 [shape = 'u32[144,128]{1,0:T(1,128)}', space=vmem, size = 0x12000, scoped, tag = 'internal scratch']
  %s0 = inlined_call_operand.vmem [shape: bf16[2048,48], index: 0, kind: input, shape index: {}]
  %s1 = inlined_call_operand.vmem [shape: bf16[48,8], index: 1, kind: input, shape index: {}]
  %s2 = inlined_call_operand.vmem [shape: f32[3,8], index: 2, kind: input, shape index: {}]
  %s3 = inlined_call_operand.vmem [shape: bf16[2048,8], index: 3, kind: output, shape index: {}]
  %s4 = sld [smem:[#allocation0]]
  $region45: #{vae1_forward.28} parent=0
    _
  %s6 = ssub.s32 1, %s4
  %s7 = scalar_select 0, %s6, %s4
  loop: start=0, step=1, limit=6
  $region2: #{vae1_forward.28} parent=0 // loop_pre_header
    _
  $region3: #{vae1_forward.28} parent=0 // loop_header
    %s9 = sphi 0, %s13
    %p10 = scmp.ge.s32.totalorder %s9, 6
    %s19 = sphi 0, %s21
    %s22 = sphi 0, %s19
    %s23 = sphi 0, %s22
    %s39 = sphi 0, %s23
    %s43 = sphi 0, %s43
    %s45 = sphi 0, %s43
    %s46 = sphi 0, %s45
    %s60 = sphi 0, %s46
    %s64 = sphi 0, %s64
    %s66 = sphi 0, %s64
    %s67 = sphi 0, %s66
    %s81 = sphi 0, %s67
    %s87 = sphi 0, %s89
    %s90 = sphi 0, %s87
    %s91 = sphi 0, %s90
    %s107 = sphi 0, %s91
  $region4: #{vae1_forward.28} parent=0 // loop_header_branch
    %12 = sbr.rel (%p10) target = $region8
  $region5: #{vae1_forward.28} parent=0 // loop_body
    %s14 = ssub.s32 %s9, 1
    %s15 = ssub.s32 %s9, 2
    %s16 = sadd.s32 %s9, 1
    %s17 = ssub.s32 %s9, %s16
    %p18 = scmp.eq.s32.totalorder %s17, 0
    %s20 = sadd.s32 %s19, 1
    %s21 = scalar_select %p18, %s19, %s20
    %p24 = pneg %p18
    %p25 = scmp.eq.s32.totalorder %s9, 3
    %p26 = por %p24, %p25
    %p27 = scmp.ne.s32.totalorder %s19, %s22
    %p28 = scmp.eq.s32.totalorder %s9, 0
    %p29 = por %p27, %p28
    %p30 = scmp.ne.s32.totalorder %s19, %s22
    %p31 = scmp.eq.s32.totalorder %s14, 3
    %p32 = por %p30, %p31
    %p33 = scmp.ne.s32.totalorder %s22, %s23
    %p34 = scmp.eq.s32.totalorder %s14, 0
    %p35 = por %p33, %p34
    %p36 = scmp.ne.s32.totalorder %s22, %s23
    %p37 = scmp.eq.s32.totalorder %s15, 3
    %p38 = por %p36, %p37
    %p40 = scmp.ne.s32.totalorder %s23, %s39
    %p41 = scmp.eq.s32.totalorder %s15, 0
    %p42 = por %p40, %p41
    %s44 = sadd.s32 %s43, 1
    %p47 = scmp.eq.s32.totalorder %s9, 3
    %p48 = scmp.ne.s32.totalorder %s43, %s45
    %p49 = scmp.eq.s32.totalorder %s9, 0
    %p50 = por %p48, %p49
    %p51 = scmp.ne.s32.totalorder %s43, %s45
    %p52 = scmp.eq.s32.totalorder %s14, 3
    %p53 = por %p51, %p52
    %p54 = scmp.ne.s32.totalorder %s45, %s46
    %p55 = scmp.eq.s32.totalorder %s14, 0
    %p56 = por %p54, %p55
    %p57 = scmp.ne.s32.totalorder %s45, %s46
    %p58 = scmp.eq.s32.totalorder %s15, 3
    %p59 = por %p57, %p58
    %p61 = scmp.ne.s32.totalorder %s46, %s60
    %p62 = scmp.eq.s32.totalorder %s15, 0
    %p63 = por %p61, %p62
    %s65 = sadd.s32 %s64, 1
    %p68 = scmp.eq.s32.totalorder %s9, 3
    %p69 = scmp.ne.s32.totalorder %s64, %s66
    %p70 = scmp.eq.s32.totalorder %s9, 0
    %p71 = por %p69, %p70
    %p72 = scmp.ne.s32.totalorder %s64, %s66
    %p73 = scmp.eq.s32.totalorder %s14, 3
    %p74 = por %p72, %p73
    %p75 = scmp.ne.s32.totalorder %s66, %s67
    %p76 = scmp.eq.s32.totalorder %s14, 0
    %p77 = por %p75, %p76
    %p78 = scmp.ne.s32.totalorder %s66, %s67
    %p79 = scmp.eq.s32.totalorder %s15, 3
    %p80 = por %p78, %p79
    %p82 = scmp.ne.s32.totalorder %s67, %s81
    %p83 = scmp.eq.s32.totalorder %s15, 0
    %p84 = por %p82, %p83
    %s85 = ssub.s32 %s9, %s16
    %p86 = scmp.eq.s32.totalorder %s85, 0
    %s88 = sadd.s32 %s87, 1
    %s89 = scalar_select %p86, %s87, %s88
    %p92 = pneg %p86
    %p93 = scmp.eq.s32.totalorder %s9, 3
    %p94 = por %p92, %p93
    %p95 = scmp.ne.s32.totalorder %s87, %s90
    %p96 = scmp.eq.s32.totalorder %s9, 0
    %p97 = por %p95, %p96
    %p98 = scmp.ne.s32.totalorder %s87, %s90
    %p99 = scmp.eq.s32.totalorder %s14, 3
    %p100 = por %p98, %p99
    %p101 = scmp.ne.s32.totalorder %s90, %s91
    %p102 = scmp.eq.s32.totalorder %s14, 0
    %p103 = por %p101, %p102
    %p104 = scmp.ne.s32.totalorder %s90, %s91
    %p105 = scmp.eq.s32.totalorder %s15, 3
    %p106 = por %p104, %p105
    %p108 = scmp.ne.s32.totalorder %s91, %s107
    %p109 = scmp.eq.s32.totalorder %s15, 0
    %p110 = por %p108, %p109
    %p111 = scmp.le.s32.totalorder 1, %s9
    %p112 = scmp.lt.s32.totalorder %s9, 5
    %p113 = pnand %p111, %p112
    %p114 = pneg %p113
    // Predicated region
    $region9: #{vae1_forward.28} parent=5 // pred_check
      _
    $region10: #{vae1_forward.28} parent=5 // pred_check_branch
      %116 = sbr.rel (%p113) target = $region12
    $region11: #{vae1_forward.28} parent=5 // pred_region
      %s117 = ssub.s32 %s9, 1
      // Predicated region
      $region13: #{vae1_forward.28} parent=11 // pred_check
        %p118 = pneg %p56
      $region14: #{vae1_forward.28} parent=11 // pred_check_branch
        %120 = sbr.rel (%p118) target = $region16
      $region15: #{vae1_forward.28} parent=11 // pred_region
        _
      $region16: #{vae1_forward.28} parent=11 // pred_fallthru
        _
      // Predicated region
      $region17: #{vae1_forward.28} parent=11 // pred_check
        %p121 = pneg %p77
      $region18: #{vae1_forward.28} parent=11 // pred_check_branch
        %123 = sbr.rel (%p121) target = $region20
      $region19: #{vae1_forward.28} parent=11 // pred_region
        _
      $region20: #{vae1_forward.28} parent=11 // pred_fallthru
        _
    $region12: #{vae1_forward.28} parent=5 // pred_fallthru
      _
    %p124 = scmp.lt.s32.totalorder %s9, 4
    // Predicated region
    $region21: #{vae1_forward.28} parent=5 // pred_check
      %p125 = pneg %p124
    $region22: #{vae1_forward.28} parent=5 // pred_check_branch
      %127 = sbr.rel (%p125) target = $region24
    $region23: #{vae1_forward.28} parent=5 // pred_region
      // Predicated region
      $region25: #{vae1_forward.28} parent=23 // pred_check
        %p128 = pneg %p29
      $region26: #{vae1_forward.28} parent=23 // pred_check_branch
        %130 = sbr.rel (%p128) target = $region28
      $region27: #{vae1_forward.28} parent=23 // pred_region
        %s131 = smul.u32 64, %s9
        %p132 = scmp.lt.s32.totalorder %s131, 255
        %s133 = scalar_select %p132, %s131, 255
        %s134 = smul.addr %s133, 4
        %s135 = scalar_lea.vmem %s0, %s134
        %s136 = smul.u32 64, %s9
      $region28: #{vae1_forward.28} parent=23 // pred_fallthru
        _
    $region24: #{vae1_forward.28} parent=5 // pred_fallthru
      _
    %p137 = scmp.le.s32.totalorder 1, %s9
    %p138 = scmp.lt.s32.totalorder %s9, 5
    %p139 = pnand %p137, %p138
    %p140 = pneg %p139
    // Predicated region
    $region29: #{vae1_forward.28} parent=5 // pred_check
      _
    $region30: #{vae1_forward.28} parent=5 // pred_check_branch
      %142 = sbr.rel (%p139) target = $region32
    $region31: #{vae1_forward.28} parent=5 // pred_region
      %s143 = ssub.s32 %s9, 1
      %s144 = smul.u32 64, %s14
      %p145 = scmp.lt.s32.totalorder %s144, 255
      %s146 = scalar_select %p145, %s144, 255
      %s147 = smul.addr %s146, 4
      %s148 = scalar_lea.vmem %s0, %s147
      %p149 = pneg %p35
      %p150 = pneg %p32
      %p151 = pneg %p56
      %p152 = pneg %p53
      %p153 = pneg %p77
      %p154 = pneg %p74
      %p155 = pneg %p103
      %p156 = pneg %p100
      %s157 = smul.u32 64, %s14
      %p158 = scmp.lt.s32.totalorder %s157, 255
      %s159 = scalar_select %p158, %s157, 255
      %s160 = smul.addr %s159, 4
      %s161 = scalar_lea.vmem %s3, %s160
      %s162 = smul.u32 64, %s14
      %p163 = scmp.lt.s32.totalorder %s162, 255
      %s164 = scalar_select %p163, %s162, 255
      %s165 = smul.addr %s164, 4
      %s166 = scalar_lea.vmem %s0, %s165
      %s167 = smul.u32 64, %s14
      %s168 = smul.u32 64, %s14
      %p169 = scmp.lt.s32.totalorder %s168, 255
      %s170 = scalar_select %p169, %s168, 255
      %s171 = smul.addr %s170, 4
      %s172 = scalar_lea.vmem %s3, %s171
      %s173 = smul.u32 64, %s14
      %v175 = vld [vmem:[%s166] sm:$0xf]
      %v176 = vld [vmem:[%s166 + $0x4] sm:$0xf]
      %v177 = vld [vmem:[%s166 + $0x8] sm:$0xf]
      %v178 = vld [vmem:[%s166 + $0xc] sm:$0xf]
      %v179 = vld [vmem:[%s166 + $0x10] sm:$0xf]
      %v180 = vld [vmem:[%s166 + $0x14] sm:$0xf]
      %v181 = vld [vmem:[%s166 + $0x18] sm:$0xf]
      %v182 = vld [vmem:[%s166 + $0x1c] sm:$0xf]
      %v183 = vld [vmem:[%s166 + $0x20] sm:$0xf]
      %v184 = vld [vmem:[%s166 + $0x24] sm:$0xf]
      %v185 = vld [vmem:[%s166 + $0x28] sm:$0xf]
      %v186 = vld [vmem:[%s166 + $0x2c] sm:$0xf]
      %v187 = vld [vmem:[%s166 + $0x30] sm:$0xf]
      %v188 = vld [vmem:[%s166 + $0x34] sm:$0xf]
      %v189 = vld [vmem:[%s166 + $0x38] sm:$0xf]
      %v190 = vld [vmem:[%s166 + $0x3c] sm:$0xf]
      %v191 = vld [vmem:[%s166 + $0x40] sm:$0xf]
      %v192 = vld [vmem:[%s166 + $0x44] sm:$0xf]
      %v193 = vld [vmem:[%s166 + $0x48] sm:$0xf]
      %v194 = vld [vmem:[%s166 + $0x4c] sm:$0xf]
      %v195 = vld [vmem:[%s166 + $0x50] sm:$0xf]
      %v196 = vld [vmem:[%s166 + $0x54] sm:$0xf]
      %v197 = vld [vmem:[%s166 + $0x58] sm:$0xf]
      %v198 = vld [vmem:[%s166 + $0x5c] sm:$0xf]
      %v199 = vld [vmem:[%s166 + $0x60] sm:$0xf]
      %v200 = vld [vmem:[%s166 + $0x64] sm:$0xf]
      %v201 = vld [vmem:[%s166 + $0x68] sm:$0xf]
      %v202 = vld [vmem:[%s166 + $0x6c] sm:$0xf]
      %v203 = vld [vmem:[%s166 + $0x70] sm:$0xf]
      %v204 = vld [vmem:[%s166 + $0x74] sm:$0xf]
      %v205 = vld [vmem:[%s166 + $0x78] sm:$0xf]
      %v206 = vld [vmem:[%s166 + $0x7c] sm:$0xf]
      %v207 = vld [vmem:[%s166 + $0x80] sm:$0xf]
      %v208 = vld [vmem:[%s166 + $0x84] sm:$0xf]
      %v209 = vld [vmem:[%s166 + $0x88] sm:$0xf]
      %v210 = vld [vmem:[%s166 + $0x8c] sm:$0xf]
      %v211 = vld [vmem:[%s166 + $0x90] sm:$0xf]
      %v212 = vld [vmem:[%s166 + $0x94] sm:$0xf]
      %v213 = vld [vmem:[%s166 + $0x98] sm:$0xf]
      %v214 = vld [vmem:[%s166 + $0x9c] sm:$0xf]
      %v215 = vld [vmem:[%s166 + $0xa0] sm:$0xf]
      %v216 = vld [vmem:[%s166 + $0xa4] sm:$0xf]
      %v217 = vld [vmem:[%s166 + $0xa8] sm:$0xf]
      %v218 = vld [vmem:[%s166 + $0xac] sm:$0xf]
      %v219 = vld [vmem:[%s166 + $0xb0] sm:$0xf]
      %v220 = vld [vmem:[%s166 + $0xb4] sm:$0xf]
      %v221 = vld [vmem:[%s166 + $0xb8] sm:$0xf]
      %v222 = vld [vmem:[%s166 + $0xbc] sm:$0xf]
      %v223 = vld [vmem:[%s166 + $0xc0] sm:$0xf]
      %v224 = vld [vmem:[%s166 + $0xc4] sm:$0xf]
      %v225 = vld [vmem:[%s166 + $0xc8] sm:$0xf]
      %v226 = vld [vmem:[%s166 + $0xcc] sm:$0xf]
      %v227 = vld [vmem:[%s166 + $0xd0] sm:$0xf]
      %v228 = vld [vmem:[%s166 + $0xd4] sm:$0xf]
      %v229 = vld [vmem:[%s166 + $0xd8] sm:$0xf]
      %v230 = vld [vmem:[%s166 + $0xdc] sm:$0xf]
      %v231 = vld [vmem:[%s166 + $0xe0] sm:$0xf]
      %v232 = vld [vmem:[%s166 + $0xe4] sm:$0xf]
      %v233 = vld [vmem:[%s166 + $0xe8] sm:$0xf]
      %v234 = vld [vmem:[%s166 + $0xec] sm:$0xf]
      %v235 = vld [vmem:[%s166 + $0xf0] sm:$0xf]
      %v236 = vld [vmem:[%s166 + $0xf4] sm:$0xf]
      %v237 = vld [vmem:[%s166 + $0xf8] sm:$0xf]
      %v238 = vld [vmem:[%s166 + $0xfc] sm:$0xf]
      %v239 = vld [vmem:[%s1] sm:$0xf]
      %v240 = vld [vmem:[%s1 + $0x4] sm:$0xf]
      %v241 = vld [vmem:[%s1 + $0x8] sm:$0xf]
      %v242 = vld [vmem:[%s1 + $0xc] sm:$0xf]
      %v243 = vld [vmem:[%s1 + $0x10] sm:$0xf]
      %v244 = vld [vmem:[%s1 + $0x14] sm:$0xf]
      %v245 = vld [vmem:[%s2] sm:$0x7]
      %v246 = vlaneseq
      %v247 = vshrl.u32 %v246, 7
      %v248 = vsub.s32 0, %v247
      %v249 = vrot.slane %v245, %v248
      %v314 = vunpack.c.l.b16 %v175
      %v315 = vunpack.c.l.b16 %v176
      %v316 = vunpack.c.l.b16 %v177
      %v317 = vunpack.c.l.b16 %v178
      %v318 = vunpack.c.l.b16 %v179
      %v319 = vunpack.c.l.b16 %v180
      %v320 = vunpack.c.l.b16 %v181
      %v321 = vunpack.c.l.b16 %v182
      %v322 = vunpack.c.l.b16 %v183
      %v323 = vunpack.c.l.b16 %v184
      %v324 = vunpack.c.l.b16 %v185
      %v325 = vunpack.c.l.b16 %v186
      %v326 = vunpack.c.l.b16 %v187
      %v327 = vunpack.c.l.b16 %v188
      %v328 = vunpack.c.l.b16 %v189
      %v329 = vunpack.c.l.b16 %v190
      %v330 = vunpack.c.l.b16 %v191
      %v331 = vunpack.c.l.b16 %v192
      %v332 = vunpack.c.l.b16 %v193
      %v333 = vunpack.c.l.b16 %v194
      %v334 = vunpack.c.l.b16 %v195
      %v335 = vunpack.c.l.b16 %v196
      %v336 = vunpack.c.l.b16 %v197
      %v337 = vunpack.c.l.b16 %v198
      %v338 = vunpack.c.l.b16 %v199
      %v339 = vunpack.c.l.b16 %v200
      %v340 = vunpack.c.l.b16 %v201
      %v341 = vunpack.c.l.b16 %v202
      %v342 = vunpack.c.l.b16 %v203
      %v343 = vunpack.c.l.b16 %v204
      %v344 = vunpack.c.l.b16 %v205
      %v345 = vunpack.c.l.b16 %v206
      %v346 = vunpack.c.l.b16 %v207
      %v347 = vunpack.c.l.b16 %v208
      %v348 = vunpack.c.l.b16 %v209
      %v349 = vunpack.c.l.b16 %v210
      %v350 = vunpack.c.l.b16 %v211
      %v351 = vunpack.c.l.b16 %v212
      %v352 = vunpack.c.l.b16 %v213
      %v353 = vunpack.c.l.b16 %v214
      %v354 = vunpack.c.l.b16 %v215
      %v355 = vunpack.c.l.b16 %v216
      %v356 = vunpack.c.l.b16 %v217
      %v357 = vunpack.c.l.b16 %v218
      %v358 = vunpack.c.l.b16 %v219
      %v359 = vunpack.c.l.b16 %v220
      %v360 = vunpack.c.l.b16 %v221
      %v361 = vunpack.c.l.b16 %v222
      %v362 = vunpack.c.l.b16 %v223
      %v363 = vunpack.c.l.b16 %v224
      %v364 = vunpack.c.l.b16 %v225
      %v365 = vunpack.c.l.b16 %v226
      %v366 = vunpack.c.l.b16 %v227
      %v367 = vunpack.c.l.b16 %v228
      %v368 = vunpack.c.l.b16 %v229
      %v369 = vunpack.c.l.b16 %v230
      %v370 = vunpack.c.l.b16 %v231
      %v371 = vunpack.c.l.b16 %v232
      %v372 = vunpack.c.l.b16 %v233
      %v373 = vunpack.c.l.b16 %v234
      %v374 = vunpack.c.l.b16 %v235
      %v375 = vunpack.c.l.b16 %v236
      %v376 = vunpack.c.l.b16 %v237
      %v377 = vunpack.c.l.b16 %v238
      %v378 = vpack.c.b16 %v315, %v314
      %v379 = vpack.c.b16 %v317, %v316
      %v380 = vpack.c.b16 %v319, %v318
      %v381 = vpack.c.b16 %v321, %v320
      %v382 = vpack.c.b16 %v323, %v322
      %v383 = vpack.c.b16 %v325, %v324
      %v384 = vpack.c.b16 %v327, %v326
      %v385 = vpack.c.b16 %v329, %v328
      %v386 = vpack.c.b16 %v331, %v330
      %v387 = vpack.c.b16 %v333, %v332
      %v388 = vpack.c.b16 %v335, %v334
      %v389 = vpack.c.b16 %v337, %v336
      %v390 = vpack.c.b16 %v339, %v338
      %v391 = vpack.c.b16 %v341, %v340
      %v392 = vpack.c.b16 %v343, %v342
      %v393 = vpack.c.b16 %v345, %v344
      %v394 = vpack.c.b16 %v347, %v346
      %v395 = vpack.c.b16 %v349, %v348
      %v396 = vpack.c.b16 %v351, %v350
      %v397 = vpack.c.b16 %v353, %v352
      %v398 = vpack.c.b16 %v355, %v354
      %v399 = vpack.c.b16 %v357, %v356
      %v400 = vpack.c.b16 %v359, %v358
      %v401 = vpack.c.b16 %v361, %v360
      %v402 = vpack.c.b16 %v363, %v362
      %v403 = vpack.c.b16 %v365, %v364
      %v404 = vpack.c.b16 %v367, %v366
      %v405 = vpack.c.b16 %v369, %v368
      %v406 = vpack.c.b16 %v371, %v370
      %v407 = vpack.c.b16 %v373, %v372
      %v408 = vpack.c.b16 %v375, %v374
      %v409 = vpack.c.b16 %v377, %v376
      %v416 = vunpack.c.l.b16 %v239
      %v417 = vunpack.c.l.b16 %v240
      %v418 = vunpack.c.l.b16 %v241
      %v419 = vunpack.c.l.b16 %v242
      %v420 = vunpack.c.l.b16 %v243
      %v421 = vunpack.c.l.b16 %v244
      %v422 = vpack.c.b16 %v417, %v416
      %v423 = vpack.c.b16 %v419, %v418
      %v424 = vpack.c.b16 %v421, %v420
      %vm428 = vcmask 392192
      %v430 = vsel %vm428, %v378, 0
      %v433 = vsel %vm428, %v379, 0
      %v436 = vsel %vm428, %v380, 0
      %v439 = vsel %vm428, %v381, 0
      %v442 = vsel %vm428, %v382, 0
      %v445 = vsel %vm428, %v383, 0
      %v448 = vsel %vm428, %v384, 0
      %v451 = vsel %vm428, %v385, 0
      %v454 = vsel %vm428, %v386, 0
      %v457 = vsel %vm428, %v387, 0
      %v460 = vsel %vm428, %v388, 0
      %v463 = vsel %vm428, %v389, 0
      %v466 = vsel %vm428, %v390, 0
      %v469 = vsel %vm428, %v391, 0
      %v472 = vsel %vm428, %v392, 0
      %v475 = vsel %vm428, %v393, 0
      %v478 = vsel %vm428, %v394, 0
      %v481 = vsel %vm428, %v395, 0
      %v484 = vsel %vm428, %v396, 0
      %v487 = vsel %vm428, %v397, 0
      %v490 = vsel %vm428, %v398, 0
      %v493 = vsel %vm428, %v399, 0
      %v496 = vsel %vm428, %v400, 0
      %v499 = vsel %vm428, %v401, 0
      %v502 = vsel %vm428, %v402, 0
      %v505 = vsel %vm428, %v403, 0
      %v508 = vsel %vm428, %v404, 0
      %v511 = vsel %vm428, %v405, 0
      %v514 = vsel %vm428, %v406, 0
      %v517 = vsel %vm428, %v407, 0
      %v520 = vsel %vm428, %v408, 0
      %v523 = vsel %vm428, %v409, 0
      %525 = vmatprep.subr.bf16.mxu0 0
      %526 = vmatpush1.bf16.msra.mxu0 %v422
      %527 = vmatprep.subr.bf16.mxu0 0
      %528 = vmatpush1.bf16.msra.mxu0 %v423
      %529 = vmatprep.subr.bf16.mxu0 0
      %530 = vmatpush1.bf16.msra.mxu0 %v424
      %531 = vmatprep.subr.bf16.mxu0 0
      %532 = vmatpush1.bf16.msra.mxu0 0
      %533 = vmatprep.subr.bf16.mxu0 0
      %534 = vmatpush1.bf16.msra.mxu0 0
      %535 = vmatprep.subr.bf16.mxu0 0
      %536 = vmatpush1.bf16.msra.mxu0 0
      %537 = vmatprep.subr.bf16.mxu0 0
      %538 = vmatpush1.bf16.msra.mxu0 0
      %539 = vmatprep.subr.bf16.mxu0 0
      %540 = vmatpush1.bf16.msra.mxu0 0
      %541 = vmatprep.subr.bf16.mxu0 0
      %542 = vmatpush1.bf16.msra.mxu0 0
      %543 = vmatprep.subr.bf16.mxu0 0
      %544 = vmatpush1.bf16.msra.mxu0 0
      %545 = vmatprep.subr.bf16.mxu0 0
      %546 = vmatpush1.bf16.msra.mxu0 0
      %547 = vmatprep.subr.bf16.mxu0 0
      %548 = vmatpush1.bf16.msra.mxu0 0
      %549 = vmatprep.subr.bf16.mxu0 0
      %550 = vmatpush1.bf16.msra.mxu0 0
      %551 = vmatprep.subr.bf16.mxu0 0
      %552 = vmatpush1.bf16.msra.mxu0 0
      %553 = vmatprep.subr.bf16.mxu0 0
      %554 = vmatpush1.bf16.msra.mxu0 0
      %555 = vmatprep.subr.bf16.mxu0 0
      %556 = vmatpush1.bf16.msra.mxu0 0
      %557 = vmatprep.mubr.bf16.mxu0 0
      %558 = vmatmul.mubr.bf16.gmra.mrb[0].mxu0 %v430
      %v559 = vpop.f32.mrb[0].mxu0
      %v560 = vadd.f32 %v249, %v559
      %v561 = vpop.f32.mrb[0].mxu0
      %v562 = vpop.f32.mrb[0].mxu0
      %v563 = vadd.f32 %v249, %v562
      %v564 = vpop.f32.mrb[0].mxu0
      %565 = vmatprep.mubr.bf16.mxu0 0
      %566 = vmatmul.mubr.bf16.gmra.mrb[0].mxu0 %v433
      %v567 = vpop.f32.mrb[0].mxu0
      %v568 = vadd.f32 %v249, %v567
      %v569 = vpop.f32.mrb[0].mxu0
      %v570 = vpop.f32.mrb[0].mxu0
      %v571 = vadd.f32 %v249, %v570
      %v572 = vpop.f32.mrb[0].mxu0
      %573 = vmatprep.mubr.bf16.mxu0 0
      %574 = vmatmul.mubr.bf16.gmra.mrb[0].mxu0 %v436
      %v575 = vpop.f32.mrb[0].mxu0
      %v576 = vadd.f32 %v249, %v575
      %v577 = vpop.f32.mrb[0].mxu0
      %v578 = vpop.f32.mrb[0].mxu0
      %v579 = vadd.f32 %v249, %v578
      %v580 = vpop.f32.mrb[0].mxu0
      %581 = vmatprep.mubr.bf16.mxu0 0
      %582 = vmatmul.mubr.bf16.gmra.mrb[0].mxu0 %v439
      %v583 = vpop.f32.mrb[0].mxu0
      %v584 = vadd.f32 %v249, %v583
      %v585 = vpop.f32.mrb[0].mxu0
      %v586 = vpop.f32.mrb[0].mxu0
      %v587 = vadd.f32 %v249, %v586
      %v588 = vpop.f32.mrb[0].mxu0
      %589 = vmatprep.mubr.bf16.mxu0 0
      %590 = vmatmul.mubr.bf16.gmra.mrb[0].mxu0 %v442
      %v591 = vpop.f32.mrb[0].mxu0
      %v592 = vadd.f32 %v249, %v591
      %v593 = vpop.f32.mrb[0].mxu0
      %v594 = vpop.f32.mrb[0].mxu0
      %v595 = vadd.f32 %v249, %v594
      %v596 = vpop.f32.mrb[0].mxu0
      %597 = vmatprep.mubr.bf16.mxu0 0
      %598 = vmatmul.mubr.bf16.gmra.mrb[0].mxu0 %v445
      %v599 = vpop.f32.mrb[0].mxu0
      %v600 = vadd.f32 %v249, %v599
      %v601 = vpop.f32.mrb[0].mxu0
      %v602 = vpop.f32.mrb[0].mxu0
      %v603 = vadd.f32 %v249, %v602
      %v604 = vpop.f32.mrb[0].mxu0
      %605 = vmatprep.mubr.bf16.mxu0 0
      %606 = vmatmul.mubr.bf16.gmra.mrb[0].mxu0 %v448
      %v607 = vpop.f32.mrb[0].mxu0
      %v608 = vadd.f32 %v249, %v607
      %v609 = vpop.f32.mrb[0].mxu0
      %v610 = vpop.f32.mrb[0].mxu0
      %v611 = vadd.f32 %v249, %v610
      %v612 = vpop.f32.mrb[0].mxu0
      %613 = vmatprep.mubr.bf16.mxu0 0
      %614 = vmatmul.mubr.bf16.gmra.mrb[0].mxu0 %v451
      %v615 = vpop.f32.mrb[0].mxu0
      %v616 = vadd.f32 %v249, %v615
      %v617 = vpop.f32.mrb[0].mxu0
      %v618 = vpop.f32.mrb[0].mxu0
      %v619 = vadd.f32 %v249, %v618
      %v620 = vpop.f32.mrb[0].mxu0
      %621 = vmatprep.mubr.bf16.mxu0 0
      %622 = vmatmul.mubr.bf16.gmra.mrb[0].mxu0 %v454
      %v623 = vpop.f32.mrb[0].mxu0
      %v624 = vadd.f32 %v249, %v623
      %v625 = vpop.f32.mrb[0].mxu0
      %v626 = vpop.f32.mrb[0].mxu0
      %v627 = vadd.f32 %v249, %v626
      %v628 = vpop.f32.mrb[0].mxu0
      %629 = vmatprep.mubr.bf16.mxu0 0
      %630 = vmatmul.mubr.bf16.gmra.mrb[0].mxu0 %v457
      %v631 = vpop.f32.mrb[0].mxu0
      %v632 = vadd.f32 %v249, %v631
      %v633 = vpop.f32.mrb[0].mxu0
      %v634 = vpop.f32.mrb[0].mxu0
      %v635 = vadd.f32 %v249, %v634
      %v636 = vpop.f32.mrb[0].mxu0
      %637 = vmatprep.mubr.bf16.mxu0 0
      %638 = vmatmul.mubr.bf16.gmra.mrb[0].mxu0 %v460
      %v639 = vpop.f32.mrb[0].mxu0
      %v640 = vadd.f32 %v249, %v639
      %v641 = vpop.f32.mrb[0].mxu0
      %v642 = vpop.f32.mrb[0].mxu0
      %v643 = vadd.f32 %v249, %v642
      %v644 = vpop.f32.mrb[0].mxu0
      %645 = vmatprep.mubr.bf16.mxu0 0
      %646 = vmatmul.mubr.bf16.gmra.mrb[0].mxu0 %v463
      %v647 = vpop.f32.mrb[0].mxu0
      %v648 = vadd.f32 %v249, %v647
      %v649 = vpop.f32.mrb[0].mxu0
      %v650 = vpop.f32.mrb[0].mxu0
      %v651 = vadd.f32 %v249, %v650
      %v652 = vpop.f32.mrb[0].mxu0
      %653 = vmatprep.mubr.bf16.mxu0 0
      %654 = vmatmul.mubr.bf16.gmra.mrb[0].mxu0 %v466
      %v655 = vpop.f32.mrb[0].mxu0
      %v656 = vadd.f32 %v249, %v655
      %v657 = vpop.f32.mrb[0].mxu0
      %v658 = vpop.f32.mrb[0].mxu0
      %v659 = vadd.f32 %v249, %v658
      %v660 = vpop.f32.mrb[0].mxu0
      %661 = vmatprep.mubr.bf16.mxu0 0
      %662 = vmatmul.mubr.bf16.gmra.mrb[0].mxu0 %v469
      %v663 = vpop.f32.mrb[0].mxu0
      %v664 = vadd.f32 %v249, %v663
      %v665 = vpop.f32.mrb[0].mxu0
      %v666 = vpop.f32.mrb[0].mxu0
      %v667 = vadd.f32 %v249, %v666
      %v668 = vpop.f32.mrb[0].mxu0
      %669 = vmatprep.mubr.bf16.mxu0 0
      %670 = vmatmul.mubr.bf16.gmra.mrb[0].mxu0 %v472
      %v671 = vpop.f32.mrb[0].mxu0
      %v672 = vadd.f32 %v249, %v671
      %v673 = vpop.f32.mrb[0].mxu0
      %v674 = vpop.f32.mrb[0].mxu0
      %v675 = vadd.f32 %v249, %v674
      %v676 = vpop.f32.mrb[0].mxu0
      %677 = vmatprep.mubr.bf16.mxu0 0
      %678 = vmatmul.mubr.bf16.gmra.mrb[0].mxu0 %v475
      %v679 = vpop.f32.mrb[0].mxu0
      %v680 = vadd.f32 %v249, %v679
      %v681 = vpop.f32.mrb[0].mxu0
      %v682 = vpop.f32.mrb[0].mxu0
      %v683 = vadd.f32 %v249, %v682
      %v684 = vpop.f32.mrb[0].mxu0
      %685 = vmatprep.mubr.bf16.mxu0 0
      %686 = vmatmul.mubr.bf16.gmra.mrb[0].mxu0 %v478
      %v687 = vpop.f32.mrb[0].mxu0
      %v688 = vadd.f32 %v249, %v687
      %v689 = vpop.f32.mrb[0].mxu0
      %v690 = vpop.f32.mrb[0].mxu0
      %v691 = vadd.f32 %v249, %v690
      %v692 = vpop.f32.mrb[0].mxu0
      %693 = vmatprep.mubr.bf16.mxu0 0
      %694 = vmatmul.mubr.bf16.gmra.mrb[0].mxu0 %v481
      %v695 = vpop.f32.mrb[0].mxu0
      %v696 = vadd.f32 %v249, %v695
      %v697 = vpop.f32.mrb[0].mxu0
      %v698 = vpop.f32.mrb[0].mxu0
      %v699 = vadd.f32 %v249, %v698
      %v700 = vpop.f32.mrb[0].mxu0
      %701 = vmatprep.mubr.bf16.mxu0 0
      %702 = vmatmul.mubr.bf16.gmra.mrb[0].mxu0 %v484
      %v703 = vpop.f32.mrb[0].mxu0
      %v704 = vadd.f32 %v249, %v703
      %v705 = vpop.f32.mrb[0].mxu0
      %v706 = vpop.f32.mrb[0].mxu0
      %v707 = vadd.f32 %v249, %v706
      %v708 = vpop.f32.mrb[0].mxu0
      %709 = vmatprep.mubr.bf16.mxu0 0
      %710 = vmatmul.mubr.bf16.gmra.mrb[0].mxu0 %v487
      %v711 = vpop.f32.mrb[0].mxu0
      %v712 = vadd.f32 %v249, %v711
      %v713 = vpop.f32.mrb[0].mxu0
      %v714 = vpop.f32.mrb[0].mxu0
      %v715 = vadd.f32 %v249, %v714
      %v716 = vpop.f32.mrb[0].mxu0
      %717 = vmatprep.mubr.bf16.mxu0 0
      %718 = vmatmul.mubr.bf16.gmra.mrb[0].mxu0 %v490
      %v719 = vpop.f32.mrb[0].mxu0
      %v720 = vadd.f32 %v249, %v719
      %v721 = vpop.f32.mrb[0].mxu0
      %v722 = vpop.f32.mrb[0].mxu0
      %v723 = vadd.f32 %v249, %v722
      %v724 = vpop.f32.mrb[0].mxu0
      %725 = vmatprep.mubr.bf16.mxu0 0
      %726 = vmatmul.mubr.bf16.gmra.mrb[0].mxu0 %v493
      %v727 = vpop.f32.mrb[0].mxu0
      %v728 = vadd.f32 %v249, %v727
      %v729 = vpop.f32.mrb[0].mxu0
      %v730 = vpop.f32.mrb[0].mxu0
      %v731 = vadd.f32 %v249, %v730
      %v732 = vpop.f32.mrb[0].mxu0
      %733 = vmatprep.mubr.bf16.mxu0 0
      %734 = vmatmul.mubr.bf16.gmra.mrb[0].mxu0 %v496
      %v735 = vpop.f32.mrb[0].mxu0
      %v736 = vadd.f32 %v249, %v735
      %v737 = vpop.f32.mrb[0].mxu0
      %v738 = vpop.f32.mrb[0].mxu0
      %v739 = vadd.f32 %v249, %v738
      %v740 = vpop.f32.mrb[0].mxu0
      %741 = vmatprep.mubr.bf16.mxu0 0
      %742 = vmatmul.mubr.bf16.gmra.mrb[0].mxu0 %v499
      %v743 = vpop.f32.mrb[0].mxu0
      %v744 = vadd.f32 %v249, %v743
      %v745 = vpop.f32.mrb[0].mxu0
      %v746 = vpop.f32.mrb[0].mxu0
      %v747 = vadd.f32 %v249, %v746
      %v748 = vpop.f32.mrb[0].mxu0
      %749 = vmatprep.mubr.bf16.mxu0 0
      %750 = vmatmul.mubr.bf16.gmra.mrb[0].mxu0 %v502
      %v751 = vpop.f32.mrb[0].mxu0
      %v752 = vadd.f32 %v249, %v751
      %v753 = vpop.f32.mrb[0].mxu0
      %v754 = vpop.f32.mrb[0].mxu0
      %v755 = vadd.f32 %v249, %v754
      %v756 = vpop.f32.mrb[0].mxu0
      %757 = vmatprep.mubr.bf16.mxu0 0
      %758 = vmatmul.mubr.bf16.gmra.mrb[0].mxu0 %v505
      %v759 = vpop.f32.mrb[0].mxu0
      %v760 = vadd.f32 %v249, %v759
      %v761 = vpop.f32.mrb[0].mxu0
      %v762 = vpop.f32.mrb[0].mxu0
      %v763 = vadd.f32 %v249, %v762
      %v764 = vpop.f32.mrb[0].mxu0
      %765 = vmatprep.mubr.bf16.mxu0 0
      %766 = vmatmul.mubr.bf16.gmra.mrb[0].mxu0 %v508
      %v767 = vpop.f32.mrb[0].mxu0
      %v768 = vadd.f32 %v249, %v767
      %v769 = vpop.f32.mrb[0].mxu0
      %v770 = vpop.f32.mrb[0].mxu0
      %v771 = vadd.f32 %v249, %v770
      %v772 = vpop.f32.mrb[0].mxu0
      %773 = vmatprep.mubr.bf16.mxu0 0
      %774 = vmatmul.mubr.bf16.gmra.mrb[0].mxu0 %v511
      %v775 = vpop.f32.mrb[0].mxu0
      %v776 = vadd.f32 %v249, %v775
      %v777 = vpop.f32.mrb[0].mxu0
      %v778 = vpop.f32.mrb[0].mxu0
      %v779 = vadd.f32 %v249, %v778
      %v780 = vpop.f32.mrb[0].mxu0
      %781 = vmatprep.mubr.bf16.mxu0 0
      %782 = vmatmul.mubr.bf16.gmra.mrb[0].mxu0 %v514
      %v783 = vpop.f32.mrb[0].mxu0
      %v784 = vadd.f32 %v249, %v783
      %v785 = vpop.f32.mrb[0].mxu0
      %v786 = vpop.f32.mrb[0].mxu0
      %v787 = vadd.f32 %v249, %v786
      %v788 = vpop.f32.mrb[0].mxu0
      %789 = vmatprep.mubr.bf16.mxu0 0
      %790 = vmatmul.mubr.bf16.gmra.mrb[0].mxu0 %v517
      %v791 = vpop.f32.mrb[0].mxu0
      %v792 = vadd.f32 %v249, %v791
      %v793 = vpop.f32.mrb[0].mxu0
      %v794 = vpop.f32.mrb[0].mxu0
      %v795 = vadd.f32 %v249, %v794
      %v796 = vpop.f32.mrb[0].mxu0
      %797 = vmatprep.mubr.bf16.mxu0 0
      %798 = vmatmul.mubr.bf16.gmra.mrb[0].mxu0 %v520
      %v799 = vpop.f32.mrb[0].mxu0
      %v800 = vadd.f32 %v249, %v799
      %v801 = vpop.f32.mrb[0].mxu0
      %v802 = vpop.f32.mrb[0].mxu0
      %v803 = vadd.f32 %v249, %v802
      %v804 = vpop.f32.mrb[0].mxu0
      %805 = vmatprep.mubr.bf16.mxu0 0
      %806 = vmatmul.mubr.bf16.gmra.mrb[0].mxu0 %v523
      %v807 = vpop.f32.mrb[0].mxu0
      %v808 = vadd.f32 %v249, %v807
      %v809 = vpop.f32.mrb[0].mxu0
      %v810 = vpop.f32.mrb[0].mxu0
      %v811 = vadd.f32 %v249, %v810
      %v812 = vpop.f32.mrb[0].mxu0
      %813 = vdwg.mxu0
      %vm814 = vcmp.ge.f32.partialorder %v560, 0.0
      %vm815 = vcmp.ge.f32.partialorder %v563, 0.0
      %vm816 = vcmp.ge.f32.partialorder %v568, 0.0
      %vm817 = vcmp.ge.f32.partialorder %v571, 0.0
      %vm818 = vcmp.ge.f32.partialorder %v576, 0.0
      %vm819 = vcmp.ge.f32.partialorder %v579, 0.0
      %vm820 = vcmp.ge.f32.partialorder %v584, 0.0
      %vm821 = vcmp.ge.f32.partialorder %v587, 0.0
      %vm822 = vcmp.ge.f32.partialorder %v592, 0.0
      %vm823 = vcmp.ge.f32.partialorder %v595, 0.0
      %vm824 = vcmp.ge.f32.partialorder %v600, 0.0
      %vm825 = vcmp.ge.f32.partialorder %v603, 0.0
      %vm826 = vcmp.ge.f32.partialorder %v608, 0.0
      %vm827 = vcmp.ge.f32.partialorder %v611, 0.0
      %vm828 = vcmp.ge.f32.partialorder %v616, 0.0
      %vm829 = vcmp.ge.f32.partialorder %v619, 0.0
      %vm830 = vcmp.ge.f32.partialorder %v624, 0.0
      %vm831 = vcmp.ge.f32.partialorder %v627, 0.0
      %vm832 = vcmp.ge.f32.partialorder %v632, 0.0
      %vm833 = vcmp.ge.f32.partialorder %v635, 0.0
      %vm834 = vcmp.ge.f32.partialorder %v640, 0.0
      %vm835 = vcmp.ge.f32.partialorder %v643, 0.0
      %vm836 = vcmp.ge.f32.partialorder %v648, 0.0
      %vm837 = vcmp.ge.f32.partialorder %v651, 0.0
      %vm838 = vcmp.ge.f32.partialorder %v656, 0.0
      %vm839 = vcmp.ge.f32.partialorder %v659, 0.0
      %vm840 = vcmp.ge.f32.partialorder %v664, 0.0
      %vm841 = vcmp.ge.f32.partialorder %v667, 0.0
      %vm842 = vcmp.ge.f32.partialorder %v672, 0.0
      %vm843 = vcmp.ge.f32.partialorder %v675, 0.0
      %vm844 = vcmp.ge.f32.partialorder %v680, 0.0
      %vm845 = vcmp.ge.f32.partialorder %v683, 0.0
      %vm846 = vcmp.ge.f32.partialorder %v688, 0.0
      %vm847 = vcmp.ge.f32.partialorder %v691, 0.0
      %vm848 = vcmp.ge.f32.partialorder %v696, 0.0
      %vm849 = vcmp.ge.f32.partialorder %v699, 0.0
      %vm850 = vcmp.ge.f32.partialorder %v704, 0.0
      %vm851 = vcmp.ge.f32.partialorder %v707, 0.0
      %vm852 = vcmp.ge.f32.partialorder %v712, 0.0
      %vm853 = vcmp.ge.f32.partialorder %v715, 0.0
      %vm854 = vcmp.ge.f32.partialorder %v720, 0.0
      %vm855 = vcmp.ge.f32.partialorder %v723, 0.0
      %vm856 = vcmp.ge.f32.partialorder %v728, 0.0
      %vm857 = vcmp.ge.f32.partialorder %v731, 0.0
      %vm858 = vcmp.ge.f32.partialorder %v736, 0.0
      %vm859 = vcmp.ge.f32.partialorder %v739, 0.0
      %vm860 = vcmp.ge.f32.partialorder %v744, 0.0
      %vm861 = vcmp.ge.f32.partialorder %v747, 0.0
      %vm862 = vcmp.ge.f32.partialorder %v752, 0.0
      %vm863 = vcmp.ge.f32.partialorder %v755, 0.0
      %vm864 = vcmp.ge.f32.partialorder %v760, 0.0
      %vm865 = vcmp.ge.f32.partialorder %v763, 0.0
      %vm866 = vcmp.ge.f32.partialorder %v768, 0.0
      %vm867 = vcmp.ge.f32.partialorder %v771, 0.0
      %vm868 = vcmp.ge.f32.partialorder %v776, 0.0
      %vm869 = vcmp.ge.f32.partialorder %v779, 0.0
      %vm870 = vcmp.ge.f32.partialorder %v784, 0.0
      %vm871 = vcmp.ge.f32.partialorder %v787, 0.0
      %vm872 = vcmp.ge.f32.partialorder %v792, 0.0
      %vm873 = vcmp.ge.f32.partialorder %v795, 0.0
      %vm874 = vcmp.ge.f32.partialorder %v800, 0.0
      %vm875 = vcmp.ge.f32.partialorder %v803, 0.0
      %vm876 = vcmp.ge.f32.partialorder %v808, 0.0
      %vm877 = vcmp.ge.f32.partialorder %v811, 0.0
      %v878 = vmul.f32 %v560, 0.2
      %v879 = vmul.f32 %v563, 0.2
      %v880 = vmul.f32 %v568, 0.2
      %v881 = vmul.f32 %v571, 0.2
      %v882 = vmul.f32 %v576, 0.2
      %v883 = vmul.f32 %v579, 0.2
      %v884 = vmul.f32 %v584, 0.2
      %v885 = vmul.f32 %v587, 0.2
      %v886 = vmul.f32 %v592, 0.2
      %v887 = vmul.f32 %v595, 0.2
      %v888 = vmul.f32 %v600, 0.2
      %v889 = vmul.f32 %v603, 0.2
      %v890 = vmul.f32 %v608, 0.2
      %v891 = vmul.f32 %v611, 0.2
      %v892 = vmul.f32 %v616, 0.2
      %v893 = vmul.f32 %v619, 0.2
      %v894 = vmul.f32 %v624, 0.2
      %v895 = vmul.f32 %v627, 0.2
      %v896 = vmul.f32 %v632, 0.2
      %v897 = vmul.f32 %v635, 0.2
      %v898 = vmul.f32 %v640, 0.2
      %v899 = vmul.f32 %v643, 0.2
      %v900 = vmul.f32 %v648, 0.2
      %v901 = vmul.f32 %v651, 0.2
      %v902 = vmul.f32 %v656, 0.2
      %v903 = vmul.f32 %v659, 0.2
      %v904 = vmul.f32 %v664, 0.2
      %v905 = vmul.f32 %v667, 0.2
      %v906 = vmul.f32 %v672, 0.2
      %v907 = vmul.f32 %v675, 0.2
      %v908 = vmul.f32 %v680, 0.2
      %v909 = vmul.f32 %v683, 0.2
      %v910 = vmul.f32 %v688, 0.2
      %v911 = vmul.f32 %v691, 0.2
      %v912 = vmul.f32 %v696, 0.2
      %v913 = vmul.f32 %v699, 0.2
      %v914 = vmul.f32 %v704, 0.2
      %v915 = vmul.f32 %v707, 0.2
      %v916 = vmul.f32 %v712, 0.2
      %v917 = vmul.f32 %v715, 0.2
      %v918 = vmul.f32 %v720, 0.2
      %v919 = vmul.f32 %v723, 0.2
      %v920 = vmul.f32 %v728, 0.2
      %v921 = vmul.f32 %v731, 0.2
      %v922 = vmul.f32 %v736, 0.2
      %v923 = vmul.f32 %v739, 0.2
      %v924 = vmul.f32 %v744, 0.2
      %v925 = vmul.f32 %v747, 0.2
      %v926 = vmul.f32 %v752, 0.2
      %v927 = vmul.f32 %v755, 0.2
      %v928 = vmul.f32 %v760, 0.2
      %v929 = vmul.f32 %v763, 0.2
      %v930 = vmul.f32 %v768, 0.2
      %v931 = vmul.f32 %v771, 0.2
      %v932 = vmul.f32 %v776, 0.2
      %v933 = vmul.f32 %v779, 0.2
      %v934 = vmul.f32 %v784, 0.2
      %v935 = vmul.f32 %v787, 0.2
      %v936 = vmul.f32 %v792, 0.2
      %v937 = vmul.f32 %v795, 0.2
      %v938 = vmul.f32 %v800, 0.2
      %v939 = vmul.f32 %v803, 0.2
      %v940 = vmul.f32 %v808, 0.2
      %v941 = vmul.f32 %v811, 0.2
      %v942 = vsel %vm814, %v560, %v878
      %v943 = vsel %vm815, %v563, %v879
      %v944 = vsel %vm816, %v568, %v880
      %v945 = vsel %vm817, %v571, %v881
      %v946 = vsel %vm818, %v576, %v882
      %v947 = vsel %vm819, %v579, %v883
      %v948 = vsel %vm820, %v584, %v884
      %v949 = vsel %vm821, %v587, %v885
      %v950 = vsel %vm822, %v592, %v886
      %v951 = vsel %vm823, %v595, %v887
      %v952 = vsel %vm824, %v600, %v888
      %v953 = vsel %vm825, %v603, %v889
      %v954 = vsel %vm826, %v608, %v890
      %v955 = vsel %vm827, %v611, %v891
      %v956 = vsel %vm828, %v616, %v892
      %v957 = vsel %vm829, %v619, %v893
      %v958 = vsel %vm830, %v624, %v894
      %v959 = vsel %vm831, %v627, %v895
      %v960 = vsel %vm832, %v632, %v896
      %v961 = vsel %vm833, %v635, %v897
      %v962 = vsel %vm834, %v640, %v898
      %v963 = vsel %vm835, %v643, %v899
      %v964 = vsel %vm836, %v648, %v900
      %v965 = vsel %vm837, %v651, %v901
      %v966 = vsel %vm838, %v656, %v902
      %v967 = vsel %vm839, %v659, %v903
      %v968 = vsel %vm840, %v664, %v904
      %v969 = vsel %vm841, %v667, %v905
      %v970 = vsel %vm842, %v672, %v906
      %v971 = vsel %vm843, %v675, %v907
      %v972 = vsel %vm844, %v680, %v908
      %v973 = vsel %vm845, %v683, %v909
      %v974 = vsel %vm846, %v688, %v910
      %v975 = vsel %vm847, %v691, %v911
      %v976 = vsel %vm848, %v696, %v912
      %v977 = vsel %vm849, %v699, %v913
      %v978 = vsel %vm850, %v704, %v914
      %v979 = vsel %vm851, %v707, %v915
      %v980 = vsel %vm852, %v712, %v916
      %v981 = vsel %vm853, %v715, %v917
      %v982 = vsel %vm854, %v720, %v918
      %v983 = vsel %vm855, %v723, %v919
      %v984 = vsel %vm856, %v728, %v920
      %v985 = vsel %vm857, %v731, %v921
      %v986 = vsel %vm858, %v736, %v922
      %v987 = vsel %vm859, %v739, %v923
      %v988 = vsel %vm860, %v744, %v924
      %v989 = vsel %vm861, %v747, %v925
      %v990 = vsel %vm862, %v752, %v926
      %v991 = vsel %vm863, %v755, %v927
      %v992 = vsel %vm864, %v760, %v928
      %v993 = vsel %vm865, %v763, %v929
      %v994 = vsel %vm866, %v768, %v930
      %v995 = vsel %vm867, %v771, %v931
      %v996 = vsel %vm868, %v776, %v932
      %v997 = vsel %vm869, %v779, %v933
      %v998 = vsel %vm870, %v784, %v934
      %v999 = vsel %vm871, %v787, %v935
      %v1000 = vsel %vm872, %v792, %v936
      %v1001 = vsel %vm873, %v795, %v937
      %v1002 = vsel %vm874, %v800, %v938
      %v1003 = vsel %vm875, %v803, %v939
      %v1004 = vsel %vm876, %v808, %v940
      %v1005 = vsel %vm877, %v811, %v941
      %v1006 = vlaneseq
      %v1007 = vshrl.u32 %v1006, 7
      %v1008 = vsub.s32 1, %v1007
      %v1009 = vrot.slane %v245, %v1008
      %v1010 = vmul.f32 %v942, %v1009
      %v1011 = vmul.f32 %v943, %v1009
      %v1012 = vmul.f32 %v944, %v1009
      %v1013 = vmul.f32 %v945, %v1009
      %v1014 = vmul.f32 %v946, %v1009
      %v1015 = vmul.f32 %v947, %v1009
      %v1016 = vmul.f32 %v948, %v1009
      %v1017 = vmul.f32 %v949, %v1009
      %v1018 = vmul.f32 %v950, %v1009
      %v1019 = vmul.f32 %v951, %v1009
      %v1020 = vmul.f32 %v952, %v1009
      %v1021 = vmul.f32 %v953, %v1009
      %v1022 = vmul.f32 %v954, %v1009
      %v1023 = vmul.f32 %v955, %v1009
      %v1024 = vmul.f32 %v956, %v1009
      %v1025 = vmul.f32 %v957, %v1009
      %v1026 = vmul.f32 %v958, %v1009
      %v1027 = vmul.f32 %v959, %v1009
      %v1028 = vmul.f32 %v960, %v1009
      %v1029 = vmul.f32 %v961, %v1009
      %v1030 = vmul.f32 %v962, %v1009
      %v1031 = vmul.f32 %v963, %v1009
      %v1032 = vmul.f32 %v964, %v1009
      %v1033 = vmul.f32 %v965, %v1009
      %v1034 = vmul.f32 %v966, %v1009
      %v1035 = vmul.f32 %v967, %v1009
      %v1036 = vmul.f32 %v968, %v1009
      %v1037 = vmul.f32 %v969, %v1009
      %v1038 = vmul.f32 %v970, %v1009
      %v1039 = vmul.f32 %v971, %v1009
      %v1040 = vmul.f32 %v972, %v1009
      %v1041 = vmul.f32 %v973, %v1009
      %v1042 = vmul.f32 %v974, %v1009
      %v1043 = vmul.f32 %v975, %v1009
      %v1044 = vmul.f32 %v976, %v1009
      %v1045 = vmul.f32 %v977, %v1009
      %v1046 = vmul.f32 %v978, %v1009
      %v1047 = vmul.f32 %v979, %v1009
      %v1048 = vmul.f32 %v980, %v1009
      %v1049 = vmul.f32 %v981, %v1009
      %v1050 = vmul.f32 %v982, %v1009
      %v1051 = vmul.f32 %v983, %v1009
      %v1052 = vmul.f32 %v984, %v1009
      %v1053 = vmul.f32 %v985, %v1009
      %v1054 = vmul.f32 %v986, %v1009
      %v1055 = vmul.f32 %v987, %v1009
      %v1056 = vmul.f32 %v988, %v1009
      %v1057 = vmul.f32 %v989, %v1009
      %v1058 = vmul.f32 %v990, %v1009
      %v1059 = vmul.f32 %v991, %v1009
      %v1060 = vmul.f32 %v992, %v1009
      %v1061 = vmul.f32 %v993, %v1009
      %v1062 = vmul.f32 %v994, %v1009
      %v1063 = vmul.f32 %v995, %v1009
      %v1064 = vmul.f32 %v996, %v1009
      %v1065 = vmul.f32 %v997, %v1009
      %v1066 = vmul.f32 %v998, %v1009
      %v1067 = vmul.f32 %v999, %v1009
      %v1068 = vmul.f32 %v1000, %v1009
      %v1069 = vmul.f32 %v1001, %v1009
      %v1070 = vmul.f32 %v1002, %v1009
      %v1071 = vmul.f32 %v1003, %v1009
      %v1072 = vmul.f32 %v1004, %v1009
      %v1073 = vmul.f32 %v1005, %v1009
      %v1074 = vlaneseq
      %v1075 = vshrl.u32 %v1074, 7
      %v1076 = vsub.s32 2, %v1075
      %v1077 = vrot.slane %v245, %v1076
      %v1078 = vadd.f32 %v1010, %v1077
      %v1079 = vadd.f32 %v1011, %v1077
      %v1080 = vadd.f32 %v1012, %v1077
      %v1081 = vadd.f32 %v1013, %v1077
      %v1082 = vadd.f32 %v1014, %v1077
      %v1083 = vadd.f32 %v1015, %v1077
      %v1084 = vadd.f32 %v1016, %v1077
      %v1085 = vadd.f32 %v1017, %v1077
      %v1086 = vadd.f32 %v1018, %v1077
      %v1087 = vadd.f32 %v1019, %v1077
      %v1088 = vadd.f32 %v1020, %v1077
      %v1089 = vadd.f32 %v1021, %v1077
      %v1090 = vadd.f32 %v1022, %v1077
      %v1091 = vadd.f32 %v1023, %v1077
      %v1092 = vadd.f32 %v1024, %v1077
      %v1093 = vadd.f32 %v1025, %v1077
      %v1094 = vadd.f32 %v1026, %v1077
      %v1095 = vadd.f32 %v1027, %v1077
      %v1096 = vadd.f32 %v1028, %v1077
      %v1097 = vadd.f32 %v1029, %v1077
      %v1098 = vadd.f32 %v1030, %v1077
      %v1099 = vadd.f32 %v1031, %v1077
      %v1100 = vadd.f32 %v1032, %v1077
      %v1101 = vadd.f32 %v1033, %v1077
      %v1102 = vadd.f32 %v1034, %v1077
      %v1103 = vadd.f32 %v1035, %v1077
      %v1104 = vadd.f32 %v1036, %v1077
      %v1105 = vadd.f32 %v1037, %v1077
      %v1106 = vadd.f32 %v1038, %v1077
      %v1107 = vadd.f32 %v1039, %v1077
      %v1108 = vadd.f32 %v1040, %v1077
      %v1109 = vadd.f32 %v1041, %v1077
      %v1110 = vadd.f32 %v1042, %v1077
      %v1111 = vadd.f32 %v1043, %v1077
      %v1112 = vadd.f32 %v1044, %v1077
      %v1113 = vadd.f32 %v1045, %v1077
      %v1114 = vadd.f32 %v1046, %v1077
      %v1115 = vadd.f32 %v1047, %v1077
      %v1116 = vadd.f32 %v1048, %v1077
      %v1117 = vadd.f32 %v1049, %v1077
      %v1118 = vadd.f32 %v1050, %v1077
      %v1119 = vadd.f32 %v1051, %v1077
      %v1120 = vadd.f32 %v1052, %v1077
      %v1121 = vadd.f32 %v1053, %v1077
      %v1122 = vadd.f32 %v1054, %v1077
      %v1123 = vadd.f32 %v1055, %v1077
      %v1124 = vadd.f32 %v1056, %v1077
      %v1125 = vadd.f32 %v1057, %v1077
      %v1126 = vadd.f32 %v1058, %v1077
      %v1127 = vadd.f32 %v1059, %v1077
      %v1128 = vadd.f32 %v1060, %v1077
      %v1129 = vadd.f32 %v1061, %v1077
      %v1130 = vadd.f32 %v1062, %v1077
      %v1131 = vadd.f32 %v1063, %v1077
      %v1132 = vadd.f32 %v1064, %v1077
      %v1133 = vadd.f32 %v1065, %v1077
      %v1134 = vadd.f32 %v1066, %v1077
      %v1135 = vadd.f32 %v1067, %v1077
      %v1136 = vadd.f32 %v1068, %v1077
      %v1137 = vadd.f32 %v1069, %v1077
      %v1138 = vadd.f32 %v1070, %v1077
      %v1139 = vadd.f32 %v1071, %v1077
      %v1140 = vadd.f32 %v1072, %v1077
      %v1141 = vadd.f32 %v1073, %v1077
      %v1142 = vpack.c.bf16 %v1079, %v1078
      %v1143 = vpack.c.bf16 %v1081, %v1080
      %v1144 = vpack.c.bf16 %v1083, %v1082
      %v1145 = vpack.c.bf16 %v1085, %v1084
      %v1146 = vpack.c.bf16 %v1087, %v1086
      %v1147 = vpack.c.bf16 %v1089, %v1088
      %v1148 = vpack.c.bf16 %v1091, %v1090
      %v1149 = vpack.c.bf16 %v1093, %v1092
      %v1150 = vpack.c.bf16 %v1095, %v1094
      %v1151 = vpack.c.bf16 %v1097, %v1096
      %v1152 = vpack.c.bf16 %v1099, %v1098
      %v1153 = vpack.c.bf16 %v1101, %v1100
      %v1154 = vpack.c.bf16 %v1103, %v1102
      %v1155 = vpack.c.bf16 %v1105, %v1104
      %v1156 = vpack.c.bf16 %v1107, %v1106
      %v1157 = vpack.c.bf16 %v1109, %v1108
      %v1158 = vpack.c.bf16 %v1111, %v1110
      %v1159 = vpack.c.bf16 %v1113, %v1112
      %v1160 = vpack.c.bf16 %v1115, %v1114
      %v1161 = vpack.c.bf16 %v1117, %v1116
      %v1162 = vpack.c.bf16 %v1119, %v1118
      %v1163 = vpack.c.bf16 %v1121, %v1120
      %v1164 = vpack.c.bf16 %v1123, %v1122
      %v1165 = vpack.c.bf16 %v1125, %v1124
      %v1166 = vpack.c.bf16 %v1127, %v1126
      %v1167 = vpack.c.bf16 %v1129, %v1128
      %v1168 = vpack.c.bf16 %v1131, %v1130
      %v1169 = vpack.c.bf16 %v1133, %v1132
      %v1170 = vpack.c.bf16 %v1135, %v1134
      %v1171 = vpack.c.bf16 %v1137, %v1136
      %v1172 = vpack.c.bf16 %v1139, %v1138
      %v1173 = vpack.c.bf16 %v1141, %v1140
      %v1206 = vunpack.c.l.b16 %v1142
      %v1207 = vunpack.c.h.b16 %v1142
      %v1208 = vunpack.c.l.b16 %v1143
      %v1209 = vunpack.c.h.b16 %v1143
      %v1210 = vunpack.c.l.b16 %v1144
      %v1211 = vunpack.c.h.b16 %v1144
      %v1212 = vunpack.c.l.b16 %v1145
      %v1213 = vunpack.c.h.b16 %v1145
      %v1214 = vunpack.c.l.b16 %v1146
      %v1215 = vunpack.c.h.b16 %v1146
      %v1216 = vunpack.c.l.b16 %v1147
      %v1217 = vunpack.c.h.b16 %v1147
      %v1218 = vunpack.c.l.b16 %v1148
      %v1219 = vunpack.c.h.b16 %v1148
      %v1220 = vunpack.c.l.b16 %v1149
      %v1221 = vunpack.c.h.b16 %v1149
      %v1222 = vunpack.c.l.b16 %v1150
      %v1223 = vunpack.c.h.b16 %v1150
      %v1224 = vunpack.c.l.b16 %v1151
      %v1225 = vunpack.c.h.b16 %v1151
      %v1226 = vunpack.c.l.b16 %v1152
      %v1227 = vunpack.c.h.b16 %v1152
      %v1228 = vunpack.c.l.b16 %v1153
      %v1229 = vunpack.c.h.b16 %v1153
      %v1230 = vunpack.c.l.b16 %v1154
      %v1231 = vunpack.c.h.b16 %v1154
      %v1232 = vunpack.c.l.b16 %v1155
      %v1233 = vunpack.c.h.b16 %v1155
      %v1234 = vunpack.c.l.b16 %v1156
      %v1235 = vunpack.c.h.b16 %v1156
      %v1236 = vunpack.c.l.b16 %v1157
      %v1237 = vunpack.c.h.b16 %v1157
      %v1238 = vunpack.c.l.b16 %v1158
      %v1239 = vunpack.c.h.b16 %v1158
      %v1240 = vunpack.c.l.b16 %v1159
      %v1241 = vunpack.c.h.b16 %v1159
      %v1242 = vunpack.c.l.b16 %v1160
      %v1243 = vunpack.c.h.b16 %v1160
      %v1244 = vunpack.c.l.b16 %v1161
      %v1245 = vunpack.c.h.b16 %v1161
      %v1246 = vunpack.c.l.b16 %v1162
      %v1247 = vunpack.c.h.b16 %v1162
      %v1248 = vunpack.c.l.b16 %v1163
      %v1249 = vunpack.c.h.b16 %v1163
      %v1250 = vunpack.c.l.b16 %v1164
      %v1251 = vunpack.c.h.b16 %v1164
      %v1252 = vunpack.c.l.b16 %v1165
      %v1253 = vunpack.c.h.b16 %v1165
      %v1254 = vunpack.c.l.b16 %v1166
      %v1255 = vunpack.c.h.b16 %v1166
      %v1256 = vunpack.c.l.b16 %v1167
      %v1257 = vunpack.c.h.b16 %v1167
      %v1258 = vunpack.c.l.b16 %v1168
      %v1259 = vunpack.c.h.b16 %v1168
      %v1260 = vunpack.c.l.b16 %v1169
      %v1261 = vunpack.c.h.b16 %v1169
      %v1262 = vunpack.c.l.b16 %v1170
      %v1263 = vunpack.c.h.b16 %v1170
      %v1264 = vunpack.c.l.b16 %v1171
      %v1265 = vunpack.c.h.b16 %v1171
      %v1266 = vunpack.c.l.b16 %v1172
      %v1267 = vunpack.c.h.b16 %v1172
      %v1268 = vunpack.c.l.b16 %v1173
      %v1269 = vunpack.c.h.b16 %v1173
      %v1270 = vpack.c.b16 %v1206, %v1206
      %v1271 = vpack.c.b16 %v1207, %v1207
      %v1272 = vpack.c.b16 %v1208, %v1208
      %v1273 = vpack.c.b16 %v1209, %v1209
      %v1274 = vpack.c.b16 %v1210, %v1210
      %v1275 = vpack.c.b16 %v1211, %v1211
      %v1276 = vpack.c.b16 %v1212, %v1212
      %v1277 = vpack.c.b16 %v1213, %v1213
      %v1278 = vpack.c.b16 %v1214, %v1214
      %v1279 = vpack.c.b16 %v1215, %v1215
      %v1280 = vpack.c.b16 %v1216, %v1216
      %v1281 = vpack.c.b16 %v1217, %v1217
      %v1282 = vpack.c.b16 %v1218, %v1218
      %v1283 = vpack.c.b16 %v1219, %v1219
      %v1284 = vpack.c.b16 %v1220, %v1220
      %v1285 = vpack.c.b16 %v1221, %v1221
      %v1286 = vpack.c.b16 %v1222, %v1222
      %v1287 = vpack.c.b16 %v1223, %v1223
      %v1288 = vpack.c.b16 %v1224, %v1224
      %v1289 = vpack.c.b16 %v1225, %v1225
      %v1290 = vpack.c.b16 %v1226, %v1226
      %v1291 = vpack.c.b16 %v1227, %v1227
      %v1292 = vpack.c.b16 %v1228, %v1228
      %v1293 = vpack.c.b16 %v1229, %v1229
      %v1294 = vpack.c.b16 %v1230, %v1230
      %v1295 = vpack.c.b16 %v1231, %v1231
      %v1296 = vpack.c.b16 %v1232, %v1232
      %v1297 = vpack.c.b16 %v1233, %v1233
      %v1298 = vpack.c.b16 %v1234, %v1234
      %v1299 = vpack.c.b16 %v1235, %v1235
      %v1300 = vpack.c.b16 %v1236, %v1236
      %v1301 = vpack.c.b16 %v1237, %v1237
      %v1302 = vpack.c.b16 %v1238, %v1238
      %v1303 = vpack.c.b16 %v1239, %v1239
      %v1304 = vpack.c.b16 %v1240, %v1240
      %v1305 = vpack.c.b16 %v1241, %v1241
      %v1306 = vpack.c.b16 %v1242, %v1242
      %v1307 = vpack.c.b16 %v1243, %v1243
      %v1308 = vpack.c.b16 %v1244, %v1244
      %v1309 = vpack.c.b16 %v1245, %v1245
      %v1310 = vpack.c.b16 %v1246, %v1246
      %v1311 = vpack.c.b16 %v1247, %v1247
      %v1312 = vpack.c.b16 %v1248, %v1248
      %v1313 = vpack.c.b16 %v1249, %v1249
      %v1314 = vpack.c.b16 %v1250, %v1250
      %v1315 = vpack.c.b16 %v1251, %v1251
      %v1316 = vpack.c.b16 %v1252, %v1252
      %v1317 = vpack.c.b16 %v1253, %v1253
      %v1318 = vpack.c.b16 %v1254, %v1254
      %v1319 = vpack.c.b16 %v1255, %v1255
      %v1320 = vpack.c.b16 %v1256, %v1256
      %v1321 = vpack.c.b16 %v1257, %v1257
      %v1322 = vpack.c.b16 %v1258, %v1258
      %v1323 = vpack.c.b16 %v1259, %v1259
      %v1324 = vpack.c.b16 %v1260, %v1260
      %v1325 = vpack.c.b16 %v1261, %v1261
      %v1326 = vpack.c.b16 %v1262, %v1262
      %v1327 = vpack.c.b16 %v1263, %v1263
      %v1328 = vpack.c.b16 %v1264, %v1264
      %v1329 = vpack.c.b16 %v1265, %v1265
      %v1330 = vpack.c.b16 %v1266, %v1266
      %v1331 = vpack.c.b16 %v1267, %v1267
      %v1332 = vpack.c.b16 %v1268, %v1268
      %v1333 = vpack.c.b16 %v1269, %v1269
      %vm1398 = vcmask 60416
      %1399 = vst.msk [vmem:[%s172] sm:$0xf] %vm1398, %v1270
      %1400 = vst.msk [vmem:[%s172 + $0x4] sm:$0xf] %vm1398, %v1271
      %1401 = vst.msk [vmem:[%s172 + $0x8] sm:$0xf] %vm1398, %v1272
      %1402 = vst.msk [vmem:[%s172 + $0xc] sm:$0xf] %vm1398, %v1273
      %1403 = vst.msk [vmem:[%s172 + $0x10] sm:$0xf] %vm1398, %v1274
      %1404 = vst.msk [vmem:[%s172 + $0x14] sm:$0xf] %vm1398, %v1275
      %1405 = vst.msk [vmem:[%s172 + $0x18] sm:$0xf] %vm1398, %v1276
      %1406 = vst.msk [vmem:[%s172 + $0x1c] sm:$0xf] %vm1398, %v1277
      %1407 = vst.msk [vmem:[%s172 + $0x20] sm:$0xf] %vm1398, %v1278
      %1408 = vst.msk [vmem:[%s172 + $0x24] sm:$0xf] %vm1398, %v1279
      %1409 = vst.msk [vmem:[%s172 + $0x28] sm:$0xf] %vm1398, %v1280
      %1410 = vst.msk [vmem:[%s172 + $0x2c] sm:$0xf] %vm1398, %v1281
      %1411 = vst.msk [vmem:[%s172 + $0x30] sm:$0xf] %vm1398, %v1282
      %1412 = vst.msk [vmem:[%s172 + $0x34] sm:$0xf] %vm1398, %v1283
      %1413 = vst.msk [vmem:[%s172 + $0x38] sm:$0xf] %vm1398, %v1284
      %1414 = vst.msk [vmem:[%s172 + $0x3c] sm:$0xf] %vm1398, %v1285
      %1415 = vst.msk [vmem:[%s172 + $0x40] sm:$0xf] %vm1398, %v1286
      %1416 = vst.msk [vmem:[%s172 + $0x44] sm:$0xf] %vm1398, %v1287
      %1417 = vst.msk [vmem:[%s172 + $0x48] sm:$0xf] %vm1398, %v1288
      %1418 = vst.msk [vmem:[%s172 + $0x4c] sm:$0xf] %vm1398, %v1289
      %1419 = vst.msk [vmem:[%s172 + $0x50] sm:$0xf] %vm1398, %v1290
      %1420 = vst.msk [vmem:[%s172 + $0x54] sm:$0xf] %vm1398, %v1291
      %1421 = vst.msk [vmem:[%s172 + $0x58] sm:$0xf] %vm1398, %v1292
      %1422 = vst.msk [vmem:[%s172 + $0x5c] sm:$0xf] %vm1398, %v1293
      %1423 = vst.msk [vmem:[%s172 + $0x60] sm:$0xf] %vm1398, %v1294
      %1424 = vst.msk [vmem:[%s172 + $0x64] sm:$0xf] %vm1398, %v1295
      %1425 = vst.msk [vmem:[%s172 + $0x68] sm:$0xf] %vm1398, %v1296
      %1426 = vst.msk [vmem:[%s172 + $0x6c] sm:$0xf] %vm1398, %v1297
      %1427 = vst.msk [vmem:[%s172 + $0x70] sm:$0xf] %vm1398, %v1298
      %1428 = vst.msk [vmem:[%s172 + $0x74] sm:$0xf] %vm1398, %v1299
      %1429 = vst.msk [vmem:[%s172 + $0x78] sm:$0xf] %vm1398, %v1300
      %1430 = vst.msk [vmem:[%s172 + $0x7c] sm:$0xf] %vm1398, %v1301
      %1431 = vst.msk [vmem:[%s172 + $0x80] sm:$0xf] %vm1398, %v1302
      %1432 = vst.msk [vmem:[%s172 + $0x84] sm:$0xf] %vm1398, %v1303
      %1433 = vst.msk [vmem:[%s172 + $0x88] sm:$0xf] %vm1398, %v1304
      %1434 = vst.msk [vmem:[%s172 + $0x8c] sm:$0xf] %vm1398, %v1305
      %1435 = vst.msk [vmem:[%s172 + $0x90] sm:$0xf] %vm1398, %v1306
      %1436 = vst.msk [vmem:[%s172 + $0x94] sm:$0xf] %vm1398, %v1307
      %1437 = vst.msk [vmem:[%s172 + $0x98] sm:$0xf] %vm1398, %v1308
      %1438 = vst.msk [vmem:[%s172 + $0x9c] sm:$0xf] %vm1398, %v1309
      %1439 = vst.msk [vmem:[%s172 + $0xa0] sm:$0xf] %vm1398, %v1310
      %1440 = vst.msk [vmem:[%s172 + $0xa4] sm:$0xf] %vm1398, %v1311
      %1441 = vst.msk [vmem:[%s172 + $0xa8] sm:$0xf] %vm1398, %v1312
      %1442 = vst.msk [vmem:[%s172 + $0xac] sm:$0xf] %vm1398, %v1313
      %1443 = vst.msk [vmem:[%s172 + $0xb0] sm:$0xf] %vm1398, %v1314
      %1444 = vst.msk [vmem:[%s172 + $0xb4] sm:$0xf] %vm1398, %v1315
      %1445 = vst.msk [vmem:[%s172 + $0xb8] sm:$0xf] %vm1398, %v1316
      %1446 = vst.msk [vmem:[%s172 + $0xbc] sm:$0xf] %vm1398, %v1317
      %1447 = vst.msk [vmem:[%s172 + $0xc0] sm:$0xf] %vm1398, %v1318
      %1448 = vst.msk [vmem:[%s172 + $0xc4] sm:$0xf] %vm1398, %v1319
      %1449 = vst.msk [vmem:[%s172 + $0xc8] sm:$0xf] %vm1398, %v1320
      %1450 = vst.msk [vmem:[%s172 + $0xcc] sm:$0xf] %vm1398, %v1321
      %1451 = vst.msk [vmem:[%s172 + $0xd0] sm:$0xf] %vm1398, %v1322
      %1452 = vst.msk [vmem:[%s172 + $0xd4] sm:$0xf] %vm1398, %v1323
      %1453 = vst.msk [vmem:[%s172 + $0xd8] sm:$0xf] %vm1398, %v1324
      %1454 = vst.msk [vmem:[%s172 + $0xdc] sm:$0xf] %vm1398, %v1325
      %1455 = vst.msk [vmem:[%s172 + $0xe0] sm:$0xf] %vm1398, %v1326
      %1456 = vst.msk [vmem:[%s172 + $0xe4] sm:$0xf] %vm1398, %v1327
      %1457 = vst.msk [vmem:[%s172 + $0xe8] sm:$0xf] %vm1398, %v1328
      %1458 = vst.msk [vmem:[%s172 + $0xec] sm:$0xf] %vm1398, %v1329
      %1459 = vst.msk [vmem:[%s172 + $0xf0] sm:$0xf] %vm1398, %v1330
      %1460 = vst.msk [vmem:[%s172 + $0xf4] sm:$0xf] %vm1398, %v1331
      %1461 = vst.msk [vmem:[%s172 + $0xf8] sm:$0xf] %vm1398, %v1332
      %1462 = vst.msk [vmem:[%s172 + $0xfc] sm:$0xf] %vm1398, %v1333
      %s1463 = smul.u32 64, %s14
      %p1464 = scmp.lt.s32.totalorder %s1463, 255
      %s1465 = scalar_select %p1464, %s1463, 255
      %s1466 = smul.addr %s1465, 4
      %s1467 = scalar_lea.vmem %s3, %s1466
      // Predicated region
      $region33: #{vae1_forward.28} parent=31 // pred_check
        %p1468 = pneg %p100
      $region34: #{vae1_forward.28} parent=31 // pred_check_branch
        %1470 = sbr.rel (%p1468) target = $region36
      $region35: #{vae1_forward.28} parent=31 // pred_region
        %s1471 = smul.u32 64, %s14
      $region36: #{vae1_forward.28} parent=31 // pred_fallthru
        _
    $region32: #{vae1_forward.28} parent=5 // pred_fallthru
      _
    %p1472 = scmp.le.s32.totalorder 2, %s9
    // Predicated region
    $region37: #{vae1_forward.28} parent=5 // pred_check
      %p1473 = pneg %p1472
    $region38: #{vae1_forward.28} parent=5 // pred_check_branch
      %1475 = sbr.rel (%p1473) target = $region40
    $region39: #{vae1_forward.28} parent=5 // pred_region
      %s1476 = ssub.s32 %s9, 2
      // Predicated region
      $region41: #{vae1_forward.28} parent=39 // pred_check
        %p1477 = pneg %p106
      $region42: #{vae1_forward.28} parent=39 // pred_check_branch
        %1479 = sbr.rel (%p1477) target = $region44
      $region43: #{vae1_forward.28} parent=39 // pred_region
        %s1480 = smul.u32 64, %s15
        %p1481 = scmp.lt.s32.totalorder %s1480, 255
        %s1482 = scalar_select %p1481, %s1480, 255
        %s1483 = smul.addr %s1482, 4
        %s1484 = scalar_lea.vmem %s3, %s1483
      $region44: #{vae1_forward.28} parent=39 // pred_fallthru
        _
    $region40: #{vae1_forward.28} parent=5 // pred_fallthru
      _
  $region6: #{vae1_forward.28} parent=0 // loop_footer
    %s13 = sadd.s32 1, %s9
  $region7: #{vae1_forward.28} parent=0 // loop_footer_branch
    %8 = sbr.rel target = $region3
  $region8: #{vae1_forward.28} parent=0 // loop_exit
    _

// kernel: vae1_forward.29
$region0: #{vae1_forward.29}
  #allocation0 [shape = 'u32[]', space=smem, size = 0x4, offset = 0x4, fixed_abs, tag = 'smem constant byte address 0x4 - core index']
  #allocation1 [shape = 'u32[144,128]{1,0:T(1,128)}', space=vmem, size = 0x12000, scoped, tag = 'internal scratch']
  %s0 = inlined_call_operand.vmem [shape: bf16[512,128], index: 0, kind: input, shape index: {}]
  %s1 = inlined_call_operand.vmem [shape: bf16[128,16], index: 1, kind: input, shape index: {}]
  %s2 = inlined_call_operand.vmem [shape: f32[3,16], index: 2, kind: input, shape index: {}]
  %s3 = inlined_call_operand.vmem [shape: bf16[512,16], index: 3, kind: output, shape index: {}]
  %s4 = sld [smem:[#allocation0]]
  $region22: #{vae1_forward.29} parent=0
    _
  %s6 = ssub.s32 1, %s4
  %s7 = scalar_select 0, %s6, %s4
  // Predicated region
  $region2: #{vae1_forward.29} parent=0 // pred_check
    _
  $region3: #{vae1_forward.29} parent=0 // pred_check_branch
    %9 = sbr.rel (0) target = $region5
  $region4: #{vae1_forward.29} parent=0 // pred_region
    _
  $region5: #{vae1_forward.29} parent=0 // pred_fallthru
    _
  // Predicated region
  $region6: #{vae1_forward.29} parent=0 // pred_check
    _
  $region7: #{vae1_forward.29} parent=0 // pred_check_branch
    %11 = sbr.rel (0) target = $region9
  $region8: #{vae1_forward.29} parent=0 // pred_region
    _
  $region9: #{vae1_forward.29} parent=0 // pred_fallthru
    _
  // Predicated region
  $region10: #{vae1_forward.29} parent=0 // pred_check
    _
  $region11: #{vae1_forward.29} parent=0 // pred_check_branch
    %13 = sbr.rel (0) target = $region13
  $region12: #{vae1_forward.29} parent=0 // pred_region
    _
  $region13: #{vae1_forward.29} parent=0 // pred_fallthru
    _
  %v15 = vld [vmem:[%s0] sm:$0xf]
  %v16 = vld [vmem:[%s0 + $0x4] sm:$0xf]
  %v17 = vld [vmem:[%s0 + $0x8] sm:$0xf]
  %v18 = vld [vmem:[%s0 + $0xc] sm:$0xf]
  %v19 = vld [vmem:[%s0 + $0x10] sm:$0xf]
  %v20 = vld [vmem:[%s0 + $0x14] sm:$0xf]
  %v21 = vld [vmem:[%s0 + $0x18] sm:$0xf]
  %v22 = vld [vmem:[%s0 + $0x1c] sm:$0xf]
  %v23 = vld [vmem:[%s0 + $0x20] sm:$0xf]
  %v24 = vld [vmem:[%s0 + $0x24] sm:$0xf]
  %v25 = vld [vmem:[%s0 + $0x28] sm:$0xf]
  %v26 = vld [vmem:[%s0 + $0x2c] sm:$0xf]
  %v27 = vld [vmem:[%s0 + $0x30] sm:$0xf]
  %v28 = vld [vmem:[%s0 + $0x34] sm:$0xf]
  %v29 = vld [vmem:[%s0 + $0x38] sm:$0xf]
  %v30 = vld [vmem:[%s0 + $0x3c] sm:$0xf]
  %v31 = vld [vmem:[%s0 + $0x40] sm:$0xf]
  %v32 = vld [vmem:[%s0 + $0x44] sm:$0xf]
  %v33 = vld [vmem:[%s0 + $0x48] sm:$0xf]
  %v34 = vld [vmem:[%s0 + $0x4c] sm:$0xf]
  %v35 = vld [vmem:[%s0 + $0x50] sm:$0xf]
  %v36 = vld [vmem:[%s0 + $0x54] sm:$0xf]
  %v37 = vld [vmem:[%s0 + $0x58] sm:$0xf]
  %v38 = vld [vmem:[%s0 + $0x5c] sm:$0xf]
  %v39 = vld [vmem:[%s0 + $0x60] sm:$0xf]
  %v40 = vld [vmem:[%s0 + $0x64] sm:$0xf]
  %v41 = vld [vmem:[%s0 + $0x68] sm:$0xf]
  %v42 = vld [vmem:[%s0 + $0x6c] sm:$0xf]
  %v43 = vld [vmem:[%s0 + $0x70] sm:$0xf]
  %v44 = vld [vmem:[%s0 + $0x74] sm:$0xf]
  %v45 = vld [vmem:[%s0 + $0x78] sm:$0xf]
  %v46 = vld [vmem:[%s0 + $0x7c] sm:$0xf]
  %v47 = vld [vmem:[%s0 + $0x80] sm:$0xf]
  %v48 = vld [vmem:[%s0 + $0x84] sm:$0xf]
  %v49 = vld [vmem:[%s0 + $0x88] sm:$0xf]
  %v50 = vld [vmem:[%s0 + $0x8c] sm:$0xf]
  %v51 = vld [vmem:[%s0 + $0x90] sm:$0xf]
  %v52 = vld [vmem:[%s0 + $0x94] sm:$0xf]
  %v53 = vld [vmem:[%s0 + $0x98] sm:$0xf]
  %v54 = vld [vmem:[%s0 + $0x9c] sm:$0xf]
  %v55 = vld [vmem:[%s0 + $0xa0] sm:$0xf]
  %v56 = vld [vmem:[%s0 + $0xa4] sm:$0xf]
  %v57 = vld [vmem:[%s0 + $0xa8] sm:$0xf]
  %v58 = vld [vmem:[%s0 + $0xac] sm:$0xf]
  %v59 = vld [vmem:[%s0 + $0xb0] sm:$0xf]
  %v60 = vld [vmem:[%s0 + $0xb4] sm:$0xf]
  %v61 = vld [vmem:[%s0 + $0xb8] sm:$0xf]
  %v62 = vld [vmem:[%s0 + $0xbc] sm:$0xf]
  %v63 = vld [vmem:[%s0 + $0xc0] sm:$0xf]
  %v64 = vld [vmem:[%s0 + $0xc4] sm:$0xf]
  %v65 = vld [vmem:[%s0 + $0xc8] sm:$0xf]
  %v66 = vld [vmem:[%s0 + $0xcc] sm:$0xf]
  %v67 = vld [vmem:[%s0 + $0xd0] sm:$0xf]
  %v68 = vld [vmem:[%s0 + $0xd4] sm:$0xf]
  %v69 = vld [vmem:[%s0 + $0xd8] sm:$0xf]
  %v70 = vld [vmem:[%s0 + $0xdc] sm:$0xf]
  %v71 = vld [vmem:[%s0 + $0xe0] sm:$0xf]
  %v72 = vld [vmem:[%s0 + $0xe4] sm:$0xf]
  %v73 = vld [vmem:[%s0 + $0xe8] sm:$0xf]
  %v74 = vld [vmem:[%s0 + $0xec] sm:$0xf]
  %v75 = vld [vmem:[%s0 + $0xf0] sm:$0xf]
  %v76 = vld [vmem:[%s0 + $0xf4] sm:$0xf]
  %v77 = vld [vmem:[%s0 + $0xf8] sm:$0xf]
  %v78 = vld [vmem:[%s0 + $0xfc] sm:$0xf]
  %v79 = vld [vmem:[%s1] sm:$0xf]
  %v80 = vld [vmem:[%s1 + $0x4] sm:$0xf]
  %v81 = vld [vmem:[%s1 + $0x8] sm:$0xf]
  %v82 = vld [vmem:[%s1 + $0xc] sm:$0xf]
  %v83 = vld [vmem:[%s1 + $0x10] sm:$0xf]
  %v84 = vld [vmem:[%s1 + $0x14] sm:$0xf]
  %v85 = vld [vmem:[%s1 + $0x18] sm:$0xf]
  %v86 = vld [vmem:[%s1 + $0x1c] sm:$0xf]
  %v87 = vld [vmem:[%s1 + $0x20] sm:$0xf]
  %v88 = vld [vmem:[%s1 + $0x24] sm:$0xf]
  %v89 = vld [vmem:[%s1 + $0x28] sm:$0xf]
  %v90 = vld [vmem:[%s1 + $0x2c] sm:$0xf]
  %v91 = vld [vmem:[%s1 + $0x30] sm:$0xf]
  %v92 = vld [vmem:[%s1 + $0x34] sm:$0xf]
  %v93 = vld [vmem:[%s1 + $0x38] sm:$0xf]
  %v94 = vld [vmem:[%s1 + $0x3c] sm:$0xf]
  %v95 = vld [vmem:[%s2] sm:$0x7]
  %v96 = vlaneseq
  %v97 = vshrl.u32 %v96, 7
  %v98 = vsub.s32 0, %v97
  %v99 = vrot.slane %v95, %v98
  %v164 = vunpack.c.l.b16 %v15
  %v165 = vunpack.c.l.b16 %v16
  %v166 = vunpack.c.l.b16 %v17
  %v167 = vunpack.c.l.b16 %v18
  %v168 = vunpack.c.l.b16 %v19
  %v169 = vunpack.c.l.b16 %v20
  %v170 = vunpack.c.l.b16 %v21
  %v171 = vunpack.c.l.b16 %v22
  %v172 = vunpack.c.l.b16 %v23
  %v173 = vunpack.c.l.b16 %v24
  %v174 = vunpack.c.l.b16 %v25
  %v175 = vunpack.c.l.b16 %v26
  %v176 = vunpack.c.l.b16 %v27
  %v177 = vunpack.c.l.b16 %v28
  %v178 = vunpack.c.l.b16 %v29
  %v179 = vunpack.c.l.b16 %v30
  %v180 = vunpack.c.l.b16 %v31
  %v181 = vunpack.c.l.b16 %v32
  %v182 = vunpack.c.l.b16 %v33
  %v183 = vunpack.c.l.b16 %v34
  %v184 = vunpack.c.l.b16 %v35
  %v185 = vunpack.c.l.b16 %v36
  %v186 = vunpack.c.l.b16 %v37
  %v187 = vunpack.c.l.b16 %v38
  %v188 = vunpack.c.l.b16 %v39
  %v189 = vunpack.c.l.b16 %v40
  %v190 = vunpack.c.l.b16 %v41
  %v191 = vunpack.c.l.b16 %v42
  %v192 = vunpack.c.l.b16 %v43
  %v193 = vunpack.c.l.b16 %v44
  %v194 = vunpack.c.l.b16 %v45
  %v195 = vunpack.c.l.b16 %v46
  %v196 = vunpack.c.l.b16 %v47
  %v197 = vunpack.c.l.b16 %v48
  %v198 = vunpack.c.l.b16 %v49
  %v199 = vunpack.c.l.b16 %v50
  %v200 = vunpack.c.l.b16 %v51
  %v201 = vunpack.c.l.b16 %v52
  %v202 = vunpack.c.l.b16 %v53
  %v203 = vunpack.c.l.b16 %v54
  %v204 = vunpack.c.l.b16 %v55
  %v205 = vunpack.c.l.b16 %v56
  %v206 = vunpack.c.l.b16 %v57
  %v207 = vunpack.c.l.b16 %v58
  %v208 = vunpack.c.l.b16 %v59
  %v209 = vunpack.c.l.b16 %v60
  %v210 = vunpack.c.l.b16 %v61
  %v211 = vunpack.c.l.b16 %v62
  %v212 = vunpack.c.l.b16 %v63
  %v213 = vunpack.c.l.b16 %v64
  %v214 = vunpack.c.l.b16 %v65
  %v215 = vunpack.c.l.b16 %v66
  %v216 = vunpack.c.l.b16 %v67
  %v217 = vunpack.c.l.b16 %v68
  %v218 = vunpack.c.l.b16 %v69
  %v219 = vunpack.c.l.b16 %v70
  %v220 = vunpack.c.l.b16 %v71
  %v221 = vunpack.c.l.b16 %v72
  %v222 = vunpack.c.l.b16 %v73
  %v223 = vunpack.c.l.b16 %v74
  %v224 = vunpack.c.l.b16 %v75
  %v225 = vunpack.c.l.b16 %v76
  %v226 = vunpack.c.l.b16 %v77
  %v227 = vunpack.c.l.b16 %v78
  %v228 = vpack.c.b16 %v165, %v164
  %v229 = vpack.c.b16 %v167, %v166
  %v230 = vpack.c.b16 %v169, %v168
  %v231 = vpack.c.b16 %v171, %v170
  %v232 = vpack.c.b16 %v173, %v172
  %v233 = vpack.c.b16 %v175, %v174
  %v234 = vpack.c.b16 %v177, %v176
  %v235 = vpack.c.b16 %v179, %v178
  %v236 = vpack.c.b16 %v181, %v180
  %v237 = vpack.c.b16 %v183, %v182
  %v238 = vpack.c.b16 %v185, %v184
  %v239 = vpack.c.b16 %v187, %v186
  %v240 = vpack.c.b16 %v189, %v188
  %v241 = vpack.c.b16 %v191, %v190
  %v242 = vpack.c.b16 %v193, %v192
  %v243 = vpack.c.b16 %v195, %v194
  %v244 = vpack.c.b16 %v197, %v196
  %v245 = vpack.c.b16 %v199, %v198
  %v246 = vpack.c.b16 %v201, %v200
  %v247 = vpack.c.b16 %v203, %v202
  %v248 = vpack.c.b16 %v205, %v204
  %v249 = vpack.c.b16 %v207, %v206
  %v250 = vpack.c.b16 %v209, %v208
  %v251 = vpack.c.b16 %v211, %v210
  %v252 = vpack.c.b16 %v213, %v212
  %v253 = vpack.c.b16 %v215, %v214
  %v254 = vpack.c.b16 %v217, %v216
  %v255 = vpack.c.b16 %v219, %v218
  %v256 = vpack.c.b16 %v221, %v220
  %v257 = vpack.c.b16 %v223, %v222
  %v258 = vpack.c.b16 %v225, %v224
  %v259 = vpack.c.b16 %v227, %v226
  %v308 = vunpack.c.l.b16 %v79
  %v309 = vunpack.c.l.b16 %v80
  %v310 = vunpack.c.l.b16 %v81
  %v311 = vunpack.c.l.b16 %v82
  %v312 = vunpack.c.l.b16 %v83
  %v313 = vunpack.c.l.b16 %v84
  %v314 = vunpack.c.l.b16 %v85
  %v315 = vunpack.c.l.b16 %v86
  %v316 = vunpack.c.l.b16 %v87
  %v317 = vunpack.c.l.b16 %v88
  %v318 = vunpack.c.l.b16 %v89
  %v319 = vunpack.c.l.b16 %v90
  %v320 = vunpack.c.l.b16 %v91
  %v321 = vunpack.c.l.b16 %v92
  %v322 = vunpack.c.l.b16 %v93
  %v323 = vunpack.c.l.b16 %v94
  %v324 = vpack.c.b16 %v309, %v308
  %v325 = vpack.c.b16 %v311, %v310
  %v326 = vpack.c.b16 %v313, %v312
  %v327 = vpack.c.b16 %v315, %v314
  %v328 = vpack.c.b16 %v317, %v316
  %v329 = vpack.c.b16 %v319, %v318
  %v330 = vpack.c.b16 %v321, %v320
  %v331 = vpack.c.b16 %v323, %v322
  %340 = vmatprep.subr.bf16.mxu0 0
  %341 = vmatpush1.bf16.msra.mxu0 %v324
  %342 = vmatprep.subr.bf16.mxu0 0
  %343 = vmatpush1.bf16.msra.mxu0 %v325
  %344 = vmatprep.subr.bf16.mxu0 0
  %345 = vmatpush1.bf16.msra.mxu0 %v326
  %346 = vmatprep.subr.bf16.mxu0 0
  %347 = vmatpush1.bf16.msra.mxu0 %v327
  %348 = vmatprep.subr.bf16.mxu0 0
  %349 = vmatpush1.bf16.msra.mxu0 %v328
  %350 = vmatprep.subr.bf16.mxu0 0
  %351 = vmatpush1.bf16.msra.mxu0 %v329
  %352 = vmatprep.subr.bf16.mxu0 0
  %353 = vmatpush1.bf16.msra.mxu0 %v330
  %354 = vmatprep.subr.bf16.mxu0 0
  %355 = vmatpush1.bf16.msra.mxu0 %v331
  %356 = vmatprep.subr.bf16.mxu0 0
  %357 = vmatpush1.bf16.msra.mxu0 0
  %358 = vmatprep.subr.bf16.mxu0 0
  %359 = vmatpush1.bf16.msra.mxu0 0
  %360 = vmatprep.subr.bf16.mxu0 0
  %361 = vmatpush1.bf16.msra.mxu0 0
  %362 = vmatprep.subr.bf16.mxu0 0
  %363 = vmatpush1.bf16.msra.mxu0 0
  %364 = vmatprep.subr.bf16.mxu0 0
  %365 = vmatpush1.bf16.msra.mxu0 0
  %366 = vmatprep.subr.bf16.mxu0 0
  %367 = vmatpush1.bf16.msra.mxu0 0
  %368 = vmatprep.subr.bf16.mxu0 0
  %369 = vmatpush1.bf16.msra.mxu0 0
  %370 = vmatprep.subr.bf16.mxu0 0
  %371 = vmatpush1.bf16.msra.mxu0 0
  %372 = vmatprep.mubr.bf16.mxu0 0
  %373 = vmatmul.mubr.bf16.gmra.mrb[0].mxu0 %v228
  %v374 = vpop.f32.mrb[0].mxu0
  %v375 = vadd.f32 %v99, %v374
  %v376 = vpop.f32.mrb[0].mxu0
  %v377 = vpop.f32.mrb[0].mxu0
  %v378 = vadd.f32 %v99, %v377
  %v379 = vpop.f32.mrb[0].mxu0
  %380 = vmatprep.mubr.bf16.mxu0 0
  %381 = vmatmul.mubr.bf16.gmra.mrb[0].mxu0 %v229
  %v382 = vpop.f32.mrb[0].mxu0
  %v383 = vadd.f32 %v99, %v382
  %v384 = vpop.f32.mrb[0].mxu0
  %v385 = vpop.f32.mrb[0].mxu0
  %v386 = vadd.f32 %v99, %v385
  %v387 = vpop.f32.mrb[0].mxu0
  %388 = vmatprep.mubr.bf16.mxu0 0
  %389 = vmatmul.mubr.bf16.gmra.mrb[0].mxu0 %v230
  %v390 = vpop.f32.mrb[0].mxu0
  %v391 = vadd.f32 %v99, %v390
  %v392 = vpop.f32.mrb[0].mxu0
  %v393 = vpop.f32.mrb[0].mxu0
  %v394 = vadd.f32 %v99, %v393
  %v395 = vpop.f32.mrb[0].mxu0
  %396 = vmatprep.mubr.bf16.mxu0 0
  %397 = vmatmul.mubr.bf16.gmra.mrb[0].mxu0 %v231
  %v398 = vpop.f32.mrb[0].mxu0
  %v399 = vadd.f32 %v99, %v398
  %v400 = vpop.f32.mrb[0].mxu0
  %v401 = vpop.f32.mrb[0].mxu0
  %v402 = vadd.f32 %v99, %v401
  %v403 = vpop.f32.mrb[0].mxu0
  %404 = vmatprep.mubr.bf16.mxu0 0
  %405 = vmatmul.mubr.bf16.gmra.mrb[0].mxu0 %v232
  %v406 = vpop.f32.mrb[0].mxu0
  %v407 = vadd.f32 %v99, %v406
  %v408 = vpop.f32.mrb[0].mxu0
  %v409 = vpop.f32.mrb[0].mxu0
  %v410 = vadd.f32 %v99, %v409
  %v411 = vpop.f32.mrb[0].mxu0
  %412 = vmatprep.mubr.bf16.mxu0 0
  %413 = vmatmul.mubr.bf16.gmra.mrb[0].mxu0 %v233
  %v414 = vpop.f32.mrb[0].mxu0
  %v415 = vadd.f32 %v99, %v414
  %v416 = vpop.f32.mrb[0].mxu0
  %v417 = vpop.f32.mrb[0].mxu0
  %v418 = vadd.f32 %v99, %v417
  %v419 = vpop.f32.mrb[0].mxu0
  %420 = vmatprep.mubr.bf16.mxu0 0
  %421 = vmatmul.mubr.bf16.gmra.mrb[0].mxu0 %v234
  %v422 = vpop.f32.mrb[0].mxu0
  %v423 = vadd.f32 %v99, %v422
  %v424 = vpop.f32.mrb[0].mxu0
  %v425 = vpop.f32.mrb[0].mxu0
  %v426 = vadd.f32 %v99, %v425
  %v427 = vpop.f32.mrb[0].mxu0
  %428 = vmatprep.mubr.bf16.mxu0 0
  %429 = vmatmul.mubr.bf16.gmra.mrb[0].mxu0 %v235
  %v430 = vpop.f32.mrb[0].mxu0
  %v431 = vadd.f32 %v99, %v430
  %v432 = vpop.f32.mrb[0].mxu0
  %v433 = vpop.f32.mrb[0].mxu0
  %v434 = vadd.f32 %v99, %v433
  %v435 = vpop.f32.mrb[0].mxu0
  %436 = vmatprep.mubr.bf16.mxu0 0
  %437 = vmatmul.mubr.bf16.gmra.mrb[0].mxu0 %v236
  %v438 = vpop.f32.mrb[0].mxu0
  %v439 = vadd.f32 %v99, %v438
  %v440 = vpop.f32.mrb[0].mxu0
  %v441 = vpop.f32.mrb[0].mxu0
  %v442 = vadd.f32 %v99, %v441
  %v443 = vpop.f32.mrb[0].mxu0
  %444 = vmatprep.mubr.bf16.mxu0 0
  %445 = vmatmul.mubr.bf16.gmra.mrb[0].mxu0 %v237
  %v446 = vpop.f32.mrb[0].mxu0
  %v447 = vadd.f32 %v99, %v446
  %v448 = vpop.f32.mrb[0].mxu0
  %v449 = vpop.f32.mrb[0].mxu0
  %v450 = vadd.f32 %v99, %v449
  %v451 = vpop.f32.mrb[0].mxu0
  %452 = vmatprep.mubr.bf16.mxu0 0
  %453 = vmatmul.mubr.bf16.gmra.mrb[0].mxu0 %v238
  %v454 = vpop.f32.mrb[0].mxu0
  %v455 = vadd.f32 %v99, %v454
  %v456 = vpop.f32.mrb[0].mxu0
  %v457 = vpop.f32.mrb[0].mxu0
  %v458 = vadd.f32 %v99, %v457
  %v459 = vpop.f32.mrb[0].mxu0
  %460 = vmatprep.mubr.bf16.mxu0 0
  %461 = vmatmul.mubr.bf16.gmra.mrb[0].mxu0 %v239
  %v462 = vpop.f32.mrb[0].mxu0
  %v463 = vadd.f32 %v99, %v462
  %v464 = vpop.f32.mrb[0].mxu0
  %v465 = vpop.f32.mrb[0].mxu0
  %v466 = vadd.f32 %v99, %v465
  %v467 = vpop.f32.mrb[0].mxu0
  %468 = vmatprep.mubr.bf16.mxu0 0
  %469 = vmatmul.mubr.bf16.gmra.mrb[0].mxu0 %v240
  %v470 = vpop.f32.mrb[0].mxu0
  %v471 = vadd.f32 %v99, %v470
  %v472 = vpop.f32.mrb[0].mxu0
  %v473 = vpop.f32.mrb[0].mxu0
  %v474 = vadd.f32 %v99, %v473
  %v475 = vpop.f32.mrb[0].mxu0
  %476 = vmatprep.mubr.bf16.mxu0 0
  %477 = vmatmul.mubr.bf16.gmra.mrb[0].mxu0 %v241
  %v478 = vpop.f32.mrb[0].mxu0
  %v479 = vadd.f32 %v99, %v478
  %v480 = vpop.f32.mrb[0].mxu0
  %v481 = vpop.f32.mrb[0].mxu0
  %v482 = vadd.f32 %v99, %v481
  %v483 = vpop.f32.mrb[0].mxu0
  %484 = vmatprep.mubr.bf16.mxu0 0
  %485 = vmatmul.mubr.bf16.gmra.mrb[0].mxu0 %v242
  %v486 = vpop.f32.mrb[0].mxu0
  %v487 = vadd.f32 %v99, %v486
  %v488 = vpop.f32.mrb[0].mxu0
  %v489 = vpop.f32.mrb[0].mxu0
  %v490 = vadd.f32 %v99, %v489
  %v491 = vpop.f32.mrb[0].mxu0
  %492 = vmatprep.mubr.bf16.mxu0 0
  %493 = vmatmul.mubr.bf16.gmra.mrb[0].mxu0 %v243
  %v494 = vpop.f32.mrb[0].mxu0
  %v495 = vadd.f32 %v99, %v494
  %v496 = vpop.f32.mrb[0].mxu0
  %v497 = vpop.f32.mrb[0].mxu0
  %v498 = vadd.f32 %v99, %v497
  %v499 = vpop.f32.mrb[0].mxu0
  %500 = vmatprep.mubr.bf16.mxu0 0
  %501 = vmatmul.mubr.bf16.gmra.mrb[0].mxu0 %v244
  %v502 = vpop.f32.mrb[0].mxu0
  %v503 = vadd.f32 %v99, %v502
  %v504 = vpop.f32.mrb[0].mxu0
  %v505 = vpop.f32.mrb[0].mxu0
  %v506 = vadd.f32 %v99, %v505
  %v507 = vpop.f32.mrb[0].mxu0
  %508 = vmatprep.mubr.bf16.mxu0 0
  %509 = vmatmul.mubr.bf16.gmra.mrb[0].mxu0 %v245
  %v510 = vpop.f32.mrb[0].mxu0
  %v511 = vadd.f32 %v99, %v510
  %v512 = vpop.f32.mrb[0].mxu0
  %v513 = vpop.f32.mrb[0].mxu0
  %v514 = vadd.f32 %v99, %v513
  %v515 = vpop.f32.mrb[0].mxu0
  %516 = vmatprep.mubr.bf16.mxu0 0
  %517 = vmatmul.mubr.bf16.gmra.mrb[0].mxu0 %v246
  %v518 = vpop.f32.mrb[0].mxu0
  %v519 = vadd.f32 %v99, %v518
  %v520 = vpop.f32.mrb[0].mxu0
  %v521 = vpop.f32.mrb[0].mxu0
  %v522 = vadd.f32 %v99, %v521
  %v523 = vpop.f32.mrb[0].mxu0
  %524 = vmatprep.mubr.bf16.mxu0 0
  %525 = vmatmul.mubr.bf16.gmra.mrb[0].mxu0 %v247
  %v526 = vpop.f32.mrb[0].mxu0
  %v527 = vadd.f32 %v99, %v526
  %v528 = vpop.f32.mrb[0].mxu0
  %v529 = vpop.f32.mrb[0].mxu0
  %v530 = vadd.f32 %v99, %v529
  %v531 = vpop.f32.mrb[0].mxu0
  %532 = vmatprep.mubr.bf16.mxu0 0
  %533 = vmatmul.mubr.bf16.gmra.mrb[0].mxu0 %v248
  %v534 = vpop.f32.mrb[0].mxu0
  %v535 = vadd.f32 %v99, %v534
  %v536 = vpop.f32.mrb[0].mxu0
  %v537 = vpop.f32.mrb[0].mxu0
  %v538 = vadd.f32 %v99, %v537
  %v539 = vpop.f32.mrb[0].mxu0
  %540 = vmatprep.mubr.bf16.mxu0 0
  %541 = vmatmul.mubr.bf16.gmra.mrb[0].mxu0 %v249
  %v542 = vpop.f32.mrb[0].mxu0
  %v543 = vadd.f32 %v99, %v542
  %v544 = vpop.f32.mrb[0].mxu0
  %v545 = vpop.f32.mrb[0].mxu0
  %v546 = vadd.f32 %v99, %v545
  %v547 = vpop.f32.mrb[0].mxu0
  %548 = vmatprep.mubr.bf16.mxu0 0
  %549 = vmatmul.mubr.bf16.gmra.mrb[0].mxu0 %v250
  %v550 = vpop.f32.mrb[0].mxu0
  %v551 = vadd.f32 %v99, %v550
  %v552 = vpop.f32.mrb[0].mxu0
  %v553 = vpop.f32.mrb[0].mxu0
  %v554 = vadd.f32 %v99, %v553
  %v555 = vpop.f32.mrb[0].mxu0
  %556 = vmatprep.mubr.bf16.mxu0 0
  %557 = vmatmul.mubr.bf16.gmra.mrb[0].mxu0 %v251
  %v558 = vpop.f32.mrb[0].mxu0
  %v559 = vadd.f32 %v99, %v558
  %v560 = vpop.f32.mrb[0].mxu0
  %v561 = vpop.f32.mrb[0].mxu0
  %v562 = vadd.f32 %v99, %v561
  %v563 = vpop.f32.mrb[0].mxu0
  %564 = vmatprep.mubr.bf16.mxu0 0
  %565 = vmatmul.mubr.bf16.gmra.mrb[0].mxu0 %v252
  %v566 = vpop.f32.mrb[0].mxu0
  %v567 = vadd.f32 %v99, %v566
  %v568 = vpop.f32.mrb[0].mxu0
  %v569 = vpop.f32.mrb[0].mxu0
  %v570 = vadd.f32 %v99, %v569
  %v571 = vpop.f32.mrb[0].mxu0
  %572 = vmatprep.mubr.bf16.mxu0 0
  %573 = vmatmul.mubr.bf16.gmra.mrb[0].mxu0 %v253
  %v574 = vpop.f32.mrb[0].mxu0
  %v575 = vadd.f32 %v99, %v574
  %v576 = vpop.f32.mrb[0].mxu0
  %v577 = vpop.f32.mrb[0].mxu0
  %v578 = vadd.f32 %v99, %v577
  %v579 = vpop.f32.mrb[0].mxu0
  %580 = vmatprep.mubr.bf16.mxu0 0
  %581 = vmatmul.mubr.bf16.gmra.mrb[0].mxu0 %v254
  %v582 = vpop.f32.mrb[0].mxu0
  %v583 = vadd.f32 %v99, %v582
  %v584 = vpop.f32.mrb[0].mxu0
  %v585 = vpop.f32.mrb[0].mxu0
  %v586 = vadd.f32 %v99, %v585
  %v587 = vpop.f32.mrb[0].mxu0
  %588 = vmatprep.mubr.bf16.mxu0 0
  %589 = vmatmul.mubr.bf16.gmra.mrb[0].mxu0 %v255
  %v590 = vpop.f32.mrb[0].mxu0
  %v591 = vadd.f32 %v99, %v590
  %v592 = vpop.f32.mrb[0].mxu0
  %v593 = vpop.f32.mrb[0].mxu0
  %v594 = vadd.f32 %v99, %v593
  %v595 = vpop.f32.mrb[0].mxu0
  %596 = vmatprep.mubr.bf16.mxu0 0
  %597 = vmatmul.mubr.bf16.gmra.mrb[0].mxu0 %v256
  %v598 = vpop.f32.mrb[0].mxu0
  %v599 = vadd.f32 %v99, %v598
  %v600 = vpop.f32.mrb[0].mxu0
  %v601 = vpop.f32.mrb[0].mxu0
  %v602 = vadd.f32 %v99, %v601
  %v603 = vpop.f32.mrb[0].mxu0
  %604 = vmatprep.mubr.bf16.mxu0 0
  %605 = vmatmul.mubr.bf16.gmra.mrb[0].mxu0 %v257
  %v606 = vpop.f32.mrb[0].mxu0
  %v607 = vadd.f32 %v99, %v606
  %v608 = vpop.f32.mrb[0].mxu0
  %v609 = vpop.f32.mrb[0].mxu0
  %v610 = vadd.f32 %v99, %v609
  %v611 = vpop.f32.mrb[0].mxu0
  %612 = vmatprep.mubr.bf16.mxu0 0
  %613 = vmatmul.mubr.bf16.gmra.mrb[0].mxu0 %v258
  %v614 = vpop.f32.mrb[0].mxu0
  %v615 = vadd.f32 %v99, %v614
  %v616 = vpop.f32.mrb[0].mxu0
  %v617 = vpop.f32.mrb[0].mxu0
  %v618 = vadd.f32 %v99, %v617
  %v619 = vpop.f32.mrb[0].mxu0
  %620 = vmatprep.mubr.bf16.mxu0 0
  %621 = vmatmul.mubr.bf16.gmra.mrb[0].mxu0 %v259
  %v622 = vpop.f32.mrb[0].mxu0
  %v623 = vadd.f32 %v99, %v622
  %v624 = vpop.f32.mrb[0].mxu0
  %v625 = vpop.f32.mrb[0].mxu0
  %v626 = vadd.f32 %v99, %v625
  %v627 = vpop.f32.mrb[0].mxu0
  %628 = vdwg.mxu0
  %vm629 = vcmp.ge.f32.partialorder %v375, 0.0
  %vm630 = vcmp.ge.f32.partialorder %v378, 0.0
  %vm631 = vcmp.ge.f32.partialorder %v383, 0.0
  %vm632 = vcmp.ge.f32.partialorder %v386, 0.0
  %vm633 = vcmp.ge.f32.partialorder %v391, 0.0
  %vm634 = vcmp.ge.f32.partialorder %v394, 0.0
  %vm635 = vcmp.ge.f32.partialorder %v399, 0.0
  %vm636 = vcmp.ge.f32.partialorder %v402, 0.0
  %vm637 = vcmp.ge.f32.partialorder %v407, 0.0
  %vm638 = vcmp.ge.f32.partialorder %v410, 0.0
  %vm639 = vcmp.ge.f32.partialorder %v415, 0.0
  %vm640 = vcmp.ge.f32.partialorder %v418, 0.0
  %vm641 = vcmp.ge.f32.partialorder %v423, 0.0
  %vm642 = vcmp.ge.f32.partialorder %v426, 0.0
  %vm643 = vcmp.ge.f32.partialorder %v431, 0.0
  %vm644 = vcmp.ge.f32.partialorder %v434, 0.0
  %vm645 = vcmp.ge.f32.partialorder %v439, 0.0
  %vm646 = vcmp.ge.f32.partialorder %v442, 0.0
  %vm647 = vcmp.ge.f32.partialorder %v447, 0.0
  %vm648 = vcmp.ge.f32.partialorder %v450, 0.0
  %vm649 = vcmp.ge.f32.partialorder %v455, 0.0
  %vm650 = vcmp.ge.f32.partialorder %v458, 0.0
  %vm651 = vcmp.ge.f32.partialorder %v463, 0.0
  %vm652 = vcmp.ge.f32.partialorder %v466, 0.0
  %vm653 = vcmp.ge.f32.partialorder %v471, 0.0
  %vm654 = vcmp.ge.f32.partialorder %v474, 0.0
  %vm655 = vcmp.ge.f32.partialorder %v479, 0.0
  %vm656 = vcmp.ge.f32.partialorder %v482, 0.0
  %vm657 = vcmp.ge.f32.partialorder %v487, 0.0
  %vm658 = vcmp.ge.f32.partialorder %v490, 0.0
  %vm659 = vcmp.ge.f32.partialorder %v495, 0.0
  %vm660 = vcmp.ge.f32.partialorder %v498, 0.0
  %vm661 = vcmp.ge.f32.partialorder %v503, 0.0
  %vm662 = vcmp.ge.f32.partialorder %v506, 0.0
  %vm663 = vcmp.ge.f32.partialorder %v511, 0.0
  %vm664 = vcmp.ge.f32.partialorder %v514, 0.0
  %vm665 = vcmp.ge.f32.partialorder %v519, 0.0
  %vm666 = vcmp.ge.f32.partialorder %v522, 0.0
  %vm667 = vcmp.ge.f32.partialorder %v527, 0.0
  %vm668 = vcmp.ge.f32.partialorder %v530, 0.0
  %vm669 = vcmp.ge.f32.partialorder %v535, 0.0
  %vm670 = vcmp.ge.f32.partialorder %v538, 0.0
  %vm671 = vcmp.ge.f32.partialorder %v543, 0.0
  %vm672 = vcmp.ge.f32.partialorder %v546, 0.0
  %vm673 = vcmp.ge.f32.partialorder %v551, 0.0
  %vm674 = vcmp.ge.f32.partialorder %v554, 0.0
  %vm675 = vcmp.ge.f32.partialorder %v559, 0.0
  %vm676 = vcmp.ge.f32.partialorder %v562, 0.0
  %vm677 = vcmp.ge.f32.partialorder %v567, 0.0
  %vm678 = vcmp.ge.f32.partialorder %v570, 0.0
  %vm679 = vcmp.ge.f32.partialorder %v575, 0.0
  %vm680 = vcmp.ge.f32.partialorder %v578, 0.0
  %vm681 = vcmp.ge.f32.partialorder %v583, 0.0
  %vm682 = vcmp.ge.f32.partialorder %v586, 0.0
  %vm683 = vcmp.ge.f32.partialorder %v591, 0.0
  %vm684 = vcmp.ge.f32.partialorder %v594, 0.0
  %vm685 = vcmp.ge.f32.partialorder %v599, 0.0
  %vm686 = vcmp.ge.f32.partialorder %v602, 0.0
  %vm687 = vcmp.ge.f32.partialorder %v607, 0.0
  %vm688 = vcmp.ge.f32.partialorder %v610, 0.0
  %vm689 = vcmp.ge.f32.partialorder %v615, 0.0
  %vm690 = vcmp.ge.f32.partialorder %v618, 0.0
  %vm691 = vcmp.ge.f32.partialorder %v623, 0.0
  %vm692 = vcmp.ge.f32.partialorder %v626, 0.0
  %v693 = vmul.f32 %v375, 0.2
  %v694 = vmul.f32 %v378, 0.2
  %v695 = vmul.f32 %v383, 0.2
  %v696 = vmul.f32 %v386, 0.2
  %v697 = vmul.f32 %v391, 0.2
  %v698 = vmul.f32 %v394, 0.2
  %v699 = vmul.f32 %v399, 0.2
  %v700 = vmul.f32 %v402, 0.2
  %v701 = vmul.f32 %v407, 0.2
  %v702 = vmul.f32 %v410, 0.2
  %v703 = vmul.f32 %v415, 0.2
  %v704 = vmul.f32 %v418, 0.2
  %v705 = vmul.f32 %v423, 0.2
  %v706 = vmul.f32 %v426, 0.2
  %v707 = vmul.f32 %v431, 0.2
  %v708 = vmul.f32 %v434, 0.2
  %v709 = vmul.f32 %v439, 0.2
  %v710 = vmul.f32 %v442, 0.2
  %v711 = vmul.f32 %v447, 0.2
  %v712 = vmul.f32 %v450, 0.2
  %v713 = vmul.f32 %v455, 0.2
  %v714 = vmul.f32 %v458, 0.2
  %v715 = vmul.f32 %v463, 0.2
  %v716 = vmul.f32 %v466, 0.2
  %v717 = vmul.f32 %v471, 0.2
  %v718 = vmul.f32 %v474, 0.2
  %v719 = vmul.f32 %v479, 0.2
  %v720 = vmul.f32 %v482, 0.2
  %v721 = vmul.f32 %v487, 0.2
  %v722 = vmul.f32 %v490, 0.2
  %v723 = vmul.f32 %v495, 0.2
  %v724 = vmul.f32 %v498, 0.2
  %v725 = vmul.f32 %v503, 0.2
  %v726 = vmul.f32 %v506, 0.2
  %v727 = vmul.f32 %v511, 0.2
  %v728 = vmul.f32 %v514, 0.2
  %v729 = vmul.f32 %v519, 0.2
  %v730 = vmul.f32 %v522, 0.2
  %v731 = vmul.f32 %v527, 0.2
  %v732 = vmul.f32 %v530, 0.2
  %v733 = vmul.f32 %v535, 0.2
  %v734 = vmul.f32 %v538, 0.2
  %v735 = vmul.f32 %v543, 0.2
  %v736 = vmul.f32 %v546, 0.2
  %v737 = vmul.f32 %v551, 0.2
  %v738 = vmul.f32 %v554, 0.2
  %v739 = vmul.f32 %v559, 0.2
  %v740 = vmul.f32 %v562, 0.2
  %v741 = vmul.f32 %v567, 0.2
  %v742 = vmul.f32 %v570, 0.2
  %v743 = vmul.f32 %v575, 0.2
  %v744 = vmul.f32 %v578, 0.2
  %v745 = vmul.f32 %v583, 0.2
  %v746 = vmul.f32 %v586, 0.2
  %v747 = vmul.f32 %v591, 0.2
  %v748 = vmul.f32 %v594, 0.2
  %v749 = vmul.f32 %v599, 0.2
  %v750 = vmul.f32 %v602, 0.2
  %v751 = vmul.f32 %v607, 0.2
  %v752 = vmul.f32 %v610, 0.2
  %v753 = vmul.f32 %v615, 0.2
  %v754 = vmul.f32 %v618, 0.2
  %v755 = vmul.f32 %v623, 0.2
  %v756 = vmul.f32 %v626, 0.2
  %v757 = vsel %vm629, %v375, %v693
  %v758 = vsel %vm630, %v378, %v694
  %v759 = vsel %vm631, %v383, %v695
  %v760 = vsel %vm632, %v386, %v696
  %v761 = vsel %vm633, %v391, %v697
  %v762 = vsel %vm634, %v394, %v698
  %v763 = vsel %vm635, %v399, %v699
  %v764 = vsel %vm636, %v402, %v700
  %v765 = vsel %vm637, %v407, %v701
  %v766 = vsel %vm638, %v410, %v702
  %v767 = vsel %vm639, %v415, %v703
  %v768 = vsel %vm640, %v418, %v704
  %v769 = vsel %vm641, %v423, %v705
  %v770 = vsel %vm642, %v426, %v706
  %v771 = vsel %vm643, %v431, %v707
  %v772 = vsel %vm644, %v434, %v708
  %v773 = vsel %vm645, %v439, %v709
  %v774 = vsel %vm646, %v442, %v710
  %v775 = vsel %vm647, %v447, %v711
  %v776 = vsel %vm648, %v450, %v712
  %v777 = vsel %vm649, %v455, %v713
  %v778 = vsel %vm650, %v458, %v714
  %v779 = vsel %vm651, %v463, %v715
  %v780 = vsel %vm652, %v466, %v716
  %v781 = vsel %vm653, %v471, %v717
  %v782 = vsel %vm654, %v474, %v718
  %v783 = vsel %vm655, %v479, %v719
  %v784 = vsel %vm656, %v482, %v720
  %v785 = vsel %vm657, %v487, %v721
  %v786 = vsel %vm658, %v490, %v722
  %v787 = vsel %vm659, %v495, %v723
  %v788 = vsel %vm660, %v498, %v724
  %v789 = vsel %vm661, %v503, %v725
  %v790 = vsel %vm662, %v506, %v726
  %v791 = vsel %vm663, %v511, %v727
  %v792 = vsel %vm664, %v514, %v728
  %v793 = vsel %vm665, %v519, %v729
  %v794 = vsel %vm666, %v522, %v730
  %v795 = vsel %vm667, %v527, %v731
  %v796 = vsel %vm668, %v530, %v732
  %v797 = vsel %vm669, %v535, %v733
  %v798 = vsel %vm670, %v538, %v734
  %v799 = vsel %vm671, %v543, %v735
  %v800 = vsel %vm672, %v546, %v736
  %v801 = vsel %vm673, %v551, %v737
  %v802 = vsel %vm674, %v554, %v738
  %v803 = vsel %vm675, %v559, %v739
  %v804 = vsel %vm676, %v562, %v740
  %v805 = vsel %vm677, %v567, %v741
  %v806 = vsel %vm678, %v570, %v742
  %v807 = vsel %vm679, %v575, %v743
  %v808 = vsel %vm680, %v578, %v744
  %v809 = vsel %vm681, %v583, %v745
  %v810 = vsel %vm682, %v586, %v746
  %v811 = vsel %vm683, %v591, %v747
  %v812 = vsel %vm684, %v594, %v748
  %v813 = vsel %vm685, %v599, %v749
  %v814 = vsel %vm686, %v602, %v750
  %v815 = vsel %vm687, %v607, %v751
  %v816 = vsel %vm688, %v610, %v752
  %v817 = vsel %vm689, %v615, %v753
  %v818 = vsel %vm690, %v618, %v754
  %v819 = vsel %vm691, %v623, %v755
  %v820 = vsel %vm692, %v626, %v756
  %v821 = vlaneseq
  %v822 = vshrl.u32 %v821, 7
  %v823 = vsub.s32 1, %v822
  %v824 = vrot.slane %v95, %v823
  %v825 = vmul.f32 %v757, %v824
  %v826 = vmul.f32 %v758, %v824
  %v827 = vmul.f32 %v759, %v824
  %v828 = vmul.f32 %v760, %v824
  %v829 = vmul.f32 %v761, %v824
  %v830 = vmul.f32 %v762, %v824
  %v831 = vmul.f32 %v763, %v824
  %v832 = vmul.f32 %v764, %v824
  %v833 = vmul.f32 %v765, %v824
  %v834 = vmul.f32 %v766, %v824
  %v835 = vmul.f32 %v767, %v824
  %v836 = vmul.f32 %v768, %v824
  %v837 = vmul.f32 %v769, %v824
  %v838 = vmul.f32 %v770, %v824
  %v839 = vmul.f32 %v771, %v824
  %v840 = vmul.f32 %v772, %v824
  %v841 = vmul.f32 %v773, %v824
  %v842 = vmul.f32 %v774, %v824
  %v843 = vmul.f32 %v775, %v824
  %v844 = vmul.f32 %v776, %v824
  %v845 = vmul.f32 %v777, %v824
  %v846 = vmul.f32 %v778, %v824
  %v847 = vmul.f32 %v779, %v824
  %v848 = vmul.f32 %v780, %v824
  %v849 = vmul.f32 %v781, %v824
  %v850 = vmul.f32 %v782, %v824
  %v851 = vmul.f32 %v783, %v824
  %v852 = vmul.f32 %v784, %v824
  %v853 = vmul.f32 %v785, %v824
  %v854 = vmul.f32 %v786, %v824
  %v855 = vmul.f32 %v787, %v824
  %v856 = vmul.f32 %v788, %v824
  %v857 = vmul.f32 %v789, %v824
  %v858 = vmul.f32 %v790, %v824
  %v859 = vmul.f32 %v791, %v824
  %v860 = vmul.f32 %v792, %v824
  %v861 = vmul.f32 %v793, %v824
  %v862 = vmul.f32 %v794, %v824
  %v863 = vmul.f32 %v795, %v824
  %v864 = vmul.f32 %v796, %v824
  %v865 = vmul.f32 %v797, %v824
  %v866 = vmul.f32 %v798, %v824
  %v867 = vmul.f32 %v799, %v824
  %v868 = vmul.f32 %v800, %v824
  %v869 = vmul.f32 %v801, %v824
  %v870 = vmul.f32 %v802, %v824
  %v871 = vmul.f32 %v803, %v824
  %v872 = vmul.f32 %v804, %v824
  %v873 = vmul.f32 %v805, %v824
  %v874 = vmul.f32 %v806, %v824
  %v875 = vmul.f32 %v807, %v824
  %v876 = vmul.f32 %v808, %v824
  %v877 = vmul.f32 %v809, %v824
  %v878 = vmul.f32 %v810, %v824
  %v879 = vmul.f32 %v811, %v824
  %v880 = vmul.f32 %v812, %v824
  %v881 = vmul.f32 %v813, %v824
  %v882 = vmul.f32 %v814, %v824
  %v883 = vmul.f32 %v815, %v824
  %v884 = vmul.f32 %v816, %v824
  %v885 = vmul.f32 %v817, %v824
  %v886 = vmul.f32 %v818, %v824
  %v887 = vmul.f32 %v819, %v824
  %v888 = vmul.f32 %v820, %v824
  %v889 = vlaneseq
  %v890 = vshrl.u32 %v889, 7
  %v891 = vsub.s32 2, %v890
  %v892 = vrot.slane %v95, %v891
  %v893 = vadd.f32 %v825, %v892
  %v894 = vadd.f32 %v826, %v892
  %v895 = vadd.f32 %v827, %v892
  %v896 = vadd.f32 %v828, %v892
  %v897 = vadd.f32 %v829, %v892
  %v898 = vadd.f32 %v830, %v892
  %v899 = vadd.f32 %v831, %v892
  %v900 = vadd.f32 %v832, %v892
  %v901 = vadd.f32 %v833, %v892
  %v902 = vadd.f32 %v834, %v892
  %v903 = vadd.f32 %v835, %v892
  %v904 = vadd.f32 %v836, %v892
  %v905 = vadd.f32 %v837, %v892
  %v906 = vadd.f32 %v838, %v892
  %v907 = vadd.f32 %v839, %v892
  %v908 = vadd.f32 %v840, %v892
  %v909 = vadd.f32 %v841, %v892
  %v910 = vadd.f32 %v842, %v892
  %v911 = vadd.f32 %v843, %v892
  %v912 = vadd.f32 %v844, %v892
  %v913 = vadd.f32 %v845, %v892
  %v914 = vadd.f32 %v846, %v892
  %v915 = vadd.f32 %v847, %v892
  %v916 = vadd.f32 %v848, %v892
  %v917 = vadd.f32 %v849, %v892
  %v918 = vadd.f32 %v850, %v892
  %v919 = vadd.f32 %v851, %v892
  %v920 = vadd.f32 %v852, %v892
  %v921 = vadd.f32 %v853, %v892
  %v922 = vadd.f32 %v854, %v892
  %v923 = vadd.f32 %v855, %v892
  %v924 = vadd.f32 %v856, %v892
  %v925 = vadd.f32 %v857, %v892
  %v926 = vadd.f32 %v858, %v892
  %v927 = vadd.f32 %v859, %v892
  %v928 = vadd.f32 %v860, %v892
  %v929 = vadd.f32 %v861, %v892
  %v930 = vadd.f32 %v862, %v892
  %v931 = vadd.f32 %v863, %v892
  %v932 = vadd.f32 %v864, %v892
  %v933 = vadd.f32 %v865, %v892
  %v934 = vadd.f32 %v866, %v892
  %v935 = vadd.f32 %v867, %v892
  %v936 = vadd.f32 %v868, %v892
  %v937 = vadd.f32 %v869, %v892
  %v938 = vadd.f32 %v870, %v892
  %v939 = vadd.f32 %v871, %v892
  %v940 = vadd.f32 %v872, %v892
  %v941 = vadd.f32 %v873, %v892
  %v942 = vadd.f32 %v874, %v892
  %v943 = vadd.f32 %v875, %v892
  %v944 = vadd.f32 %v876, %v892
  %v945 = vadd.f32 %v877, %v892
  %v946 = vadd.f32 %v878, %v892
  %v947 = vadd.f32 %v879, %v892
  %v948 = vadd.f32 %v880, %v892
  %v949 = vadd.f32 %v881, %v892
  %v950 = vadd.f32 %v882, %v892
  %v951 = vadd.f32 %v883, %v892
  %v952 = vadd.f32 %v884, %v892
  %v953 = vadd.f32 %v885, %v892
  %v954 = vadd.f32 %v886, %v892
  %v955 = vadd.f32 %v887, %v892
  %v956 = vadd.f32 %v888, %v892
  %v957 = vpack.c.bf16 %v894, %v893
  %v958 = vpack.c.bf16 %v896, %v895
  %v959 = vpack.c.bf16 %v898, %v897
  %v960 = vpack.c.bf16 %v900, %v899
  %v961 = vpack.c.bf16 %v902, %v901
  %v962 = vpack.c.bf16 %v904, %v903
  %v963 = vpack.c.bf16 %v906, %v905
  %v964 = vpack.c.bf16 %v908, %v907
  %v965 = vpack.c.bf16 %v910, %v909
  %v966 = vpack.c.bf16 %v912, %v911
  %v967 = vpack.c.bf16 %v914, %v913
  %v968 = vpack.c.bf16 %v916, %v915
  %v969 = vpack.c.bf16 %v918, %v917
  %v970 = vpack.c.bf16 %v920, %v919
  %v971 = vpack.c.bf16 %v922, %v921
  %v972 = vpack.c.bf16 %v924, %v923
  %v973 = vpack.c.bf16 %v926, %v925
  %v974 = vpack.c.bf16 %v928, %v927
  %v975 = vpack.c.bf16 %v930, %v929
  %v976 = vpack.c.bf16 %v932, %v931
  %v977 = vpack.c.bf16 %v934, %v933
  %v978 = vpack.c.bf16 %v936, %v935
  %v979 = vpack.c.bf16 %v938, %v937
  %v980 = vpack.c.bf16 %v940, %v939
  %v981 = vpack.c.bf16 %v942, %v941
  %v982 = vpack.c.bf16 %v944, %v943
  %v983 = vpack.c.bf16 %v946, %v945
  %v984 = vpack.c.bf16 %v948, %v947
  %v985 = vpack.c.bf16 %v950, %v949
  %v986 = vpack.c.bf16 %v952, %v951
  %v987 = vpack.c.bf16 %v954, %v953
  %v988 = vpack.c.bf16 %v956, %v955
  %v1021 = vunpack.c.l.b16 %v957
  %v1022 = vunpack.c.h.b16 %v957
  %v1023 = vunpack.c.l.b16 %v958
  %v1024 = vunpack.c.h.b16 %v958
  %v1025 = vunpack.c.l.b16 %v959
  %v1026 = vunpack.c.h.b16 %v959
  %v1027 = vunpack.c.l.b16 %v960
  %v1028 = vunpack.c.h.b16 %v960
  %v1029 = vunpack.c.l.b16 %v961
  %v1030 = vunpack.c.h.b16 %v961
  %v1031 = vunpack.c.l.b16 %v962
  %v1032 = vunpack.c.h.b16 %v962
  %v1033 = vunpack.c.l.b16 %v963
  %v1034 = vunpack.c.h.b16 %v963
  %v1035 = vunpack.c.l.b16 %v964
  %v1036 = vunpack.c.h.b16 %v964
  %v1037 = vunpack.c.l.b16 %v965
  %v1038 = vunpack.c.h.b16 %v965
  %v1039 = vunpack.c.l.b16 %v966
  %v1040 = vunpack.c.h.b16 %v966
  %v1041 = vunpack.c.l.b16 %v967
  %v1042 = vunpack.c.h.b16 %v967
  %v1043 = vunpack.c.l.b16 %v968
  %v1044 = vunpack.c.h.b16 %v968
  %v1045 = vunpack.c.l.b16 %v969
  %v1046 = vunpack.c.h.b16 %v969
  %v1047 = vunpack.c.l.b16 %v970
  %v1048 = vunpack.c.h.b16 %v970
  %v1049 = vunpack.c.l.b16 %v971
  %v1050 = vunpack.c.h.b16 %v971
  %v1051 = vunpack.c.l.b16 %v972
  %v1052 = vunpack.c.h.b16 %v972
  %v1053 = vunpack.c.l.b16 %v973
  %v1054 = vunpack.c.h.b16 %v973
  %v1055 = vunpack.c.l.b16 %v974
  %v1056 = vunpack.c.h.b16 %v974
  %v1057 = vunpack.c.l.b16 %v975
  %v1058 = vunpack.c.h.b16 %v975
  %v1059 = vunpack.c.l.b16 %v976
  %v1060 = vunpack.c.h.b16 %v976
  %v1061 = vunpack.c.l.b16 %v977
  %v1062 = vunpack.c.h.b16 %v977
  %v1063 = vunpack.c.l.b16 %v978
  %v1064 = vunpack.c.h.b16 %v978
  %v1065 = vunpack.c.l.b16 %v979
  %v1066 = vunpack.c.h.b16 %v979
  %v1067 = vunpack.c.l.b16 %v980
  %v1068 = vunpack.c.h.b16 %v980
  %v1069 = vunpack.c.l.b16 %v981
  %v1070 = vunpack.c.h.b16 %v981
  %v1071 = vunpack.c.l.b16 %v982
  %v1072 = vunpack.c.h.b16 %v982
  %v1073 = vunpack.c.l.b16 %v983
  %v1074 = vunpack.c.h.b16 %v983
  %v1075 = vunpack.c.l.b16 %v984
  %v1076 = vunpack.c.h.b16 %v984
  %v1077 = vunpack.c.l.b16 %v985
  %v1078 = vunpack.c.h.b16 %v985
  %v1079 = vunpack.c.l.b16 %v986
  %v1080 = vunpack.c.h.b16 %v986
  %v1081 = vunpack.c.l.b16 %v987
  %v1082 = vunpack.c.h.b16 %v987
  %v1083 = vunpack.c.l.b16 %v988
  %v1084 = vunpack.c.h.b16 %v988
  %v1085 = vpack.c.b16 %v1021, %v1021
  %v1086 = vpack.c.b16 %v1022, %v1022
  %v1087 = vpack.c.b16 %v1023, %v1023
  %v1088 = vpack.c.b16 %v1024, %v1024
  %v1089 = vpack.c.b16 %v1025, %v1025
  %v1090 = vpack.c.b16 %v1026, %v1026
  %v1091 = vpack.c.b16 %v1027, %v1027
  %v1092 = vpack.c.b16 %v1028, %v1028
  %v1093 = vpack.c.b16 %v1029, %v1029
  %v1094 = vpack.c.b16 %v1030, %v1030
  %v1095 = vpack.c.b16 %v1031, %v1031
  %v1096 = vpack.c.b16 %v1032, %v1032
  %v1097 = vpack.c.b16 %v1033, %v1033
  %v1098 = vpack.c.b16 %v1034, %v1034
  %v1099 = vpack.c.b16 %v1035, %v1035
  %v1100 = vpack.c.b16 %v1036, %v1036
  %v1101 = vpack.c.b16 %v1037, %v1037
  %v1102 = vpack.c.b16 %v1038, %v1038
  %v1103 = vpack.c.b16 %v1039, %v1039
  %v1104 = vpack.c.b16 %v1040, %v1040
  %v1105 = vpack.c.b16 %v1041, %v1041
  %v1106 = vpack.c.b16 %v1042, %v1042
  %v1107 = vpack.c.b16 %v1043, %v1043
  %v1108 = vpack.c.b16 %v1044, %v1044
  %v1109 = vpack.c.b16 %v1045, %v1045
  %v1110 = vpack.c.b16 %v1046, %v1046
  %v1111 = vpack.c.b16 %v1047, %v1047
  %v1112 = vpack.c.b16 %v1048, %v1048
  %v1113 = vpack.c.b16 %v1049, %v1049
  %v1114 = vpack.c.b16 %v1050, %v1050
  %v1115 = vpack.c.b16 %v1051, %v1051
  %v1116 = vpack.c.b16 %v1052, %v1052
  %v1117 = vpack.c.b16 %v1053, %v1053
  %v1118 = vpack.c.b16 %v1054, %v1054
  %v1119 = vpack.c.b16 %v1055, %v1055
  %v1120 = vpack.c.b16 %v1056, %v1056
  %v1121 = vpack.c.b16 %v1057, %v1057
  %v1122 = vpack.c.b16 %v1058, %v1058
  %v1123 = vpack.c.b16 %v1059, %v1059
  %v1124 = vpack.c.b16 %v1060, %v1060
  %v1125 = vpack.c.b16 %v1061, %v1061
  %v1126 = vpack.c.b16 %v1062, %v1062
  %v1127 = vpack.c.b16 %v1063, %v1063
  %v1128 = vpack.c.b16 %v1064, %v1064
  %v1129 = vpack.c.b16 %v1065, %v1065
  %v1130 = vpack.c.b16 %v1066, %v1066
  %v1131 = vpack.c.b16 %v1067, %v1067
  %v1132 = vpack.c.b16 %v1068, %v1068
  %v1133 = vpack.c.b16 %v1069, %v1069
  %v1134 = vpack.c.b16 %v1070, %v1070
  %v1135 = vpack.c.b16 %v1071, %v1071
  %v1136 = vpack.c.b16 %v1072, %v1072
  %v1137 = vpack.c.b16 %v1073, %v1073
  %v1138 = vpack.c.b16 %v1074, %v1074
  %v1139 = vpack.c.b16 %v1075, %v1075
  %v1140 = vpack.c.b16 %v1076, %v1076
  %v1141 = vpack.c.b16 %v1077, %v1077
  %v1142 = vpack.c.b16 %v1078, %v1078
  %v1143 = vpack.c.b16 %v1079, %v1079
  %v1144 = vpack.c.b16 %v1080, %v1080
  %v1145 = vpack.c.b16 %v1081, %v1081
  %v1146 = vpack.c.b16 %v1082, %v1082
  %v1147 = vpack.c.b16 %v1083, %v1083
  %v1148 = vpack.c.b16 %v1084, %v1084
  %vm1213 = vcmask 125952
  %1214 = vst.msk [vmem:[%s3] sm:$0xf] %vm1213, %v1085
  %1215 = vst.msk [vmem:[%s3 + $0x4] sm:$0xf] %vm1213, %v1086
  %1216 = vst.msk [vmem:[%s3 + $0x8] sm:$0xf] %vm1213, %v1087
  %1217 = vst.msk [vmem:[%s3 + $0xc] sm:$0xf] %vm1213, %v1088
  %1218 = vst.msk [vmem:[%s3 + $0x10] sm:$0xf] %vm1213, %v1089
  %1219 = vst.msk [vmem:[%s3 + $0x14] sm:$0xf] %vm1213, %v1090
  %1220 = vst.msk [vmem:[%s3 + $0x18] sm:$0xf] %vm1213, %v1091
  %1221 = vst.msk [vmem:[%s3 + $0x1c] sm:$0xf] %vm1213, %v1092
  %1222 = vst.msk [vmem:[%s3 + $0x20] sm:$0xf] %vm1213, %v1093
  %1223 = vst.msk [vmem:[%s3 + $0x24] sm:$0xf] %vm1213, %v1094
  %1224 = vst.msk [vmem:[%s3 + $0x28] sm:$0xf] %vm1213, %v1095
  %1225 = vst.msk [vmem:[%s3 + $0x2c] sm:$0xf] %vm1213, %v1096
  %1226 = vst.msk [vmem:[%s3 + $0x30] sm:$0xf] %vm1213, %v1097
  %1227 = vst.msk [vmem:[%s3 + $0x34] sm:$0xf] %vm1213, %v1098
  %1228 = vst.msk [vmem:[%s3 + $0x38] sm:$0xf] %vm1213, %v1099
  %1229 = vst.msk [vmem:[%s3 + $0x3c] sm:$0xf] %vm1213, %v1100
  %1230 = vst.msk [vmem:[%s3 + $0x40] sm:$0xf] %vm1213, %v1101
  %1231 = vst.msk [vmem:[%s3 + $0x44] sm:$0xf] %vm1213, %v1102
  %1232 = vst.msk [vmem:[%s3 + $0x48] sm:$0xf] %vm1213, %v1103
  %1233 = vst.msk [vmem:[%s3 + $0x4c] sm:$0xf] %vm1213, %v1104
  %1234 = vst.msk [vmem:[%s3 + $0x50] sm:$0xf] %vm1213, %v1105
  %1235 = vst.msk [vmem:[%s3 + $0x54] sm:$0xf] %vm1213, %v1106
  %1236 = vst.msk [vmem:[%s3 + $0x58] sm:$0xf] %vm1213, %v1107
  %1237 = vst.msk [vmem:[%s3 + $0x5c] sm:$0xf] %vm1213, %v1108
  %1238 = vst.msk [vmem:[%s3 + $0x60] sm:$0xf] %vm1213, %v1109
  %1239 = vst.msk [vmem:[%s3 + $0x64] sm:$0xf] %vm1213, %v1110
  %1240 = vst.msk [vmem:[%s3 + $0x68] sm:$0xf] %vm1213, %v1111
  %1241 = vst.msk [vmem:[%s3 + $0x6c] sm:$0xf] %vm1213, %v1112
  %1242 = vst.msk [vmem:[%s3 + $0x70] sm:$0xf] %vm1213, %v1113
  %1243 = vst.msk [vmem:[%s3 + $0x74] sm:$0xf] %vm1213, %v1114
  %1244 = vst.msk [vmem:[%s3 + $0x78] sm:$0xf] %vm1213, %v1115
  %1245 = vst.msk [vmem:[%s3 + $0x7c] sm:$0xf] %vm1213, %v1116
  %1246 = vst.msk [vmem:[%s3 + $0x80] sm:$0xf] %vm1213, %v1117
  %1247 = vst.msk [vmem:[%s3 + $0x84] sm:$0xf] %vm1213, %v1118
  %1248 = vst.msk [vmem:[%s3 + $0x88] sm:$0xf] %vm1213, %v1119
  %1249 = vst.msk [vmem:[%s3 + $0x8c] sm:$0xf] %vm1213, %v1120
  %1250 = vst.msk [vmem:[%s3 + $0x90] sm:$0xf] %vm1213, %v1121
  %1251 = vst.msk [vmem:[%s3 + $0x94] sm:$0xf] %vm1213, %v1122
  %1252 = vst.msk [vmem:[%s3 + $0x98] sm:$0xf] %vm1213, %v1123
  %1253 = vst.msk [vmem:[%s3 + $0x9c] sm:$0xf] %vm1213, %v1124
  %1254 = vst.msk [vmem:[%s3 + $0xa0] sm:$0xf] %vm1213, %v1125
  %1255 = vst.msk [vmem:[%s3 + $0xa4] sm:$0xf] %vm1213, %v1126
  %1256 = vst.msk [vmem:[%s3 + $0xa8] sm:$0xf] %vm1213, %v1127
  %1257 = vst.msk [vmem:[%s3 + $0xac] sm:$0xf] %vm1213, %v1128
  %1258 = vst.msk [vmem:[%s3 + $0xb0] sm:$0xf] %vm1213, %v1129
  %1259 = vst.msk [vmem:[%s3 + $0xb4] sm:$0xf] %vm1213, %v1130
  %1260 = vst.msk [vmem:[%s3 + $0xb8] sm:$0xf] %vm1213, %v1131
  %1261 = vst.msk [vmem:[%s3 + $0xbc] sm:$0xf] %vm1213, %v1132
  %1262 = vst.msk [vmem:[%s3 + $0xc0] sm:$0xf] %vm1213, %v1133
  %1263 = vst.msk [vmem:[%s3 + $0xc4] sm:$0xf] %vm1213, %v1134
  %1264 = vst.msk [vmem:[%s3 + $0xc8] sm:$0xf] %vm1213, %v1135
  %1265 = vst.msk [vmem:[%s3 + $0xcc] sm:$0xf] %vm1213, %v1136
  %1266 = vst.msk [vmem:[%s3 + $0xd0] sm:$0xf] %vm1213, %v1137
  %1267 = vst.msk [vmem:[%s3 + $0xd4] sm:$0xf] %vm1213, %v1138
  %1268 = vst.msk [vmem:[%s3 + $0xd8] sm:$0xf] %vm1213, %v1139
  %1269 = vst.msk [vmem:[%s3 + $0xdc] sm:$0xf] %vm1213, %v1140
  %1270 = vst.msk [vmem:[%s3 + $0xe0] sm:$0xf] %vm1213, %v1141
  %1271 = vst.msk [vmem:[%s3 + $0xe4] sm:$0xf] %vm1213, %v1142
  %1272 = vst.msk [vmem:[%s3 + $0xe8] sm:$0xf] %vm1213, %v1143
  %1273 = vst.msk [vmem:[%s3 + $0xec] sm:$0xf] %vm1213, %v1144
  %1274 = vst.msk [vmem:[%s3 + $0xf0] sm:$0xf] %vm1213, %v1145
  %1275 = vst.msk [vmem:[%s3 + $0xf4] sm:$0xf] %vm1213, %v1146
  %1276 = vst.msk [vmem:[%s3 + $0xf8] sm:$0xf] %vm1213, %v1147
  %1277 = vst.msk [vmem:[%s3 + $0xfc] sm:$0xf] %vm1213, %v1148
  // Predicated region
  $region14: #{vae1_forward.29} parent=0 // pred_check
    _
  $region15: #{vae1_forward.29} parent=0 // pred_check_branch
    %1279 = sbr.rel (0) target = $region17
  $region16: #{vae1_forward.29} parent=0 // pred_region
    _
  $region17: #{vae1_forward.29} parent=0 // pred_fallthru
    _
  // Predicated region
  $region18: #{vae1_forward.29} parent=0 // pred_check
    _
  $region19: #{vae1_forward.29} parent=0 // pred_check_branch
    %1281 = sbr.rel (0) target = $region21
  $region20: #{vae1_forward.29} parent=0 // pred_region
    _
  $region21: #{vae1_forward.29} parent=0 // pred_fallthru
    _

// kernel: vae1_forward.30
$region0: #{vae1_forward.30}
  #allocation0 [shape = 'u32[]', space=smem, size = 0x4, offset = 0x4, fixed_abs, tag = 'smem constant byte address 0x4 - core index']
  #allocation1 [shape = 'u32[144,128]{1,0:T(1,128)}', space=vmem, size = 0x12000, scoped, tag = 'internal scratch']
  %s0 = inlined_call_operand.vmem [shape: bf16[128,256], index: 0, kind: input, shape index: {}]
  %s1 = inlined_call_operand.vmem [shape: bf16[256,32], index: 1, kind: input, shape index: {}]
  %s2 = inlined_call_operand.vmem [shape: f32[3,32], index: 2, kind: input, shape index: {}]
  %s3 = inlined_call_operand.vmem [shape: bf16[128,32], index: 3, kind: output, shape index: {}]
  %s4 = sld [smem:[#allocation0]]
  $region22: #{vae1_forward.30} parent=0
    _
  %s6 = ssub.s32 1, %s4
  %s7 = scalar_select 0, %s6, %s4
  // Predicated region
  $region2: #{vae1_forward.30} parent=0 // pred_check
    _
  $region3: #{vae1_forward.30} parent=0 // pred_check_branch
    %9 = sbr.rel (0) target = $region5
  $region4: #{vae1_forward.30} parent=0 // pred_region
    _
  $region5: #{vae1_forward.30} parent=0 // pred_fallthru
    _
  // Predicated region
  $region6: #{vae1_forward.30} parent=0 // pred_check
    _
  $region7: #{vae1_forward.30} parent=0 // pred_check_branch
    %11 = sbr.rel (0) target = $region9
  $region8: #{vae1_forward.30} parent=0 // pred_region
    _
  $region9: #{vae1_forward.30} parent=0 // pred_fallthru
    _
  // Predicated region
  $region10: #{vae1_forward.30} parent=0 // pred_check
    _
  $region11: #{vae1_forward.30} parent=0 // pred_check_branch
    %13 = sbr.rel (0) target = $region13
  $region12: #{vae1_forward.30} parent=0 // pred_region
    _
  $region13: #{vae1_forward.30} parent=0 // pred_fallthru
    _
  %v15 = vld [vmem:[%s0] sm:$0xff]
  %v16 = vld [vmem:[%s0 + $0x8] sm:$0xff]
  %v17 = vld [vmem:[%s0 + $0x10] sm:$0xff]
  %v18 = vld [vmem:[%s0 + $0x18] sm:$0xff]
  %v19 = vld [vmem:[%s0 + $0x20] sm:$0xff]
  %v20 = vld [vmem:[%s0 + $0x28] sm:$0xff]
  %v21 = vld [vmem:[%s0 + $0x30] sm:$0xff]
  %v22 = vld [vmem:[%s0 + $0x38] sm:$0xff]
  %v23 = vld [vmem:[%s0 + $0x40] sm:$0xff]
  %v24 = vld [vmem:[%s0 + $0x48] sm:$0xff]
  %v25 = vld [vmem:[%s0 + $0x50] sm:$0xff]
  %v26 = vld [vmem:[%s0 + $0x58] sm:$0xff]
  %v27 = vld [vmem:[%s0 + $0x60] sm:$0xff]
  %v28 = vld [vmem:[%s0 + $0x68] sm:$0xff]
  %v29 = vld [vmem:[%s0 + $0x70] sm:$0xff]
  %v30 = vld [vmem:[%s0 + $0x78] sm:$0xff]
  %v31 = vld [vmem:[%s1] sm:$0xf]
  %v32 = vld [vmem:[%s1 + $0x4] sm:$0xf]
  %v33 = vld [vmem:[%s1 + $0x8] sm:$0xf]
  %v34 = vld [vmem:[%s1 + $0xc] sm:$0xf]
  %v35 = vld [vmem:[%s1 + $0x10] sm:$0xf]
  %v36 = vld [vmem:[%s1 + $0x14] sm:$0xf]
  %v37 = vld [vmem:[%s1 + $0x18] sm:$0xf]
  %v38 = vld [vmem:[%s1 + $0x1c] sm:$0xf]
  %v39 = vld [vmem:[%s1 + $0x20] sm:$0xf]
  %v40 = vld [vmem:[%s1 + $0x24] sm:$0xf]
  %v41 = vld [vmem:[%s1 + $0x28] sm:$0xf]
  %v42 = vld [vmem:[%s1 + $0x2c] sm:$0xf]
  %v43 = vld [vmem:[%s1 + $0x30] sm:$0xf]
  %v44 = vld [vmem:[%s1 + $0x34] sm:$0xf]
  %v45 = vld [vmem:[%s1 + $0x38] sm:$0xf]
  %v46 = vld [vmem:[%s1 + $0x3c] sm:$0xf]
  %v47 = vld [vmem:[%s1 + $0x40] sm:$0xf]
  %v48 = vld [vmem:[%s1 + $0x44] sm:$0xf]
  %v49 = vld [vmem:[%s1 + $0x48] sm:$0xf]
  %v50 = vld [vmem:[%s1 + $0x4c] sm:$0xf]
  %v51 = vld [vmem:[%s1 + $0x50] sm:$0xf]
  %v52 = vld [vmem:[%s1 + $0x54] sm:$0xf]
  %v53 = vld [vmem:[%s1 + $0x58] sm:$0xf]
  %v54 = vld [vmem:[%s1 + $0x5c] sm:$0xf]
  %v55 = vld [vmem:[%s1 + $0x60] sm:$0xf]
  %v56 = vld [vmem:[%s1 + $0x64] sm:$0xf]
  %v57 = vld [vmem:[%s1 + $0x68] sm:$0xf]
  %v58 = vld [vmem:[%s1 + $0x6c] sm:$0xf]
  %v59 = vld [vmem:[%s1 + $0x70] sm:$0xf]
  %v60 = vld [vmem:[%s1 + $0x74] sm:$0xf]
  %v61 = vld [vmem:[%s1 + $0x78] sm:$0xf]
  %v62 = vld [vmem:[%s1 + $0x7c] sm:$0xf]
  %v63 = vld [vmem:[%s2] sm:$0x7]
  %v64 = vlaneseq
  %v65 = vshrl.u32 %v64, 7
  %v66 = vsub.s32 0, %v65
  %v67 = vrot.slane %v63, %v66
  %v84 = vunpack.c.l.b16 %v15
  %v85 = vunpack.c.h.b16 %v15
  %v86 = vunpack.c.l.b16 %v16
  %v87 = vunpack.c.h.b16 %v16
  %v88 = vunpack.c.l.b16 %v17
  %v89 = vunpack.c.h.b16 %v17
  %v90 = vunpack.c.l.b16 %v18
  %v91 = vunpack.c.h.b16 %v18
  %v92 = vunpack.c.l.b16 %v19
  %v93 = vunpack.c.h.b16 %v19
  %v94 = vunpack.c.l.b16 %v20
  %v95 = vunpack.c.h.b16 %v20
  %v96 = vunpack.c.l.b16 %v21
  %v97 = vunpack.c.h.b16 %v21
  %v98 = vunpack.c.l.b16 %v22
  %v99 = vunpack.c.h.b16 %v22
  %v100 = vunpack.c.l.b16 %v23
  %v101 = vunpack.c.h.b16 %v23
  %v102 = vunpack.c.l.b16 %v24
  %v103 = vunpack.c.h.b16 %v24
  %v104 = vunpack.c.l.b16 %v25
  %v105 = vunpack.c.h.b16 %v25
  %v106 = vunpack.c.l.b16 %v26
  %v107 = vunpack.c.h.b16 %v26
  %v108 = vunpack.c.l.b16 %v27
  %v109 = vunpack.c.h.b16 %v27
  %v110 = vunpack.c.l.b16 %v28
  %v111 = vunpack.c.h.b16 %v28
  %v112 = vunpack.c.l.b16 %v29
  %v113 = vunpack.c.h.b16 %v29
  %v114 = vunpack.c.l.b16 %v30
  %v115 = vunpack.c.h.b16 %v30
  %v116 = vpack.c.b16 %v86, %v84
  %v117 = vpack.c.b16 %v87, %v85
  %v118 = vpack.c.b16 %v90, %v88
  %v119 = vpack.c.b16 %v91, %v89
  %v120 = vpack.c.b16 %v94, %v92
  %v121 = vpack.c.b16 %v95, %v93
  %v122 = vpack.c.b16 %v98, %v96
  %v123 = vpack.c.b16 %v99, %v97
  %v124 = vpack.c.b16 %v102, %v100
  %v125 = vpack.c.b16 %v103, %v101
  %v126 = vpack.c.b16 %v106, %v104
  %v127 = vpack.c.b16 %v107, %v105
  %v128 = vpack.c.b16 %v110, %v108
  %v129 = vpack.c.b16 %v111, %v109
  %v130 = vpack.c.b16 %v114, %v112
  %v131 = vpack.c.b16 %v115, %v113
  %v180 = vunpack.c.l.b16 %v31
  %v181 = vunpack.c.l.b16 %v32
  %v182 = vunpack.c.l.b16 %v33
  %v183 = vunpack.c.l.b16 %v34
  %v184 = vunpack.c.l.b16 %v35
  %v185 = vunpack.c.l.b16 %v36
  %v186 = vunpack.c.l.b16 %v37
  %v187 = vunpack.c.l.b16 %v38
  %v188 = vunpack.c.l.b16 %v39
  %v189 = vunpack.c.l.b16 %v40
  %v190 = vunpack.c.l.b16 %v41
  %v191 = vunpack.c.l.b16 %v42
  %v192 = vunpack.c.l.b16 %v43
  %v193 = vunpack.c.l.b16 %v44
  %v194 = vunpack.c.l.b16 %v45
  %v195 = vunpack.c.l.b16 %v46
  %v196 = vunpack.c.l.b16 %v47
  %v197 = vunpack.c.l.b16 %v48
  %v198 = vunpack.c.l.b16 %v49
  %v199 = vunpack.c.l.b16 %v50
  %v200 = vunpack.c.l.b16 %v51
  %v201 = vunpack.c.l.b16 %v52
  %v202 = vunpack.c.l.b16 %v53
  %v203 = vunpack.c.l.b16 %v54
  %v204 = vunpack.c.l.b16 %v55
  %v205 = vunpack.c.l.b16 %v56
  %v206 = vunpack.c.l.b16 %v57
  %v207 = vunpack.c.l.b16 %v58
  %v208 = vunpack.c.l.b16 %v59
  %v209 = vunpack.c.l.b16 %v60
  %v210 = vunpack.c.l.b16 %v61
  %v211 = vunpack.c.l.b16 %v62
  %v212 = vpack.c.b16 %v181, %v180
  %v213 = vpack.c.b16 %v183, %v182
  %v214 = vpack.c.b16 %v185, %v184
  %v215 = vpack.c.b16 %v187, %v186
  %v216 = vpack.c.b16 %v189, %v188
  %v217 = vpack.c.b16 %v191, %v190
  %v218 = vpack.c.b16 %v193, %v192
  %v219 = vpack.c.b16 %v195, %v194
  %v220 = vpack.c.b16 %v197, %v196
  %v221 = vpack.c.b16 %v199, %v198
  %v222 = vpack.c.b16 %v201, %v200
  %v223 = vpack.c.b16 %v203, %v202
  %v224 = vpack.c.b16 %v205, %v204
  %v225 = vpack.c.b16 %v207, %v206
  %v226 = vpack.c.b16 %v209, %v208
  %v227 = vpack.c.b16 %v211, %v210
  %244 = vmatprep.subr.bf16.mxu0 0
  %245 = vmatpush1.bf16.msra.mxu0 %v212
  %246 = vmatprep.subr.bf16.mxu0 0
  %247 = vmatpush1.bf16.msra.mxu0 %v213
  %248 = vmatprep.subr.bf16.mxu0 0
  %249 = vmatpush1.bf16.msra.mxu0 %v214
  %250 = vmatprep.subr.bf16.mxu0 0
  %251 = vmatpush1.bf16.msra.mxu0 %v215
  %252 = vmatprep.subr.bf16.mxu0 0
  %253 = vmatpush1.bf16.msra.mxu0 %v216
  %254 = vmatprep.subr.bf16.mxu0 0
  %255 = vmatpush1.bf16.msra.mxu0 %v217
  %256 = vmatprep.subr.bf16.mxu0 0
  %257 = vmatpush1.bf16.msra.mxu0 %v218
  %258 = vmatprep.subr.bf16.mxu0 0
  %259 = vmatpush1.bf16.msra.mxu0 %v219
  %260 = vmatprep.subr.bf16.mxu0 0
  %261 = vmatpush1.bf16.msra.mxu0 %v220
  %262 = vmatprep.subr.bf16.mxu0 0
  %263 = vmatpush1.bf16.msra.mxu0 %v221
  %264 = vmatprep.subr.bf16.mxu0 0
  %265 = vmatpush1.bf16.msra.mxu0 %v222
  %266 = vmatprep.subr.bf16.mxu0 0
  %267 = vmatpush1.bf16.msra.mxu0 %v223
  %268 = vmatprep.subr.bf16.mxu0 0
  %269 = vmatpush1.bf16.msra.mxu0 %v224
  %270 = vmatprep.subr.bf16.mxu0 0
  %271 = vmatpush1.bf16.msra.mxu0 %v225
  %272 = vmatprep.subr.bf16.mxu0 0
  %273 = vmatpush1.bf16.msra.mxu0 %v226
  %274 = vmatprep.subr.bf16.mxu0 0
  %275 = vmatpush1.bf16.msra.mxu0 %v227
  %276 = vmatprep.mubr.bf16.mxu0 %v117
  %277 = vmatmul.mubr.bf16.gmra.mrb[0].mxu0 %v116
  %v278 = vpop.f32.mrb[0].mxu0
  %v279 = vadd.f32 %v67, %v278
  %v280 = vpop.f32.mrb[0].mxu0
  %v281 = vpop.f32.mrb[0].mxu0
  %v282 = vadd.f32 %v67, %v281
  %v283 = vpop.f32.mrb[0].mxu0
  %284 = vmatprep.mubr.bf16.mxu0 %v119
  %285 = vmatmul.mubr.bf16.gmra.mrb[0].mxu0 %v118
  %v286 = vpop.f32.mrb[0].mxu0
  %v287 = vadd.f32 %v67, %v286
  %v288 = vpop.f32.mrb[0].mxu0
  %v289 = vpop.f32.mrb[0].mxu0
  %v290 = vadd.f32 %v67, %v289
  %v291 = vpop.f32.mrb[0].mxu0
  %292 = vmatprep.mubr.bf16.mxu0 %v121
  %293 = vmatmul.mubr.bf16.gmra.mrb[0].mxu0 %v120
  %v294 = vpop.f32.mrb[0].mxu0
  %v295 = vadd.f32 %v67, %v294
  %v296 = vpop.f32.mrb[0].mxu0
  %v297 = vpop.f32.mrb[0].mxu0
  %v298 = vadd.f32 %v67, %v297
  %v299 = vpop.f32.mrb[0].mxu0
  %300 = vmatprep.mubr.bf16.mxu0 %v123
  %301 = vmatmul.mubr.bf16.gmra.mrb[0].mxu0 %v122
  %v302 = vpop.f32.mrb[0].mxu0
  %v303 = vadd.f32 %v67, %v302
  %v304 = vpop.f32.mrb[0].mxu0
  %v305 = vpop.f32.mrb[0].mxu0
  %v306 = vadd.f32 %v67, %v305
  %v307 = vpop.f32.mrb[0].mxu0
  %308 = vmatprep.mubr.bf16.mxu0 %v125
  %309 = vmatmul.mubr.bf16.gmra.mrb[0].mxu0 %v124
  %v310 = vpop.f32.mrb[0].mxu0
  %v311 = vadd.f32 %v67, %v310
  %v312 = vpop.f32.mrb[0].mxu0
  %v313 = vpop.f32.mrb[0].mxu0
  %v314 = vadd.f32 %v67, %v313
  %v315 = vpop.f32.mrb[0].mxu0
  %316 = vmatprep.mubr.bf16.mxu0 %v127
  %317 = vmatmul.mubr.bf16.gmra.mrb[0].mxu0 %v126
  %v318 = vpop.f32.mrb[0].mxu0
  %v319 = vadd.f32 %v67, %v318
  %v320 = vpop.f32.mrb[0].mxu0
  %v321 = vpop.f32.mrb[0].mxu0
  %v322 = vadd.f32 %v67, %v321
  %v323 = vpop.f32.mrb[0].mxu0
  %324 = vmatprep.mubr.bf16.mxu0 %v129
  %325 = vmatmul.mubr.bf16.gmra.mrb[0].mxu0 %v128
  %v326 = vpop.f32.mrb[0].mxu0
  %v327 = vadd.f32 %v67, %v326
  %v328 = vpop.f32.mrb[0].mxu0
  %v329 = vpop.f32.mrb[0].mxu0
  %v330 = vadd.f32 %v67, %v329
  %v331 = vpop.f32.mrb[0].mxu0
  %332 = vmatprep.mubr.bf16.mxu0 %v131
  %333 = vmatmul.mubr.bf16.gmra.mrb[0].mxu0 %v130
  %v334 = vpop.f32.mrb[0].mxu0
  %v335 = vadd.f32 %v67, %v334
  %v336 = vpop.f32.mrb[0].mxu0
  %v337 = vpop.f32.mrb[0].mxu0
  %v338 = vadd.f32 %v67, %v337
  %v339 = vpop.f32.mrb[0].mxu0
  %340 = vdwg.mxu0
  %vm341 = vcmp.ge.f32.partialorder %v279, 0.0
  %vm342 = vcmp.ge.f32.partialorder %v282, 0.0
  %vm343 = vcmp.ge.f32.partialorder %v287, 0.0
  %vm344 = vcmp.ge.f32.partialorder %v290, 0.0
  %vm345 = vcmp.ge.f32.partialorder %v295, 0.0
  %vm346 = vcmp.ge.f32.partialorder %v298, 0.0
  %vm347 = vcmp.ge.f32.partialorder %v303, 0.0
  %vm348 = vcmp.ge.f32.partialorder %v306, 0.0
  %vm349 = vcmp.ge.f32.partialorder %v311, 0.0
  %vm350 = vcmp.ge.f32.partialorder %v314, 0.0
  %vm351 = vcmp.ge.f32.partialorder %v319, 0.0
  %vm352 = vcmp.ge.f32.partialorder %v322, 0.0
  %vm353 = vcmp.ge.f32.partialorder %v327, 0.0
  %vm354 = vcmp.ge.f32.partialorder %v330, 0.0
  %vm355 = vcmp.ge.f32.partialorder %v335, 0.0
  %vm356 = vcmp.ge.f32.partialorder %v338, 0.0
  %v357 = vmul.f32 %v279, 0.2
  %v358 = vmul.f32 %v282, 0.2
  %v359 = vmul.f32 %v287, 0.2
  %v360 = vmul.f32 %v290, 0.2
  %v361 = vmul.f32 %v295, 0.2
  %v362 = vmul.f32 %v298, 0.2
  %v363 = vmul.f32 %v303, 0.2
  %v364 = vmul.f32 %v306, 0.2
  %v365 = vmul.f32 %v311, 0.2
  %v366 = vmul.f32 %v314, 0.2
  %v367 = vmul.f32 %v319, 0.2
  %v368 = vmul.f32 %v322, 0.2
  %v369 = vmul.f32 %v327, 0.2
  %v370 = vmul.f32 %v330, 0.2
  %v371 = vmul.f32 %v335, 0.2
  %v372 = vmul.f32 %v338, 0.2
  %v373 = vsel %vm341, %v279, %v357
  %v374 = vsel %vm342, %v282, %v358
  %v375 = vsel %vm343, %v287, %v359
  %v376 = vsel %vm344, %v290, %v360
  %v377 = vsel %vm345, %v295, %v361
  %v378 = vsel %vm346, %v298, %v362
  %v379 = vsel %vm347, %v303, %v363
  %v380 = vsel %vm348, %v306, %v364
  %v381 = vsel %vm349, %v311, %v365
  %v382 = vsel %vm350, %v314, %v366
  %v383 = vsel %vm351, %v319, %v367
  %v384 = vsel %vm352, %v322, %v368
  %v385 = vsel %vm353, %v327, %v369
  %v386 = vsel %vm354, %v330, %v370
  %v387 = vsel %vm355, %v335, %v371
  %v388 = vsel %vm356, %v338, %v372
  %v389 = vlaneseq
  %v390 = vshrl.u32 %v389, 7
  %v391 = vsub.s32 1, %v390
  %v392 = vrot.slane %v63, %v391
  %v393 = vmul.f32 %v373, %v392
  %v394 = vmul.f32 %v374, %v392
  %v395 = vmul.f32 %v375, %v392
  %v396 = vmul.f32 %v376, %v392
  %v397 = vmul.f32 %v377, %v392
  %v398 = vmul.f32 %v378, %v392
  %v399 = vmul.f32 %v379, %v392
  %v400 = vmul.f32 %v380, %v392
  %v401 = vmul.f32 %v381, %v392
  %v402 = vmul.f32 %v382, %v392
  %v403 = vmul.f32 %v383, %v392
  %v404 = vmul.f32 %v384, %v392
  %v405 = vmul.f32 %v385, %v392
  %v406 = vmul.f32 %v386, %v392
  %v407 = vmul.f32 %v387, %v392
  %v408 = vmul.f32 %v388, %v392
  %v409 = vlaneseq
  %v410 = vshrl.u32 %v409, 7
  %v411 = vsub.s32 2, %v410
  %v412 = vrot.slane %v63, %v411
  %v413 = vadd.f32 %v393, %v412
  %v414 = vadd.f32 %v394, %v412
  %v415 = vadd.f32 %v395, %v412
  %v416 = vadd.f32 %v396, %v412
  %v417 = vadd.f32 %v397, %v412
  %v418 = vadd.f32 %v398, %v412
  %v419 = vadd.f32 %v399, %v412
  %v420 = vadd.f32 %v400, %v412
  %v421 = vadd.f32 %v401, %v412
  %v422 = vadd.f32 %v402, %v412
  %v423 = vadd.f32 %v403, %v412
  %v424 = vadd.f32 %v404, %v412
  %v425 = vadd.f32 %v405, %v412
  %v426 = vadd.f32 %v406, %v412
  %v427 = vadd.f32 %v407, %v412
  %v428 = vadd.f32 %v408, %v412
  %v429 = vpack.c.bf16 %v414, %v413
  %v430 = vpack.c.bf16 %v416, %v415
  %v431 = vpack.c.bf16 %v418, %v417
  %v432 = vpack.c.bf16 %v420, %v419
  %v433 = vpack.c.bf16 %v422, %v421
  %v434 = vpack.c.bf16 %v424, %v423
  %v435 = vpack.c.bf16 %v426, %v425
  %v436 = vpack.c.bf16 %v428, %v427
  %v445 = vunpack.c.l.b16 %v429
  %v446 = vunpack.c.h.b16 %v429
  %v447 = vunpack.c.l.b16 %v430
  %v448 = vunpack.c.h.b16 %v430
  %v449 = vunpack.c.l.b16 %v431
  %v450 = vunpack.c.h.b16 %v431
  %v451 = vunpack.c.l.b16 %v432
  %v452 = vunpack.c.h.b16 %v432
  %v453 = vunpack.c.l.b16 %v433
  %v454 = vunpack.c.h.b16 %v433
  %v455 = vunpack.c.l.b16 %v434
  %v456 = vunpack.c.h.b16 %v434
  %v457 = vunpack.c.l.b16 %v435
  %v458 = vunpack.c.h.b16 %v435
  %v459 = vunpack.c.l.b16 %v436
  %v460 = vunpack.c.h.b16 %v436
  %v461 = vpack.c.b16 %v445, %v445
  %v462 = vpack.c.b16 %v446, %v446
  %v463 = vpack.c.b16 %v447, %v447
  %v464 = vpack.c.b16 %v448, %v448
  %v465 = vpack.c.b16 %v449, %v449
  %v466 = vpack.c.b16 %v450, %v450
  %v467 = vpack.c.b16 %v451, %v451
  %v468 = vpack.c.b16 %v452, %v452
  %v469 = vpack.c.b16 %v453, %v453
  %v470 = vpack.c.b16 %v454, %v454
  %v471 = vpack.c.b16 %v455, %v455
  %v472 = vpack.c.b16 %v456, %v456
  %v473 = vpack.c.b16 %v457, %v457
  %v474 = vpack.c.b16 %v458, %v458
  %v475 = vpack.c.b16 %v459, %v459
  %v476 = vpack.c.b16 %v460, %v460
  %vm493 = vcmask 257024
  %494 = vst.msk [vmem:[%s3] sm:$0xf] %vm493, %v461
  %495 = vst.msk [vmem:[%s3 + $0x4] sm:$0xf] %vm493, %v462
  %496 = vst.msk [vmem:[%s3 + $0x8] sm:$0xf] %vm493, %v463
  %497 = vst.msk [vmem:[%s3 + $0xc] sm:$0xf] %vm493, %v464
  %498 = vst.msk [vmem:[%s3 + $0x10] sm:$0xf] %vm493, %v465
  %499 = vst.msk [vmem:[%s3 + $0x14] sm:$0xf] %vm493, %v466
  %500 = vst.msk [vmem:[%s3 + $0x18] sm:$0xf] %vm493, %v467
  %501 = vst.msk [vmem:[%s3 + $0x1c] sm:$0xf] %vm493, %v468
  %502 = vst.msk [vmem:[%s3 + $0x20] sm:$0xf] %vm493, %v469
  %503 = vst.msk [vmem:[%s3 + $0x24] sm:$0xf] %vm493, %v470
  %504 = vst.msk [vmem:[%s3 + $0x28] sm:$0xf] %vm493, %v471
  %505 = vst.msk [vmem:[%s3 + $0x2c] sm:$0xf] %vm493, %v472
  %506 = vst.msk [vmem:[%s3 + $0x30] sm:$0xf] %vm493, %v473
  %507 = vst.msk [vmem:[%s3 + $0x34] sm:$0xf] %vm493, %v474
  %508 = vst.msk [vmem:[%s3 + $0x38] sm:$0xf] %vm493, %v475
  %509 = vst.msk [vmem:[%s3 + $0x3c] sm:$0xf] %vm493, %v476
  // Predicated region
  $region14: #{vae1_forward.30} parent=0 // pred_check
    _
  $region15: #{vae1_forward.30} parent=0 // pred_check_branch
    %511 = sbr.rel (0) target = $region17
  $region16: #{vae1_forward.30} parent=0 // pred_region
    _
  $region17: #{vae1_forward.30} parent=0 // pred_fallthru
    _
  // Predicated region
  $region18: #{vae1_forward.30} parent=0 // pred_check
    _
  $region19: #{vae1_forward.30} parent=0 // pred_check_branch
    %513 = sbr.rel (0) target = $region21
  $region20: #{vae1_forward.30} parent=0 // pred_region
    _
  $region21: #{vae1_forward.30} parent=0 // pred_fallthru
    _

// kernel: vae1_forward.31
$region0: #{vae1_forward.31}
  #allocation0 [shape = 'u32[]', space=smem, size = 0x4, offset = 0x4, fixed_abs, tag = 'smem constant byte address 0x4 - core index']
  #allocation1 [shape = 'u32[144,128]{1,0:T(1,128)}', space=vmem, size = 0x12000, scoped, tag = 'internal scratch']
  %s0 = inlined_call_operand.vmem [shape: bf16[32,512], index: 0, kind: input, shape index: {}]
  %s1 = inlined_call_operand.vmem [shape: bf16[512,64], index: 1, kind: input, shape index: {}]
  %s2 = inlined_call_operand.vmem [shape: f32[3,64], index: 2, kind: input, shape index: {}]
  %s3 = inlined_call_operand.vmem [shape: bf16[32,64], index: 3, kind: output, shape index: {}]
  %s4 = sld [smem:[#allocation0]]
  $region22: #{vae1_forward.31} parent=0
    _
  %s6 = ssub.s32 1, %s4
  %s7 = scalar_select 0, %s6, %s4
  // Predicated region
  $region2: #{vae1_forward.31} parent=0 // pred_check
    _
  $region3: #{vae1_forward.31} parent=0 // pred_check_branch
    %9 = sbr.rel (0) target = $region5
  $region4: #{vae1_forward.31} parent=0 // pred_region
    _
  $region5: #{vae1_forward.31} parent=0 // pred_fallthru
    _
  // Predicated region
  $region6: #{vae1_forward.31} parent=0 // pred_check
    _
  $region7: #{vae1_forward.31} parent=0 // pred_check_branch
    %11 = sbr.rel (0) target = $region9
  $region8: #{vae1_forward.31} parent=0 // pred_region
    _
  $region9: #{vae1_forward.31} parent=0 // pred_fallthru
    _
  // Predicated region
  $region10: #{vae1_forward.31} parent=0 // pred_check
    _
  $region11: #{vae1_forward.31} parent=0 // pred_check_branch
    %13 = sbr.rel (0) target = $region13
  $region12: #{vae1_forward.31} parent=0 // pred_region
    _
  $region13: #{vae1_forward.31} parent=0 // pred_fallthru
    _
  %v15 = vld [vmem:[%s0] sm:$0xff]
  %v16 = vld [vmem:[%s0 + $0x8] sm:$0xff]
  %v17 = vld [vmem:[%s0 + $0x10] sm:$0xff]
  %v18 = vld [vmem:[%s0 + $0x18] sm:$0xff]
  %v19 = vld [vmem:[%s0 + $0x20] sm:$0xff]
  %v20 = vld [vmem:[%s0 + $0x28] sm:$0xff]
  %v21 = vld [vmem:[%s0 + $0x30] sm:$0xff]
  %v22 = vld [vmem:[%s0 + $0x38] sm:$0xff]
  %v23 = vld [vmem:[%s1] sm:$0xf]
  %v24 = vld [vmem:[%s1 + $0x4] sm:$0xf]
  %v25 = vld [vmem:[%s1 + $0x8] sm:$0xf]
  %v26 = vld [vmem:[%s1 + $0xc] sm:$0xf]
  %v27 = vld [vmem:[%s1 + $0x10] sm:$0xf]
  %v28 = vld [vmem:[%s1 + $0x14] sm:$0xf]
  %v29 = vld [vmem:[%s1 + $0x18] sm:$0xf]
  %v30 = vld [vmem:[%s1 + $0x1c] sm:$0xf]
  %v31 = vld [vmem:[%s1 + $0x20] sm:$0xf]
  %v32 = vld [vmem:[%s1 + $0x24] sm:$0xf]
  %v33 = vld [vmem:[%s1 + $0x28] sm:$0xf]
  %v34 = vld [vmem:[%s1 + $0x2c] sm:$0xf]
  %v35 = vld [vmem:[%s1 + $0x30] sm:$0xf]
  %v36 = vld [vmem:[%s1 + $0x34] sm:$0xf]
  %v37 = vld [vmem:[%s1 + $0x38] sm:$0xf]
  %v38 = vld [vmem:[%s1 + $0x3c] sm:$0xf]
  %v39 = vld [vmem:[%s1 + $0x40] sm:$0xf]
  %v40 = vld [vmem:[%s1 + $0x44] sm:$0xf]
  %v41 = vld [vmem:[%s1 + $0x48] sm:$0xf]
  %v42 = vld [vmem:[%s1 + $0x4c] sm:$0xf]
  %v43 = vld [vmem:[%s1 + $0x50] sm:$0xf]
  %v44 = vld [vmem:[%s1 + $0x54] sm:$0xf]
  %v45 = vld [vmem:[%s1 + $0x58] sm:$0xf]
  %v46 = vld [vmem:[%s1 + $0x5c] sm:$0xf]
  %v47 = vld [vmem:[%s1 + $0x60] sm:$0xf]
  %v48 = vld [vmem:[%s1 + $0x64] sm:$0xf]
  %v49 = vld [vmem:[%s1 + $0x68] sm:$0xf]
  %v50 = vld [vmem:[%s1 + $0x6c] sm:$0xf]
  %v51 = vld [vmem:[%s1 + $0x70] sm:$0xf]
  %v52 = vld [vmem:[%s1 + $0x74] sm:$0xf]
  %v53 = vld [vmem:[%s1 + $0x78] sm:$0xf]
  %v54 = vld [vmem:[%s1 + $0x7c] sm:$0xf]
  %v55 = vld [vmem:[%s1 + $0x80] sm:$0xf]
  %v56 = vld [vmem:[%s1 + $0x84] sm:$0xf]
  %v57 = vld [vmem:[%s1 + $0x88] sm:$0xf]
  %v58 = vld [vmem:[%s1 + $0x8c] sm:$0xf]
  %v59 = vld [vmem:[%s1 + $0x90] sm:$0xf]
  %v60 = vld [vmem:[%s1 + $0x94] sm:$0xf]
  %v61 = vld [vmem:[%s1 + $0x98] sm:$0xf]
  %v62 = vld [vmem:[%s1 + $0x9c] sm:$0xf]
  %v63 = vld [vmem:[%s1 + $0xa0] sm:$0xf]
  %v64 = vld [vmem:[%s1 + $0xa4] sm:$0xf]
  %v65 = vld [vmem:[%s1 + $0xa8] sm:$0xf]
  %v66 = vld [vmem:[%s1 + $0xac] sm:$0xf]
  %v67 = vld [vmem:[%s1 + $0xb0] sm:$0xf]
  %v68 = vld [vmem:[%s1 + $0xb4] sm:$0xf]
  %v69 = vld [vmem:[%s1 + $0xb8] sm:$0xf]
  %v70 = vld [vmem:[%s1 + $0xbc] sm:$0xf]
  %v71 = vld [vmem:[%s1 + $0xc0] sm:$0xf]
  %v72 = vld [vmem:[%s1 + $0xc4] sm:$0xf]
  %v73 = vld [vmem:[%s1 + $0xc8] sm:$0xf]
  %v74 = vld [vmem:[%s1 + $0xcc] sm:$0xf]
  %v75 = vld [vmem:[%s1 + $0xd0] sm:$0xf]
  %v76 = vld [vmem:[%s1 + $0xd4] sm:$0xf]
  %v77 = vld [vmem:[%s1 + $0xd8] sm:$0xf]
  %v78 = vld [vmem:[%s1 + $0xdc] sm:$0xf]
  %v79 = vld [vmem:[%s1 + $0xe0] sm:$0xf]
  %v80 = vld [vmem:[%s1 + $0xe4] sm:$0xf]
  %v81 = vld [vmem:[%s1 + $0xe8] sm:$0xf]
  %v82 = vld [vmem:[%s1 + $0xec] sm:$0xf]
  %v83 = vld [vmem:[%s1 + $0xf0] sm:$0xf]
  %v84 = vld [vmem:[%s1 + $0xf4] sm:$0xf]
  %v85 = vld [vmem:[%s1 + $0xf8] sm:$0xf]
  %v86 = vld [vmem:[%s1 + $0xfc] sm:$0xf]
  %v87 = vld [vmem:[%s2] sm:$0x7]
  %v88 = vlaneseq
  %v89 = vshrl.u32 %v88, 7
  %v90 = vsub.s32 0, %v89
  %v91 = vrot.slane %v87, %v90
  %v100 = vunpack.c.l.b16 %v15
  %v101 = vunpack.c.h.b16 %v15
  %v102 = vunpack.c.l.b16 %v16
  %v103 = vunpack.c.h.b16 %v16
  %v104 = vunpack.c.l.b16 %v17
  %v105 = vunpack.c.h.b16 %v17
  %v106 = vunpack.c.l.b16 %v18
  %v107 = vunpack.c.h.b16 %v18
  %v108 = vunpack.c.l.b16 %v19
  %v109 = vunpack.c.h.b16 %v19
  %v110 = vunpack.c.l.b16 %v20
  %v111 = vunpack.c.h.b16 %v20
  %v112 = vunpack.c.l.b16 %v21
  %v113 = vunpack.c.h.b16 %v21
  %v114 = vunpack.c.l.b16 %v22
  %v115 = vunpack.c.h.b16 %v22
  %v116 = vpack.c.b16 %v104, %v100
  %v117 = vpack.c.b16 %v105, %v101
  %v118 = vpack.c.b16 %v106, %v102
  %v119 = vpack.c.b16 %v107, %v103
  %v120 = vpack.c.b16 %v112, %v108
  %v121 = vpack.c.b16 %v113, %v109
  %v122 = vpack.c.b16 %v114, %v110
  %v123 = vpack.c.b16 %v115, %v111
  %v196 = vunpack.c.l.b16 %v23
  %v197 = vunpack.c.l.b16 %v24
  %v198 = vunpack.c.l.b16 %v25
  %v199 = vunpack.c.l.b16 %v26
  %v200 = vunpack.c.l.b16 %v27
  %v201 = vunpack.c.l.b16 %v28
  %v202 = vunpack.c.l.b16 %v29
  %v203 = vunpack.c.l.b16 %v30
  %v204 = vunpack.c.l.b16 %v31
  %v205 = vunpack.c.l.b16 %v32
  %v206 = vunpack.c.l.b16 %v33
  %v207 = vunpack.c.l.b16 %v34
  %v208 = vunpack.c.l.b16 %v35
  %v209 = vunpack.c.l.b16 %v36
  %v210 = vunpack.c.l.b16 %v37
  %v211 = vunpack.c.l.b16 %v38
  %v212 = vunpack.c.l.b16 %v39
  %v213 = vunpack.c.l.b16 %v40
  %v214 = vunpack.c.l.b16 %v41
  %v215 = vunpack.c.l.b16 %v42
  %v216 = vunpack.c.l.b16 %v43
  %v217 = vunpack.c.l.b16 %v44
  %v218 = vunpack.c.l.b16 %v45
  %v219 = vunpack.c.l.b16 %v46
  %v220 = vunpack.c.l.b16 %v47
  %v221 = vunpack.c.l.b16 %v48
  %v222 = vunpack.c.l.b16 %v49
  %v223 = vunpack.c.l.b16 %v50
  %v224 = vunpack.c.l.b16 %v51
  %v225 = vunpack.c.l.b16 %v52
  %v226 = vunpack.c.l.b16 %v53
  %v227 = vunpack.c.l.b16 %v54
  %v228 = vunpack.c.l.b16 %v55
  %v229 = vunpack.c.l.b16 %v56
  %v230 = vunpack.c.l.b16 %v57
  %v231 = vunpack.c.l.b16 %v58
  %v232 = vunpack.c.l.b16 %v59
  %v233 = vunpack.c.l.b16 %v60
  %v234 = vunpack.c.l.b16 %v61
  %v235 = vunpack.c.l.b16 %v62
  %v236 = vunpack.c.l.b16 %v63
  %v237 = vunpack.c.l.b16 %v64
  %v238 = vunpack.c.l.b16 %v65
  %v239 = vunpack.c.l.b16 %v66
  %v240 = vunpack.c.l.b16 %v67
  %v241 = vunpack.c.l.b16 %v68
  %v242 = vunpack.c.l.b16 %v69
  %v243 = vunpack.c.l.b16 %v70
  %v244 = vunpack.c.l.b16 %v71
  %v245 = vunpack.c.l.b16 %v72
  %v246 = vunpack.c.l.b16 %v73
  %v247 = vunpack.c.l.b16 %v74
  %v248 = vunpack.c.l.b16 %v75
  %v249 = vunpack.c.l.b16 %v76
  %v250 = vunpack.c.l.b16 %v77
  %v251 = vunpack.c.l.b16 %v78
  %v252 = vunpack.c.l.b16 %v79
  %v253 = vunpack.c.l.b16 %v80
  %v254 = vunpack.c.l.b16 %v81
  %v255 = vunpack.c.l.b16 %v82
  %v256 = vunpack.c.l.b16 %v83
  %v257 = vunpack.c.l.b16 %v84
  %v258 = vunpack.c.l.b16 %v85
  %v259 = vunpack.c.l.b16 %v86
  %v260 = vpack.c.b16 %v197, %v196
  %v261 = vpack.c.b16 %v199, %v198
  %v262 = vpack.c.b16 %v201, %v200
  %v263 = vpack.c.b16 %v203, %v202
  %v264 = vpack.c.b16 %v205, %v204
  %v265 = vpack.c.b16 %v207, %v206
  %v266 = vpack.c.b16 %v209, %v208
  %v267 = vpack.c.b16 %v211, %v210
  %v268 = vpack.c.b16 %v213, %v212
  %v269 = vpack.c.b16 %v215, %v214
  %v270 = vpack.c.b16 %v217, %v216
  %v271 = vpack.c.b16 %v219, %v218
  %v272 = vpack.c.b16 %v221, %v220
  %v273 = vpack.c.b16 %v223, %v222
  %v274 = vpack.c.b16 %v225, %v224
  %v275 = vpack.c.b16 %v227, %v226
  %v276 = vpack.c.b16 %v229, %v228
  %v277 = vpack.c.b16 %v231, %v230
  %v278 = vpack.c.b16 %v233, %v232
  %v279 = vpack.c.b16 %v235, %v234
  %v280 = vpack.c.b16 %v237, %v236
  %v281 = vpack.c.b16 %v239, %v238
  %v282 = vpack.c.b16 %v241, %v240
  %v283 = vpack.c.b16 %v243, %v242
  %v284 = vpack.c.b16 %v245, %v244
  %v285 = vpack.c.b16 %v247, %v246
  %v286 = vpack.c.b16 %v249, %v248
  %v287 = vpack.c.b16 %v251, %v250
  %v288 = vpack.c.b16 %v253, %v252
  %v289 = vpack.c.b16 %v255, %v254
  %v290 = vpack.c.b16 %v257, %v256
  %v291 = vpack.c.b16 %v259, %v258
  %324 = vmatprep.subr.bf16.mxu0 0
  %325 = vmatpush1.bf16.msra.mxu0 %v260
  %326 = vmatprep.subr.bf16.mxu0 0
  %327 = vmatpush1.bf16.msra.mxu0 %v261
  %328 = vmatprep.subr.bf16.mxu0 0
  %329 = vmatpush1.bf16.msra.mxu0 %v262
  %330 = vmatprep.subr.bf16.mxu0 0
  %331 = vmatpush1.bf16.msra.mxu0 %v263
  %332 = vmatprep.subr.bf16.mxu0 0
  %333 = vmatpush1.bf16.msra.mxu0 %v264
  %334 = vmatprep.subr.bf16.mxu0 0
  %335 = vmatpush1.bf16.msra.mxu0 %v265
  %336 = vmatprep.subr.bf16.mxu0 0
  %337 = vmatpush1.bf16.msra.mxu0 %v266
  %338 = vmatprep.subr.bf16.mxu0 0
  %339 = vmatpush1.bf16.msra.mxu0 %v267
  %340 = vmatprep.subr.bf16.mxu0 0
  %341 = vmatpush1.bf16.msra.mxu0 %v268
  %342 = vmatprep.subr.bf16.mxu0 0
  %343 = vmatpush1.bf16.msra.mxu0 %v269
  %344 = vmatprep.subr.bf16.mxu0 0
  %345 = vmatpush1.bf16.msra.mxu0 %v270
  %346 = vmatprep.subr.bf16.mxu0 0
  %347 = vmatpush1.bf16.msra.mxu0 %v271
  %348 = vmatprep.subr.bf16.mxu0 0
  %349 = vmatpush1.bf16.msra.mxu0 %v272
  %350 = vmatprep.subr.bf16.mxu0 0
  %351 = vmatpush1.bf16.msra.mxu0 %v273
  %352 = vmatprep.subr.bf16.mxu0 0
  %353 = vmatpush1.bf16.msra.mxu0 %v274
  %354 = vmatprep.subr.bf16.mxu0 0
  %355 = vmatpush1.bf16.msra.mxu0 %v275
  %356 = vmatprep.mubr.bf16.mxu0 %v117
  %357 = vmatmul.mubr.bf16.gmra.mrb[0].mxu0 %v116
  %v358 = vpop.f32.mrb[0].mxu0
  %v359 = vadd.f32 %v91, %v358
  %v360 = vpop.f32.mrb[0].mxu0
  %v361 = vpop.f32.mrb[0].mxu0
  %v362 = vadd.f32 %v91, %v361
  %v363 = vpop.f32.mrb[0].mxu0
  %364 = vmatprep.mubr.bf16.mxu0 %v121
  %365 = vmatmul.mubr.bf16.gmra.mrb[0].mxu0 %v120
  %v366 = vpop.f32.mrb[0].mxu0
  %v367 = vadd.f32 %v91, %v366
  %v368 = vpop.f32.mrb[0].mxu0
  %v369 = vpop.f32.mrb[0].mxu0
  %v370 = vadd.f32 %v91, %v369
  %v371 = vpop.f32.mrb[0].mxu0
  %372 = vdwg.mxu0
  %373 = vmatprep.subr.bf16.mxu0 0
  %374 = vmatpush1.bf16.msra.mxu0 %v276
  %375 = vmatprep.subr.bf16.mxu0 0
  %376 = vmatpush1.bf16.msra.mxu0 %v277
  %377 = vmatprep.subr.bf16.mxu0 0
  %378 = vmatpush1.bf16.msra.mxu0 %v278
  %379 = vmatprep.subr.bf16.mxu0 0
  %380 = vmatpush1.bf16.msra.mxu0 %v279
  %381 = vmatprep.subr.bf16.mxu0 0
  %382 = vmatpush1.bf16.msra.mxu0 %v280
  %383 = vmatprep.subr.bf16.mxu0 0
  %384 = vmatpush1.bf16.msra.mxu0 %v281
  %385 = vmatprep.subr.bf16.mxu0 0
  %386 = vmatpush1.bf16.msra.mxu0 %v282
  %387 = vmatprep.subr.bf16.mxu0 0
  %388 = vmatpush1.bf16.msra.mxu0 %v283
  %389 = vmatprep.subr.bf16.mxu0 0
  %390 = vmatpush1.bf16.msra.mxu0 %v284
  %391 = vmatprep.subr.bf16.mxu0 0
  %392 = vmatpush1.bf16.msra.mxu0 %v285
  %393 = vmatprep.subr.bf16.mxu0 0
  %394 = vmatpush1.bf16.msra.mxu0 %v286
  %395 = vmatprep.subr.bf16.mxu0 0
  %396 = vmatpush1.bf16.msra.mxu0 %v287
  %397 = vmatprep.subr.bf16.mxu0 0
  %398 = vmatpush1.bf16.msra.mxu0 %v288
  %399 = vmatprep.subr.bf16.mxu0 0
  %400 = vmatpush1.bf16.msra.mxu0 %v289
  %401 = vmatprep.subr.bf16.mxu0 0
  %402 = vmatpush1.bf16.msra.mxu0 %v290
  %403 = vmatprep.subr.bf16.mxu0 0
  %404 = vmatpush1.bf16.msra.mxu0 %v291
  %405 = vmatprep.mubr.bf16.mxu0 %v119
  %406 = vmatmul.mubr.bf16.gmra.mrb[0].mxu0 %v118
  %v407 = vpop.f32.mrb[0].mxu0
  %v408 = vadd.f32 %v359, %v407
  %v409 = vpop.f32.mrb[0].mxu0
  %v410 = vpop.f32.mrb[0].mxu0
  %v411 = vadd.f32 %v362, %v410
  %v412 = vpop.f32.mrb[0].mxu0
  %413 = vmatprep.mubr.bf16.mxu0 %v123
  %414 = vmatmul.mubr.bf16.gmra.mrb[0].mxu0 %v122
  %v415 = vpop.f32.mrb[0].mxu0
  %v416 = vadd.f32 %v367, %v415
  %v417 = vpop.f32.mrb[0].mxu0
  %v418 = vpop.f32.mrb[0].mxu0
  %v419 = vadd.f32 %v370, %v418
  %v420 = vpop.f32.mrb[0].mxu0
  %421 = vdwg.mxu0
  %vm422 = vcmp.ge.f32.partialorder %v408, 0.0
  %vm423 = vcmp.ge.f32.partialorder %v411, 0.0
  %vm424 = vcmp.ge.f32.partialorder %v416, 0.0
  %vm425 = vcmp.ge.f32.partialorder %v419, 0.0
  %v426 = vmul.f32 %v408, 0.2
  %v427 = vmul.f32 %v411, 0.2
  %v428 = vmul.f32 %v416, 0.2
  %v429 = vmul.f32 %v419, 0.2
  %v430 = vsel %vm422, %v408, %v426
  %v431 = vsel %vm423, %v411, %v427
  %v432 = vsel %vm424, %v416, %v428
  %v433 = vsel %vm425, %v419, %v429
  %v434 = vlaneseq
  %v435 = vshrl.u32 %v434, 7
  %v436 = vsub.s32 1, %v435
  %v437 = vrot.slane %v87, %v436
  %v438 = vmul.f32 %v430, %v437
  %v439 = vmul.f32 %v431, %v437
  %v440 = vmul.f32 %v432, %v437
  %v441 = vmul.f32 %v433, %v437
  %v442 = vlaneseq
  %v443 = vshrl.u32 %v442, 7
  %v444 = vsub.s32 2, %v443
  %v445 = vrot.slane %v87, %v444
  %v446 = vadd.f32 %v438, %v445
  %v447 = vadd.f32 %v439, %v445
  %v448 = vadd.f32 %v440, %v445
  %v449 = vadd.f32 %v441, %v445
  %v450 = vpack.c.bf16 %v447, %v446
  %v451 = vpack.c.bf16 %v449, %v448
  %v454 = vunpack.c.l.b16 %v450
  %v455 = vunpack.c.h.b16 %v450
  %v456 = vunpack.c.l.b16 %v451
  %v457 = vunpack.c.h.b16 %v451
  %v458 = vpack.c.b16 %v454, %v454
  %v459 = vpack.c.b16 %v455, %v455
  %v460 = vpack.c.b16 %v456, %v456
  %v461 = vpack.c.b16 %v457, %v457
  %vm466 = vcmask 519168
  %467 = vst.msk [vmem:[%s3] sm:$0xf] %vm466, %v458
  %468 = vst.msk [vmem:[%s3 + $0x4] sm:$0xf] %vm466, %v459
  %469 = vst.msk [vmem:[%s3 + $0x8] sm:$0xf] %vm466, %v460
  %470 = vst.msk [vmem:[%s3 + $0xc] sm:$0xf] %vm466, %v461
  // Predicated region
  $region14: #{vae1_forward.31} parent=0 // pred_check
    _
  $region15: #{vae1_forward.31} parent=0 // pred_check_branch
    %472 = sbr.rel (0) target = $region17
  $region16: #{vae1_forward.31} parent=0 // pred_region
    _
  $region17: #{vae1_forward.31} parent=0 // pred_fallthru
    _
  // Predicated region
  $region18: #{vae1_forward.31} parent=0 // pred_check
    _
  $region19: #{vae1_forward.31} parent=0 // pred_check_branch
    %474 = sbr.rel (0) target = $region21
  $region20: #{vae1_forward.31} parent=0 // pred_region
    _
  $region21: #{vae1_forward.31} parent=0 // pred_fallthru
    _

// kernel: vae1_forward.32
$region0: #{vae1_forward.32}
  #allocation0 [shape = 'u32[]', space=smem, size = 0x4, offset = 0x4, fixed_abs, tag = 'smem constant byte address 0x4 - core index']
  #allocation1 [shape = 'u32[144,128]{1,0:T(1,128)}', space=vmem, size = 0x12000, scoped, tag = 'internal scratch']
  %s0 = inlined_call_operand.vmem [shape: bf16[8,1024], index: 0, kind: input, shape index: {}]
  %s1 = inlined_call_operand.vmem [shape: bf16[1024,128], index: 1, kind: input, shape index: {}]
  %s2 = inlined_call_operand.vmem [shape: f32[3,128], index: 2, kind: input, shape index: {}]
  %s3 = inlined_call_operand.vmem [shape: bf16[8,128], index: 3, kind: output, shape index: {}]
  %s4 = sld [smem:[#allocation0]]
  $region22: #{vae1_forward.32} parent=0
    _
  %s6 = ssub.s32 1, %s4
  %s7 = scalar_select 0, %s6, %s4
  // Predicated region
  $region2: #{vae1_forward.32} parent=0 // pred_check
    _
  $region3: #{vae1_forward.32} parent=0 // pred_check_branch
    %9 = sbr.rel (0) target = $region5
  $region4: #{vae1_forward.32} parent=0 // pred_region
    _
  $region5: #{vae1_forward.32} parent=0 // pred_fallthru
    _
  // Predicated region
  $region6: #{vae1_forward.32} parent=0 // pred_check
    _
  $region7: #{vae1_forward.32} parent=0 // pred_check_branch
    %11 = sbr.rel (0) target = $region9
  $region8: #{vae1_forward.32} parent=0 // pred_region
    _
  $region9: #{vae1_forward.32} parent=0 // pred_fallthru
    _
  // Predicated region
  $region10: #{vae1_forward.32} parent=0 // pred_check
    _
  $region11: #{vae1_forward.32} parent=0 // pred_check_branch
    %13 = sbr.rel (0) target = $region13
  $region12: #{vae1_forward.32} parent=0 // pred_region
    _
  $region13: #{vae1_forward.32} parent=0 // pred_fallthru
    _
  %v15 = vld [vmem:[%s0] sm:$0xff]
  %v16 = vld [vmem:[%s0 + $0x8] sm:$0xff]
  %v17 = vld [vmem:[%s0 + $0x10] sm:$0xff]
  %v18 = vld [vmem:[%s0 + $0x18] sm:$0xff]
  %v19 = vld [vmem:[%s1] sm:$0xf]
  %v20 = vld [vmem:[%s1 + $0x4] sm:$0xf]
  %v21 = vld [vmem:[%s1 + $0x8] sm:$0xf]
  %v22 = vld [vmem:[%s1 + $0xc] sm:$0xf]
  %v23 = vld [vmem:[%s1 + $0x10] sm:$0xf]
  %v24 = vld [vmem:[%s1 + $0x14] sm:$0xf]
  %v25 = vld [vmem:[%s1 + $0x18] sm:$0xf]
  %v26 = vld [vmem:[%s1 + $0x1c] sm:$0xf]
  %v27 = vld [vmem:[%s1 + $0x20] sm:$0xf]
  %v28 = vld [vmem:[%s1 + $0x24] sm:$0xf]
  %v29 = vld [vmem:[%s1 + $0x28] sm:$0xf]
  %v30 = vld [vmem:[%s1 + $0x2c] sm:$0xf]
  %v31 = vld [vmem:[%s1 + $0x30] sm:$0xf]
  %v32 = vld [vmem:[%s1 + $0x34] sm:$0xf]
  %v33 = vld [vmem:[%s1 + $0x38] sm:$0xf]
  %v34 = vld [vmem:[%s1 + $0x3c] sm:$0xf]
  %v35 = vld [vmem:[%s1 + $0x40] sm:$0xf]
  %v36 = vld [vmem:[%s1 + $0x44] sm:$0xf]
  %v37 = vld [vmem:[%s1 + $0x48] sm:$0xf]
  %v38 = vld [vmem:[%s1 + $0x4c] sm:$0xf]
  %v39 = vld [vmem:[%s1 + $0x50] sm:$0xf]
  %v40 = vld [vmem:[%s1 + $0x54] sm:$0xf]
  %v41 = vld [vmem:[%s1 + $0x58] sm:$0xf]
  %v42 = vld [vmem:[%s1 + $0x5c] sm:$0xf]
  %v43 = vld [vmem:[%s1 + $0x60] sm:$0xf]
  %v44 = vld [vmem:[%s1 + $0x64] sm:$0xf]
  %v45 = vld [vmem:[%s1 + $0x68] sm:$0xf]
  %v46 = vld [vmem:[%s1 + $0x6c] sm:$0xf]
  %v47 = vld [vmem:[%s1 + $0x70] sm:$0xf]
  %v48 = vld [vmem:[%s1 + $0x74] sm:$0xf]
  %v49 = vld [vmem:[%s1 + $0x78] sm:$0xf]
  %v50 = vld [vmem:[%s1 + $0x7c] sm:$0xf]
  %v51 = vld [vmem:[%s1 + $0x80] sm:$0xf]
  %v52 = vld [vmem:[%s1 + $0x84] sm:$0xf]
  %v53 = vld [vmem:[%s1 + $0x88] sm:$0xf]
  %v54 = vld [vmem:[%s1 + $0x8c] sm:$0xf]
  %v55 = vld [vmem:[%s1 + $0x90] sm:$0xf]
  %v56 = vld [vmem:[%s1 + $0x94] sm:$0xf]
  %v57 = vld [vmem:[%s1 + $0x98] sm:$0xf]
  %v58 = vld [vmem:[%s1 + $0x9c] sm:$0xf]
  %v59 = vld [vmem:[%s1 + $0xa0] sm:$0xf]
  %v60 = vld [vmem:[%s1 + $0xa4] sm:$0xf]
  %v61 = vld [vmem:[%s1 + $0xa8] sm:$0xf]
  %v62 = vld [vmem:[%s1 + $0xac] sm:$0xf]
  %v63 = vld [vmem:[%s1 + $0xb0] sm:$0xf]
  %v64 = vld [vmem:[%s1 + $0xb4] sm:$0xf]
  %v65 = vld [vmem:[%s1 + $0xb8] sm:$0xf]
  %v66 = vld [vmem:[%s1 + $0xbc] sm:$0xf]
  %v67 = vld [vmem:[%s1 + $0xc0] sm:$0xf]
  %v68 = vld [vmem:[%s1 + $0xc4] sm:$0xf]
  %v69 = vld [vmem:[%s1 + $0xc8] sm:$0xf]
  %v70 = vld [vmem:[%s1 + $0xcc] sm:$0xf]
  %v71 = vld [vmem:[%s1 + $0xd0] sm:$0xf]
  %v72 = vld [vmem:[%s1 + $0xd4] sm:$0xf]
  %v73 = vld [vmem:[%s1 + $0xd8] sm:$0xf]
  %v74 = vld [vmem:[%s1 + $0xdc] sm:$0xf]
  %v75 = vld [vmem:[%s1 + $0xe0] sm:$0xf]
  %v76 = vld [vmem:[%s1 + $0xe4] sm:$0xf]
  %v77 = vld [vmem:[%s1 + $0xe8] sm:$0xf]
  %v78 = vld [vmem:[%s1 + $0xec] sm:$0xf]
  %v79 = vld [vmem:[%s1 + $0xf0] sm:$0xf]
  %v80 = vld [vmem:[%s1 + $0xf4] sm:$0xf]
  %v81 = vld [vmem:[%s1 + $0xf8] sm:$0xf]
  %v82 = vld [vmem:[%s1 + $0xfc] sm:$0xf]
  %v83 = vld [vmem:[%s1 + $0x100] sm:$0xf]
  %v84 = vld [vmem:[%s1 + $0x104] sm:$0xf]
  %v85 = vld [vmem:[%s1 + $0x108] sm:$0xf]
  %v86 = vld [vmem:[%s1 + $0x10c] sm:$0xf]
  %v87 = vld [vmem:[%s1 + $0x110] sm:$0xf]
  %v88 = vld [vmem:[%s1 + $0x114] sm:$0xf]
  %v89 = vld [vmem:[%s1 + $0x118] sm:$0xf]
  %v90 = vld [vmem:[%s1 + $0x11c] sm:$0xf]
  %v91 = vld [vmem:[%s1 + $0x120] sm:$0xf]
  %v92 = vld [vmem:[%s1 + $0x124] sm:$0xf]
  %v93 = vld [vmem:[%s1 + $0x128] sm:$0xf]
  %v94 = vld [vmem:[%s1 + $0x12c] sm:$0xf]
  %v95 = vld [vmem:[%s1 + $0x130] sm:$0xf]
  %v96 = vld [vmem:[%s1 + $0x134] sm:$0xf]
  %v97 = vld [vmem:[%s1 + $0x138] sm:$0xf]
  %v98 = vld [vmem:[%s1 + $0x13c] sm:$0xf]
  %v99 = vld [vmem:[%s1 + $0x140] sm:$0xf]
  %v100 = vld [vmem:[%s1 + $0x144] sm:$0xf]
  %v101 = vld [vmem:[%s1 + $0x148] sm:$0xf]
  %v102 = vld [vmem:[%s1 + $0x14c] sm:$0xf]
  %v103 = vld [vmem:[%s1 + $0x150] sm:$0xf]
  %v104 = vld [vmem:[%s1 + $0x154] sm:$0xf]
  %v105 = vld [vmem:[%s1 + $0x158] sm:$0xf]
  %v106 = vld [vmem:[%s1 + $0x15c] sm:$0xf]
  %v107 = vld [vmem:[%s1 + $0x160] sm:$0xf]
  %v108 = vld [vmem:[%s1 + $0x164] sm:$0xf]
  %v109 = vld [vmem:[%s1 + $0x168] sm:$0xf]
  %v110 = vld [vmem:[%s1 + $0x16c] sm:$0xf]
  %v111 = vld [vmem:[%s1 + $0x170] sm:$0xf]
  %v112 = vld [vmem:[%s1 + $0x174] sm:$0xf]
  %v113 = vld [vmem:[%s1 + $0x178] sm:$0xf]
  %v114 = vld [vmem:[%s1 + $0x17c] sm:$0xf]
  %v115 = vld [vmem:[%s1 + $0x180] sm:$0xf]
  %v116 = vld [vmem:[%s1 + $0x184] sm:$0xf]
  %v117 = vld [vmem:[%s1 + $0x188] sm:$0xf]
  %v118 = vld [vmem:[%s1 + $0x18c] sm:$0xf]
  %v119 = vld [vmem:[%s1 + $0x190] sm:$0xf]
  %v120 = vld [vmem:[%s1 + $0x194] sm:$0xf]
  %v121 = vld [vmem:[%s1 + $0x198] sm:$0xf]
  %v122 = vld [vmem:[%s1 + $0x19c] sm:$0xf]
  %v123 = vld [vmem:[%s1 + $0x1a0] sm:$0xf]
  %v124 = vld [vmem:[%s1 + $0x1a4] sm:$0xf]
  %v125 = vld [vmem:[%s1 + $0x1a8] sm:$0xf]
  %v126 = vld [vmem:[%s1 + $0x1ac] sm:$0xf]
  %v127 = vld [vmem:[%s1 + $0x1b0] sm:$0xf]
  %v128 = vld [vmem:[%s1 + $0x1b4] sm:$0xf]
  %v129 = vld [vmem:[%s1 + $0x1b8] sm:$0xf]
  %v130 = vld [vmem:[%s1 + $0x1bc] sm:$0xf]
  %v131 = vld [vmem:[%s1 + $0x1c0] sm:$0xf]
  %v132 = vld [vmem:[%s1 + $0x1c4] sm:$0xf]
  %v133 = vld [vmem:[%s1 + $0x1c8] sm:$0xf]
  %v134 = vld [vmem:[%s1 + $0x1cc] sm:$0xf]
  %v135 = vld [vmem:[%s1 + $0x1d0] sm:$0xf]
  %v136 = vld [vmem:[%s1 + $0x1d4] sm:$0xf]
  %v137 = vld [vmem:[%s1 + $0x1d8] sm:$0xf]
  %v138 = vld [vmem:[%s1 + $0x1dc] sm:$0xf]
  %v139 = vld [vmem:[%s1 + $0x1e0] sm:$0xf]
  %v140 = vld [vmem:[%s1 + $0x1e4] sm:$0xf]
  %v141 = vld [vmem:[%s1 + $0x1e8] sm:$0xf]
  %v142 = vld [vmem:[%s1 + $0x1ec] sm:$0xf]
  %v143 = vld [vmem:[%s1 + $0x1f0] sm:$0xf]
  %v144 = vld [vmem:[%s1 + $0x1f4] sm:$0xf]
  %v145 = vld [vmem:[%s1 + $0x1f8] sm:$0xf]
  %v146 = vld [vmem:[%s1 + $0x1fc] sm:$0xf]
  %v147 = vld [vmem:[%s2] sm:$0x7]
  %v148 = vlaneseq
  %v149 = vshrl.u32 %v148, 7
  %v150 = vsub.s32 0, %v149
  %v151 = vrot.slane %v147, %v150
  %v156 = vunpack.c.l.b16 %v15
  %v157 = vunpack.c.h.b16 %v15
  %v158 = vunpack.c.l.b16 %v16
  %v159 = vunpack.c.h.b16 %v16
  %v160 = vunpack.c.l.b16 %v17
  %v161 = vunpack.c.h.b16 %v17
  %v162 = vunpack.c.l.b16 %v18
  %v163 = vunpack.c.h.b16 %v18
  %v164 = vpack.c.b16 %v156, %v156
  %v165 = vpack.c.b16 %v157, %v157
  %v166 = vpack.c.b16 %v158, %v158
  %v167 = vpack.c.b16 %v159, %v159
  %v168 = vpack.c.b16 %v160, %v160
  %v169 = vpack.c.b16 %v161, %v161
  %v170 = vpack.c.b16 %v162, %v162
  %v171 = vpack.c.b16 %v163, %v163
  %v308 = vunpack.c.l.b16 %v19
  %v309 = vunpack.c.l.b16 %v20
  %v310 = vunpack.c.l.b16 %v21
  %v311 = vunpack.c.l.b16 %v22
  %v312 = vunpack.c.l.b16 %v23
  %v313 = vunpack.c.l.b16 %v24
  %v314 = vunpack.c.l.b16 %v25
  %v315 = vunpack.c.l.b16 %v26
  %v316 = vunpack.c.l.b16 %v27
  %v317 = vunpack.c.l.b16 %v28
  %v318 = vunpack.c.l.b16 %v29
  %v319 = vunpack.c.l.b16 %v30
  %v320 = vunpack.c.l.b16 %v31
  %v321 = vunpack.c.l.b16 %v32
  %v322 = vunpack.c.l.b16 %v33
  %v323 = vunpack.c.l.b16 %v34
  %v324 = vunpack.c.l.b16 %v35
  %v325 = vunpack.c.l.b16 %v36
  %v326 = vunpack.c.l.b16 %v37
  %v327 = vunpack.c.l.b16 %v38
  %v328 = vunpack.c.l.b16 %v39
  %v329 = vunpack.c.l.b16 %v40
  %v330 = vunpack.c.l.b16 %v41
  %v331 = vunpack.c.l.b16 %v42
  %v332 = vunpack.c.l.b16 %v43
  %v333 = vunpack.c.l.b16 %v44
  %v334 = vunpack.c.l.b16 %v45
  %v335 = vunpack.c.l.b16 %v46
  %v336 = vunpack.c.l.b16 %v47
  %v337 = vunpack.c.l.b16 %v48
  %v338 = vunpack.c.l.b16 %v49
  %v339 = vunpack.c.l.b16 %v50
  %v340 = vunpack.c.l.b16 %v51
  %v341 = vunpack.c.l.b16 %v52
  %v342 = vunpack.c.l.b16 %v53
  %v343 = vunpack.c.l.b16 %v54
  %v344 = vunpack.c.l.b16 %v55
  %v345 = vunpack.c.l.b16 %v56
  %v346 = vunpack.c.l.b16 %v57
  %v347 = vunpack.c.l.b16 %v58
  %v348 = vunpack.c.l.b16 %v59
  %v349 = vunpack.c.l.b16 %v60
  %v350 = vunpack.c.l.b16 %v61
  %v351 = vunpack.c.l.b16 %v62
  %v352 = vunpack.c.l.b16 %v63
  %v353 = vunpack.c.l.b16 %v64
  %v354 = vunpack.c.l.b16 %v65
  %v355 = vunpack.c.l.b16 %v66
  %v356 = vunpack.c.l.b16 %v67
  %v357 = vunpack.c.l.b16 %v68
  %v358 = vunpack.c.l.b16 %v69
  %v359 = vunpack.c.l.b16 %v70
  %v360 = vunpack.c.l.b16 %v71
  %v361 = vunpack.c.l.b16 %v72
  %v362 = vunpack.c.l.b16 %v73
  %v363 = vunpack.c.l.b16 %v74
  %v364 = vunpack.c.l.b16 %v75
  %v365 = vunpack.c.l.b16 %v76
  %v366 = vunpack.c.l.b16 %v77
  %v367 = vunpack.c.l.b16 %v78
  %v368 = vunpack.c.l.b16 %v79
  %v369 = vunpack.c.l.b16 %v80
  %v370 = vunpack.c.l.b16 %v81
  %v371 = vunpack.c.l.b16 %v82
  %v372 = vunpack.c.l.b16 %v83
  %v373 = vunpack.c.l.b16 %v84
  %v374 = vunpack.c.l.b16 %v85
  %v375 = vunpack.c.l.b16 %v86
  %v376 = vunpack.c.l.b16 %v87
  %v377 = vunpack.c.l.b16 %v88
  %v378 = vunpack.c.l.b16 %v89
  %v379 = vunpack.c.l.b16 %v90
  %v380 = vunpack.c.l.b16 %v91
  %v381 = vunpack.c.l.b16 %v92
  %v382 = vunpack.c.l.b16 %v93
  %v383 = vunpack.c.l.b16 %v94
  %v384 = vunpack.c.l.b16 %v95
  %v385 = vunpack.c.l.b16 %v96
  %v386 = vunpack.c.l.b16 %v97
  %v387 = vunpack.c.l.b16 %v98
  %v388 = vunpack.c.l.b16 %v99
  %v389 = vunpack.c.l.b16 %v100
  %v390 = vunpack.c.l.b16 %v101
  %v391 = vunpack.c.l.b16 %v102
  %v392 = vunpack.c.l.b16 %v103
  %v393 = vunpack.c.l.b16 %v104
  %v394 = vunpack.c.l.b16 %v105
  %v395 = vunpack.c.l.b16 %v106
  %v396 = vunpack.c.l.b16 %v107
  %v397 = vunpack.c.l.b16 %v108
  %v398 = vunpack.c.l.b16 %v109
  %v399 = vunpack.c.l.b16 %v110
  %v400 = vunpack.c.l.b16 %v111
  %v401 = vunpack.c.l.b16 %v112
  %v402 = vunpack.c.l.b16 %v113
  %v403 = vunpack.c.l.b16 %v114
  %v404 = vunpack.c.l.b16 %v115
  %v405 = vunpack.c.l.b16 %v116
  %v406 = vunpack.c.l.b16 %v117
  %v407 = vunpack.c.l.b16 %v118
  %v408 = vunpack.c.l.b16 %v119
  %v409 = vunpack.c.l.b16 %v120
  %v410 = vunpack.c.l.b16 %v121
  %v411 = vunpack.c.l.b16 %v122
  %v412 = vunpack.c.l.b16 %v123
  %v413 = vunpack.c.l.b16 %v124
  %v414 = vunpack.c.l.b16 %v125
  %v415 = vunpack.c.l.b16 %v126
  %v416 = vunpack.c.l.b16 %v127
  %v417 = vunpack.c.l.b16 %v128
  %v418 = vunpack.c.l.b16 %v129
  %v419 = vunpack.c.l.b16 %v130
  %v420 = vunpack.c.l.b16 %v131
  %v421 = vunpack.c.l.b16 %v132
  %v422 = vunpack.c.l.b16 %v133
  %v423 = vunpack.c.l.b16 %v134
  %v424 = vunpack.c.l.b16 %v135
  %v425 = vunpack.c.l.b16 %v136
  %v426 = vunpack.c.l.b16 %v137
  %v427 = vunpack.c.l.b16 %v138
  %v428 = vunpack.c.l.b16 %v139
  %v429 = vunpack.c.l.b16 %v140
  %v430 = vunpack.c.l.b16 %v141
  %v431 = vunpack.c.l.b16 %v142
  %v432 = vunpack.c.l.b16 %v143
  %v433 = vunpack.c.l.b16 %v144
  %v434 = vunpack.c.l.b16 %v145
  %v435 = vunpack.c.l.b16 %v146
  %v436 = vpack.c.b16 %v309, %v308
  %v437 = vpack.c.b16 %v311, %v310
  %v438 = vpack.c.b16 %v313, %v312
  %v439 = vpack.c.b16 %v315, %v314
  %v440 = vpack.c.b16 %v317, %v316
  %v441 = vpack.c.b16 %v319, %v318
  %v442 = vpack.c.b16 %v321, %v320
  %v443 = vpack.c.b16 %v323, %v322
  %v444 = vpack.c.b16 %v325, %v324
  %v445 = vpack.c.b16 %v327, %v326
  %v446 = vpack.c.b16 %v329, %v328
  %v447 = vpack.c.b16 %v331, %v330
  %v448 = vpack.c.b16 %v333, %v332
  %v449 = vpack.c.b16 %v335, %v334
  %v450 = vpack.c.b16 %v337, %v336
  %v451 = vpack.c.b16 %v339, %v338
  %v452 = vpack.c.b16 %v341, %v340
  %v453 = vpack.c.b16 %v343, %v342
  %v454 = vpack.c.b16 %v345, %v344
  %v455 = vpack.c.b16 %v347, %v346
  %v456 = vpack.c.b16 %v349, %v348
  %v457 = vpack.c.b16 %v351, %v350
  %v458 = vpack.c.b16 %v353, %v352
  %v459 = vpack.c.b16 %v355, %v354
  %v460 = vpack.c.b16 %v357, %v356
  %v461 = vpack.c.b16 %v359, %v358
  %v462 = vpack.c.b16 %v361, %v360
  %v463 = vpack.c.b16 %v363, %v362
  %v464 = vpack.c.b16 %v365, %v364
  %v465 = vpack.c.b16 %v367, %v366
  %v466 = vpack.c.b16 %v369, %v368
  %v467 = vpack.c.b16 %v371, %v370
  %v468 = vpack.c.b16 %v373, %v372
  %v469 = vpack.c.b16 %v375, %v374
  %v470 = vpack.c.b16 %v377, %v376
  %v471 = vpack.c.b16 %v379, %v378
  %v472 = vpack.c.b16 %v381, %v380
  %v473 = vpack.c.b16 %v383, %v382
  %v474 = vpack.c.b16 %v385, %v384
  %v475 = vpack.c.b16 %v387, %v386
  %v476 = vpack.c.b16 %v389, %v388
  %v477 = vpack.c.b16 %v391, %v390
  %v478 = vpack.c.b16 %v393, %v392
  %v479 = vpack.c.b16 %v395, %v394
  %v480 = vpack.c.b16 %v397, %v396
  %v481 = vpack.c.b16 %v399, %v398
  %v482 = vpack.c.b16 %v401, %v400
  %v483 = vpack.c.b16 %v403, %v402
  %v484 = vpack.c.b16 %v405, %v404
  %v485 = vpack.c.b16 %v407, %v406
  %v486 = vpack.c.b16 %v409, %v408
  %v487 = vpack.c.b16 %v411, %v410
  %v488 = vpack.c.b16 %v413, %v412
  %v489 = vpack.c.b16 %v415, %v414
  %v490 = vpack.c.b16 %v417, %v416
  %v491 = vpack.c.b16 %v419, %v418
  %v492 = vpack.c.b16 %v421, %v420
  %v493 = vpack.c.b16 %v423, %v422
  %v494 = vpack.c.b16 %v425, %v424
  %v495 = vpack.c.b16 %v427, %v426
  %v496 = vpack.c.b16 %v429, %v428
  %v497 = vpack.c.b16 %v431, %v430
  %v498 = vpack.c.b16 %v433, %v432
  %v499 = vpack.c.b16 %v435, %v434
  %564 = vmatprep.subr.bf16.mxu0 0
  %565 = vmatpush1.bf16.msra.mxu0 %v436
  %566 = vmatprep.subr.bf16.mxu0 0
  %567 = vmatpush1.bf16.msra.mxu0 %v437
  %568 = vmatprep.subr.bf16.mxu0 0
  %569 = vmatpush1.bf16.msra.mxu0 %v438
  %570 = vmatprep.subr.bf16.mxu0 0
  %571 = vmatpush1.bf16.msra.mxu0 %v439
  %572 = vmatprep.subr.bf16.mxu0 0
  %573 = vmatpush1.bf16.msra.mxu0 %v440
  %574 = vmatprep.subr.bf16.mxu0 0
  %575 = vmatpush1.bf16.msra.mxu0 %v441
  %576 = vmatprep.subr.bf16.mxu0 0
  %577 = vmatpush1.bf16.msra.mxu0 %v442
  %578 = vmatprep.subr.bf16.mxu0 0
  %579 = vmatpush1.bf16.msra.mxu0 %v443
  %580 = vmatprep.subr.bf16.mxu0 0
  %581 = vmatpush1.bf16.msra.mxu0 %v444
  %582 = vmatprep.subr.bf16.mxu0 0
  %583 = vmatpush1.bf16.msra.mxu0 %v445
  %584 = vmatprep.subr.bf16.mxu0 0
  %585 = vmatpush1.bf16.msra.mxu0 %v446
  %586 = vmatprep.subr.bf16.mxu0 0
  %587 = vmatpush1.bf16.msra.mxu0 %v447
  %588 = vmatprep.subr.bf16.mxu0 0
  %589 = vmatpush1.bf16.msra.mxu0 %v448
  %590 = vmatprep.subr.bf16.mxu0 0
  %591 = vmatpush1.bf16.msra.mxu0 %v449
  %592 = vmatprep.subr.bf16.mxu0 0
  %593 = vmatpush1.bf16.msra.mxu0 %v450
  %594 = vmatprep.subr.bf16.mxu0 0
  %595 = vmatpush1.bf16.msra.mxu0 %v451
  %596 = vmatprep.mubr.bf16.mxu0 %v165
  %597 = vmatmul.mubr.bf16.gmra.mrb[0].mxu0 %v164
  %v598 = vpop.f32.mrb[0].mxu0
  %v599 = vadd.f32 %v151, %v598
  %v600 = vpop.f32.mrb[0].mxu0
  %v601 = vpop.f32.mrb[0].mxu0
  %v602 = vpop.f32.mrb[0].mxu0
  %603 = vdwg.mxu0
  %604 = vmatprep.subr.bf16.mxu0 0
  %605 = vmatpush1.bf16.msra.mxu0 %v452
  %606 = vmatprep.subr.bf16.mxu0 0
  %607 = vmatpush1.bf16.msra.mxu0 %v453
  %608 = vmatprep.subr.bf16.mxu0 0
  %609 = vmatpush1.bf16.msra.mxu0 %v454
  %610 = vmatprep.subr.bf16.mxu0 0
  %611 = vmatpush1.bf16.msra.mxu0 %v455
  %612 = vmatprep.subr.bf16.mxu0 0
  %613 = vmatpush1.bf16.msra.mxu0 %v456
  %614 = vmatprep.subr.bf16.mxu0 0
  %615 = vmatpush1.bf16.msra.mxu0 %v457
  %616 = vmatprep.subr.bf16.mxu0 0
  %617 = vmatpush1.bf16.msra.mxu0 %v458
  %618 = vmatprep.subr.bf16.mxu0 0
  %619 = vmatpush1.bf16.msra.mxu0 %v459
  %620 = vmatprep.subr.bf16.mxu0 0
  %621 = vmatpush1.bf16.msra.mxu0 %v460
  %622 = vmatprep.subr.bf16.mxu0 0
  %623 = vmatpush1.bf16.msra.mxu0 %v461
  %624 = vmatprep.subr.bf16.mxu0 0
  %625 = vmatpush1.bf16.msra.mxu0 %v462
  %626 = vmatprep.subr.bf16.mxu0 0
  %627 = vmatpush1.bf16.msra.mxu0 %v463
  %628 = vmatprep.subr.bf16.mxu0 0
  %629 = vmatpush1.bf16.msra.mxu0 %v464
  %630 = vmatprep.subr.bf16.mxu0 0
  %631 = vmatpush1.bf16.msra.mxu0 %v465
  %632 = vmatprep.subr.bf16.mxu0 0
  %633 = vmatpush1.bf16.msra.mxu0 %v466
  %634 = vmatprep.subr.bf16.mxu0 0
  %635 = vmatpush1.bf16.msra.mxu0 %v467
  %636 = vmatprep.mubr.bf16.mxu0 %v167
  %637 = vmatmul.mubr.bf16.gmra.mrb[0].mxu0 %v166
  %v638 = vpop.f32.mrb[0].mxu0
  %v639 = vadd.f32 %v599, %v638
  %v640 = vpop.f32.mrb[0].mxu0
  %v641 = vpop.f32.mrb[0].mxu0
  %v642 = vpop.f32.mrb[0].mxu0
  %643 = vdwg.mxu0
  %644 = vmatprep.subr.bf16.mxu0 0
  %645 = vmatpush1.bf16.msra.mxu0 %v468
  %646 = vmatprep.subr.bf16.mxu0 0
  %647 = vmatpush1.bf16.msra.mxu0 %v469
  %648 = vmatprep.subr.bf16.mxu0 0
  %649 = vmatpush1.bf16.msra.mxu0 %v470
  %650 = vmatprep.subr.bf16.mxu0 0
  %651 = vmatpush1.bf16.msra.mxu0 %v471
  %652 = vmatprep.subr.bf16.mxu0 0
  %653 = vmatpush1.bf16.msra.mxu0 %v472
  %654 = vmatprep.subr.bf16.mxu0 0
  %655 = vmatpush1.bf16.msra.mxu0 %v473
  %656 = vmatprep.subr.bf16.mxu0 0
  %657 = vmatpush1.bf16.msra.mxu0 %v474
  %658 = vmatprep.subr.bf16.mxu0 0
  %659 = vmatpush1.bf16.msra.mxu0 %v475
  %660 = vmatprep.subr.bf16.mxu0 0
  %661 = vmatpush1.bf16.msra.mxu0 %v476
  %662 = vmatprep.subr.bf16.mxu0 0
  %663 = vmatpush1.bf16.msra.mxu0 %v477
  %664 = vmatprep.subr.bf16.mxu0 0
  %665 = vmatpush1.bf16.msra.mxu0 %v478
  %666 = vmatprep.subr.bf16.mxu0 0
  %667 = vmatpush1.bf16.msra.mxu0 %v479
  %668 = vmatprep.subr.bf16.mxu0 0
  %669 = vmatpush1.bf16.msra.mxu0 %v480
  %670 = vmatprep.subr.bf16.mxu0 0
  %671 = vmatpush1.bf16.msra.mxu0 %v481
  %672 = vmatprep.subr.bf16.mxu0 0
  %673 = vmatpush1.bf16.msra.mxu0 %v482
  %674 = vmatprep.subr.bf16.mxu0 0
  %675 = vmatpush1.bf16.msra.mxu0 %v483
  %676 = vmatprep.mubr.bf16.mxu0 %v169
  %677 = vmatmul.mubr.bf16.gmra.mrb[0].mxu0 %v168
  %v678 = vpop.f32.mrb[0].mxu0
  %v679 = vadd.f32 %v639, %v678
  %v680 = vpop.f32.mrb[0].mxu0
  %v681 = vpop.f32.mrb[0].mxu0
  %v682 = vpop.f32.mrb[0].mxu0
  %683 = vdwg.mxu0
  %684 = vmatprep.subr.bf16.mxu0 0
  %685 = vmatpush1.bf16.msra.mxu0 %v484
  %686 = vmatprep.subr.bf16.mxu0 0
  %687 = vmatpush1.bf16.msra.mxu0 %v485
  %688 = vmatprep.subr.bf16.mxu0 0
  %689 = vmatpush1.bf16.msra.mxu0 %v486
  %690 = vmatprep.subr.bf16.mxu0 0
  %691 = vmatpush1.bf16.msra.mxu0 %v487
  %692 = vmatprep.subr.bf16.mxu0 0
  %693 = vmatpush1.bf16.msra.mxu0 %v488
  %694 = vmatprep.subr.bf16.mxu0 0
  %695 = vmatpush1.bf16.msra.mxu0 %v489
  %696 = vmatprep.subr.bf16.mxu0 0
  %697 = vmatpush1.bf16.msra.mxu0 %v490
  %698 = vmatprep.subr.bf16.mxu0 0
  %699 = vmatpush1.bf16.msra.mxu0 %v491
  %700 = vmatprep.subr.bf16.mxu0 0
  %701 = vmatpush1.bf16.msra.mxu0 %v492
  %702 = vmatprep.subr.bf16.mxu0 0
  %703 = vmatpush1.bf16.msra.mxu0 %v493
  %704 = vmatprep.subr.bf16.mxu0 0
  %705 = vmatpush1.bf16.msra.mxu0 %v494
  %706 = vmatprep.subr.bf16.mxu0 0
  %707 = vmatpush1.bf16.msra.mxu0 %v495
  %708 = vmatprep.subr.bf16.mxu0 0
  %709 = vmatpush1.bf16.msra.mxu0 %v496
  %710 = vmatprep.subr.bf16.mxu0 0
  %711 = vmatpush1.bf16.msra.mxu0 %v497
  %712 = vmatprep.subr.bf16.mxu0 0
  %713 = vmatpush1.bf16.msra.mxu0 %v498
  %714 = vmatprep.subr.bf16.mxu0 0
  %715 = vmatpush1.bf16.msra.mxu0 %v499
  %716 = vmatprep.mubr.bf16.mxu0 %v171
  %717 = vmatmul.mubr.bf16.gmra.mrb[0].mxu0 %v170
  %v718 = vpop.f32.mrb[0].mxu0
  %v719 = vadd.f32 %v679, %v718
  %v720 = vpop.f32.mrb[0].mxu0
  %v721 = vpop.f32.mrb[0].mxu0
  %v722 = vpop.f32.mrb[0].mxu0
  %723 = vdwg.mxu0
  %vm724 = vcmp.ge.f32.partialorder %v719, 0.0
  %v725 = vmul.f32 %v719, 0.2
  %v726 = vsel %vm724, %v719, %v725
  %v727 = vlaneseq
  %v728 = vshrl.u32 %v727, 7
  %v729 = vsub.s32 1, %v728
  %v730 = vrot.slane %v147, %v729
  %v731 = vmul.f32 %v726, %v730
  %v732 = vlaneseq
  %v733 = vshrl.u32 %v732, 7
  %v734 = vsub.s32 2, %v733
  %v735 = vrot.slane %v147, %v734
  %v736 = vadd.f32 %v731, %v735
  %v737 = vpack.c.bf16 %v736, %v736
  %738 = vst [vmem:[%s3] sm:$0xf] %v737
  // Predicated region
  $region14: #{vae1_forward.32} parent=0 // pred_check
    _
  $region15: #{vae1_forward.32} parent=0 // pred_check_branch
    %740 = sbr.rel (0) target = $region17
  $region16: #{vae1_forward.32} parent=0 // pred_region
    _
  $region17: #{vae1_forward.32} parent=0 // pred_fallthru
    _
  // Predicated region
  $region18: #{vae1_forward.32} parent=0 // pred_check
    _
  $region19: #{vae1_forward.32} parent=0 // pred_check_branch
    %742 = sbr.rel (0) target = $region21
  $region20: #{vae1_forward.32} parent=0 // pred_region
    _
  $region21: #{vae1_forward.32} parent=0 // pred_fallthru
    _

// kernel: vae1_forward.33
$region0: #{vae1_forward.33}
  #allocation0 [shape = 'u32[]', space=smem, size = 0x4, offset = 0x4, fixed_abs, tag = 'smem constant byte address 0x4 - core index']
  #allocation1 [shape = 'u32[144,128]{1,0:T(1,128)}', space=vmem, size = 0x12000, scoped, tag = 'internal scratch']
  %s0 = inlined_call_operand.vmem [shape: bf16[8,2048], index: 0, kind: input, shape index: {}]
  %s1 = inlined_call_operand.vmem [shape: bf16[2048,128], index: 1, kind: input, shape index: {}]
  %s2 = inlined_call_operand.vmem [shape: f32[3,128], index: 2, kind: input, shape index: {}]
  %s3 = inlined_call_operand.vmem [shape: bf16[8,128], index: 3, kind: output, shape index: {}]
  %s4 = sld [smem:[#allocation0]]
  $region22: #{vae1_forward.33} parent=0
    _
  %s6 = ssub.s32 1, %s4
  %s7 = scalar_select 0, %s6, %s4
  // Predicated region
  $region2: #{vae1_forward.33} parent=0 // pred_check
    _
  $region3: #{vae1_forward.33} parent=0 // pred_check_branch
    %9 = sbr.rel (0) target = $region5
  $region4: #{vae1_forward.33} parent=0 // pred_region
    _
  $region5: #{vae1_forward.33} parent=0 // pred_fallthru
    _
  // Predicated region
  $region6: #{vae1_forward.33} parent=0 // pred_check
    _
  $region7: #{vae1_forward.33} parent=0 // pred_check_branch
    %11 = sbr.rel (0) target = $region9
  $region8: #{vae1_forward.33} parent=0 // pred_region
    _
  $region9: #{vae1_forward.33} parent=0 // pred_fallthru
    _
  // Predicated region
  $region10: #{vae1_forward.33} parent=0 // pred_check
    _
  $region11: #{vae1_forward.33} parent=0 // pred_check_branch
    %13 = sbr.rel (0) target = $region13
  $region12: #{vae1_forward.33} parent=0 // pred_region
    _
  $region13: #{vae1_forward.33} parent=0 // pred_fallthru
    _
  %v15 = vld [vmem:[%s0] sm:$0xff]
  %v16 = vld [vmem:[%s0 + $0x8] sm:$0xff]
  %v17 = vld [vmem:[%s0 + $0x10] sm:$0xff]
  %v18 = vld [vmem:[%s0 + $0x18] sm:$0xff]
  %v19 = vld [vmem:[%s0 + $0x20] sm:$0xff]
  %v20 = vld [vmem:[%s0 + $0x28] sm:$0xff]
  %v21 = vld [vmem:[%s0 + $0x30] sm:$0xff]
  %v22 = vld [vmem:[%s0 + $0x38] sm:$0xff]
  %v23 = vld [vmem:[%s1] sm:$0xf]
  %v24 = vld [vmem:[%s1 + $0x4] sm:$0xf]
  %v25 = vld [vmem:[%s1 + $0x8] sm:$0xf]
  %v26 = vld [vmem:[%s1 + $0xc] sm:$0xf]
  %v27 = vld [vmem:[%s1 + $0x10] sm:$0xf]
  %v28 = vld [vmem:[%s1 + $0x14] sm:$0xf]
  %v29 = vld [vmem:[%s1 + $0x18] sm:$0xf]
  %v30 = vld [vmem:[%s1 + $0x1c] sm:$0xf]
  %v31 = vld [vmem:[%s1 + $0x20] sm:$0xf]
  %v32 = vld [vmem:[%s1 + $0x24] sm:$0xf]
  %v33 = vld [vmem:[%s1 + $0x28] sm:$0xf]
  %v34 = vld [vmem:[%s1 + $0x2c] sm:$0xf]
  %v35 = vld [vmem:[%s1 + $0x30] sm:$0xf]
  %v36 = vld [vmem:[%s1 + $0x34] sm:$0xf]
  %v37 = vld [vmem:[%s1 + $0x38] sm:$0xf]
  %v38 = vld [vmem:[%s1 + $0x3c] sm:$0xf]
  %v39 = vld [vmem:[%s1 + $0x40] sm:$0xf]
  %v40 = vld [vmem:[%s1 + $0x44] sm:$0xf]
  %v41 = vld [vmem:[%s1 + $0x48] sm:$0xf]
  %v42 = vld [vmem:[%s1 + $0x4c] sm:$0xf]
  %v43 = vld [vmem:[%s1 + $0x50] sm:$0xf]
  %v44 = vld [vmem:[%s1 + $0x54] sm:$0xf]
  %v45 = vld [vmem:[%s1 + $0x58] sm:$0xf]
  %v46 = vld [vmem:[%s1 + $0x5c] sm:$0xf]
  %v47 = vld [vmem:[%s1 + $0x60] sm:$0xf]
  %v48 = vld [vmem:[%s1 + $0x64] sm:$0xf]
  %v49 = vld [vmem:[%s1 + $0x68] sm:$0xf]
  %v50 = vld [vmem:[%s1 + $0x6c] sm:$0xf]
  %v51 = vld [vmem:[%s1 + $0x70] sm:$0xf]
  %v52 = vld [vmem:[%s1 + $0x74] sm:$0xf]
  %v53 = vld [vmem:[%s1 + $0x78] sm:$0xf]
  %v54 = vld [vmem:[%s1 + $0x7c] sm:$0xf]
  %v55 = vld [vmem:[%s1 + $0x80] sm:$0xf]
  %v56 = vld [vmem:[%s1 + $0x84] sm:$0xf]
  %v57 = vld [vmem:[%s1 + $0x88] sm:$0xf]
  %v58 = vld [vmem:[%s1 + $0x8c] sm:$0xf]
  %v59 = vld [vmem:[%s1 + $0x90] sm:$0xf]
  %v60 = vld [vmem:[%s1 + $0x94] sm:$0xf]
  %v61 = vld [vmem:[%s1 + $0x98] sm:$0xf]
  %v62 = vld [vmem:[%s1 + $0x9c] sm:$0xf]
  %v63 = vld [vmem:[%s1 + $0xa0] sm:$0xf]
  %v64 = vld [vmem:[%s1 + $0xa4] sm:$0xf]
  %v65 = vld [vmem:[%s1 + $0xa8] sm:$0xf]
  %v66 = vld [vmem:[%s1 + $0xac] sm:$0xf]
  %v67 = vld [vmem:[%s1 + $0xb0] sm:$0xf]
  %v68 = vld [vmem:[%s1 + $0xb4] sm:$0xf]
  %v69 = vld [vmem:[%s1 + $0xb8] sm:$0xf]
  %v70 = vld [vmem:[%s1 + $0xbc] sm:$0xf]
  %v71 = vld [vmem:[%s1 + $0xc0] sm:$0xf]
  %v72 = vld [vmem:[%s1 + $0xc4] sm:$0xf]
  %v73 = vld [vmem:[%s1 + $0xc8] sm:$0xf]
  %v74 = vld [vmem:[%s1 + $0xcc] sm:$0xf]
  %v75 = vld [vmem:[%s1 + $0xd0] sm:$0xf]
  %v76 = vld [vmem:[%s1 + $0xd4] sm:$0xf]
  %v77 = vld [vmem:[%s1 + $0xd8] sm:$0xf]
  %v78 = vld [vmem:[%s1 + $0xdc] sm:$0xf]
  %v79 = vld [vmem:[%s1 + $0xe0] sm:$0xf]
  %v80 = vld [vmem:[%s1 + $0xe4] sm:$0xf]
  %v81 = vld [vmem:[%s1 + $0xe8] sm:$0xf]
  %v82 = vld [vmem:[%s1 + $0xec] sm:$0xf]
  %v83 = vld [vmem:[%s1 + $0xf0] sm:$0xf]
  %v84 = vld [vmem:[%s1 + $0xf4] sm:$0xf]
  %v85 = vld [vmem:[%s1 + $0xf8] sm:$0xf]
  %v86 = vld [vmem:[%s1 + $0xfc] sm:$0xf]
  %v87 = vld [vmem:[%s1 + $0x100] sm:$0xf]
  %v88 = vld [vmem:[%s1 + $0x104] sm:$0xf]
  %v89 = vld [vmem:[%s1 + $0x108] sm:$0xf]
  %v90 = vld [vmem:[%s1 + $0x10c] sm:$0xf]
  %v91 = vld [vmem:[%s1 + $0x110] sm:$0xf]
  %v92 = vld [vmem:[%s1 + $0x114] sm:$0xf]
  %v93 = vld [vmem:[%s1 + $0x118] sm:$0xf]
  %v94 = vld [vmem:[%s1 + $0x11c] sm:$0xf]
  %v95 = vld [vmem:[%s1 + $0x120] sm:$0xf]
  %v96 = vld [vmem:[%s1 + $0x124] sm:$0xf]
  %v97 = vld [vmem:[%s1 + $0x128] sm:$0xf]
  %v98 = vld [vmem:[%s1 + $0x12c] sm:$0xf]
  %v99 = vld [vmem:[%s1 + $0x130] sm:$0xf]
  %v100 = vld [vmem:[%s1 + $0x134] sm:$0xf]
  %v101 = vld [vmem:[%s1 + $0x138] sm:$0xf]
  %v102 = vld [vmem:[%s1 + $0x13c] sm:$0xf]
  %v103 = vld [vmem:[%s1 + $0x140] sm:$0xf]
  %v104 = vld [vmem:[%s1 + $0x144] sm:$0xf]
  %v105 = vld [vmem:[%s1 + $0x148] sm:$0xf]
  %v106 = vld [vmem:[%s1 + $0x14c] sm:$0xf]
  %v107 = vld [vmem:[%s1 + $0x150] sm:$0xf]
  %v108 = vld [vmem:[%s1 + $0x154] sm:$0xf]
  %v109 = vld [vmem:[%s1 + $0x158] sm:$0xf]
  %v110 = vld [vmem:[%s1 + $0x15c] sm:$0xf]
  %v111 = vld [vmem:[%s1 + $0x160] sm:$0xf]
  %v112 = vld [vmem:[%s1 + $0x164] sm:$0xf]
  %v113 = vld [vmem:[%s1 + $0x168] sm:$0xf]
  %v114 = vld [vmem:[%s1 + $0x16c] sm:$0xf]
  %v115 = vld [vmem:[%s1 + $0x170] sm:$0xf]
  %v116 = vld [vmem:[%s1 + $0x174] sm:$0xf]
  %v117 = vld [vmem:[%s1 + $0x178] sm:$0xf]
  %v118 = vld [vmem:[%s1 + $0x17c] sm:$0xf]
  %v119 = vld [vmem:[%s1 + $0x180] sm:$0xf]
  %v120 = vld [vmem:[%s1 + $0x184] sm:$0xf]
  %v121 = vld [vmem:[%s1 + $0x188] sm:$0xf]
  %v122 = vld [vmem:[%s1 + $0x18c] sm:$0xf]
  %v123 = vld [vmem:[%s1 + $0x190] sm:$0xf]
  %v124 = vld [vmem:[%s1 + $0x194] sm:$0xf]
  %v125 = vld [vmem:[%s1 + $0x198] sm:$0xf]
  %v126 = vld [vmem:[%s1 + $0x19c] sm:$0xf]
  %v127 = vld [vmem:[%s1 + $0x1a0] sm:$0xf]
  %v128 = vld [vmem:[%s1 + $0x1a4] sm:$0xf]
  %v129 = vld [vmem:[%s1 + $0x1a8] sm:$0xf]
  %v130 = vld [vmem:[%s1 + $0x1ac] sm:$0xf]
  %v131 = vld [vmem:[%s1 + $0x1b0] sm:$0xf]
  %v132 = vld [vmem:[%s1 + $0x1b4] sm:$0xf]
  %v133 = vld [vmem:[%s1 + $0x1b8] sm:$0xf]
  %v134 = vld [vmem:[%s1 + $0x1bc] sm:$0xf]
  %v135 = vld [vmem:[%s1 + $0x1c0] sm:$0xf]
  %v136 = vld [vmem:[%s1 + $0x1c4] sm:$0xf]
  %v137 = vld [vmem:[%s1 + $0x1c8] sm:$0xf]
  %v138 = vld [vmem:[%s1 + $0x1cc] sm:$0xf]
  %v139 = vld [vmem:[%s1 + $0x1d0] sm:$0xf]
  %v140 = vld [vmem:[%s1 + $0x1d4] sm:$0xf]
  %v141 = vld [vmem:[%s1 + $0x1d8] sm:$0xf]
  %v142 = vld [vmem:[%s1 + $0x1dc] sm:$0xf]
  %v143 = vld [vmem:[%s1 + $0x1e0] sm:$0xf]
  %v144 = vld [vmem:[%s1 + $0x1e4] sm:$0xf]
  %v145 = vld [vmem:[%s1 + $0x1e8] sm:$0xf]
  %v146 = vld [vmem:[%s1 + $0x1ec] sm:$0xf]
  %v147 = vld [vmem:[%s1 + $0x1f0] sm:$0xf]
  %v148 = vld [vmem:[%s1 + $0x1f4] sm:$0xf]
  %v149 = vld [vmem:[%s1 + $0x1f8] sm:$0xf]
  %v150 = vld [vmem:[%s1 + $0x1fc] sm:$0xf]
  %v151 = vld [vmem:[%s1 + $0x200] sm:$0xf]
  %v152 = vld [vmem:[%s1 + $0x204] sm:$0xf]
  %v153 = vld [vmem:[%s1 + $0x208] sm:$0xf]
  %v154 = vld [vmem:[%s1 + $0x20c] sm:$0xf]
  %v155 = vld [vmem:[%s1 + $0x210] sm:$0xf]
  %v156 = vld [vmem:[%s1 + $0x214] sm:$0xf]
  %v157 = vld [vmem:[%s1 + $0x218] sm:$0xf]
  %v158 = vld [vmem:[%s1 + $0x21c] sm:$0xf]
  %v159 = vld [vmem:[%s1 + $0x220] sm:$0xf]
  %v160 = vld [vmem:[%s1 + $0x224] sm:$0xf]
  %v161 = vld [vmem:[%s1 + $0x228] sm:$0xf]
  %v162 = vld [vmem:[%s1 + $0x22c] sm:$0xf]
  %v163 = vld [vmem:[%s1 + $0x230] sm:$0xf]
  %v164 = vld [vmem:[%s1 + $0x234] sm:$0xf]
  %v165 = vld [vmem:[%s1 + $0x238] sm:$0xf]
  %v166 = vld [vmem:[%s1 + $0x23c] sm:$0xf]
  %v167 = vld [vmem:[%s1 + $0x240] sm:$0xf]
  %v168 = vld [vmem:[%s1 + $0x244] sm:$0xf]
  %v169 = vld [vmem:[%s1 + $0x248] sm:$0xf]
  %v170 = vld [vmem:[%s1 + $0x24c] sm:$0xf]
  %v171 = vld [vmem:[%s1 + $0x250] sm:$0xf]
  %v172 = vld [vmem:[%s1 + $0x254] sm:$0xf]
  %v173 = vld [vmem:[%s1 + $0x258] sm:$0xf]
  %v174 = vld [vmem:[%s1 + $0x25c] sm:$0xf]
  %v175 = vld [vmem:[%s1 + $0x260] sm:$0xf]
  %v176 = vld [vmem:[%s1 + $0x264] sm:$0xf]
  %v177 = vld [vmem:[%s1 + $0x268] sm:$0xf]
  %v178 = vld [vmem:[%s1 + $0x26c] sm:$0xf]
  %v179 = vld [vmem:[%s1 + $0x270] sm:$0xf]
  %v180 = vld [vmem:[%s1 + $0x274] sm:$0xf]
  %v181 = vld [vmem:[%s1 + $0x278] sm:$0xf]
  %v182 = vld [vmem:[%s1 + $0x27c] sm:$0xf]
  %v183 = vld [vmem:[%s1 + $0x280] sm:$0xf]
  %v184 = vld [vmem:[%s1 + $0x284] sm:$0xf]
  %v185 = vld [vmem:[%s1 + $0x288] sm:$0xf]
  %v186 = vld [vmem:[%s1 + $0x28c] sm:$0xf]
  %v187 = vld [vmem:[%s1 + $0x290] sm:$0xf]
  %v188 = vld [vmem:[%s1 + $0x294] sm:$0xf]
  %v189 = vld [vmem:[%s1 + $0x298] sm:$0xf]
  %v190 = vld [vmem:[%s1 + $0x29c] sm:$0xf]
  %v191 = vld [vmem:[%s1 + $0x2a0] sm:$0xf]
  %v192 = vld [vmem:[%s1 + $0x2a4] sm:$0xf]
  %v193 = vld [vmem:[%s1 + $0x2a8] sm:$0xf]
  %v194 = vld [vmem:[%s1 + $0x2ac] sm:$0xf]
  %v195 = vld [vmem:[%s1 + $0x2b0] sm:$0xf]
  %v196 = vld [vmem:[%s1 + $0x2b4] sm:$0xf]
  %v197 = vld [vmem:[%s1 + $0x2b8] sm:$0xf]
  %v198 = vld [vmem:[%s1 + $0x2bc] sm:$0xf]
  %v199 = vld [vmem:[%s1 + $0x2c0] sm:$0xf]
  %v200 = vld [vmem:[%s1 + $0x2c4] sm:$0xf]
  %v201 = vld [vmem:[%s1 + $0x2c8] sm:$0xf]
  %v202 = vld [vmem:[%s1 + $0x2cc] sm:$0xf]
  %v203 = vld [vmem:[%s1 + $0x2d0] sm:$0xf]
  %v204 = vld [vmem:[%s1 + $0x2d4] sm:$0xf]
  %v205 = vld [vmem:[%s1 + $0x2d8] sm:$0xf]
  %v206 = vld [vmem:[%s1 + $0x2dc] sm:$0xf]
  %v207 = vld [vmem:[%s1 + $0x2e0] sm:$0xf]
  %v208 = vld [vmem:[%s1 + $0x2e4] sm:$0xf]
  %v209 = vld [vmem:[%s1 + $0x2e8] sm:$0xf]
  %v210 = vld [vmem:[%s1 + $0x2ec] sm:$0xf]
  %v211 = vld [vmem:[%s1 + $0x2f0] sm:$0xf]
  %v212 = vld [vmem:[%s1 + $0x2f4] sm:$0xf]
  %v213 = vld [vmem:[%s1 + $0x2f8] sm:$0xf]
  %v214 = vld [vmem:[%s1 + $0x2fc] sm:$0xf]
  %v215 = vld [vmem:[%s1 + $0x300] sm:$0xf]
  %v216 = vld [vmem:[%s1 + $0x304] sm:$0xf]
  %v217 = vld [vmem:[%s1 + $0x308] sm:$0xf]
  %v218 = vld [vmem:[%s1 + $0x30c] sm:$0xf]
  %v219 = vld [vmem:[%s1 + $0x310] sm:$0xf]
  %v220 = vld [vmem:[%s1 + $0x314] sm:$0xf]
  %v221 = vld [vmem:[%s1 + $0x318] sm:$0xf]
  %v222 = vld [vmem:[%s1 + $0x31c] sm:$0xf]
  %v223 = vld [vmem:[%s1 + $0x320] sm:$0xf]
  %v224 = vld [vmem:[%s1 + $0x324] sm:$0xf]
  %v225 = vld [vmem:[%s1 + $0x328] sm:$0xf]
  %v226 = vld [vmem:[%s1 + $0x32c] sm:$0xf]
  %v227 = vld [vmem:[%s1 + $0x330] sm:$0xf]
  %v228 = vld [vmem:[%s1 + $0x334] sm:$0xf]
  %v229 = vld [vmem:[%s1 + $0x338] sm:$0xf]
  %v230 = vld [vmem:[%s1 + $0x33c] sm:$0xf]
  %v231 = vld [vmem:[%s1 + $0x340] sm:$0xf]
  %v232 = vld [vmem:[%s1 + $0x344] sm:$0xf]
  %v233 = vld [vmem:[%s1 + $0x348] sm:$0xf]
  %v234 = vld [vmem:[%s1 + $0x34c] sm:$0xf]
  %v235 = vld [vmem:[%s1 + $0x350] sm:$0xf]
  %v236 = vld [vmem:[%s1 + $0x354] sm:$0xf]
  %v237 = vld [vmem:[%s1 + $0x358] sm:$0xf]
  %v238 = vld [vmem:[%s1 + $0x35c] sm:$0xf]
  %v239 = vld [vmem:[%s1 + $0x360] sm:$0xf]
  %v240 = vld [vmem:[%s1 + $0x364] sm:$0xf]
  %v241 = vld [vmem:[%s1 + $0x368] sm:$0xf]
  %v242 = vld [vmem:[%s1 + $0x36c] sm:$0xf]
  %v243 = vld [vmem:[%s1 + $0x370] sm:$0xf]
  %v244 = vld [vmem:[%s1 + $0x374] sm:$0xf]
  %v245 = vld [vmem:[%s1 + $0x378] sm:$0xf]
  %v246 = vld [vmem:[%s1 + $0x37c] sm:$0xf]
  %v247 = vld [vmem:[%s1 + $0x380] sm:$0xf]
  %v248 = vld [vmem:[%s1 + $0x384] sm:$0xf]
  %v249 = vld [vmem:[%s1 + $0x388] sm:$0xf]
  %v250 = vld [vmem:[%s1 + $0x38c] sm:$0xf]
  %v251 = vld [vmem:[%s1 + $0x390] sm:$0xf]
  %v252 = vld [vmem:[%s1 + $0x394] sm:$0xf]
  %v253 = vld [vmem:[%s1 + $0x398] sm:$0xf]
  %v254 = vld [vmem:[%s1 + $0x39c] sm:$0xf]
  %v255 = vld [vmem:[%s1 + $0x3a0] sm:$0xf]
  %v256 = vld [vmem:[%s1 + $0x3a4] sm:$0xf]
  %v257 = vld [vmem:[%s1 + $0x3a8] sm:$0xf]
  %v258 = vld [vmem:[%s1 + $0x3ac] sm:$0xf]
  %v259 = vld [vmem:[%s1 + $0x3b0] sm:$0xf]
  %v260 = vld [vmem:[%s1 + $0x3b4] sm:$0xf]
  %v261 = vld [vmem:[%s1 + $0x3b8] sm:$0xf]
  %v262 = vld [vmem:[%s1 + $0x3bc] sm:$0xf]
  %v263 = vld [vmem:[%s1 + $0x3c0] sm:$0xf]
  %v264 = vld [vmem:[%s1 + $0x3c4] sm:$0xf]
  %v265 = vld [vmem:[%s1 + $0x3c8] sm:$0xf]
  %v266 = vld [vmem:[%s1 + $0x3cc] sm:$0xf]
  %v267 = vld [vmem:[%s1 + $0x3d0] sm:$0xf]
  %v268 = vld [vmem:[%s1 + $0x3d4] sm:$0xf]
  %v269 = vld [vmem:[%s1 + $0x3d8] sm:$0xf]
  %v270 = vld [vmem:[%s1 + $0x3dc] sm:$0xf]
  %v271 = vld [vmem:[%s1 + $0x3e0] sm:$0xf]
  %v272 = vld [vmem:[%s1 + $0x3e4] sm:$0xf]
  %v273 = vld [vmem:[%s1 + $0x3e8] sm:$0xf]
  %v274 = vld [vmem:[%s1 + $0x3ec] sm:$0xf]
  %v275 = vld [vmem:[%s1 + $0x3f0] sm:$0xf]
  %v276 = vld [vmem:[%s1 + $0x3f4] sm:$0xf]
  %v277 = vld [vmem:[%s1 + $0x3f8] sm:$0xf]
  %v278 = vld [vmem:[%s1 + $0x3fc] sm:$0xf]
  %v279 = vld [vmem:[%s2] sm:$0x7]
  %v280 = vlaneseq
  %v281 = vshrl.u32 %v280, 7
  %v282 = vsub.s32 0, %v281
  %v283 = vrot.slane %v279, %v282
  %v292 = vunpack.c.l.b16 %v15
  %v293 = vunpack.c.h.b16 %v15
  %v294 = vunpack.c.l.b16 %v16
  %v295 = vunpack.c.h.b16 %v16
  %v296 = vunpack.c.l.b16 %v17
  %v297 = vunpack.c.h.b16 %v17
  %v298 = vunpack.c.l.b16 %v18
  %v299 = vunpack.c.h.b16 %v18
  %v300 = vunpack.c.l.b16 %v19
  %v301 = vunpack.c.h.b16 %v19
  %v302 = vunpack.c.l.b16 %v20
  %v303 = vunpack.c.h.b16 %v20
  %v304 = vunpack.c.l.b16 %v21
  %v305 = vunpack.c.h.b16 %v21
  %v306 = vunpack.c.l.b16 %v22
  %v307 = vunpack.c.h.b16 %v22
  %v308 = vpack.c.b16 %v292, %v292
  %v309 = vpack.c.b16 %v293, %v293
  %v310 = vpack.c.b16 %v294, %v294
  %v311 = vpack.c.b16 %v295, %v295
  %v312 = vpack.c.b16 %v296, %v296
  %v313 = vpack.c.b16 %v297, %v297
  %v314 = vpack.c.b16 %v298, %v298
  %v315 = vpack.c.b16 %v299, %v299
  %v316 = vpack.c.b16 %v300, %v300
  %v317 = vpack.c.b16 %v301, %v301
  %v318 = vpack.c.b16 %v302, %v302
  %v319 = vpack.c.b16 %v303, %v303
  %v320 = vpack.c.b16 %v304, %v304
  %v321 = vpack.c.b16 %v305, %v305
  %v322 = vpack.c.b16 %v306, %v306
  %v323 = vpack.c.b16 %v307, %v307
  %v596 = vunpack.c.l.b16 %v23
  %v597 = vunpack.c.l.b16 %v24
  %v598 = vunpack.c.l.b16 %v25
  %v599 = vunpack.c.l.b16 %v26
  %v600 = vunpack.c.l.b16 %v27
  %v601 = vunpack.c.l.b16 %v28
  %v602 = vunpack.c.l.b16 %v29
  %v603 = vunpack.c.l.b16 %v30
  %v604 = vunpack.c.l.b16 %v31
  %v605 = vunpack.c.l.b16 %v32
  %v606 = vunpack.c.l.b16 %v33
  %v607 = vunpack.c.l.b16 %v34
  %v608 = vunpack.c.l.b16 %v35
  %v609 = vunpack.c.l.b16 %v36
  %v610 = vunpack.c.l.b16 %v37
  %v611 = vunpack.c.l.b16 %v38
  %v612 = vunpack.c.l.b16 %v39
  %v613 = vunpack.c.l.b16 %v40
  %v614 = vunpack.c.l.b16 %v41
  %v615 = vunpack.c.l.b16 %v42
  %v616 = vunpack.c.l.b16 %v43
  %v617 = vunpack.c.l.b16 %v44
  %v618 = vunpack.c.l.b16 %v45
  %v619 = vunpack.c.l.b16 %v46
  %v620 = vunpack.c.l.b16 %v47
  %v621 = vunpack.c.l.b16 %v48
  %v622 = vunpack.c.l.b16 %v49
  %v623 = vunpack.c.l.b16 %v50
  %v624 = vunpack.c.l.b16 %v51
  %v625 = vunpack.c.l.b16 %v52
  %v626 = vunpack.c.l.b16 %v53
  %v627 = vunpack.c.l.b16 %v54
  %v628 = vunpack.c.l.b16 %v55
  %v629 = vunpack.c.l.b16 %v56
  %v630 = vunpack.c.l.b16 %v57
  %v631 = vunpack.c.l.b16 %v58
  %v632 = vunpack.c.l.b16 %v59
  %v633 = vunpack.c.l.b16 %v60
  %v634 = vunpack.c.l.b16 %v61
  %v635 = vunpack.c.l.b16 %v62
  %v636 = vunpack.c.l.b16 %v63
  %v637 = vunpack.c.l.b16 %v64
  %v638 = vunpack.c.l.b16 %v65
  %v639 = vunpack.c.l.b16 %v66
  %v640 = vunpack.c.l.b16 %v67
  %v641 = vunpack.c.l.b16 %v68
  %v642 = vunpack.c.l.b16 %v69
  %v643 = vunpack.c.l.b16 %v70
  %v644 = vunpack.c.l.b16 %v71
  %v645 = vunpack.c.l.b16 %v72
  %v646 = vunpack.c.l.b16 %v73
  %v647 = vunpack.c.l.b16 %v74
  %v648 = vunpack.c.l.b16 %v75
  %v649 = vunpack.c.l.b16 %v76
  %v650 = vunpack.c.l.b16 %v77
  %v651 = vunpack.c.l.b16 %v78
  %v652 = vunpack.c.l.b16 %v79
  %v653 = vunpack.c.l.b16 %v80
  %v654 = vunpack.c.l.b16 %v81
  %v655 = vunpack.c.l.b16 %v82
  %v656 = vunpack.c.l.b16 %v83
  %v657 = vunpack.c.l.b16 %v84
  %v658 = vunpack.c.l.b16 %v85
  %v659 = vunpack.c.l.b16 %v86
  %v660 = vunpack.c.l.b16 %v87
  %v661 = vunpack.c.l.b16 %v88
  %v662 = vunpack.c.l.b16 %v89
  %v663 = vunpack.c.l.b16 %v90
  %v664 = vunpack.c.l.b16 %v91
  %v665 = vunpack.c.l.b16 %v92
  %v666 = vunpack.c.l.b16 %v93
  %v667 = vunpack.c.l.b16 %v94
  %v668 = vunpack.c.l.b16 %v95
  %v669 = vunpack.c.l.b16 %v96
  %v670 = vunpack.c.l.b16 %v97
  %v671 = vunpack.c.l.b16 %v98
  %v672 = vunpack.c.l.b16 %v99
  %v673 = vunpack.c.l.b16 %v100
  %v674 = vunpack.c.l.b16 %v101
  %v675 = vunpack.c.l.b16 %v102
  %v676 = vunpack.c.l.b16 %v103
  %v677 = vunpack.c.l.b16 %v104
  %v678 = vunpack.c.l.b16 %v105
  %v679 = vunpack.c.l.b16 %v106
  %v680 = vunpack.c.l.b16 %v107
  %v681 = vunpack.c.l.b16 %v108
  %v682 = vunpack.c.l.b16 %v109
  %v683 = vunpack.c.l.b16 %v110
  %v684 = vunpack.c.l.b16 %v111
  %v685 = vunpack.c.l.b16 %v112
  %v686 = vunpack.c.l.b16 %v113
  %v687 = vunpack.c.l.b16 %v114
  %v688 = vunpack.c.l.b16 %v115
  %v689 = vunpack.c.l.b16 %v116
  %v690 = vunpack.c.l.b16 %v117
  %v691 = vunpack.c.l.b16 %v118
  %v692 = vunpack.c.l.b16 %v119
  %v693 = vunpack.c.l.b16 %v120
  %v694 = vunpack.c.l.b16 %v121
  %v695 = vunpack.c.l.b16 %v122
  %v696 = vunpack.c.l.b16 %v123
  %v697 = vunpack.c.l.b16 %v124
  %v698 = vunpack.c.l.b16 %v125
  %v699 = vunpack.c.l.b16 %v126
  %v700 = vunpack.c.l.b16 %v127
  %v701 = vunpack.c.l.b16 %v128
  %v702 = vunpack.c.l.b16 %v129
  %v703 = vunpack.c.l.b16 %v130
  %v704 = vunpack.c.l.b16 %v131
  %v705 = vunpack.c.l.b16 %v132
  %v706 = vunpack.c.l.b16 %v133
  %v707 = vunpack.c.l.b16 %v134
  %v708 = vunpack.c.l.b16 %v135
  %v709 = vunpack.c.l.b16 %v136
  %v710 = vunpack.c.l.b16 %v137
  %v711 = vunpack.c.l.b16 %v138
  %v712 = vunpack.c.l.b16 %v139
  %v713 = vunpack.c.l.b16 %v140
  %v714 = vunpack.c.l.b16 %v141
  %v715 = vunpack.c.l.b16 %v142
  %v716 = vunpack.c.l.b16 %v143
  %v717 = vunpack.c.l.b16 %v144
  %v718 = vunpack.c.l.b16 %v145
  %v719 = vunpack.c.l.b16 %v146
  %v720 = vunpack.c.l.b16 %v147
  %v721 = vunpack.c.l.b16 %v148
  %v722 = vunpack.c.l.b16 %v149
  %v723 = vunpack.c.l.b16 %v150
  %v724 = vunpack.c.l.b16 %v151
  %v725 = vunpack.c.l.b16 %v152
  %v726 = vunpack.c.l.b16 %v153
  %v727 = vunpack.c.l.b16 %v154
  %v728 = vunpack.c.l.b16 %v155
  %v729 = vunpack.c.l.b16 %v156
  %v730 = vunpack.c.l.b16 %v157
  %v731 = vunpack.c.l.b16 %v158
  %v732 = vunpack.c.l.b16 %v159
  %v733 = vunpack.c.l.b16 %v160
  %v734 = vunpack.c.l.b16 %v161
  %v735 = vunpack.c.l.b16 %v162
  %v736 = vunpack.c.l.b16 %v163
  %v737 = vunpack.c.l.b16 %v164
  %v738 = vunpack.c.l.b16 %v165
  %v739 = vunpack.c.l.b16 %v166
  %v740 = vunpack.c.l.b16 %v167
  %v741 = vunpack.c.l.b16 %v168
  %v742 = vunpack.c.l.b16 %v169
  %v743 = vunpack.c.l.b16 %v170
  %v744 = vunpack.c.l.b16 %v171
  %v745 = vunpack.c.l.b16 %v172
  %v746 = vunpack.c.l.b16 %v173
  %v747 = vunpack.c.l.b16 %v174
  %v748 = vunpack.c.l.b16 %v175
  %v749 = vunpack.c.l.b16 %v176
  %v750 = vunpack.c.l.b16 %v177
  %v751 = vunpack.c.l.b16 %v178
  %v752 = vunpack.c.l.b16 %v179
  %v753 = vunpack.c.l.b16 %v180
  %v754 = vunpack.c.l.b16 %v181
  %v755 = vunpack.c.l.b16 %v182
  %v756 = vunpack.c.l.b16 %v183
  %v757 = vunpack.c.l.b16 %v184
  %v758 = vunpack.c.l.b16 %v185
  %v759 = vunpack.c.l.b16 %v186
  %v760 = vunpack.c.l.b16 %v187
  %v761 = vunpack.c.l.b16 %v188
  %v762 = vunpack.c.l.b16 %v189
  %v763 = vunpack.c.l.b16 %v190
  %v764 = vunpack.c.l.b16 %v191
  %v765 = vunpack.c.l.b16 %v192
  %v766 = vunpack.c.l.b16 %v193
  %v767 = vunpack.c.l.b16 %v194
  %v768 = vunpack.c.l.b16 %v195
  %v769 = vunpack.c.l.b16 %v196
  %v770 = vunpack.c.l.b16 %v197
  %v771 = vunpack.c.l.b16 %v198
  %v772 = vunpack.c.l.b16 %v199
  %v773 = vunpack.c.l.b16 %v200
  %v774 = vunpack.c.l.b16 %v201
  %v775 = vunpack.c.l.b16 %v202
  %v776 = vunpack.c.l.b16 %v203
  %v777 = vunpack.c.l.b16 %v204
  %v778 = vunpack.c.l.b16 %v205
  %v779 = vunpack.c.l.b16 %v206
  %v780 = vunpack.c.l.b16 %v207
  %v781 = vunpack.c.l.b16 %v208
  %v782 = vunpack.c.l.b16 %v209
  %v783 = vunpack.c.l.b16 %v210
  %v784 = vunpack.c.l.b16 %v211
  %v785 = vunpack.c.l.b16 %v212
  %v786 = vunpack.c.l.b16 %v213
  %v787 = vunpack.c.l.b16 %v214
  %v788 = vunpack.c.l.b16 %v215
  %v789 = vunpack.c.l.b16 %v216
  %v790 = vunpack.c.l.b16 %v217
  %v791 = vunpack.c.l.b16 %v218
  %v792 = vunpack.c.l.b16 %v219
  %v793 = vunpack.c.l.b16 %v220
  %v794 = vunpack.c.l.b16 %v221
  %v795 = vunpack.c.l.b16 %v222
  %v796 = vunpack.c.l.b16 %v223
  %v797 = vunpack.c.l.b16 %v224
  %v798 = vunpack.c.l.b16 %v225
  %v799 = vunpack.c.l.b16 %v226
  %v800 = vunpack.c.l.b16 %v227
  %v801 = vunpack.c.l.b16 %v228
  %v802 = vunpack.c.l.b16 %v229
  %v803 = vunpack.c.l.b16 %v230
  %v804 = vunpack.c.l.b16 %v231
  %v805 = vunpack.c.l.b16 %v232
  %v806 = vunpack.c.l.b16 %v233
  %v807 = vunpack.c.l.b16 %v234
  %v808 = vunpack.c.l.b16 %v235
  %v809 = vunpack.c.l.b16 %v236
  %v810 = vunpack.c.l.b16 %v237
  %v811 = vunpack.c.l.b16 %v238
  %v812 = vunpack.c.l.b16 %v239
  %v813 = vunpack.c.l.b16 %v240
  %v814 = vunpack.c.l.b16 %v241
  %v815 = vunpack.c.l.b16 %v242
  %v816 = vunpack.c.l.b16 %v243
  %v817 = vunpack.c.l.b16 %v244
  %v818 = vunpack.c.l.b16 %v245
  %v819 = vunpack.c.l.b16 %v246
  %v820 = vunpack.c.l.b16 %v247
  %v821 = vunpack.c.l.b16 %v248
  %v822 = vunpack.c.l.b16 %v249
  %v823 = vunpack.c.l.b16 %v250
  %v824 = vunpack.c.l.b16 %v251
  %v825 = vunpack.c.l.b16 %v252
  %v826 = vunpack.c.l.b16 %v253
  %v827 = vunpack.c.l.b16 %v254
  %v828 = vunpack.c.l.b16 %v255
  %v829 = vunpack.c.l.b16 %v256
  %v830 = vunpack.c.l.b16 %v257
  %v831 = vunpack.c.l.b16 %v258
  %v832 = vunpack.c.l.b16 %v259
  %v833 = vunpack.c.l.b16 %v260
  %v834 = vunpack.c.l.b16 %v261
  %v835 = vunpack.c.l.b16 %v262
  %v836 = vunpack.c.l.b16 %v263
  %v837 = vunpack.c.l.b16 %v264
  %v838 = vunpack.c.l.b16 %v265
  %v839 = vunpack.c.l.b16 %v266
  %v840 = vunpack.c.l.b16 %v267
  %v841 = vunpack.c.l.b16 %v268
  %v842 = vunpack.c.l.b16 %v269
  %v843 = vunpack.c.l.b16 %v270
  %v844 = vunpack.c.l.b16 %v271
  %v845 = vunpack.c.l.b16 %v272
  %v846 = vunpack.c.l.b16 %v273
  %v847 = vunpack.c.l.b16 %v274
  %v848 = vunpack.c.l.b16 %v275
  %v849 = vunpack.c.l.b16 %v276
  %v850 = vunpack.c.l.b16 %v277
  %v851 = vunpack.c.l.b16 %v278
  %v852 = vpack.c.b16 %v597, %v596
  %v853 = vpack.c.b16 %v599, %v598
  %v854 = vpack.c.b16 %v601, %v600
  %v855 = vpack.c.b16 %v603, %v602
  %v856 = vpack.c.b16 %v605, %v604
  %v857 = vpack.c.b16 %v607, %v606
  %v858 = vpack.c.b16 %v609, %v608
  %v859 = vpack.c.b16 %v611, %v610
  %v860 = vpack.c.b16 %v613, %v612
  %v861 = vpack.c.b16 %v615, %v614
  %v862 = vpack.c.b16 %v617, %v616
  %v863 = vpack.c.b16 %v619, %v618
  %v864 = vpack.c.b16 %v621, %v620
  %v865 = vpack.c.b16 %v623, %v622
  %v866 = vpack.c.b16 %v625, %v624
  %v867 = vpack.c.b16 %v627, %v626
  %v868 = vpack.c.b16 %v629, %v628
  %v869 = vpack.c.b16 %v631, %v630
  %v870 = vpack.c.b16 %v633, %v632
  %v871 = vpack.c.b16 %v635, %v634
  %v872 = vpack.c.b16 %v637, %v636
  %v873 = vpack.c.b16 %v639, %v638
  %v874 = vpack.c.b16 %v641, %v640
  %v875 = vpack.c.b16 %v643, %v642
  %v876 = vpack.c.b16 %v645, %v644
  %v877 = vpack.c.b16 %v647, %v646
  %v878 = vpack.c.b16 %v649, %v648
  %v879 = vpack.c.b16 %v651, %v650
  %v880 = vpack.c.b16 %v653, %v652
  %v881 = vpack.c.b16 %v655, %v654
  %v882 = vpack.c.b16 %v657, %v656
  %v883 = vpack.c.b16 %v659, %v658
  %v884 = vpack.c.b16 %v661, %v660
  %v885 = vpack.c.b16 %v663, %v662
  %v886 = vpack.c.b16 %v665, %v664
  %v887 = vpack.c.b16 %v667, %v666
  %v888 = vpack.c.b16 %v669, %v668
  %v889 = vpack.c.b16 %v671, %v670
  %v890 = vpack.c.b16 %v673, %v672
  %v891 = vpack.c.b16 %v675, %v674
  %v892 = vpack.c.b16 %v677, %v676
  %v893 = vpack.c.b16 %v679, %v678
  %v894 = vpack.c.b16 %v681, %v680
  %v895 = vpack.c.b16 %v683, %v682
  %v896 = vpack.c.b16 %v685, %v684
  %v897 = vpack.c.b16 %v687, %v686
  %v898 = vpack.c.b16 %v689, %v688
  %v899 = vpack.c.b16 %v691, %v690
  %v900 = vpack.c.b16 %v693, %v692
  %v901 = vpack.c.b16 %v695, %v694
  %v902 = vpack.c.b16 %v697, %v696
  %v903 = vpack.c.b16 %v699, %v698
  %v904 = vpack.c.b16 %v701, %v700
  %v905 = vpack.c.b16 %v703, %v702
  %v906 = vpack.c.b16 %v705, %v704
  %v907 = vpack.c.b16 %v707, %v706
  %v908 = vpack.c.b16 %v709, %v708
  %v909 = vpack.c.b16 %v711, %v710
  %v910 = vpack.c.b16 %v713, %v712
  %v911 = vpack.c.b16 %v715, %v714
  %v912 = vpack.c.b16 %v717, %v716
  %v913 = vpack.c.b16 %v719, %v718
  %v914 = vpack.c.b16 %v721, %v720
  %v915 = vpack.c.b16 %v723, %v722
  %v916 = vpack.c.b16 %v725, %v724
  %v917 = vpack.c.b16 %v727, %v726
  %v918 = vpack.c.b16 %v729, %v728
  %v919 = vpack.c.b16 %v731, %v730
  %v920 = vpack.c.b16 %v733, %v732
  %v921 = vpack.c.b16 %v735, %v734
  %v922 = vpack.c.b16 %v737, %v736
  %v923 = vpack.c.b16 %v739, %v738
  %v924 = vpack.c.b16 %v741, %v740
  %v925 = vpack.c.b16 %v743, %v742
  %v926 = vpack.c.b16 %v745, %v744
  %v927 = vpack.c.b16 %v747, %v746
  %v928 = vpack.c.b16 %v749, %v748
  %v929 = vpack.c.b16 %v751, %v750
  %v930 = vpack.c.b16 %v753, %v752
  %v931 = vpack.c.b16 %v755, %v754
  %v932 = vpack.c.b16 %v757, %v756
  %v933 = vpack.c.b16 %v759, %v758
  %v934 = vpack.c.b16 %v761, %v760
  %v935 = vpack.c.b16 %v763, %v762
  %v936 = vpack.c.b16 %v765, %v764
  %v937 = vpack.c.b16 %v767, %v766
  %v938 = vpack.c.b16 %v769, %v768
  %v939 = vpack.c.b16 %v771, %v770
  %v940 = vpack.c.b16 %v773, %v772
  %v941 = vpack.c.b16 %v775, %v774
  %v942 = vpack.c.b16 %v777, %v776
  %v943 = vpack.c.b16 %v779, %v778
  %v944 = vpack.c.b16 %v781, %v780
  %v945 = vpack.c.b16 %v783, %v782
  %v946 = vpack.c.b16 %v785, %v784
  %v947 = vpack.c.b16 %v787, %v786
  %v948 = vpack.c.b16 %v789, %v788
  %v949 = vpack.c.b16 %v791, %v790
  %v950 = vpack.c.b16 %v793, %v792
  %v951 = vpack.c.b16 %v795, %v794
  %v952 = vpack.c.b16 %v797, %v796
  %v953 = vpack.c.b16 %v799, %v798
  %v954 = vpack.c.b16 %v801, %v800
  %v955 = vpack.c.b16 %v803, %v802
  %v956 = vpack.c.b16 %v805, %v804
  %v957 = vpack.c.b16 %v807, %v806
  %v958 = vpack.c.b16 %v809, %v808
  %v959 = vpack.c.b16 %v811, %v810
  %v960 = vpack.c.b16 %v813, %v812
  %v961 = vpack.c.b16 %v815, %v814
  %v962 = vpack.c.b16 %v817, %v816
  %v963 = vpack.c.b16 %v819, %v818
  %v964 = vpack.c.b16 %v821, %v820
  %v965 = vpack.c.b16 %v823, %v822
  %v966 = vpack.c.b16 %v825, %v824
  %v967 = vpack.c.b16 %v827, %v826
  %v968 = vpack.c.b16 %v829, %v828
  %v969 = vpack.c.b16 %v831, %v830
  %v970 = vpack.c.b16 %v833, %v832
  %v971 = vpack.c.b16 %v835, %v834
  %v972 = vpack.c.b16 %v837, %v836
  %v973 = vpack.c.b16 %v839, %v838
  %v974 = vpack.c.b16 %v841, %v840
  %v975 = vpack.c.b16 %v843, %v842
  %v976 = vpack.c.b16 %v845, %v844
  %v977 = vpack.c.b16 %v847, %v846
  %v978 = vpack.c.b16 %v849, %v848
  %v979 = vpack.c.b16 %v851, %v850
  %1108 = vmatprep.subr.bf16.mxu0 0
  %1109 = vmatpush1.bf16.msra.mxu0 %v852
  %1110 = vmatprep.subr.bf16.mxu0 0
  %1111 = vmatpush1.bf16.msra.mxu0 %v853
  %1112 = vmatprep.subr.bf16.mxu0 0
  %1113 = vmatpush1.bf16.msra.mxu0 %v854
  %1114 = vmatprep.subr.bf16.mxu0 0
  %1115 = vmatpush1.bf16.msra.mxu0 %v855
  %1116 = vmatprep.subr.bf16.mxu0 0
  %1117 = vmatpush1.bf16.msra.mxu0 %v856
  %1118 = vmatprep.subr.bf16.mxu0 0
  %1119 = vmatpush1.bf16.msra.mxu0 %v857
  %1120 = vmatprep.subr.bf16.mxu0 0
  %1121 = vmatpush1.bf16.msra.mxu0 %v858
  %1122 = vmatprep.subr.bf16.mxu0 0
  %1123 = vmatpush1.bf16.msra.mxu0 %v859
  %1124 = vmatprep.subr.bf16.mxu0 0
  %1125 = vmatpush1.bf16.msra.mxu0 %v860
  %1126 = vmatprep.subr.bf16.mxu0 0
  %1127 = vmatpush1.bf16.msra.mxu0 %v861
  %1128 = vmatprep.subr.bf16.mxu0 0
  %1129 = vmatpush1.bf16.msra.mxu0 %v862
  %1130 = vmatprep.subr.bf16.mxu0 0
  %1131 = vmatpush1.bf16.msra.mxu0 %v863
  %1132 = vmatprep.subr.bf16.mxu0 0
  %1133 = vmatpush1.bf16.msra.mxu0 %v864
  %1134 = vmatprep.subr.bf16.mxu0 0
  %1135 = vmatpush1.bf16.msra.mxu0 %v865
  %1136 = vmatprep.subr.bf16.mxu0 0
  %1137 = vmatpush1.bf16.msra.mxu0 %v866
  %1138 = vmatprep.subr.bf16.mxu0 0
  %1139 = vmatpush1.bf16.msra.mxu0 %v867
  %1140 = vmatprep.mubr.bf16.mxu0 %v309
  %1141 = vmatmul.mubr.bf16.gmra.mrb[0].mxu0 %v308
  %v1142 = vpop.f32.mrb[0].mxu0
  %v1143 = vadd.f32 %v283, %v1142
  %v1144 = vpop.f32.mrb[0].mxu0
  %v1145 = vpop.f32.mrb[0].mxu0
  %v1146 = vpop.f32.mrb[0].mxu0
  %1147 = vdwg.mxu0
  %1148 = vmatprep.subr.bf16.mxu0 0
  %1149 = vmatpush1.bf16.msra.mxu0 %v868
  %1150 = vmatprep.subr.bf16.mxu0 0
  %1151 = vmatpush1.bf16.msra.mxu0 %v869
  %1152 = vmatprep.subr.bf16.mxu0 0
  %1153 = vmatpush1.bf16.msra.mxu0 %v870
  %1154 = vmatprep.subr.bf16.mxu0 0
  %1155 = vmatpush1.bf16.msra.mxu0 %v871
  %1156 = vmatprep.subr.bf16.mxu0 0
  %1157 = vmatpush1.bf16.msra.mxu0 %v872
  %1158 = vmatprep.subr.bf16.mxu0 0
  %1159 = vmatpush1.bf16.msra.mxu0 %v873
  %1160 = vmatprep.subr.bf16.mxu0 0
  %1161 = vmatpush1.bf16.msra.mxu0 %v874
  %1162 = vmatprep.subr.bf16.mxu0 0
  %1163 = vmatpush1.bf16.msra.mxu0 %v875
  %1164 = vmatprep.subr.bf16.mxu0 0
  %1165 = vmatpush1.bf16.msra.mxu0 %v876
  %1166 = vmatprep.subr.bf16.mxu0 0
  %1167 = vmatpush1.bf16.msra.mxu0 %v877
  %1168 = vmatprep.subr.bf16.mxu0 0
  %1169 = vmatpush1.bf16.msra.mxu0 %v878
  %1170 = vmatprep.subr.bf16.mxu0 0
  %1171 = vmatpush1.bf16.msra.mxu0 %v879
  %1172 = vmatprep.subr.bf16.mxu0 0
  %1173 = vmatpush1.bf16.msra.mxu0 %v880
  %1174 = vmatprep.subr.bf16.mxu0 0
  %1175 = vmatpush1.bf16.msra.mxu0 %v881
  %1176 = vmatprep.subr.bf16.mxu0 0
  %1177 = vmatpush1.bf16.msra.mxu0 %v882
  %1178 = vmatprep.subr.bf16.mxu0 0
  %1179 = vmatpush1.bf16.msra.mxu0 %v883
  %1180 = vmatprep.mubr.bf16.mxu0 %v311
  %1181 = vmatmul.mubr.bf16.gmra.mrb[0].mxu0 %v310
  %v1182 = vpop.f32.mrb[0].mxu0
  %v1183 = vadd.f32 %v1143, %v1182
  %v1184 = vpop.f32.mrb[0].mxu0
  %v1185 = vpop.f32.mrb[0].mxu0
  %v1186 = vpop.f32.mrb[0].mxu0
  %1187 = vdwg.mxu0
  %1188 = vmatprep.subr.bf16.mxu0 0
  %1189 = vmatpush1.bf16.msra.mxu0 %v884
  %1190 = vmatprep.subr.bf16.mxu0 0
  %1191 = vmatpush1.bf16.msra.mxu0 %v885
  %1192 = vmatprep.subr.bf16.mxu0 0
  %1193 = vmatpush1.bf16.msra.mxu0 %v886
  %1194 = vmatprep.subr.bf16.mxu0 0
  %1195 = vmatpush1.bf16.msra.mxu0 %v887
  %1196 = vmatprep.subr.bf16.mxu0 0
  %1197 = vmatpush1.bf16.msra.mxu0 %v888
  %1198 = vmatprep.subr.bf16.mxu0 0
  %1199 = vmatpush1.bf16.msra.mxu0 %v889
  %1200 = vmatprep.subr.bf16.mxu0 0
  %1201 = vmatpush1.bf16.msra.mxu0 %v890
  %1202 = vmatprep.subr.bf16.mxu0 0
  %1203 = vmatpush1.bf16.msra.mxu0 %v891
  %1204 = vmatprep.subr.bf16.mxu0 0
  %1205 = vmatpush1.bf16.msra.mxu0 %v892
  %1206 = vmatprep.subr.bf16.mxu0 0
  %1207 = vmatpush1.bf16.msra.mxu0 %v893
  %1208 = vmatprep.subr.bf16.mxu0 0
  %1209 = vmatpush1.bf16.msra.mxu0 %v894
  %1210 = vmatprep.subr.bf16.mxu0 0
  %1211 = vmatpush1.bf16.msra.mxu0 %v895
  %1212 = vmatprep.subr.bf16.mxu0 0
  %1213 = vmatpush1.bf16.msra.mxu0 %v896
  %1214 = vmatprep.subr.bf16.mxu0 0
  %1215 = vmatpush1.bf16.msra.mxu0 %v897
  %1216 = vmatprep.subr.bf16.mxu0 0
  %1217 = vmatpush1.bf16.msra.mxu0 %v898
  %1218 = vmatprep.subr.bf16.mxu0 0
  %1219 = vmatpush1.bf16.msra.mxu0 %v899
  %1220 = vmatprep.mubr.bf16.mxu0 %v313
  %1221 = vmatmul.mubr.bf16.gmra.mrb[0].mxu0 %v312
  %v1222 = vpop.f32.mrb[0].mxu0
  %v1223 = vadd.f32 %v1183, %v1222
  %v1224 = vpop.f32.mrb[0].mxu0
  %v1225 = vpop.f32.mrb[0].mxu0
  %v1226 = vpop.f32.mrb[0].mxu0
  %1227 = vdwg.mxu0
  %1228 = vmatprep.subr.bf16.mxu0 0
  %1229 = vmatpush1.bf16.msra.mxu0 %v900
  %1230 = vmatprep.subr.bf16.mxu0 0
  %1231 = vmatpush1.bf16.msra.mxu0 %v901
  %1232 = vmatprep.subr.bf16.mxu0 0
  %1233 = vmatpush1.bf16.msra.mxu0 %v902
  %1234 = vmatprep.subr.bf16.mxu0 0
  %1235 = vmatpush1.bf16.msra.mxu0 %v903
  %1236 = vmatprep.subr.bf16.mxu0 0
  %1237 = vmatpush1.bf16.msra.mxu0 %v904
  %1238 = vmatprep.subr.bf16.mxu0 0
  %1239 = vmatpush1.bf16.msra.mxu0 %v905
  %1240 = vmatprep.subr.bf16.mxu0 0
  %1241 = vmatpush1.bf16.msra.mxu0 %v906
  %1242 = vmatprep.subr.bf16.mxu0 0
  %1243 = vmatpush1.bf16.msra.mxu0 %v907
  %1244 = vmatprep.subr.bf16.mxu0 0
  %1245 = vmatpush1.bf16.msra.mxu0 %v908
  %1246 = vmatprep.subr.bf16.mxu0 0
  %1247 = vmatpush1.bf16.msra.mxu0 %v909
  %1248 = vmatprep.subr.bf16.mxu0 0
  %1249 = vmatpush1.bf16.msra.mxu0 %v910
  %1250 = vmatprep.subr.bf16.mxu0 0
  %1251 = vmatpush1.bf16.msra.mxu0 %v911
  %1252 = vmatprep.subr.bf16.mxu0 0
  %1253 = vmatpush1.bf16.msra.mxu0 %v912
  %1254 = vmatprep.subr.bf16.mxu0 0
  %1255 = vmatpush1.bf16.msra.mxu0 %v913
  %1256 = vmatprep.subr.bf16.mxu0 0
  %1257 = vmatpush1.bf16.msra.mxu0 %v914
  %1258 = vmatprep.subr.bf16.mxu0 0
  %1259 = vmatpush1.bf16.msra.mxu0 %v915
  %1260 = vmatprep.mubr.bf16.mxu0 %v315
  %1261 = vmatmul.mubr.bf16.gmra.mrb[0].mxu0 %v314
  %v1262 = vpop.f32.mrb[0].mxu0
  %v1263 = vadd.f32 %v1223, %v1262
  %v1264 = vpop.f32.mrb[0].mxu0
  %v1265 = vpop.f32.mrb[0].mxu0
  %v1266 = vpop.f32.mrb[0].mxu0
  %1267 = vdwg.mxu0
  %1268 = vmatprep.subr.bf16.mxu0 0
  %1269 = vmatpush1.bf16.msra.mxu0 %v916
  %1270 = vmatprep.subr.bf16.mxu0 0
  %1271 = vmatpush1.bf16.msra.mxu0 %v917
  %1272 = vmatprep.subr.bf16.mxu0 0
  %1273 = vmatpush1.bf16.msra.mxu0 %v918
  %1274 = vmatprep.subr.bf16.mxu0 0
  %1275 = vmatpush1.bf16.msra.mxu0 %v919
  %1276 = vmatprep.subr.bf16.mxu0 0
  %1277 = vmatpush1.bf16.msra.mxu0 %v920
  %1278 = vmatprep.subr.bf16.mxu0 0
  %1279 = vmatpush1.bf16.msra.mxu0 %v921
  %1280 = vmatprep.subr.bf16.mxu0 0
  %1281 = vmatpush1.bf16.msra.mxu0 %v922
  %1282 = vmatprep.subr.bf16.mxu0 0
  %1283 = vmatpush1.bf16.msra.mxu0 %v923
  %1284 = vmatprep.subr.bf16.mxu0 0
  %1285 = vmatpush1.bf16.msra.mxu0 %v924
  %1286 = vmatprep.subr.bf16.mxu0 0
  %1287 = vmatpush1.bf16.msra.mxu0 %v925
  %1288 = vmatprep.subr.bf16.mxu0 0
  %1289 = vmatpush1.bf16.msra.mxu0 %v926
  %1290 = vmatprep.subr.bf16.mxu0 0
  %1291 = vmatpush1.bf16.msra.mxu0 %v927
  %1292 = vmatprep.subr.bf16.mxu0 0
  %1293 = vmatpush1.bf16.msra.mxu0 %v928
  %1294 = vmatprep.subr.bf16.mxu0 0
  %1295 = vmatpush1.bf16.msra.mxu0 %v929
  %1296 = vmatprep.subr.bf16.mxu0 0
  %1297 = vmatpush1.bf16.msra.mxu0 %v930
  %1298 = vmatprep.subr.bf16.mxu0 0
  %1299 = vmatpush1.bf16.msra.mxu0 %v931
  %1300 = vmatprep.mubr.bf16.mxu0 %v317
  %1301 = vmatmul.mubr.bf16.gmra.mrb[0].mxu0 %v316
  %v1302 = vpop.f32.mrb[0].mxu0
  %v1303 = vadd.f32 %v1263, %v1302
  %v1304 = vpop.f32.mrb[0].mxu0
  %v1305 = vpop.f32.mrb[0].mxu0
  %v1306 = vpop.f32.mrb[0].mxu0
  %1307 = vdwg.mxu0
  %1308 = vmatprep.subr.bf16.mxu0 0
  %1309 = vmatpush1.bf16.msra.mxu0 %v932
  %1310 = vmatprep.subr.bf16.mxu0 0
  %1311 = vmatpush1.bf16.msra.mxu0 %v933
  %1312 = vmatprep.subr.bf16.mxu0 0
  %1313 = vmatpush1.bf16.msra.mxu0 %v934
  %1314 = vmatprep.subr.bf16.mxu0 0
  %1315 = vmatpush1.bf16.msra.mxu0 %v935
  %1316 = vmatprep.subr.bf16.mxu0 0
  %1317 = vmatpush1.bf16.msra.mxu0 %v936
  %1318 = vmatprep.subr.bf16.mxu0 0
  %1319 = vmatpush1.bf16.msra.mxu0 %v937
  %1320 = vmatprep.subr.bf16.mxu0 0
  %1321 = vmatpush1.bf16.msra.mxu0 %v938
  %1322 = vmatprep.subr.bf16.mxu0 0
  %1323 = vmatpush1.bf16.msra.mxu0 %v939
  %1324 = vmatprep.subr.bf16.mxu0 0
  %1325 = vmatpush1.bf16.msra.mxu0 %v940
  %1326 = vmatprep.subr.bf16.mxu0 0
  %1327 = vmatpush1.bf16.msra.mxu0 %v941
  %1328 = vmatprep.subr.bf16.mxu0 0
  %1329 = vmatpush1.bf16.msra.mxu0 %v942
  %1330 = vmatprep.subr.bf16.mxu0 0
  %1331 = vmatpush1.bf16.msra.mxu0 %v943
  %1332 = vmatprep.subr.bf16.mxu0 0
  %1333 = vmatpush1.bf16.msra.mxu0 %v944
  %1334 = vmatprep.subr.bf16.mxu0 0
  %1335 = vmatpush1.bf16.msra.mxu0 %v945
  %1336 = vmatprep.subr.bf16.mxu0 0
  %1337 = vmatpush1.bf16.msra.mxu0 %v946
  %1338 = vmatprep.subr.bf16.mxu0 0
  %1339 = vmatpush1.bf16.msra.mxu0 %v947
  %1340 = vmatprep.mubr.bf16.mxu0 %v319
  %1341 = vmatmul.mubr.bf16.gmra.mrb[0].mxu0 %v318
  %v1342 = vpop.f32.mrb[0].mxu0
  %v1343 = vadd.f32 %v1303, %v1342
  %v1344 = vpop.f32.mrb[0].mxu0
  %v1345 = vpop.f32.mrb[0].mxu0
  %v1346 = vpop.f32.mrb[0].mxu0
  %1347 = vdwg.mxu0
  %1348 = vmatprep.subr.bf16.mxu0 0
  %1349 = vmatpush1.bf16.msra.mxu0 %v948
  %1350 = vmatprep.subr.bf16.mxu0 0
  %1351 = vmatpush1.bf16.msra.mxu0 %v949
  %1352 = vmatprep.subr.bf16.mxu0 0
  %1353 = vmatpush1.bf16.msra.mxu0 %v950
  %1354 = vmatprep.subr.bf16.mxu0 0
  %1355 = vmatpush1.bf16.msra.mxu0 %v951
  %1356 = vmatprep.subr.bf16.mxu0 0
  %1357 = vmatpush1.bf16.msra.mxu0 %v952
  %1358 = vmatprep.subr.bf16.mxu0 0
  %1359 = vmatpush1.bf16.msra.mxu0 %v953
  %1360 = vmatprep.subr.bf16.mxu0 0
  %1361 = vmatpush1.bf16.msra.mxu0 %v954
  %1362 = vmatprep.subr.bf16.mxu0 0
  %1363 = vmatpush1.bf16.msra.mxu0 %v955
  %1364 = vmatprep.subr.bf16.mxu0 0
  %1365 = vmatpush1.bf16.msra.mxu0 %v956
  %1366 = vmatprep.subr.bf16.mxu0 0
  %1367 = vmatpush1.bf16.msra.mxu0 %v957
  %1368 = vmatprep.subr.bf16.mxu0 0
  %1369 = vmatpush1.bf16.msra.mxu0 %v958
  %1370 = vmatprep.subr.bf16.mxu0 0
  %1371 = vmatpush1.bf16.msra.mxu0 %v959
  %1372 = vmatprep.subr.bf16.mxu0 0
  %1373 = vmatpush1.bf16.msra.mxu0 %v960
  %1374 = vmatprep.subr.bf16.mxu0 0
  %1375 = vmatpush1.bf16.msra.mxu0 %v961
  %1376 = vmatprep.subr.bf16.mxu0 0
  %1377 = vmatpush1.bf16.msra.mxu0 %v962
  %1378 = vmatprep.subr.bf16.mxu0 0
  %1379 = vmatpush1.bf16.msra.mxu0 %v963
  %1380 = vmatprep.mubr.bf16.mxu0 %v321
  %1381 = vmatmul.mubr.bf16.gmra.mrb[0].mxu0 %v320
  %v1382 = vpop.f32.mrb[0].mxu0
  %v1383 = vadd.f32 %v1343, %v1382
  %v1384 = vpop.f32.mrb[0].mxu0
  %v1385 = vpop.f32.mrb[0].mxu0
  %v1386 = vpop.f32.mrb[0].mxu0
  %1387 = vdwg.mxu0
  %1388 = vmatprep.subr.bf16.mxu0 0
  %1389 = vmatpush1.bf16.msra.mxu0 %v964
  %1390 = vmatprep.subr.bf16.mxu0 0
  %1391 = vmatpush1.bf16.msra.mxu0 %v965
  %1392 = vmatprep.subr.bf16.mxu0 0
  %1393 = vmatpush1.bf16.msra.mxu0 %v966
  %1394 = vmatprep.subr.bf16.mxu0 0
  %1395 = vmatpush1.bf16.msra.mxu0 %v967
  %1396 = vmatprep.subr.bf16.mxu0 0
  %1397 = vmatpush1.bf16.msra.mxu0 %v968
  %1398 = vmatprep.subr.bf16.mxu0 0
  %1399 = vmatpush1.bf16.msra.mxu0 %v969
  %1400 = vmatprep.subr.bf16.mxu0 0
  %1401 = vmatpush1.bf16.msra.mxu0 %v970
  %1402 = vmatprep.subr.bf16.mxu0 0
  %1403 = vmatpush1.bf16.msra.mxu0 %v971
  %1404 = vmatprep.subr.bf16.mxu0 0
  %1405 = vmatpush1.bf16.msra.mxu0 %v972
  %1406 = vmatprep.subr.bf16.mxu0 0
  %1407 = vmatpush1.bf16.msra.mxu0 %v973
  %1408 = vmatprep.subr.bf16.mxu0 0
  %1409 = vmatpush1.bf16.msra.mxu0 %v974
  %1410 = vmatprep.subr.bf16.mxu0 0
  %1411 = vmatpush1.bf16.msra.mxu0 %v975
  %1412 = vmatprep.subr.bf16.mxu0 0
  %1413 = vmatpush1.bf16.msra.mxu0 %v976
  %1414 = vmatprep.subr.bf16.mxu0 0
  %1415 = vmatpush1.bf16.msra.mxu0 %v977
  %1416 = vmatprep.subr.bf16.mxu0 0
  %1417 = vmatpush1.bf16.msra.mxu0 %v978
  %1418 = vmatprep.subr.bf16.mxu0 0
  %1419 = vmatpush1.bf16.msra.mxu0 %v979
  %1420 = vmatprep.mubr.bf16.mxu0 %v323
  %1421 = vmatmul.mubr.bf16.gmra.mrb[0].mxu0 %v322
  %v1422 = vpop.f32.mrb[0].mxu0
  %v1423 = vadd.f32 %v1383, %v1422
  %v1424 = vpop.f32.mrb[0].mxu0
  %v1425 = vpop.f32.mrb[0].mxu0
  %v1426 = vpop.f32.mrb[0].mxu0
  %1427 = vdwg.mxu0
  %vm1428 = vcmp.ge.f32.partialorder %v1423, 0.0
  %v1429 = vmul.f32 %v1423, 0.2
  %v1430 = vsel %vm1428, %v1423, %v1429
  %v1431 = vlaneseq
  %v1432 = vshrl.u32 %v1431, 7
  %v1433 = vsub.s32 1, %v1432
  %v1434 = vrot.slane %v279, %v1433
  %v1435 = vmul.f32 %v1430, %v1434
  %v1436 = vlaneseq
  %v1437 = vshrl.u32 %v1436, 7
  %v1438 = vsub.s32 2, %v1437
  %v1439 = vrot.slane %v279, %v1438
  %v1440 = vadd.f32 %v1435, %v1439
  %v1441 = vpack.c.bf16 %v1440, %v1440
  %1442 = vst [vmem:[%s3] sm:$0xf] %v1441
  // Predicated region
  $region14: #{vae1_forward.33} parent=0 // pred_check
    _
  $region15: #{vae1_forward.33} parent=0 // pred_check_branch
    %1444 = sbr.rel (0) target = $region17
  $region16: #{vae1_forward.33} parent=0 // pred_region
    _
  $region17: #{vae1_forward.33} parent=0 // pred_fallthru
    _
  // Predicated region
  $region18: #{vae1_forward.33} parent=0 // pred_check
    _
  $region19: #{vae1_forward.33} parent=0 // pred_check_branch
    %1446 = sbr.rel (0) target = $region21
  $region20: #{vae1_forward.33} parent=0 // pred_region
    _
  $region21: #{vae1_forward.33} parent=0 // pred_fallthru
    _

// kernel: vae1_forward.34
$region0: #{vae1_forward.34}
  #allocation0 [shape = 'u32[]', space=smem, size = 0x4, offset = 0x4, fixed_abs, tag = 'smem constant byte address 0x4 - core index']
  #allocation1 [shape = 'u32[144,128]{1,0:T(1,128)}', space=vmem, size = 0x12000, scoped, tag = 'internal scratch']
  %s0 = inlined_call_operand.vmem [shape: bf16[8,128], index: 0, kind: input, shape index: {}]
  %s1 = inlined_call_operand.vmem [shape: bf16[128,512], index: 1, kind: input, shape index: {}]
  %s2 = inlined_call_operand.vmem [shape: f32[3,512], index: 2, kind: input, shape index: {}]
  %s3 = inlined_call_operand.vmem [shape: bf16[8,512], index: 3, kind: output, shape index: {}]
  %s4 = sld [smem:[#allocation0]]
  $region22: #{vae1_forward.34} parent=0
    _
  %s6 = ssub.s32 1, %s4
  %s7 = scalar_select 0, %s6, %s4
  // Predicated region
  $region2: #{vae1_forward.34} parent=0 // pred_check
    _
  $region3: #{vae1_forward.34} parent=0 // pred_check_branch
    %9 = sbr.rel (0) target = $region5
  $region4: #{vae1_forward.34} parent=0 // pred_region
    _
  $region5: #{vae1_forward.34} parent=0 // pred_fallthru
    _
  // Predicated region
  $region6: #{vae1_forward.34} parent=0 // pred_check
    _
  $region7: #{vae1_forward.34} parent=0 // pred_check_branch
    %11 = sbr.rel (0) target = $region9
  $region8: #{vae1_forward.34} parent=0 // pred_region
    _
  $region9: #{vae1_forward.34} parent=0 // pred_fallthru
    _
  // Predicated region
  $region10: #{vae1_forward.34} parent=0 // pred_check
    _
  $region11: #{vae1_forward.34} parent=0 // pred_check_branch
    %13 = sbr.rel (0) target = $region13
  $region12: #{vae1_forward.34} parent=0 // pred_region
    _
  $region13: #{vae1_forward.34} parent=0 // pred_fallthru
    _
  %v15 = vld [vmem:[%s0] sm:$0xf]
  %v16 = vld [vmem:[%s1] sm:$0xff]
  %v17 = vld [vmem:[%s1 + $0x8] sm:$0xff]
  %v18 = vld [vmem:[%s1 + $0x10] sm:$0xff]
  %v19 = vld [vmem:[%s1 + $0x18] sm:$0xff]
  %v20 = vld [vmem:[%s1 + $0x20] sm:$0xff]
  %v21 = vld [vmem:[%s1 + $0x28] sm:$0xff]
  %v22 = vld [vmem:[%s1 + $0x30] sm:$0xff]
  %v23 = vld [vmem:[%s1 + $0x38] sm:$0xff]
  %v24 = vld [vmem:[%s1 + $0x40] sm:$0xff]
  %v25 = vld [vmem:[%s1 + $0x48] sm:$0xff]
  %v26 = vld [vmem:[%s1 + $0x50] sm:$0xff]
  %v27 = vld [vmem:[%s1 + $0x58] sm:$0xff]
  %v28 = vld [vmem:[%s1 + $0x60] sm:$0xff]
  %v29 = vld [vmem:[%s1 + $0x68] sm:$0xff]
  %v30 = vld [vmem:[%s1 + $0x70] sm:$0xff]
  %v31 = vld [vmem:[%s1 + $0x78] sm:$0xff]
  %v32 = vld [vmem:[%s1 + $0x80] sm:$0xff]
  %v33 = vld [vmem:[%s1 + $0x88] sm:$0xff]
  %v34 = vld [vmem:[%s1 + $0x90] sm:$0xff]
  %v35 = vld [vmem:[%s1 + $0x98] sm:$0xff]
  %v36 = vld [vmem:[%s1 + $0xa0] sm:$0xff]
  %v37 = vld [vmem:[%s1 + $0xa8] sm:$0xff]
  %v38 = vld [vmem:[%s1 + $0xb0] sm:$0xff]
  %v39 = vld [vmem:[%s1 + $0xb8] sm:$0xff]
  %v40 = vld [vmem:[%s1 + $0xc0] sm:$0xff]
  %v41 = vld [vmem:[%s1 + $0xc8] sm:$0xff]
  %v42 = vld [vmem:[%s1 + $0xd0] sm:$0xff]
  %v43 = vld [vmem:[%s1 + $0xd8] sm:$0xff]
  %v44 = vld [vmem:[%s1 + $0xe0] sm:$0xff]
  %v45 = vld [vmem:[%s1 + $0xe8] sm:$0xff]
  %v46 = vld [vmem:[%s1 + $0xf0] sm:$0xff]
  %v47 = vld [vmem:[%s1 + $0xf8] sm:$0xff]
  %v48 = vld [vmem:[%s2] sm:$0x77]
  %v49 = vld [vmem:[%s2 + $0x8] sm:$0x77]
  %v52 = vlaneseq
  %v53 = vshrl.u32 %v52, 7
  %v54 = vsub.s32 0, %v53
  %v55 = vrot.slane %v48, %v54
  %v56 = vlaneseq
  %v57 = vshrl.u32 %v56, 7
  %v58 = vsub.s32 4, %v57
  %v59 = vrot.slane %v48, %v58
  %v60 = vlaneseq
  %v61 = vshrl.u32 %v60, 7
  %v62 = vsub.s32 0, %v61
  %v63 = vrot.slane %v49, %v62
  %v64 = vlaneseq
  %v65 = vshrl.u32 %v64, 7
  %v66 = vsub.s32 4, %v65
  %v67 = vrot.slane %v49, %v66
  %v72 = vlaneseq
  %v73 = vshrl.u32 %v72, 7
  %v74 = vsub.s32 0, %v73
  %v75 = vrot.slane %v55, %v74
  %v76 = vlaneseq
  %v77 = vshrl.u32 %v76, 7
  %v78 = vsub.s32 0, %v77
  %v79 = vrot.slane %v59, %v78
  %v80 = vlaneseq
  %v81 = vshrl.u32 %v80, 7
  %v82 = vsub.s32 0, %v81
  %v83 = vrot.slane %v63, %v82
  %v84 = vlaneseq
  %v85 = vshrl.u32 %v84, 7
  %v86 = vsub.s32 0, %v85
  %v87 = vrot.slane %v67, %v86
  %v120 = vunpack.c.l.b16 %v16
  %v121 = vunpack.c.h.b16 %v16
  %v122 = vunpack.c.l.b16 %v17
  %v123 = vunpack.c.h.b16 %v17
  %v124 = vunpack.c.l.b16 %v18
  %v125 = vunpack.c.h.b16 %v18
  %v126 = vunpack.c.l.b16 %v19
  %v127 = vunpack.c.h.b16 %v19
  %v128 = vunpack.c.l.b16 %v20
  %v129 = vunpack.c.h.b16 %v20
  %v130 = vunpack.c.l.b16 %v21
  %v131 = vunpack.c.h.b16 %v21
  %v132 = vunpack.c.l.b16 %v22
  %v133 = vunpack.c.h.b16 %v22
  %v134 = vunpack.c.l.b16 %v23
  %v135 = vunpack.c.h.b16 %v23
  %v136 = vunpack.c.l.b16 %v24
  %v137 = vunpack.c.h.b16 %v24
  %v138 = vunpack.c.l.b16 %v25
  %v139 = vunpack.c.h.b16 %v25
  %v140 = vunpack.c.l.b16 %v26
  %v141 = vunpack.c.h.b16 %v26
  %v142 = vunpack.c.l.b16 %v27
  %v143 = vunpack.c.h.b16 %v27
  %v144 = vunpack.c.l.b16 %v28
  %v145 = vunpack.c.h.b16 %v28
  %v146 = vunpack.c.l.b16 %v29
  %v147 = vunpack.c.h.b16 %v29
  %v148 = vunpack.c.l.b16 %v30
  %v149 = vunpack.c.h.b16 %v30
  %v150 = vunpack.c.l.b16 %v31
  %v151 = vunpack.c.h.b16 %v31
  %v152 = vunpack.c.l.b16 %v32
  %v153 = vunpack.c.h.b16 %v32
  %v154 = vunpack.c.l.b16 %v33
  %v155 = vunpack.c.h.b16 %v33
  %v156 = vunpack.c.l.b16 %v34
  %v157 = vunpack.c.h.b16 %v34
  %v158 = vunpack.c.l.b16 %v35
  %v159 = vunpack.c.h.b16 %v35
  %v160 = vunpack.c.l.b16 %v36
  %v161 = vunpack.c.h.b16 %v36
  %v162 = vunpack.c.l.b16 %v37
  %v163 = vunpack.c.h.b16 %v37
  %v164 = vunpack.c.l.b16 %v38
  %v165 = vunpack.c.h.b16 %v38
  %v166 = vunpack.c.l.b16 %v39
  %v167 = vunpack.c.h.b16 %v39
  %v168 = vunpack.c.l.b16 %v40
  %v169 = vunpack.c.h.b16 %v40
  %v170 = vunpack.c.l.b16 %v41
  %v171 = vunpack.c.h.b16 %v41
  %v172 = vunpack.c.l.b16 %v42
  %v173 = vunpack.c.h.b16 %v42
  %v174 = vunpack.c.l.b16 %v43
  %v175 = vunpack.c.h.b16 %v43
  %v176 = vunpack.c.l.b16 %v44
  %v177 = vunpack.c.h.b16 %v44
  %v178 = vunpack.c.l.b16 %v45
  %v179 = vunpack.c.h.b16 %v45
  %v180 = vunpack.c.l.b16 %v46
  %v181 = vunpack.c.h.b16 %v46
  %v182 = vunpack.c.l.b16 %v47
  %v183 = vunpack.c.h.b16 %v47
  %v184 = vpack.c.b16 %v124, %v120
  %v185 = vpack.c.b16 %v125, %v121
  %v186 = vpack.c.b16 %v126, %v122
  %v187 = vpack.c.b16 %v127, %v123
  %v188 = vpack.c.b16 %v132, %v128
  %v189 = vpack.c.b16 %v133, %v129
  %v190 = vpack.c.b16 %v134, %v130
  %v191 = vpack.c.b16 %v135, %v131
  %v192 = vpack.c.b16 %v140, %v136
  %v193 = vpack.c.b16 %v141, %v137
  %v194 = vpack.c.b16 %v142, %v138
  %v195 = vpack.c.b16 %v143, %v139
  %v196 = vpack.c.b16 %v148, %v144
  %v197 = vpack.c.b16 %v149, %v145
  %v198 = vpack.c.b16 %v150, %v146
  %v199 = vpack.c.b16 %v151, %v147
  %v200 = vpack.c.b16 %v156, %v152
  %v201 = vpack.c.b16 %v157, %v153
  %v202 = vpack.c.b16 %v158, %v154
  %v203 = vpack.c.b16 %v159, %v155
  %v204 = vpack.c.b16 %v164, %v160
  %v205 = vpack.c.b16 %v165, %v161
  %v206 = vpack.c.b16 %v166, %v162
  %v207 = vpack.c.b16 %v167, %v163
  %v208 = vpack.c.b16 %v172, %v168
  %v209 = vpack.c.b16 %v173, %v169
  %v210 = vpack.c.b16 %v174, %v170
  %v211 = vpack.c.b16 %v175, %v171
  %v212 = vpack.c.b16 %v180, %v176
  %v213 = vpack.c.b16 %v181, %v177
  %v214 = vpack.c.b16 %v182, %v178
  %v215 = vpack.c.b16 %v183, %v179
  %248 = vmatprep.subr.bf16.mxu0 %v185
  %249 = vmatpush1.bf16.msra.mxu0 %v184
  %250 = vmatprep.subr.bf16.mxu0 %v189
  %251 = vmatpush1.bf16.msra.mxu0 %v188
  %252 = vmatprep.subr.bf16.mxu0 %v193
  %253 = vmatpush1.bf16.msra.mxu0 %v192
  %254 = vmatprep.subr.bf16.mxu0 %v197
  %255 = vmatpush1.bf16.msra.mxu0 %v196
  %256 = vmatprep.subr.bf16.mxu0 %v201
  %257 = vmatpush1.bf16.msra.mxu0 %v200
  %258 = vmatprep.subr.bf16.mxu0 %v205
  %259 = vmatpush1.bf16.msra.mxu0 %v204
  %260 = vmatprep.subr.bf16.mxu0 %v209
  %261 = vmatpush1.bf16.msra.mxu0 %v208
  %262 = vmatprep.subr.bf16.mxu0 %v213
  %263 = vmatpush1.bf16.msra.mxu0 %v212
  %264 = vmatprep.subr.bf16.mxu0 0
  %265 = vmatpush1.bf16.msra.mxu0 0
  %266 = vmatprep.subr.bf16.mxu0 0
  %267 = vmatpush1.bf16.msra.mxu0 0
  %268 = vmatprep.subr.bf16.mxu0 0
  %269 = vmatpush1.bf16.msra.mxu0 0
  %270 = vmatprep.subr.bf16.mxu0 0
  %271 = vmatpush1.bf16.msra.mxu0 0
  %272 = vmatprep.subr.bf16.mxu0 0
  %273 = vmatpush1.bf16.msra.mxu0 0
  %274 = vmatprep.subr.bf16.mxu0 0
  %275 = vmatpush1.bf16.msra.mxu0 0
  %276 = vmatprep.subr.bf16.mxu0 0
  %277 = vmatpush1.bf16.msra.mxu0 0
  %278 = vmatprep.subr.bf16.mxu0 0
  %279 = vmatpush1.bf16.msra.mxu0 0
  %280 = vmatprep.mubr.bf16.mxu0 0
  %281 = vmatmul.mubr.bf16.gmra.mrb[0].mxu0 %v15
  %v282 = vpop.f32.mrb[0].mxu0
  %v283 = vadd.f32 %v75, %v282
  %v284 = vpop.f32.mrb[0].mxu0
  %v285 = vadd.f32 %v79, %v284
  %v286 = vpop.f32.mrb[0].mxu0
  %v287 = vpop.f32.mrb[0].mxu0
  %288 = vdwg.mxu0
  %289 = vmatprep.subr.bf16.mxu0 %v187
  %290 = vmatpush1.bf16.msra.mxu0 %v186
  %291 = vmatprep.subr.bf16.mxu0 %v191
  %292 = vmatpush1.bf16.msra.mxu0 %v190
  %293 = vmatprep.subr.bf16.mxu0 %v195
  %294 = vmatpush1.bf16.msra.mxu0 %v194
  %295 = vmatprep.subr.bf16.mxu0 %v199
  %296 = vmatpush1.bf16.msra.mxu0 %v198
  %297 = vmatprep.subr.bf16.mxu0 %v203
  %298 = vmatpush1.bf16.msra.mxu0 %v202
  %299 = vmatprep.subr.bf16.mxu0 %v207
  %300 = vmatpush1.bf16.msra.mxu0 %v206
  %301 = vmatprep.subr.bf16.mxu0 %v211
  %302 = vmatpush1.bf16.msra.mxu0 %v210
  %303 = vmatprep.subr.bf16.mxu0 %v215
  %304 = vmatpush1.bf16.msra.mxu0 %v214
  %305 = vmatprep.subr.bf16.mxu0 0
  %306 = vmatpush1.bf16.msra.mxu0 0
  %307 = vmatprep.subr.bf16.mxu0 0
  %308 = vmatpush1.bf16.msra.mxu0 0
  %309 = vmatprep.subr.bf16.mxu0 0
  %310 = vmatpush1.bf16.msra.mxu0 0
  %311 = vmatprep.subr.bf16.mxu0 0
  %312 = vmatpush1.bf16.msra.mxu0 0
  %313 = vmatprep.subr.bf16.mxu0 0
  %314 = vmatpush1.bf16.msra.mxu0 0
  %315 = vmatprep.subr.bf16.mxu0 0
  %316 = vmatpush1.bf16.msra.mxu0 0
  %317 = vmatprep.subr.bf16.mxu0 0
  %318 = vmatpush1.bf16.msra.mxu0 0
  %319 = vmatprep.subr.bf16.mxu0 0
  %320 = vmatpush1.bf16.msra.mxu0 0
  %321 = vmatprep.mubr.bf16.mxu0 0
  %322 = vmatmul.mubr.bf16.gmra.mrb[0].mxu0 %v15
  %v323 = vpop.f32.mrb[0].mxu0
  %v324 = vadd.f32 %v83, %v323
  %v325 = vpop.f32.mrb[0].mxu0
  %v326 = vadd.f32 %v87, %v325
  %v327 = vpop.f32.mrb[0].mxu0
  %v328 = vpop.f32.mrb[0].mxu0
  %329 = vdwg.mxu0
  %vm330 = vcmp.ge.f32.partialorder %v283, 0.0
  %vm331 = vcmp.ge.f32.partialorder %v285, 0.0
  %vm332 = vcmp.ge.f32.partialorder %v324, 0.0
  %vm333 = vcmp.ge.f32.partialorder %v326, 0.0
  %v334 = vmul.f32 %v283, 0.2
  %v335 = vmul.f32 %v285, 0.2
  %v336 = vmul.f32 %v324, 0.2
  %v337 = vmul.f32 %v326, 0.2
  %v338 = vsel %vm330, %v283, %v334
  %v339 = vsel %vm331, %v285, %v335
  %v340 = vsel %vm332, %v324, %v336
  %v341 = vsel %vm333, %v326, %v337
  %v342 = vlaneseq
  %v343 = vshrl.u32 %v342, 7
  %v344 = vsub.s32 1, %v343
  %v345 = vrot.slane %v48, %v344
  %v346 = vlaneseq
  %v347 = vshrl.u32 %v346, 7
  %v348 = vsub.s32 5, %v347
  %v349 = vrot.slane %v48, %v348
  %v350 = vlaneseq
  %v351 = vshrl.u32 %v350, 7
  %v352 = vsub.s32 1, %v351
  %v353 = vrot.slane %v49, %v352
  %v354 = vlaneseq
  %v355 = vshrl.u32 %v354, 7
  %v356 = vsub.s32 5, %v355
  %v357 = vrot.slane %v49, %v356
  %v362 = vlaneseq
  %v363 = vshrl.u32 %v362, 7
  %v364 = vsub.s32 1, %v363
  %v365 = vrot.slane %v345, %v364
  %v366 = vlaneseq
  %v367 = vshrl.u32 %v366, 7
  %v368 = vsub.s32 1, %v367
  %v369 = vrot.slane %v349, %v368
  %v370 = vlaneseq
  %v371 = vshrl.u32 %v370, 7
  %v372 = vsub.s32 1, %v371
  %v373 = vrot.slane %v353, %v372
  %v374 = vlaneseq
  %v375 = vshrl.u32 %v374, 7
  %v376 = vsub.s32 1, %v375
  %v377 = vrot.slane %v357, %v376
  %v378 = vmul.f32 %v338, %v365
  %v379 = vmul.f32 %v339, %v369
  %v380 = vmul.f32 %v340, %v373
  %v381 = vmul.f32 %v341, %v377
  %v382 = vlaneseq
  %v383 = vshrl.u32 %v382, 7
  %v384 = vsub.s32 2, %v383
  %v385 = vrot.slane %v48, %v384
  %v386 = vlaneseq
  %v387 = vshrl.u32 %v386, 7
  %v388 = vsub.s32 6, %v387
  %v389 = vrot.slane %v48, %v388
  %v390 = vlaneseq
  %v391 = vshrl.u32 %v390, 7
  %v392 = vsub.s32 2, %v391
  %v393 = vrot.slane %v49, %v392
  %v394 = vlaneseq
  %v395 = vshrl.u32 %v394, 7
  %v396 = vsub.s32 6, %v395
  %v397 = vrot.slane %v49, %v396
  %v402 = vlaneseq
  %v403 = vshrl.u32 %v402, 7
  %v404 = vsub.s32 2, %v403
  %v405 = vrot.slane %v385, %v404
  %v406 = vlaneseq
  %v407 = vshrl.u32 %v406, 7
  %v408 = vsub.s32 2, %v407
  %v409 = vrot.slane %v389, %v408
  %v410 = vlaneseq
  %v411 = vshrl.u32 %v410, 7
  %v412 = vsub.s32 2, %v411
  %v413 = vrot.slane %v393, %v412
  %v414 = vlaneseq
  %v415 = vshrl.u32 %v414, 7
  %v416 = vsub.s32 2, %v415
  %v417 = vrot.slane %v397, %v416
  %v418 = vadd.f32 %v378, %v405
  %v419 = vadd.f32 %v379, %v409
  %v420 = vadd.f32 %v380, %v413
  %v421 = vadd.f32 %v381, %v417
  %v422 = vpack.c.bf16 %v418, %v418
  %v423 = vpack.c.bf16 %v419, %v419
  %v424 = vpack.c.bf16 %v420, %v420
  %v425 = vpack.c.bf16 %v421, %v421
  %v430 = vunpack.c.l.b16 %v422
  %v431 = vunpack.c.l.b16 %v423
  %v432 = vunpack.c.l.b16 %v424
  %v433 = vunpack.c.l.b16 %v425
  %v434 = vpack.c.b16 %v431, %v430
  %v435 = vpack.c.b16 %v433, %v432
  %438 = vst [vmem:[%s3] sm:$0xff] %v434
  %439 = vst [vmem:[%s3 + $0x8] sm:$0xff] %v435
  // Predicated region
  $region14: #{vae1_forward.34} parent=0 // pred_check
    _
  $region15: #{vae1_forward.34} parent=0 // pred_check_branch
    %441 = sbr.rel (0) target = $region17
  $region16: #{vae1_forward.34} parent=0 // pred_region
    _
  $region17: #{vae1_forward.34} parent=0 // pred_fallthru
    _
  // Predicated region
  $region18: #{vae1_forward.34} parent=0 // pred_check
    _
  $region19: #{vae1_forward.34} parent=0 // pred_check_branch
    %443 = sbr.rel (0) target = $region21
  $region20: #{vae1_forward.34} parent=0 // pred_region
    _
  $region21: #{vae1_forward.34} parent=0 // pred_fallthru
    _

// kernel: vae1_forward.35
$region0: #{vae1_forward.35}
  #allocation0 [shape = 'u32[]', space=smem, size = 0x4, offset = 0x4, fixed_abs, tag = 'smem constant byte address 0x4 - core index']
  #allocation1 [shape = 'u32[144,128]{1,0:T(1,128)}', space=vmem, size = 0x12000, scoped, tag = 'internal scratch']
  %s0 = inlined_call_operand.vmem [shape: bf16[8,512], index: 0, kind: input, shape index: {}]
  %s1 = inlined_call_operand.vmem [shape: bf16[512,32], index: 1, kind: input, shape index: {}]
  %s2 = inlined_call_operand.vmem [shape: f32[3,32], index: 2, kind: input, shape index: {}]
  %s3 = inlined_call_operand.vmem [shape: f32[8,32], index: 3, kind: output, shape index: {}]
  %s4 = sld [smem:[#allocation0]]
  $region22: #{vae1_forward.35} parent=0
    _
  %s6 = ssub.s32 1, %s4
  %s7 = scalar_select 0, %s6, %s4
  // Predicated region
  $region2: #{vae1_forward.35} parent=0 // pred_check
    _
  $region3: #{vae1_forward.35} parent=0 // pred_check_branch
    %9 = sbr.rel (0) target = $region5
  $region4: #{vae1_forward.35} parent=0 // pred_region
    _
  $region5: #{vae1_forward.35} parent=0 // pred_fallthru
    _
  // Predicated region
  $region6: #{vae1_forward.35} parent=0 // pred_check
    _
  $region7: #{vae1_forward.35} parent=0 // pred_check_branch
    %11 = sbr.rel (0) target = $region9
  $region8: #{vae1_forward.35} parent=0 // pred_region
    _
  $region9: #{vae1_forward.35} parent=0 // pred_fallthru
    _
  // Predicated region
  $region10: #{vae1_forward.35} parent=0 // pred_check
    _
  $region11: #{vae1_forward.35} parent=0 // pred_check_branch
    %13 = sbr.rel (0) target = $region13
  $region12: #{vae1_forward.35} parent=0 // pred_region
    _
  $region13: #{vae1_forward.35} parent=0 // pred_fallthru
    _
  %v15 = vld [vmem:[%s0] sm:$0xff]
  %v16 = vld [vmem:[%s0 + $0x8] sm:$0xff]
  %v17 = vld [vmem:[%s1] sm:$0xf]
  %v18 = vld [vmem:[%s1 + $0x4] sm:$0xf]
  %v19 = vld [vmem:[%s1 + $0x8] sm:$0xf]
  %v20 = vld [vmem:[%s1 + $0xc] sm:$0xf]
  %v21 = vld [vmem:[%s1 + $0x10] sm:$0xf]
  %v22 = vld [vmem:[%s1 + $0x14] sm:$0xf]
  %v23 = vld [vmem:[%s1 + $0x18] sm:$0xf]
  %v24 = vld [vmem:[%s1 + $0x1c] sm:$0xf]
  %v25 = vld [vmem:[%s1 + $0x20] sm:$0xf]
  %v26 = vld [vmem:[%s1 + $0x24] sm:$0xf]
  %v27 = vld [vmem:[%s1 + $0x28] sm:$0xf]
  %v28 = vld [vmem:[%s1 + $0x2c] sm:$0xf]
  %v29 = vld [vmem:[%s1 + $0x30] sm:$0xf]
  %v30 = vld [vmem:[%s1 + $0x34] sm:$0xf]
  %v31 = vld [vmem:[%s1 + $0x38] sm:$0xf]
  %v32 = vld [vmem:[%s1 + $0x3c] sm:$0xf]
  %v33 = vld [vmem:[%s1 + $0x40] sm:$0xf]
  %v34 = vld [vmem:[%s1 + $0x44] sm:$0xf]
  %v35 = vld [vmem:[%s1 + $0x48] sm:$0xf]
  %v36 = vld [vmem:[%s1 + $0x4c] sm:$0xf]
  %v37 = vld [vmem:[%s1 + $0x50] sm:$0xf]
  %v38 = vld [vmem:[%s1 + $0x54] sm:$0xf]
  %v39 = vld [vmem:[%s1 + $0x58] sm:$0xf]
  %v40 = vld [vmem:[%s1 + $0x5c] sm:$0xf]
  %v41 = vld [vmem:[%s1 + $0x60] sm:$0xf]
  %v42 = vld [vmem:[%s1 + $0x64] sm:$0xf]
  %v43 = vld [vmem:[%s1 + $0x68] sm:$0xf]
  %v44 = vld [vmem:[%s1 + $0x6c] sm:$0xf]
  %v45 = vld [vmem:[%s1 + $0x70] sm:$0xf]
  %v46 = vld [vmem:[%s1 + $0x74] sm:$0xf]
  %v47 = vld [vmem:[%s1 + $0x78] sm:$0xf]
  %v48 = vld [vmem:[%s1 + $0x7c] sm:$0xf]
  %v49 = vld [vmem:[%s1 + $0x80] sm:$0xf]
  %v50 = vld [vmem:[%s1 + $0x84] sm:$0xf]
  %v51 = vld [vmem:[%s1 + $0x88] sm:$0xf]
  %v52 = vld [vmem:[%s1 + $0x8c] sm:$0xf]
  %v53 = vld [vmem:[%s1 + $0x90] sm:$0xf]
  %v54 = vld [vmem:[%s1 + $0x94] sm:$0xf]
  %v55 = vld [vmem:[%s1 + $0x98] sm:$0xf]
  %v56 = vld [vmem:[%s1 + $0x9c] sm:$0xf]
  %v57 = vld [vmem:[%s1 + $0xa0] sm:$0xf]
  %v58 = vld [vmem:[%s1 + $0xa4] sm:$0xf]
  %v59 = vld [vmem:[%s1 + $0xa8] sm:$0xf]
  %v60 = vld [vmem:[%s1 + $0xac] sm:$0xf]
  %v61 = vld [vmem:[%s1 + $0xb0] sm:$0xf]
  %v62 = vld [vmem:[%s1 + $0xb4] sm:$0xf]
  %v63 = vld [vmem:[%s1 + $0xb8] sm:$0xf]
  %v64 = vld [vmem:[%s1 + $0xbc] sm:$0xf]
  %v65 = vld [vmem:[%s1 + $0xc0] sm:$0xf]
  %v66 = vld [vmem:[%s1 + $0xc4] sm:$0xf]
  %v67 = vld [vmem:[%s1 + $0xc8] sm:$0xf]
  %v68 = vld [vmem:[%s1 + $0xcc] sm:$0xf]
  %v69 = vld [vmem:[%s1 + $0xd0] sm:$0xf]
  %v70 = vld [vmem:[%s1 + $0xd4] sm:$0xf]
  %v71 = vld [vmem:[%s1 + $0xd8] sm:$0xf]
  %v72 = vld [vmem:[%s1 + $0xdc] sm:$0xf]
  %v73 = vld [vmem:[%s1 + $0xe0] sm:$0xf]
  %v74 = vld [vmem:[%s1 + $0xe4] sm:$0xf]
  %v75 = vld [vmem:[%s1 + $0xe8] sm:$0xf]
  %v76 = vld [vmem:[%s1 + $0xec] sm:$0xf]
  %v77 = vld [vmem:[%s1 + $0xf0] sm:$0xf]
  %v78 = vld [vmem:[%s1 + $0xf4] sm:$0xf]
  %v79 = vld [vmem:[%s1 + $0xf8] sm:$0xf]
  %v80 = vld [vmem:[%s1 + $0xfc] sm:$0xf]
  %v81 = vld [vmem:[%s2] sm:$0x7]
  %v82 = vlaneseq
  %v83 = vshrl.u32 %v82, 7
  %v84 = vsub.s32 0, %v83
  %v85 = vrot.slane %v81, %v84
  %v88 = vunpack.c.l.b16 %v15
  %v89 = vunpack.c.h.b16 %v15
  %v90 = vunpack.c.l.b16 %v16
  %v91 = vunpack.c.h.b16 %v16
  %v92 = vpack.c.b16 %v88, %v88
  %v93 = vpack.c.b16 %v89, %v89
  %v94 = vpack.c.b16 %v90, %v90
  %v95 = vpack.c.b16 %v91, %v91
  %v164 = vunpack.c.l.b16 %v17
  %v165 = vunpack.c.l.b16 %v18
  %v166 = vunpack.c.l.b16 %v19
  %v167 = vunpack.c.l.b16 %v20
  %v168 = vunpack.c.l.b16 %v21
  %v169 = vunpack.c.l.b16 %v22
  %v170 = vunpack.c.l.b16 %v23
  %v171 = vunpack.c.l.b16 %v24
  %v172 = vunpack.c.l.b16 %v25
  %v173 = vunpack.c.l.b16 %v26
  %v174 = vunpack.c.l.b16 %v27
  %v175 = vunpack.c.l.b16 %v28
  %v176 = vunpack.c.l.b16 %v29
  %v177 = vunpack.c.l.b16 %v30
  %v178 = vunpack.c.l.b16 %v31
  %v179 = vunpack.c.l.b16 %v32
  %v180 = vunpack.c.l.b16 %v33
  %v181 = vunpack.c.l.b16 %v34
  %v182 = vunpack.c.l.b16 %v35
  %v183 = vunpack.c.l.b16 %v36
  %v184 = vunpack.c.l.b16 %v37
  %v185 = vunpack.c.l.b16 %v38
  %v186 = vunpack.c.l.b16 %v39
  %v187 = vunpack.c.l.b16 %v40
  %v188 = vunpack.c.l.b16 %v41
  %v189 = vunpack.c.l.b16 %v42
  %v190 = vunpack.c.l.b16 %v43
  %v191 = vunpack.c.l.b16 %v44
  %v192 = vunpack.c.l.b16 %v45
  %v193 = vunpack.c.l.b16 %v46
  %v194 = vunpack.c.l.b16 %v47
  %v195 = vunpack.c.l.b16 %v48
  %v196 = vunpack.c.l.b16 %v49
  %v197 = vunpack.c.l.b16 %v50
  %v198 = vunpack.c.l.b16 %v51
  %v199 = vunpack.c.l.b16 %v52
  %v200 = vunpack.c.l.b16 %v53
  %v201 = vunpack.c.l.b16 %v54
  %v202 = vunpack.c.l.b16 %v55
  %v203 = vunpack.c.l.b16 %v56
  %v204 = vunpack.c.l.b16 %v57
  %v205 = vunpack.c.l.b16 %v58
  %v206 = vunpack.c.l.b16 %v59
  %v207 = vunpack.c.l.b16 %v60
  %v208 = vunpack.c.l.b16 %v61
  %v209 = vunpack.c.l.b16 %v62
  %v210 = vunpack.c.l.b16 %v63
  %v211 = vunpack.c.l.b16 %v64
  %v212 = vunpack.c.l.b16 %v65
  %v213 = vunpack.c.l.b16 %v66
  %v214 = vunpack.c.l.b16 %v67
  %v215 = vunpack.c.l.b16 %v68
  %v216 = vunpack.c.l.b16 %v69
  %v217 = vunpack.c.l.b16 %v70
  %v218 = vunpack.c.l.b16 %v71
  %v219 = vunpack.c.l.b16 %v72
  %v220 = vunpack.c.l.b16 %v73
  %v221 = vunpack.c.l.b16 %v74
  %v222 = vunpack.c.l.b16 %v75
  %v223 = vunpack.c.l.b16 %v76
  %v224 = vunpack.c.l.b16 %v77
  %v225 = vunpack.c.l.b16 %v78
  %v226 = vunpack.c.l.b16 %v79
  %v227 = vunpack.c.l.b16 %v80
  %v228 = vpack.c.b16 %v165, %v164
  %v229 = vpack.c.b16 %v167, %v166
  %v230 = vpack.c.b16 %v169, %v168
  %v231 = vpack.c.b16 %v171, %v170
  %v232 = vpack.c.b16 %v173, %v172
  %v233 = vpack.c.b16 %v175, %v174
  %v234 = vpack.c.b16 %v177, %v176
  %v235 = vpack.c.b16 %v179, %v178
  %v236 = vpack.c.b16 %v181, %v180
  %v237 = vpack.c.b16 %v183, %v182
  %v238 = vpack.c.b16 %v185, %v184
  %v239 = vpack.c.b16 %v187, %v186
  %v240 = vpack.c.b16 %v189, %v188
  %v241 = vpack.c.b16 %v191, %v190
  %v242 = vpack.c.b16 %v193, %v192
  %v243 = vpack.c.b16 %v195, %v194
  %v244 = vpack.c.b16 %v197, %v196
  %v245 = vpack.c.b16 %v199, %v198
  %v246 = vpack.c.b16 %v201, %v200
  %v247 = vpack.c.b16 %v203, %v202
  %v248 = vpack.c.b16 %v205, %v204
  %v249 = vpack.c.b16 %v207, %v206
  %v250 = vpack.c.b16 %v209, %v208
  %v251 = vpack.c.b16 %v211, %v210
  %v252 = vpack.c.b16 %v213, %v212
  %v253 = vpack.c.b16 %v215, %v214
  %v254 = vpack.c.b16 %v217, %v216
  %v255 = vpack.c.b16 %v219, %v218
  %v256 = vpack.c.b16 %v221, %v220
  %v257 = vpack.c.b16 %v223, %v222
  %v258 = vpack.c.b16 %v225, %v224
  %v259 = vpack.c.b16 %v227, %v226
  %292 = vmatprep.subr.bf16.mxu0 0
  %293 = vmatpush1.bf16.msra.mxu0 %v228
  %294 = vmatprep.subr.bf16.mxu0 0
  %295 = vmatpush1.bf16.msra.mxu0 %v229
  %296 = vmatprep.subr.bf16.mxu0 0
  %297 = vmatpush1.bf16.msra.mxu0 %v230
  %298 = vmatprep.subr.bf16.mxu0 0
  %299 = vmatpush1.bf16.msra.mxu0 %v231
  %300 = vmatprep.subr.bf16.mxu0 0
  %301 = vmatpush1.bf16.msra.mxu0 %v232
  %302 = vmatprep.subr.bf16.mxu0 0
  %303 = vmatpush1.bf16.msra.mxu0 %v233
  %304 = vmatprep.subr.bf16.mxu0 0
  %305 = vmatpush1.bf16.msra.mxu0 %v234
  %306 = vmatprep.subr.bf16.mxu0 0
  %307 = vmatpush1.bf16.msra.mxu0 %v235
  %308 = vmatprep.subr.bf16.mxu0 0
  %309 = vmatpush1.bf16.msra.mxu0 %v236
  %310 = vmatprep.subr.bf16.mxu0 0
  %311 = vmatpush1.bf16.msra.mxu0 %v237
  %312 = vmatprep.subr.bf16.mxu0 0
  %313 = vmatpush1.bf16.msra.mxu0 %v238
  %314 = vmatprep.subr.bf16.mxu0 0
  %315 = vmatpush1.bf16.msra.mxu0 %v239
  %316 = vmatprep.subr.bf16.mxu0 0
  %317 = vmatpush1.bf16.msra.mxu0 %v240
  %318 = vmatprep.subr.bf16.mxu0 0
  %319 = vmatpush1.bf16.msra.mxu0 %v241
  %320 = vmatprep.subr.bf16.mxu0 0
  %321 = vmatpush1.bf16.msra.mxu0 %v242
  %322 = vmatprep.subr.bf16.mxu0 0
  %323 = vmatpush1.bf16.msra.mxu0 %v243
  %324 = vmatprep.mubr.bf16.mxu0 %v93
  %325 = vmatmul.mubr.bf16.gmra.mrb[0].mxu0 %v92
  %v326 = vpop.f32.mrb[0].mxu0
  %v327 = vadd.f32 %v85, %v326
  %v328 = vpop.f32.mrb[0].mxu0
  %v329 = vpop.f32.mrb[0].mxu0
  %v330 = vpop.f32.mrb[0].mxu0
  %331 = vdwg.mxu0
  %332 = vmatprep.subr.bf16.mxu0 0
  %333 = vmatpush1.bf16.msra.mxu0 %v244
  %334 = vmatprep.subr.bf16.mxu0 0
  %335 = vmatpush1.bf16.msra.mxu0 %v245
  %336 = vmatprep.subr.bf16.mxu0 0
  %337 = vmatpush1.bf16.msra.mxu0 %v246
  %338 = vmatprep.subr.bf16.mxu0 0
  %339 = vmatpush1.bf16.msra.mxu0 %v247
  %340 = vmatprep.subr.bf16.mxu0 0
  %341 = vmatpush1.bf16.msra.mxu0 %v248
  %342 = vmatprep.subr.bf16.mxu0 0
  %343 = vmatpush1.bf16.msra.mxu0 %v249
  %344 = vmatprep.subr.bf16.mxu0 0
  %345 = vmatpush1.bf16.msra.mxu0 %v250
  %346 = vmatprep.subr.bf16.mxu0 0
  %347 = vmatpush1.bf16.msra.mxu0 %v251
  %348 = vmatprep.subr.bf16.mxu0 0
  %349 = vmatpush1.bf16.msra.mxu0 %v252
  %350 = vmatprep.subr.bf16.mxu0 0
  %351 = vmatpush1.bf16.msra.mxu0 %v253
  %352 = vmatprep.subr.bf16.mxu0 0
  %353 = vmatpush1.bf16.msra.mxu0 %v254
  %354 = vmatprep.subr.bf16.mxu0 0
  %355 = vmatpush1.bf16.msra.mxu0 %v255
  %356 = vmatprep.subr.bf16.mxu0 0
  %357 = vmatpush1.bf16.msra.mxu0 %v256
  %358 = vmatprep.subr.bf16.mxu0 0
  %359 = vmatpush1.bf16.msra.mxu0 %v257
  %360 = vmatprep.subr.bf16.mxu0 0
  %361 = vmatpush1.bf16.msra.mxu0 %v258
  %362 = vmatprep.subr.bf16.mxu0 0
  %363 = vmatpush1.bf16.msra.mxu0 %v259
  %364 = vmatprep.mubr.bf16.mxu0 %v95
  %365 = vmatmul.mubr.bf16.gmra.mrb[0].mxu0 %v94
  %v366 = vpop.f32.mrb[0].mxu0
  %v367 = vadd.f32 %v327, %v366
  %v368 = vpop.f32.mrb[0].mxu0
  %v369 = vpop.f32.mrb[0].mxu0
  %v370 = vpop.f32.mrb[0].mxu0
  %371 = vdwg.mxu0
  %v372 = vlaneseq
  %v373 = vshrl.u32 %v372, 7
  %v374 = vsub.s32 1, %v373
  %v375 = vrot.slane %v81, %v374
  %v376 = vmul.f32 %v367, %v375
  %v377 = vlaneseq
  %v378 = vshrl.u32 %v377, 7
  %v379 = vsub.s32 2, %v378
  %v380 = vrot.slane %v81, %v379
  %v381 = vadd.f32 %v376, %v380
  %vm382 = vcmask 261120
  %383 = vst.msk [vmem:[%s3] sm:$0xff] %vm382, %v381
  // Predicated region
  $region14: #{vae1_forward.35} parent=0 // pred_check
    _
  $region15: #{vae1_forward.35} parent=0 // pred_check_branch
    %385 = sbr.rel (0) target = $region17
  $region16: #{vae1_forward.35} parent=0 // pred_region
    _
  $region17: #{vae1_forward.35} parent=0 // pred_fallthru
    _
  // Predicated region
  $region18: #{vae1_forward.35} parent=0 // pred_check
    _
  $region19: #{vae1_forward.35} parent=0 // pred_check_branch
    %387 = sbr.rel (0) target = $region21
  $region20: #{vae1_forward.35} parent=0 // pred_region
    _
  $region21: #{vae1_forward.35} parent=0 // pred_fallthru
    _

// kernel: vae1_forward.36
$region0: #{vae1_forward.36}
  #allocation0 [shape = 'u32[]', space=smem, size = 0x4, offset = 0x4, fixed_abs, tag = 'smem constant byte address 0x4 - core index']
  #allocation1 [shape = 'u32[144,128]{1,0:T(1,128)}', space=vmem, size = 0x12000, scoped, tag = 'internal scratch']
  %s0 = inlined_call_operand.vmem [shape: bf16[8,16], index: 0, kind: input, shape index: {}]
  %s1 = inlined_call_operand.vmem [shape: bf16[16,16], index: 1, kind: input, shape index: {}]
  %s2 = inlined_call_operand.vmem [shape: f32[3,16], index: 2, kind: input, shape index: {}]
  %s3 = inlined_call_operand.vmem [shape: bf16[8,16], index: 3, kind: output, shape index: {}]
  %s4 = sld [smem:[#allocation0]]
  $region22: #{vae1_forward.36} parent=0
    _
  %s6 = ssub.s32 1, %s4
  %s7 = scalar_select 0, %s6, %s4
  // Predicated region
  $region2: #{vae1_forward.36} parent=0 // pred_check
    _
  $region3: #{vae1_forward.36} parent=0 // pred_check_branch
    %9 = sbr.rel (0) target = $region5
  $region4: #{vae1_forward.36} parent=0 // pred_region
    _
  $region5: #{vae1_forward.36} parent=0 // pred_fallthru
    _
  // Predicated region
  $region6: #{vae1_forward.36} parent=0 // pred_check
    _
  $region7: #{vae1_forward.36} parent=0 // pred_check_branch
    %11 = sbr.rel (0) target = $region9
  $region8: #{vae1_forward.36} parent=0 // pred_region
    _
  $region9: #{vae1_forward.36} parent=0 // pred_fallthru
    _
  // Predicated region
  $region10: #{vae1_forward.36} parent=0 // pred_check
    _
  $region11: #{vae1_forward.36} parent=0 // pred_check_branch
    %13 = sbr.rel (0) target = $region13
  $region12: #{vae1_forward.36} parent=0 // pred_region
    _
  $region13: #{vae1_forward.36} parent=0 // pred_fallthru
    _
  %v15 = vld [vmem:[%s0] sm:$0xf]
  %v16 = vld [vmem:[%s1] sm:$0xf]
  %v17 = vld [vmem:[%s1 + $0x4] sm:$0xf]
  %v18 = vld [vmem:[%s2] sm:$0x7]
  %v19 = vlaneseq
  %v20 = vshrl.u32 %v19, 7
  %v21 = vsub.s32 0, %v20
  %v22 = vrot.slane %v18, %v21
  %v25 = vunpack.c.l.b16 %v16
  %v26 = vunpack.c.l.b16 %v17
  %v27 = vpack.c.b16 %v26, %v25
  %vm29 = vcmask 130048
  %v31 = vsel %vm29, %v15, 0
  %33 = vmatprep.subr.bf16.mxu0 0
  %34 = vmatpush1.bf16.msra.mxu0 %v27
  %35 = vmatprep.subr.bf16.mxu0 0
  %36 = vmatpush1.bf16.msra.mxu0 0
  %37 = vmatprep.subr.bf16.mxu0 0
  %38 = vmatpush1.bf16.msra.mxu0 0
  %39 = vmatprep.subr.bf16.mxu0 0
  %40 = vmatpush1.bf16.msra.mxu0 0
  %41 = vmatprep.subr.bf16.mxu0 0
  %42 = vmatpush1.bf16.msra.mxu0 0
  %43 = vmatprep.subr.bf16.mxu0 0
  %44 = vmatpush1.bf16.msra.mxu0 0
  %45 = vmatprep.subr.bf16.mxu0 0
  %46 = vmatpush1.bf16.msra.mxu0 0
  %47 = vmatprep.subr.bf16.mxu0 0
  %48 = vmatpush1.bf16.msra.mxu0 0
  %49 = vmatprep.subr.bf16.mxu0 0
  %50 = vmatpush1.bf16.msra.mxu0 0
  %51 = vmatprep.subr.bf16.mxu0 0
  %52 = vmatpush1.bf16.msra.mxu0 0
  %53 = vmatprep.subr.bf16.mxu0 0
  %54 = vmatpush1.bf16.msra.mxu0 0
  %55 = vmatprep.subr.bf16.mxu0 0
  %56 = vmatpush1.bf16.msra.mxu0 0
  %57 = vmatprep.subr.bf16.mxu0 0
  %58 = vmatpush1.bf16.msra.mxu0 0
  %59 = vmatprep.subr.bf16.mxu0 0
  %60 = vmatpush1.bf16.msra.mxu0 0
  %61 = vmatprep.subr.bf16.mxu0 0
  %62 = vmatpush1.bf16.msra.mxu0 0
  %63 = vmatprep.subr.bf16.mxu0 0
  %64 = vmatpush1.bf16.msra.mxu0 0
  %65 = vmatprep.mubr.bf16.mxu0 0
  %66 = vmatmul.mubr.bf16.gmra.mrb[0].mxu0 %v31
  %v67 = vpop.f32.mrb[0].mxu0
  %v68 = vadd.f32 %v22, %v67
  %v69 = vpop.f32.mrb[0].mxu0
  %v70 = vpop.f32.mrb[0].mxu0
  %v71 = vpop.f32.mrb[0].mxu0
  %72 = vdwg.mxu0
  %vm73 = vcmp.ge.f32.partialorder %v68, 0.0
  %v74 = vmul.f32 %v68, 0.2
  %v75 = vsel %vm73, %v68, %v74
  %v76 = vlaneseq
  %v77 = vshrl.u32 %v76, 7
  %v78 = vsub.s32 1, %v77
  %v79 = vrot.slane %v18, %v78
  %v80 = vmul.f32 %v75, %v79
  %v81 = vlaneseq
  %v82 = vshrl.u32 %v81, 7
  %v83 = vsub.s32 2, %v82
  %v84 = vrot.slane %v18, %v83
  %v85 = vadd.f32 %v80, %v84
  %v86 = vpack.c.bf16 %v85, %v85
  %vm87 = vcmask 125952
  %88 = vst.msk [vmem:[%s3] sm:$0xf] %vm87, %v86
  // Predicated region
  $region14: #{vae1_forward.36} parent=0 // pred_check
    _
  $region15: #{vae1_forward.36} parent=0 // pred_check_branch
    %90 = sbr.rel (0) target = $region17
  $region16: #{vae1_forward.36} parent=0 // pred_region
    _
  $region17: #{vae1_forward.36} parent=0 // pred_fallthru
    _
  // Predicated region
  $region18: #{vae1_forward.36} parent=0 // pred_check
    _
  $region19: #{vae1_forward.36} parent=0 // pred_check_branch
    %92 = sbr.rel (0) target = $region21
  $region20: #{vae1_forward.36} parent=0 // pred_region
    _
  $region21: #{vae1_forward.36} parent=0 // pred_fallthru
    _

// kernel: vae1_forward.37
$region0: #{vae1_forward.37}
  #allocation0 [shape = 'u32[]', space=smem, size = 0x4, offset = 0x4, fixed_abs, tag = 'smem constant byte address 0x4 - core index']
  #allocation1 [shape = 'u32[144,128]{1,0:T(1,128)}', space=vmem, size = 0x12000, scoped, tag = 'internal scratch']
  %s0 = inlined_call_operand.vmem [shape: bf16[32,256], index: 0, kind: input, shape index: {}]
  %s1 = inlined_call_operand.vmem [shape: bf16[256,32], index: 1, kind: input, shape index: {}]
  %s2 = inlined_call_operand.vmem [shape: f32[3,32], index: 2, kind: input, shape index: {}]
  %s3 = inlined_call_operand.vmem [shape: bf16[32,32], index: 3, kind: output, shape index: {}]
  %s4 = sld [smem:[#allocation0]]
  $region22: #{vae1_forward.37} parent=0
    _
  %s6 = ssub.s32 1, %s4
  %s7 = scalar_select 0, %s6, %s4
  // Predicated region
  $region2: #{vae1_forward.37} parent=0 // pred_check
    _
  $region3: #{vae1_forward.37} parent=0 // pred_check_branch
    %9 = sbr.rel (0) target = $region5
  $region4: #{vae1_forward.37} parent=0 // pred_region
    _
  $region5: #{vae1_forward.37} parent=0 // pred_fallthru
    _
  // Predicated region
  $region6: #{vae1_forward.37} parent=0 // pred_check
    _
  $region7: #{vae1_forward.37} parent=0 // pred_check_branch
    %11 = sbr.rel (0) target = $region9
  $region8: #{vae1_forward.37} parent=0 // pred_region
    _
  $region9: #{vae1_forward.37} parent=0 // pred_fallthru
    _
  // Predicated region
  $region10: #{vae1_forward.37} parent=0 // pred_check
    _
  $region11: #{vae1_forward.37} parent=0 // pred_check_branch
    %13 = sbr.rel (0) target = $region13
  $region12: #{vae1_forward.37} parent=0 // pred_region
    _
  $region13: #{vae1_forward.37} parent=0 // pred_fallthru
    _
  %v15 = vld [vmem:[%s0] sm:$0xff]
  %v16 = vld [vmem:[%s0 + $0x8] sm:$0xff]
  %v17 = vld [vmem:[%s0 + $0x10] sm:$0xff]
  %v18 = vld [vmem:[%s0 + $0x18] sm:$0xff]
  %v19 = vld [vmem:[%s1] sm:$0xf]
  %v20 = vld [vmem:[%s1 + $0x4] sm:$0xf]
  %v21 = vld [vmem:[%s1 + $0x8] sm:$0xf]
  %v22 = vld [vmem:[%s1 + $0xc] sm:$0xf]
  %v23 = vld [vmem:[%s1 + $0x10] sm:$0xf]
  %v24 = vld [vmem:[%s1 + $0x14] sm:$0xf]
  %v25 = vld [vmem:[%s1 + $0x18] sm:$0xf]
  %v26 = vld [vmem:[%s1 + $0x1c] sm:$0xf]
  %v27 = vld [vmem:[%s1 + $0x20] sm:$0xf]
  %v28 = vld [vmem:[%s1 + $0x24] sm:$0xf]
  %v29 = vld [vmem:[%s1 + $0x28] sm:$0xf]
  %v30 = vld [vmem:[%s1 + $0x2c] sm:$0xf]
  %v31 = vld [vmem:[%s1 + $0x30] sm:$0xf]
  %v32 = vld [vmem:[%s1 + $0x34] sm:$0xf]
  %v33 = vld [vmem:[%s1 + $0x38] sm:$0xf]
  %v34 = vld [vmem:[%s1 + $0x3c] sm:$0xf]
  %v35 = vld [vmem:[%s1 + $0x40] sm:$0xf]
  %v36 = vld [vmem:[%s1 + $0x44] sm:$0xf]
  %v37 = vld [vmem:[%s1 + $0x48] sm:$0xf]
  %v38 = vld [vmem:[%s1 + $0x4c] sm:$0xf]
  %v39 = vld [vmem:[%s1 + $0x50] sm:$0xf]
  %v40 = vld [vmem:[%s1 + $0x54] sm:$0xf]
  %v41 = vld [vmem:[%s1 + $0x58] sm:$0xf]
  %v42 = vld [vmem:[%s1 + $0x5c] sm:$0xf]
  %v43 = vld [vmem:[%s1 + $0x60] sm:$0xf]
  %v44 = vld [vmem:[%s1 + $0x64] sm:$0xf]
  %v45 = vld [vmem:[%s1 + $0x68] sm:$0xf]
  %v46 = vld [vmem:[%s1 + $0x6c] sm:$0xf]
  %v47 = vld [vmem:[%s1 + $0x70] sm:$0xf]
  %v48 = vld [vmem:[%s1 + $0x74] sm:$0xf]
  %v49 = vld [vmem:[%s1 + $0x78] sm:$0xf]
  %v50 = vld [vmem:[%s1 + $0x7c] sm:$0xf]
  %v51 = vld [vmem:[%s2] sm:$0x7]
  %v52 = vlaneseq
  %v53 = vshrl.u32 %v52, 7
  %v54 = vsub.s32 0, %v53
  %v55 = vrot.slane %v51, %v54
  %v60 = vunpack.c.l.b16 %v15
  %v61 = vunpack.c.h.b16 %v15
  %v62 = vunpack.c.l.b16 %v16
  %v63 = vunpack.c.h.b16 %v16
  %v64 = vunpack.c.l.b16 %v17
  %v65 = vunpack.c.h.b16 %v17
  %v66 = vunpack.c.l.b16 %v18
  %v67 = vunpack.c.h.b16 %v18
  %v68 = vpack.c.b16 %v62, %v60
  %v69 = vpack.c.b16 %v63, %v61
  %v70 = vpack.c.b16 %v66, %v64
  %v71 = vpack.c.b16 %v67, %v65
  %v108 = vunpack.c.l.b16 %v19
  %v109 = vunpack.c.l.b16 %v20
  %v110 = vunpack.c.l.b16 %v21
  %v111 = vunpack.c.l.b16 %v22
  %v112 = vunpack.c.l.b16 %v23
  %v113 = vunpack.c.l.b16 %v24
  %v114 = vunpack.c.l.b16 %v25
  %v115 = vunpack.c.l.b16 %v26
  %v116 = vunpack.c.l.b16 %v27
  %v117 = vunpack.c.l.b16 %v28
  %v118 = vunpack.c.l.b16 %v29
  %v119 = vunpack.c.l.b16 %v30
  %v120 = vunpack.c.l.b16 %v31
  %v121 = vunpack.c.l.b16 %v32
  %v122 = vunpack.c.l.b16 %v33
  %v123 = vunpack.c.l.b16 %v34
  %v124 = vunpack.c.l.b16 %v35
  %v125 = vunpack.c.l.b16 %v36
  %v126 = vunpack.c.l.b16 %v37
  %v127 = vunpack.c.l.b16 %v38
  %v128 = vunpack.c.l.b16 %v39
  %v129 = vunpack.c.l.b16 %v40
  %v130 = vunpack.c.l.b16 %v41
  %v131 = vunpack.c.l.b16 %v42
  %v132 = vunpack.c.l.b16 %v43
  %v133 = vunpack.c.l.b16 %v44
  %v134 = vunpack.c.l.b16 %v45
  %v135 = vunpack.c.l.b16 %v46
  %v136 = vunpack.c.l.b16 %v47
  %v137 = vunpack.c.l.b16 %v48
  %v138 = vunpack.c.l.b16 %v49
  %v139 = vunpack.c.l.b16 %v50
  %v140 = vpack.c.b16 %v109, %v108
  %v141 = vpack.c.b16 %v111, %v110
  %v142 = vpack.c.b16 %v113, %v112
  %v143 = vpack.c.b16 %v115, %v114
  %v144 = vpack.c.b16 %v117, %v116
  %v145 = vpack.c.b16 %v119, %v118
  %v146 = vpack.c.b16 %v121, %v120
  %v147 = vpack.c.b16 %v123, %v122
  %v148 = vpack.c.b16 %v125, %v124
  %v149 = vpack.c.b16 %v127, %v126
  %v150 = vpack.c.b16 %v129, %v128
  %v151 = vpack.c.b16 %v131, %v130
  %v152 = vpack.c.b16 %v133, %v132
  %v153 = vpack.c.b16 %v135, %v134
  %v154 = vpack.c.b16 %v137, %v136
  %v155 = vpack.c.b16 %v139, %v138
  %172 = vmatprep.subr.bf16.mxu0 0
  %173 = vmatpush1.bf16.msra.mxu0 %v140
  %174 = vmatprep.subr.bf16.mxu0 0
  %175 = vmatpush1.bf16.msra.mxu0 %v141
  %176 = vmatprep.subr.bf16.mxu0 0
  %177 = vmatpush1.bf16.msra.mxu0 %v142
  %178 = vmatprep.subr.bf16.mxu0 0
  %179 = vmatpush1.bf16.msra.mxu0 %v143
  %180 = vmatprep.subr.bf16.mxu0 0
  %181 = vmatpush1.bf16.msra.mxu0 %v144
  %182 = vmatprep.subr.bf16.mxu0 0
  %183 = vmatpush1.bf16.msra.mxu0 %v145
  %184 = vmatprep.subr.bf16.mxu0 0
  %185 = vmatpush1.bf16.msra.mxu0 %v146
  %186 = vmatprep.subr.bf16.mxu0 0
  %187 = vmatpush1.bf16.msra.mxu0 %v147
  %188 = vmatprep.subr.bf16.mxu0 0
  %189 = vmatpush1.bf16.msra.mxu0 %v148
  %190 = vmatprep.subr.bf16.mxu0 0
  %191 = vmatpush1.bf16.msra.mxu0 %v149
  %192 = vmatprep.subr.bf16.mxu0 0
  %193 = vmatpush1.bf16.msra.mxu0 %v150
  %194 = vmatprep.subr.bf16.mxu0 0
  %195 = vmatpush1.bf16.msra.mxu0 %v151
  %196 = vmatprep.subr.bf16.mxu0 0
  %197 = vmatpush1.bf16.msra.mxu0 %v152
  %198 = vmatprep.subr.bf16.mxu0 0
  %199 = vmatpush1.bf16.msra.mxu0 %v153
  %200 = vmatprep.subr.bf16.mxu0 0
  %201 = vmatpush1.bf16.msra.mxu0 %v154
  %202 = vmatprep.subr.bf16.mxu0 0
  %203 = vmatpush1.bf16.msra.mxu0 %v155
  %204 = vmatprep.mubr.bf16.mxu0 %v69
  %205 = vmatmul.mubr.bf16.gmra.mrb[0].mxu0 %v68
  %v206 = vpop.f32.mrb[0].mxu0
  %v207 = vadd.f32 %v55, %v206
  %v208 = vpop.f32.mrb[0].mxu0
  %v209 = vpop.f32.mrb[0].mxu0
  %v210 = vadd.f32 %v55, %v209
  %v211 = vpop.f32.mrb[0].mxu0
  %212 = vmatprep.mubr.bf16.mxu0 %v71
  %213 = vmatmul.mubr.bf16.gmra.mrb[0].mxu0 %v70
  %v214 = vpop.f32.mrb[0].mxu0
  %v215 = vadd.f32 %v55, %v214
  %v216 = vpop.f32.mrb[0].mxu0
  %v217 = vpop.f32.mrb[0].mxu0
  %v218 = vadd.f32 %v55, %v217
  %v219 = vpop.f32.mrb[0].mxu0
  %220 = vdwg.mxu0
  %vm221 = vcmp.ge.f32.partialorder %v207, 0.0
  %vm222 = vcmp.ge.f32.partialorder %v210, 0.0
  %vm223 = vcmp.ge.f32.partialorder %v215, 0.0
  %vm224 = vcmp.ge.f32.partialorder %v218, 0.0
  %v225 = vmul.f32 %v207, 0.2
  %v226 = vmul.f32 %v210, 0.2
  %v227 = vmul.f32 %v215, 0.2
  %v228 = vmul.f32 %v218, 0.2
  %v229 = vsel %vm221, %v207, %v225
  %v230 = vsel %vm222, %v210, %v226
  %v231 = vsel %vm223, %v215, %v227
  %v232 = vsel %vm224, %v218, %v228
  %v233 = vlaneseq
  %v234 = vshrl.u32 %v233, 7
  %v235 = vsub.s32 1, %v234
  %v236 = vrot.slane %v51, %v235
  %v237 = vmul.f32 %v229, %v236
  %v238 = vmul.f32 %v230, %v236
  %v239 = vmul.f32 %v231, %v236
  %v240 = vmul.f32 %v232, %v236
  %v241 = vlaneseq
  %v242 = vshrl.u32 %v241, 7
  %v243 = vsub.s32 2, %v242
  %v244 = vrot.slane %v51, %v243
  %v245 = vadd.f32 %v237, %v244
  %v246 = vadd.f32 %v238, %v244
  %v247 = vadd.f32 %v239, %v244
  %v248 = vadd.f32 %v240, %v244
  %v249 = vpack.c.bf16 %v246, %v245
  %v250 = vpack.c.bf16 %v248, %v247
  %v253 = vunpack.c.l.b16 %v249
  %v254 = vunpack.c.h.b16 %v249
  %v255 = vunpack.c.l.b16 %v250
  %v256 = vunpack.c.h.b16 %v250
  %v257 = vpack.c.b16 %v253, %v253
  %v258 = vpack.c.b16 %v254, %v254
  %v259 = vpack.c.b16 %v255, %v255
  %v260 = vpack.c.b16 %v256, %v256
  %vm265 = vcmask 257024
  %266 = vst.msk [vmem:[%s3] sm:$0xf] %vm265, %v257
  %267 = vst.msk [vmem:[%s3 + $0x4] sm:$0xf] %vm265, %v258
  %268 = vst.msk [vmem:[%s3 + $0x8] sm:$0xf] %vm265, %v259
  %269 = vst.msk [vmem:[%s3 + $0xc] sm:$0xf] %vm265, %v260
  // Predicated region
  $region14: #{vae1_forward.37} parent=0 // pred_check
    _
  $region15: #{vae1_forward.37} parent=0 // pred_check_branch
    %271 = sbr.rel (0) target = $region17
  $region16: #{vae1_forward.37} parent=0 // pred_region
    _
  $region17: #{vae1_forward.37} parent=0 // pred_fallthru
    _
  // Predicated region
  $region18: #{vae1_forward.37} parent=0 // pred_check
    _
  $region19: #{vae1_forward.37} parent=0 // pred_check_branch
    %273 = sbr.rel (0) target = $region21
  $region20: #{vae1_forward.37} parent=0 // pred_region
    _
  $region21: #{vae1_forward.37} parent=0 // pred_fallthru
    _

// kernel: vae1_forward.38
$region0: #{vae1_forward.38}
  #allocation0 [shape = 'u32[]', space=smem, size = 0x4, offset = 0x4, fixed_abs, tag = 'smem constant byte address 0x4 - core index']
  #allocation1 [shape = 'u32[144,128]{1,0:T(1,128)}', space=vmem, size = 0x12000, scoped, tag = 'internal scratch']
  %s0 = inlined_call_operand.vmem [shape: bf16[32,128], index: 0, kind: input, shape index: {}]
  %s1 = inlined_call_operand.vmem [shape: bf16[128,32], index: 1, kind: input, shape index: {}]
  %s2 = inlined_call_operand.vmem [shape: f32[3,32], index: 2, kind: input, shape index: {}]
  %s3 = inlined_call_operand.vmem [shape: bf16[32,32], index: 3, kind: output, shape index: {}]
  %s4 = sld [smem:[#allocation0]]
  $region22: #{vae1_forward.38} parent=0
    _
  %s6 = ssub.s32 1, %s4
  %s7 = scalar_select 0, %s6, %s4
  // Predicated region
  $region2: #{vae1_forward.38} parent=0 // pred_check
    _
  $region3: #{vae1_forward.38} parent=0 // pred_check_branch
    %9 = sbr.rel (0) target = $region5
  $region4: #{vae1_forward.38} parent=0 // pred_region
    _
  $region5: #{vae1_forward.38} parent=0 // pred_fallthru
    _
  // Predicated region
  $region6: #{vae1_forward.38} parent=0 // pred_check
    _
  $region7: #{vae1_forward.38} parent=0 // pred_check_branch
    %11 = sbr.rel (0) target = $region9
  $region8: #{vae1_forward.38} parent=0 // pred_region
    _
  $region9: #{vae1_forward.38} parent=0 // pred_fallthru
    _
  // Predicated region
  $region10: #{vae1_forward.38} parent=0 // pred_check
    _
  $region11: #{vae1_forward.38} parent=0 // pred_check_branch
    %13 = sbr.rel (0) target = $region13
  $region12: #{vae1_forward.38} parent=0 // pred_region
    _
  $region13: #{vae1_forward.38} parent=0 // pred_fallthru
    _
  %v15 = vld [vmem:[%s0] sm:$0xf]
  %v16 = vld [vmem:[%s0 + $0x4] sm:$0xf]
  %v17 = vld [vmem:[%s0 + $0x8] sm:$0xf]
  %v18 = vld [vmem:[%s0 + $0xc] sm:$0xf]
  %v19 = vld [vmem:[%s1] sm:$0xf]
  %v20 = vld [vmem:[%s1 + $0x4] sm:$0xf]
  %v21 = vld [vmem:[%s1 + $0x8] sm:$0xf]
  %v22 = vld [vmem:[%s1 + $0xc] sm:$0xf]
  %v23 = vld [vmem:[%s1 + $0x10] sm:$0xf]
  %v24 = vld [vmem:[%s1 + $0x14] sm:$0xf]
  %v25 = vld [vmem:[%s1 + $0x18] sm:$0xf]
  %v26 = vld [vmem:[%s1 + $0x1c] sm:$0xf]
  %v27 = vld [vmem:[%s1 + $0x20] sm:$0xf]
  %v28 = vld [vmem:[%s1 + $0x24] sm:$0xf]
  %v29 = vld [vmem:[%s1 + $0x28] sm:$0xf]
  %v30 = vld [vmem:[%s1 + $0x2c] sm:$0xf]
  %v31 = vld [vmem:[%s1 + $0x30] sm:$0xf]
  %v32 = vld [vmem:[%s1 + $0x34] sm:$0xf]
  %v33 = vld [vmem:[%s1 + $0x38] sm:$0xf]
  %v34 = vld [vmem:[%s1 + $0x3c] sm:$0xf]
  %v35 = vld [vmem:[%s2] sm:$0x7]
  %v36 = vlaneseq
  %v37 = vshrl.u32 %v36, 7
  %v38 = vsub.s32 0, %v37
  %v39 = vrot.slane %v35, %v38
  %v44 = vunpack.c.l.b16 %v15
  %v45 = vunpack.c.l.b16 %v16
  %v46 = vunpack.c.l.b16 %v17
  %v47 = vunpack.c.l.b16 %v18
  %v48 = vpack.c.b16 %v45, %v44
  %v49 = vpack.c.b16 %v47, %v46
  %v68 = vunpack.c.l.b16 %v19
  %v69 = vunpack.c.l.b16 %v20
  %v70 = vunpack.c.l.b16 %v21
  %v71 = vunpack.c.l.b16 %v22
  %v72 = vunpack.c.l.b16 %v23
  %v73 = vunpack.c.l.b16 %v24
  %v74 = vunpack.c.l.b16 %v25
  %v75 = vunpack.c.l.b16 %v26
  %v76 = vunpack.c.l.b16 %v27
  %v77 = vunpack.c.l.b16 %v28
  %v78 = vunpack.c.l.b16 %v29
  %v79 = vunpack.c.l.b16 %v30
  %v80 = vunpack.c.l.b16 %v31
  %v81 = vunpack.c.l.b16 %v32
  %v82 = vunpack.c.l.b16 %v33
  %v83 = vunpack.c.l.b16 %v34
  %v84 = vpack.c.b16 %v69, %v68
  %v85 = vpack.c.b16 %v71, %v70
  %v86 = vpack.c.b16 %v73, %v72
  %v87 = vpack.c.b16 %v75, %v74
  %v88 = vpack.c.b16 %v77, %v76
  %v89 = vpack.c.b16 %v79, %v78
  %v90 = vpack.c.b16 %v81, %v80
  %v91 = vpack.c.b16 %v83, %v82
  %100 = vmatprep.subr.bf16.mxu0 0
  %101 = vmatpush1.bf16.msra.mxu0 %v84
  %102 = vmatprep.subr.bf16.mxu0 0
  %103 = vmatpush1.bf16.msra.mxu0 %v85
  %104 = vmatprep.subr.bf16.mxu0 0
  %105 = vmatpush1.bf16.msra.mxu0 %v86
  %106 = vmatprep.subr.bf16.mxu0 0
  %107 = vmatpush1.bf16.msra.mxu0 %v87
  %108 = vmatprep.subr.bf16.mxu0 0
  %109 = vmatpush1.bf16.msra.mxu0 %v88
  %110 = vmatprep.subr.bf16.mxu0 0
  %111 = vmatpush1.bf16.msra.mxu0 %v89
  %112 = vmatprep.subr.bf16.mxu0 0
  %113 = vmatpush1.bf16.msra.mxu0 %v90
  %114 = vmatprep.subr.bf16.mxu0 0
  %115 = vmatpush1.bf16.msra.mxu0 %v91
  %116 = vmatprep.subr.bf16.mxu0 0
  %117 = vmatpush1.bf16.msra.mxu0 0
  %118 = vmatprep.subr.bf16.mxu0 0
  %119 = vmatpush1.bf16.msra.mxu0 0
  %120 = vmatprep.subr.bf16.mxu0 0
  %121 = vmatpush1.bf16.msra.mxu0 0
  %122 = vmatprep.subr.bf16.mxu0 0
  %123 = vmatpush1.bf16.msra.mxu0 0
  %124 = vmatprep.subr.bf16.mxu0 0
  %125 = vmatpush1.bf16.msra.mxu0 0
  %126 = vmatprep.subr.bf16.mxu0 0
  %127 = vmatpush1.bf16.msra.mxu0 0
  %128 = vmatprep.subr.bf16.mxu0 0
  %129 = vmatpush1.bf16.msra.mxu0 0
  %130 = vmatprep.subr.bf16.mxu0 0
  %131 = vmatpush1.bf16.msra.mxu0 0
  %132 = vmatprep.mubr.bf16.mxu0 0
  %133 = vmatmul.mubr.bf16.gmra.mrb[0].mxu0 %v48
  %v134 = vpop.f32.mrb[0].mxu0
  %v135 = vadd.f32 %v39, %v134
  %v136 = vpop.f32.mrb[0].mxu0
  %v137 = vpop.f32.mrb[0].mxu0
  %v138 = vadd.f32 %v39, %v137
  %v139 = vpop.f32.mrb[0].mxu0
  %140 = vmatprep.mubr.bf16.mxu0 0
  %141 = vmatmul.mubr.bf16.gmra.mrb[0].mxu0 %v49
  %v142 = vpop.f32.mrb[0].mxu0
  %v143 = vadd.f32 %v39, %v142
  %v144 = vpop.f32.mrb[0].mxu0
  %v145 = vpop.f32.mrb[0].mxu0
  %v146 = vadd.f32 %v39, %v145
  %v147 = vpop.f32.mrb[0].mxu0
  %148 = vdwg.mxu0
  %vm149 = vcmp.ge.f32.partialorder %v135, 0.0
  %vm150 = vcmp.ge.f32.partialorder %v138, 0.0
  %vm151 = vcmp.ge.f32.partialorder %v143, 0.0
  %vm152 = vcmp.ge.f32.partialorder %v146, 0.0
  %v153 = vmul.f32 %v135, 0.2
  %v154 = vmul.f32 %v138, 0.2
  %v155 = vmul.f32 %v143, 0.2
  %v156 = vmul.f32 %v146, 0.2
  %v157 = vsel %vm149, %v135, %v153
  %v158 = vsel %vm150, %v138, %v154
  %v159 = vsel %vm151, %v143, %v155
  %v160 = vsel %vm152, %v146, %v156
  %v161 = vlaneseq
  %v162 = vshrl.u32 %v161, 7
  %v163 = vsub.s32 1, %v162
  %v164 = vrot.slane %v35, %v163
  %v165 = vmul.f32 %v157, %v164
  %v166 = vmul.f32 %v158, %v164
  %v167 = vmul.f32 %v159, %v164
  %v168 = vmul.f32 %v160, %v164
  %v169 = vlaneseq
  %v170 = vshrl.u32 %v169, 7
  %v171 = vsub.s32 2, %v170
  %v172 = vrot.slane %v35, %v171
  %v173 = vadd.f32 %v165, %v172
  %v174 = vadd.f32 %v166, %v172
  %v175 = vadd.f32 %v167, %v172
  %v176 = vadd.f32 %v168, %v172
  %v177 = vpack.c.bf16 %v174, %v173
  %v178 = vpack.c.bf16 %v176, %v175
  %v181 = vunpack.c.l.b16 %v177
  %v182 = vunpack.c.h.b16 %v177
  %v183 = vunpack.c.l.b16 %v178
  %v184 = vunpack.c.h.b16 %v178
  %v185 = vpack.c.b16 %v181, %v181
  %v186 = vpack.c.b16 %v182, %v182
  %v187 = vpack.c.b16 %v183, %v183
  %v188 = vpack.c.b16 %v184, %v184
  %vm193 = vcmask 257024
  %194 = vst.msk [vmem:[%s3] sm:$0xf] %vm193, %v185
  %195 = vst.msk [vmem:[%s3 + $0x4] sm:$0xf] %vm193, %v186
  %196 = vst.msk [vmem:[%s3 + $0x8] sm:$0xf] %vm193, %v187
  %197 = vst.msk [vmem:[%s3 + $0xc] sm:$0xf] %vm193, %v188
  // Predicated region
  $region14: #{vae1_forward.38} parent=0 // pred_check
    _
  $region15: #{vae1_forward.38} parent=0 // pred_check_branch
    %199 = sbr.rel (0) target = $region17
  $region16: #{vae1_forward.38} parent=0 // pred_region
    _
  $region17: #{vae1_forward.38} parent=0 // pred_fallthru
    _
  // Predicated region
  $region18: #{vae1_forward.38} parent=0 // pred_check
    _
  $region19: #{vae1_forward.38} parent=0 // pred_check_branch
    %201 = sbr.rel (0) target = $region21
  $region20: #{vae1_forward.38} parent=0 // pred_region
    _
  $region21: #{vae1_forward.38} parent=0 // pred_fallthru
    _

// kernel: vae1_forward.42
$region0: #{vae1_forward.42}
  #allocation0 [shape = 'u32[]', space=smem, size = 0x4, offset = 0x4, fixed_abs, tag = 'smem constant byte address 0x4 - core index']
  #allocation1 [shape = 'u32[144,128]{1,0:T(1,128)}', space=vmem, size = 0x12000, scoped, tag = 'internal scratch']
  %s0 = inlined_call_operand.vmem [shape: bf16[128,288], index: 0, kind: input, shape index: {}]
  %s1 = inlined_call_operand.vmem [shape: bf16[288,16], index: 1, kind: input, shape index: {}]
  %s2 = inlined_call_operand.vmem [shape: f32[3,16], index: 2, kind: input, shape index: {}]
  %s3 = inlined_call_operand.vmem [shape: bf16[128,16], index: 3, kind: output, shape index: {}]
  %s4 = sld [smem:[#allocation0]]
  $region22: #{vae1_forward.42} parent=0
    _
  %s6 = ssub.s32 1, %s4
  %s7 = scalar_select 0, %s6, %s4
  // Predicated region
  $region2: #{vae1_forward.42} parent=0 // pred_check
    _
  $region3: #{vae1_forward.42} parent=0 // pred_check_branch
    %9 = sbr.rel (0) target = $region5
  $region4: #{vae1_forward.42} parent=0 // pred_region
    _
  $region5: #{vae1_forward.42} parent=0 // pred_fallthru
    _
  // Predicated region
  $region6: #{vae1_forward.42} parent=0 // pred_check
    _
  $region7: #{vae1_forward.42} parent=0 // pred_check_branch
    %11 = sbr.rel (0) target = $region9
  $region8: #{vae1_forward.42} parent=0 // pred_region
    _
  $region9: #{vae1_forward.42} parent=0 // pred_fallthru
    _
  // Predicated region
  $region10: #{vae1_forward.42} parent=0 // pred_check
    _
  $region11: #{vae1_forward.42} parent=0 // pred_check_branch
    %13 = sbr.rel (0) target = $region13
  $region12: #{vae1_forward.42} parent=0 // pred_region
    _
  $region13: #{vae1_forward.42} parent=0 // pred_fallthru
    _
  %v15 = vld [vmem:[%s0] sm:$0xff]
  %v16 = vld [vmem:[%s0 + $0x8] sm:$0xf]
  %v17 = vld [vmem:[%s0 + $0xc] sm:$0xff]
  %v18 = vld [vmem:[%s0 + $0x14] sm:$0xf]
  %v19 = vld [vmem:[%s0 + $0x18] sm:$0xff]
  %v20 = vld [vmem:[%s0 + $0x20] sm:$0xf]
  %v21 = vld [vmem:[%s0 + $0x24] sm:$0xff]
  %v22 = vld [vmem:[%s0 + $0x2c] sm:$0xf]
  %v23 = vld [vmem:[%s0 + $0x30] sm:$0xff]
  %v24 = vld [vmem:[%s0 + $0x38] sm:$0xf]
  %v25 = vld [vmem:[%s0 + $0x3c] sm:$0xff]
  %v26 = vld [vmem:[%s0 + $0x44] sm:$0xf]
  %v27 = vld [vmem:[%s0 + $0x48] sm:$0xff]
  %v28 = vld [vmem:[%s0 + $0x50] sm:$0xf]
  %v29 = vld [vmem:[%s0 + $0x54] sm:$0xff]
  %v30 = vld [vmem:[%s0 + $0x5c] sm:$0xf]
  %v31 = vld [vmem:[%s0 + $0x60] sm:$0xff]
  %v32 = vld [vmem:[%s0 + $0x68] sm:$0xf]
  %v33 = vld [vmem:[%s0 + $0x6c] sm:$0xff]
  %v34 = vld [vmem:[%s0 + $0x74] sm:$0xf]
  %v35 = vld [vmem:[%s0 + $0x78] sm:$0xff]
  %v36 = vld [vmem:[%s0 + $0x80] sm:$0xf]
  %v37 = vld [vmem:[%s0 + $0x84] sm:$0xff]
  %v38 = vld [vmem:[%s0 + $0x8c] sm:$0xf]
  %v39 = vld [vmem:[%s0 + $0x90] sm:$0xff]
  %v40 = vld [vmem:[%s0 + $0x98] sm:$0xf]
  %v41 = vld [vmem:[%s0 + $0x9c] sm:$0xff]
  %v42 = vld [vmem:[%s0 + $0xa4] sm:$0xf]
  %v43 = vld [vmem:[%s0 + $0xa8] sm:$0xff]
  %v44 = vld [vmem:[%s0 + $0xb0] sm:$0xf]
  %v45 = vld [vmem:[%s0 + $0xb4] sm:$0xff]
  %v46 = vld [vmem:[%s0 + $0xbc] sm:$0xf]
  %v47 = vld [vmem:[%s1] sm:$0xf]
  %v48 = vld [vmem:[%s1 + $0x4] sm:$0xf]
  %v49 = vld [vmem:[%s1 + $0x8] sm:$0xf]
  %v50 = vld [vmem:[%s1 + $0xc] sm:$0xf]
  %v51 = vld [vmem:[%s1 + $0x10] sm:$0xf]
  %v52 = vld [vmem:[%s1 + $0x14] sm:$0xf]
  %v53 = vld [vmem:[%s1 + $0x18] sm:$0xf]
  %v54 = vld [vmem:[%s1 + $0x1c] sm:$0xf]
  %v55 = vld [vmem:[%s1 + $0x20] sm:$0xf]
  %v56 = vld [vmem:[%s1 + $0x24] sm:$0xf]
  %v57 = vld [vmem:[%s1 + $0x28] sm:$0xf]
  %v58 = vld [vmem:[%s1 + $0x2c] sm:$0xf]
  %v59 = vld [vmem:[%s1 + $0x30] sm:$0xf]
  %v60 = vld [vmem:[%s1 + $0x34] sm:$0xf]
  %v61 = vld [vmem:[%s1 + $0x38] sm:$0xf]
  %v62 = vld [vmem:[%s1 + $0x3c] sm:$0xf]
  %v63 = vld [vmem:[%s1 + $0x40] sm:$0xf]
  %v64 = vld [vmem:[%s1 + $0x44] sm:$0xf]
  %v65 = vld [vmem:[%s1 + $0x48] sm:$0xf]
  %v66 = vld [vmem:[%s1 + $0x4c] sm:$0xf]
  %v67 = vld [vmem:[%s1 + $0x50] sm:$0xf]
  %v68 = vld [vmem:[%s1 + $0x54] sm:$0xf]
  %v69 = vld [vmem:[%s1 + $0x58] sm:$0xf]
  %v70 = vld [vmem:[%s1 + $0x5c] sm:$0xf]
  %v71 = vld [vmem:[%s1 + $0x60] sm:$0xf]
  %v72 = vld [vmem:[%s1 + $0x64] sm:$0xf]
  %v73 = vld [vmem:[%s1 + $0x68] sm:$0xf]
  %v74 = vld [vmem:[%s1 + $0x6c] sm:$0xf]
  %v75 = vld [vmem:[%s1 + $0x70] sm:$0xf]
  %v76 = vld [vmem:[%s1 + $0x74] sm:$0xf]
  %v77 = vld [vmem:[%s1 + $0x78] sm:$0xf]
  %v78 = vld [vmem:[%s1 + $0x7c] sm:$0xf]
  %v79 = vld [vmem:[%s1 + $0x80] sm:$0xf]
  %v80 = vld [vmem:[%s1 + $0x84] sm:$0xf]
  %v81 = vld [vmem:[%s1 + $0x88] sm:$0xf]
  %v82 = vld [vmem:[%s1 + $0x8c] sm:$0xf]
  %v83 = vld [vmem:[%s2] sm:$0x7]
  %v84 = vlaneseq
  %v85 = vshrl.u32 %v84, 7
  %v86 = vsub.s32 0, %v85
  %v87 = vrot.slane %v83, %v86
  %v120 = vunpack.c.l.b16 %v15
  %v121 = vunpack.c.h.b16 %v15
  %v122 = vunpack.c.l.b16 %v16
  %v123 = vunpack.c.l.b16 %v17
  %v124 = vunpack.c.h.b16 %v17
  %v125 = vunpack.c.l.b16 %v18
  %v126 = vunpack.c.l.b16 %v19
  %v127 = vunpack.c.h.b16 %v19
  %v128 = vunpack.c.l.b16 %v20
  %v129 = vunpack.c.l.b16 %v21
  %v130 = vunpack.c.h.b16 %v21
  %v131 = vunpack.c.l.b16 %v22
  %v132 = vunpack.c.l.b16 %v23
  %v133 = vunpack.c.h.b16 %v23
  %v134 = vunpack.c.l.b16 %v24
  %v135 = vunpack.c.l.b16 %v25
  %v136 = vunpack.c.h.b16 %v25
  %v137 = vunpack.c.l.b16 %v26
  %v138 = vunpack.c.l.b16 %v27
  %v139 = vunpack.c.h.b16 %v27
  %v140 = vunpack.c.l.b16 %v28
  %v141 = vunpack.c.l.b16 %v29
  %v142 = vunpack.c.h.b16 %v29
  %v143 = vunpack.c.l.b16 %v30
  %v144 = vunpack.c.l.b16 %v31
  %v145 = vunpack.c.h.b16 %v31
  %v146 = vunpack.c.l.b16 %v32
  %v147 = vunpack.c.l.b16 %v33
  %v148 = vunpack.c.h.b16 %v33
  %v149 = vunpack.c.l.b16 %v34
  %v150 = vunpack.c.l.b16 %v35
  %v151 = vunpack.c.h.b16 %v35
  %v152 = vunpack.c.l.b16 %v36
  %v153 = vunpack.c.l.b16 %v37
  %v154 = vunpack.c.h.b16 %v37
  %v155 = vunpack.c.l.b16 %v38
  %v156 = vunpack.c.l.b16 %v39
  %v157 = vunpack.c.h.b16 %v39
  %v158 = vunpack.c.l.b16 %v40
  %v159 = vunpack.c.l.b16 %v41
  %v160 = vunpack.c.h.b16 %v41
  %v161 = vunpack.c.l.b16 %v42
  %v162 = vunpack.c.l.b16 %v43
  %v163 = vunpack.c.h.b16 %v43
  %v164 = vunpack.c.l.b16 %v44
  %v165 = vunpack.c.l.b16 %v45
  %v166 = vunpack.c.h.b16 %v45
  %v167 = vunpack.c.l.b16 %v46
  %v168 = vpack.c.b16 %v123, %v120
  %v169 = vpack.c.b16 %v124, %v121
  %v170 = vpack.c.b16 %v125, %v122
  %v171 = vpack.c.b16 %v129, %v126
  %v172 = vpack.c.b16 %v130, %v127
  %v173 = vpack.c.b16 %v131, %v128
  %v174 = vpack.c.b16 %v135, %v132
  %v175 = vpack.c.b16 %v136, %v133
  %v176 = vpack.c.b16 %v137, %v134
  %v177 = vpack.c.b16 %v141, %v138
  %v178 = vpack.c.b16 %v142, %v139
  %v179 = vpack.c.b16 %v143, %v140
  %v180 = vpack.c.b16 %v147, %v144
  %v181 = vpack.c.b16 %v148, %v145
  %v182 = vpack.c.b16 %v149, %v146
  %v183 = vpack.c.b16 %v153, %v150
  %v184 = vpack.c.b16 %v154, %v151
  %v185 = vpack.c.b16 %v155, %v152
  %v186 = vpack.c.b16 %v159, %v156
  %v187 = vpack.c.b16 %v160, %v157
  %v188 = vpack.c.b16 %v161, %v158
  %v189 = vpack.c.b16 %v165, %v162
  %v190 = vpack.c.b16 %v166, %v163
  %v191 = vpack.c.b16 %v167, %v164
  %v244 = vunpack.c.l.b16 %v47
  %v245 = vunpack.c.l.b16 %v48
  %v246 = vunpack.c.l.b16 %v49
  %v247 = vunpack.c.l.b16 %v50
  %v248 = vunpack.c.l.b16 %v51
  %v249 = vunpack.c.l.b16 %v52
  %v250 = vunpack.c.l.b16 %v53
  %v251 = vunpack.c.l.b16 %v54
  %v252 = vunpack.c.l.b16 %v55
  %v253 = vunpack.c.l.b16 %v56
  %v254 = vunpack.c.l.b16 %v57
  %v255 = vunpack.c.l.b16 %v58
  %v256 = vunpack.c.l.b16 %v59
  %v257 = vunpack.c.l.b16 %v60
  %v258 = vunpack.c.l.b16 %v61
  %v259 = vunpack.c.l.b16 %v62
  %v260 = vunpack.c.l.b16 %v63
  %v261 = vunpack.c.l.b16 %v64
  %v262 = vunpack.c.l.b16 %v65
  %v263 = vunpack.c.l.b16 %v66
  %v264 = vunpack.c.l.b16 %v67
  %v265 = vunpack.c.l.b16 %v68
  %v266 = vunpack.c.l.b16 %v69
  %v267 = vunpack.c.l.b16 %v70
  %v268 = vunpack.c.l.b16 %v71
  %v269 = vunpack.c.l.b16 %v72
  %v270 = vunpack.c.l.b16 %v73
  %v271 = vunpack.c.l.b16 %v74
  %v272 = vunpack.c.l.b16 %v75
  %v273 = vunpack.c.l.b16 %v76
  %v274 = vunpack.c.l.b16 %v77
  %v275 = vunpack.c.l.b16 %v78
  %v276 = vunpack.c.l.b16 %v79
  %v277 = vunpack.c.l.b16 %v80
  %v278 = vunpack.c.l.b16 %v81
  %v279 = vunpack.c.l.b16 %v82
  %v280 = vpack.c.b16 %v245, %v244
  %v281 = vpack.c.b16 %v247, %v246
  %v282 = vpack.c.b16 %v249, %v248
  %v283 = vpack.c.b16 %v251, %v250
  %v284 = vpack.c.b16 %v253, %v252
  %v285 = vpack.c.b16 %v255, %v254
  %v286 = vpack.c.b16 %v257, %v256
  %v287 = vpack.c.b16 %v259, %v258
  %v288 = vpack.c.b16 %v261, %v260
  %v289 = vpack.c.b16 %v263, %v262
  %v290 = vpack.c.b16 %v265, %v264
  %v291 = vpack.c.b16 %v267, %v266
  %v292 = vpack.c.b16 %v269, %v268
  %v293 = vpack.c.b16 %v271, %v270
  %v294 = vpack.c.b16 %v273, %v272
  %v295 = vpack.c.b16 %v275, %v274
  %v296 = vpack.c.b16 %v277, %v276
  %v297 = vpack.c.b16 %v279, %v278
  %vm316 = vcmask 261120
  %v318 = vsel %vm316, %v170, 0
  %v321 = vsel %vm316, %v173, 0
  %v324 = vsel %vm316, %v176, 0
  %v327 = vsel %vm316, %v179, 0
  %v330 = vsel %vm316, %v182, 0
  %v333 = vsel %vm316, %v185, 0
  %v336 = vsel %vm316, %v188, 0
  %v339 = vsel %vm316, %v191, 0
  %341 = vmatprep.subr.bf16.mxu0 0
  %342 = vmatpush1.bf16.msra.mxu0 %v280
  %343 = vmatprep.subr.bf16.mxu0 0
  %344 = vmatpush1.bf16.msra.mxu0 %v281
  %345 = vmatprep.subr.bf16.mxu0 0
  %346 = vmatpush1.bf16.msra.mxu0 %v282
  %347 = vmatprep.subr.bf16.mxu0 0
  %348 = vmatpush1.bf16.msra.mxu0 %v283
  %349 = vmatprep.subr.bf16.mxu0 0
  %350 = vmatpush1.bf16.msra.mxu0 %v284
  %351 = vmatprep.subr.bf16.mxu0 0
  %352 = vmatpush1.bf16.msra.mxu0 %v285
  %353 = vmatprep.subr.bf16.mxu0 0
  %354 = vmatpush1.bf16.msra.mxu0 %v286
  %355 = vmatprep.subr.bf16.mxu0 0
  %356 = vmatpush1.bf16.msra.mxu0 %v287
  %357 = vmatprep.subr.bf16.mxu0 0
  %358 = vmatpush1.bf16.msra.mxu0 %v288
  %359 = vmatprep.subr.bf16.mxu0 0
  %360 = vmatpush1.bf16.msra.mxu0 %v289
  %361 = vmatprep.subr.bf16.mxu0 0
  %362 = vmatpush1.bf16.msra.mxu0 %v290
  %363 = vmatprep.subr.bf16.mxu0 0
  %364 = vmatpush1.bf16.msra.mxu0 %v291
  %365 = vmatprep.subr.bf16.mxu0 0
  %366 = vmatpush1.bf16.msra.mxu0 %v292
  %367 = vmatprep.subr.bf16.mxu0 0
  %368 = vmatpush1.bf16.msra.mxu0 %v293
  %369 = vmatprep.subr.bf16.mxu0 0
  %370 = vmatpush1.bf16.msra.mxu0 %v294
  %371 = vmatprep.subr.bf16.mxu0 0
  %372 = vmatpush1.bf16.msra.mxu0 %v295
  %373 = vmatprep.mubr.bf16.mxu0 %v169
  %374 = vmatmul.mubr.bf16.gmra.mrb[0].mxu0 %v168
  %v375 = vpop.f32.mrb[0].mxu0
  %v376 = vadd.f32 %v87, %v375
  %v377 = vpop.f32.mrb[0].mxu0
  %v378 = vpop.f32.mrb[0].mxu0
  %v379 = vadd.f32 %v87, %v378
  %v380 = vpop.f32.mrb[0].mxu0
  %381 = vmatprep.mubr.bf16.mxu0 %v172
  %382 = vmatmul.mubr.bf16.gmra.mrb[0].mxu0 %v171
  %v383 = vpop.f32.mrb[0].mxu0
  %v384 = vadd.f32 %v87, %v383
  %v385 = vpop.f32.mrb[0].mxu0
  %v386 = vpop.f32.mrb[0].mxu0
  %v387 = vadd.f32 %v87, %v386
  %v388 = vpop.f32.mrb[0].mxu0
  %389 = vmatprep.mubr.bf16.mxu0 %v175
  %390 = vmatmul.mubr.bf16.gmra.mrb[0].mxu0 %v174
  %v391 = vpop.f32.mrb[0].mxu0
  %v392 = vadd.f32 %v87, %v391
  %v393 = vpop.f32.mrb[0].mxu0
  %v394 = vpop.f32.mrb[0].mxu0
  %v395 = vadd.f32 %v87, %v394
  %v396 = vpop.f32.mrb[0].mxu0
  %397 = vmatprep.mubr.bf16.mxu0 %v178
  %398 = vmatmul.mubr.bf16.gmra.mrb[0].mxu0 %v177
  %v399 = vpop.f32.mrb[0].mxu0
  %v400 = vadd.f32 %v87, %v399
  %v401 = vpop.f32.mrb[0].mxu0
  %v402 = vpop.f32.mrb[0].mxu0
  %v403 = vadd.f32 %v87, %v402
  %v404 = vpop.f32.mrb[0].mxu0
  %405 = vmatprep.mubr.bf16.mxu0 %v181
  %406 = vmatmul.mubr.bf16.gmra.mrb[0].mxu0 %v180
  %v407 = vpop.f32.mrb[0].mxu0
  %v408 = vadd.f32 %v87, %v407
  %v409 = vpop.f32.mrb[0].mxu0
  %v410 = vpop.f32.mrb[0].mxu0
  %v411 = vadd.f32 %v87, %v410
  %v412 = vpop.f32.mrb[0].mxu0
  %413 = vmatprep.mubr.bf16.mxu0 %v184
  %414 = vmatmul.mubr.bf16.gmra.mrb[0].mxu0 %v183
  %v415 = vpop.f32.mrb[0].mxu0
  %v416 = vadd.f32 %v87, %v415
  %v417 = vpop.f32.mrb[0].mxu0
  %v418 = vpop.f32.mrb[0].mxu0
  %v419 = vadd.f32 %v87, %v418
  %v420 = vpop.f32.mrb[0].mxu0
  %421 = vmatprep.mubr.bf16.mxu0 %v187
  %422 = vmatmul.mubr.bf16.gmra.mrb[0].mxu0 %v186
  %v423 = vpop.f32.mrb[0].mxu0
  %v424 = vadd.f32 %v87, %v423
  %v425 = vpop.f32.mrb[0].mxu0
  %v426 = vpop.f32.mrb[0].mxu0
  %v427 = vadd.f32 %v87, %v426
  %v428 = vpop.f32.mrb[0].mxu0
  %429 = vmatprep.mubr.bf16.mxu0 %v190
  %430 = vmatmul.mubr.bf16.gmra.mrb[0].mxu0 %v189
  %v431 = vpop.f32.mrb[0].mxu0
  %v432 = vadd.f32 %v87, %v431
  %v433 = vpop.f32.mrb[0].mxu0
  %v434 = vpop.f32.mrb[0].mxu0
  %v435 = vadd.f32 %v87, %v434
  %v436 = vpop.f32.mrb[0].mxu0
  %437 = vdwg.mxu0
  %438 = vmatprep.subr.bf16.mxu0 0
  %439 = vmatpush1.bf16.msra.mxu0 %v296
  %440 = vmatprep.subr.bf16.mxu0 0
  %441 = vmatpush1.bf16.msra.mxu0 %v297
  %442 = vmatprep.subr.bf16.mxu0 0
  %443 = vmatpush1.bf16.msra.mxu0 0
  %444 = vmatprep.subr.bf16.mxu0 0
  %445 = vmatpush1.bf16.msra.mxu0 0
  %446 = vmatprep.subr.bf16.mxu0 0
  %447 = vmatpush1.bf16.msra.mxu0 0
  %448 = vmatprep.subr.bf16.mxu0 0
  %449 = vmatpush1.bf16.msra.mxu0 0
  %450 = vmatprep.subr.bf16.mxu0 0
  %451 = vmatpush1.bf16.msra.mxu0 0
  %452 = vmatprep.subr.bf16.mxu0 0
  %453 = vmatpush1.bf16.msra.mxu0 0
  %454 = vmatprep.subr.bf16.mxu0 0
  %455 = vmatpush1.bf16.msra.mxu0 0
  %456 = vmatprep.subr.bf16.mxu0 0
  %457 = vmatpush1.bf16.msra.mxu0 0
  %458 = vmatprep.subr.bf16.mxu0 0
  %459 = vmatpush1.bf16.msra.mxu0 0
  %460 = vmatprep.subr.bf16.mxu0 0
  %461 = vmatpush1.bf16.msra.mxu0 0
  %462 = vmatprep.subr.bf16.mxu0 0
  %463 = vmatpush1.bf16.msra.mxu0 0
  %464 = vmatprep.subr.bf16.mxu0 0
  %465 = vmatpush1.bf16.msra.mxu0 0
  %466 = vmatprep.subr.bf16.mxu0 0
  %467 = vmatpush1.bf16.msra.mxu0 0
  %468 = vmatprep.subr.bf16.mxu0 0
  %469 = vmatpush1.bf16.msra.mxu0 0
  %470 = vmatprep.mubr.bf16.mxu0 0
  %471 = vmatmul.mubr.bf16.gmra.mrb[0].mxu0 %v318
  %v472 = vpop.f32.mrb[0].mxu0
  %v473 = vadd.f32 %v376, %v472
  %v474 = vpop.f32.mrb[0].mxu0
  %v475 = vpop.f32.mrb[0].mxu0
  %v476 = vadd.f32 %v379, %v475
  %v477 = vpop.f32.mrb[0].mxu0
  %478 = vmatprep.mubr.bf16.mxu0 0
  %479 = vmatmul.mubr.bf16.gmra.mrb[0].mxu0 %v321
  %v480 = vpop.f32.mrb[0].mxu0
  %v481 = vadd.f32 %v384, %v480
  %v482 = vpop.f32.mrb[0].mxu0
  %v483 = vpop.f32.mrb[0].mxu0
  %v484 = vadd.f32 %v387, %v483
  %v485 = vpop.f32.mrb[0].mxu0
  %486 = vmatprep.mubr.bf16.mxu0 0
  %487 = vmatmul.mubr.bf16.gmra.mrb[0].mxu0 %v324
  %v488 = vpop.f32.mrb[0].mxu0
  %v489 = vadd.f32 %v392, %v488
  %v490 = vpop.f32.mrb[0].mxu0
  %v491 = vpop.f32.mrb[0].mxu0
  %v492 = vadd.f32 %v395, %v491
  %v493 = vpop.f32.mrb[0].mxu0
  %494 = vmatprep.mubr.bf16.mxu0 0
  %495 = vmatmul.mubr.bf16.gmra.mrb[0].mxu0 %v327
  %v496 = vpop.f32.mrb[0].mxu0
  %v497 = vadd.f32 %v400, %v496
  %v498 = vpop.f32.mrb[0].mxu0
  %v499 = vpop.f32.mrb[0].mxu0
  %v500 = vadd.f32 %v403, %v499
  %v501 = vpop.f32.mrb[0].mxu0
  %502 = vmatprep.mubr.bf16.mxu0 0
  %503 = vmatmul.mubr.bf16.gmra.mrb[0].mxu0 %v330
  %v504 = vpop.f32.mrb[0].mxu0
  %v505 = vadd.f32 %v408, %v504
  %v506 = vpop.f32.mrb[0].mxu0
  %v507 = vpop.f32.mrb[0].mxu0
  %v508 = vadd.f32 %v411, %v507
  %v509 = vpop.f32.mrb[0].mxu0
  %510 = vmatprep.mubr.bf16.mxu0 0
  %511 = vmatmul.mubr.bf16.gmra.mrb[0].mxu0 %v333
  %v512 = vpop.f32.mrb[0].mxu0
  %v513 = vadd.f32 %v416, %v512
  %v514 = vpop.f32.mrb[0].mxu0
  %v515 = vpop.f32.mrb[0].mxu0
  %v516 = vadd.f32 %v419, %v515
  %v517 = vpop.f32.mrb[0].mxu0
  %518 = vmatprep.mubr.bf16.mxu0 0
  %519 = vmatmul.mubr.bf16.gmra.mrb[0].mxu0 %v336
  %v520 = vpop.f32.mrb[0].mxu0
  %v521 = vadd.f32 %v424, %v520
  %v522 = vpop.f32.mrb[0].mxu0
  %v523 = vpop.f32.mrb[0].mxu0
  %v524 = vadd.f32 %v427, %v523
  %v525 = vpop.f32.mrb[0].mxu0
  %526 = vmatprep.mubr.bf16.mxu0 0
  %527 = vmatmul.mubr.bf16.gmra.mrb[0].mxu0 %v339
  %v528 = vpop.f32.mrb[0].mxu0
  %v529 = vadd.f32 %v432, %v528
  %v530 = vpop.f32.mrb[0].mxu0
  %v531 = vpop.f32.mrb[0].mxu0
  %v532 = vadd.f32 %v435, %v531
  %v533 = vpop.f32.mrb[0].mxu0
  %534 = vdwg.mxu0
  %vm535 = vcmp.ge.f32.partialorder %v473, 0.0
  %vm536 = vcmp.ge.f32.partialorder %v476, 0.0
  %vm537 = vcmp.ge.f32.partialorder %v481, 0.0
  %vm538 = vcmp.ge.f32.partialorder %v484, 0.0
  %vm539 = vcmp.ge.f32.partialorder %v489, 0.0
  %vm540 = vcmp.ge.f32.partialorder %v492, 0.0
  %vm541 = vcmp.ge.f32.partialorder %v497, 0.0
  %vm542 = vcmp.ge.f32.partialorder %v500, 0.0
  %vm543 = vcmp.ge.f32.partialorder %v505, 0.0
  %vm544 = vcmp.ge.f32.partialorder %v508, 0.0
  %vm545 = vcmp.ge.f32.partialorder %v513, 0.0
  %vm546 = vcmp.ge.f32.partialorder %v516, 0.0
  %vm547 = vcmp.ge.f32.partialorder %v521, 0.0
  %vm548 = vcmp.ge.f32.partialorder %v524, 0.0
  %vm549 = vcmp.ge.f32.partialorder %v529, 0.0
  %vm550 = vcmp.ge.f32.partialorder %v532, 0.0
  %v551 = vmul.f32 %v473, 0.2
  %v552 = vmul.f32 %v476, 0.2
  %v553 = vmul.f32 %v481, 0.2
  %v554 = vmul.f32 %v484, 0.2
  %v555 = vmul.f32 %v489, 0.2
  %v556 = vmul.f32 %v492, 0.2
  %v557 = vmul.f32 %v497, 0.2
  %v558 = vmul.f32 %v500, 0.2
  %v559 = vmul.f32 %v505, 0.2
  %v560 = vmul.f32 %v508, 0.2
  %v561 = vmul.f32 %v513, 0.2
  %v562 = vmul.f32 %v516, 0.2
  %v563 = vmul.f32 %v521, 0.2
  %v564 = vmul.f32 %v524, 0.2
  %v565 = vmul.f32 %v529, 0.2
  %v566 = vmul.f32 %v532, 0.2
  %v567 = vsel %vm535, %v473, %v551
  %v568 = vsel %vm536, %v476, %v552
  %v569 = vsel %vm537, %v481, %v553
  %v570 = vsel %vm538, %v484, %v554
  %v571 = vsel %vm539, %v489, %v555
  %v572 = vsel %vm540, %v492, %v556
  %v573 = vsel %vm541, %v497, %v557
  %v574 = vsel %vm542, %v500, %v558
  %v575 = vsel %vm543, %v505, %v559
  %v576 = vsel %vm544, %v508, %v560
  %v577 = vsel %vm545, %v513, %v561
  %v578 = vsel %vm546, %v516, %v562
  %v579 = vsel %vm547, %v521, %v563
  %v580 = vsel %vm548, %v524, %v564
  %v581 = vsel %vm549, %v529, %v565
  %v582 = vsel %vm550, %v532, %v566
  %v583 = vlaneseq
  %v584 = vshrl.u32 %v583, 7
  %v585 = vsub.s32 1, %v584
  %v586 = vrot.slane %v83, %v585
  %v587 = vmul.f32 %v567, %v586
  %v588 = vmul.f32 %v568, %v586
  %v589 = vmul.f32 %v569, %v586
  %v590 = vmul.f32 %v570, %v586
  %v591 = vmul.f32 %v571, %v586
  %v592 = vmul.f32 %v572, %v586
  %v593 = vmul.f32 %v573, %v586
  %v594 = vmul.f32 %v574, %v586
  %v595 = vmul.f32 %v575, %v586
  %v596 = vmul.f32 %v576, %v586
  %v597 = vmul.f32 %v577, %v586
  %v598 = vmul.f32 %v578, %v586
  %v599 = vmul.f32 %v579, %v586
  %v600 = vmul.f32 %v580, %v586
  %v601 = vmul.f32 %v581, %v586
  %v602 = vmul.f32 %v582, %v586
  %v603 = vlaneseq
  %v604 = vshrl.u32 %v603, 7
  %v605 = vsub.s32 2, %v604
  %v606 = vrot.slane %v83, %v605
  %v607 = vadd.f32 %v587, %v606
  %v608 = vadd.f32 %v588, %v606
  %v609 = vadd.f32 %v589, %v606
  %v610 = vadd.f32 %v590, %v606
  %v611 = vadd.f32 %v591, %v606
  %v612 = vadd.f32 %v592, %v606
  %v613 = vadd.f32 %v593, %v606
  %v614 = vadd.f32 %v594, %v606
  %v615 = vadd.f32 %v595, %v606
  %v616 = vadd.f32 %v596, %v606
  %v617 = vadd.f32 %v597, %v606
  %v618 = vadd.f32 %v598, %v606
  %v619 = vadd.f32 %v599, %v606
  %v620 = vadd.f32 %v600, %v606
  %v621 = vadd.f32 %v601, %v606
  %v622 = vadd.f32 %v602, %v606
  %v623 = vpack.c.bf16 %v608, %v607
  %v624 = vpack.c.bf16 %v610, %v609
  %v625 = vpack.c.bf16 %v612, %v611
  %v626 = vpack.c.bf16 %v614, %v613
  %v627 = vpack.c.bf16 %v616, %v615
  %v628 = vpack.c.bf16 %v618, %v617
  %v629 = vpack.c.bf16 %v620, %v619
  %v630 = vpack.c.bf16 %v622, %v621
  %v639 = vunpack.c.l.b16 %v623
  %v640 = vunpack.c.h.b16 %v623
  %v641 = vunpack.c.l.b16 %v624
  %v642 = vunpack.c.h.b16 %v624
  %v643 = vunpack.c.l.b16 %v625
  %v644 = vunpack.c.h.b16 %v625
  %v645 = vunpack.c.l.b16 %v626
  %v646 = vunpack.c.h.b16 %v626
  %v647 = vunpack.c.l.b16 %v627
  %v648 = vunpack.c.h.b16 %v627
  %v649 = vunpack.c.l.b16 %v628
  %v650 = vunpack.c.h.b16 %v628
  %v651 = vunpack.c.l.b16 %v629
  %v652 = vunpack.c.h.b16 %v629
  %v653 = vunpack.c.l.b16 %v630
  %v654 = vunpack.c.h.b16 %v630
  %v655 = vpack.c.b16 %v639, %v639
  %v656 = vpack.c.b16 %v640, %v640
  %v657 = vpack.c.b16 %v641, %v641
  %v658 = vpack.c.b16 %v642, %v642
  %v659 = vpack.c.b16 %v643, %v643
  %v660 = vpack.c.b16 %v644, %v644
  %v661 = vpack.c.b16 %v645, %v645
  %v662 = vpack.c.b16 %v646, %v646
  %v663 = vpack.c.b16 %v647, %v647
  %v664 = vpack.c.b16 %v648, %v648
  %v665 = vpack.c.b16 %v649, %v649
  %v666 = vpack.c.b16 %v650, %v650
  %v667 = vpack.c.b16 %v651, %v651
  %v668 = vpack.c.b16 %v652, %v652
  %v669 = vpack.c.b16 %v653, %v653
  %v670 = vpack.c.b16 %v654, %v654
  %vm687 = vcmask 125952
  %688 = vst.msk [vmem:[%s3] sm:$0xf] %vm687, %v655
  %689 = vst.msk [vmem:[%s3 + $0x4] sm:$0xf] %vm687, %v656
  %690 = vst.msk [vmem:[%s3 + $0x8] sm:$0xf] %vm687, %v657
  %691 = vst.msk [vmem:[%s3 + $0xc] sm:$0xf] %vm687, %v658
  %692 = vst.msk [vmem:[%s3 + $0x10] sm:$0xf] %vm687, %v659
  %693 = vst.msk [vmem:[%s3 + $0x14] sm:$0xf] %vm687, %v660
  %694 = vst.msk [vmem:[%s3 + $0x18] sm:$0xf] %vm687, %v661
  %695 = vst.msk [vmem:[%s3 + $0x1c] sm:$0xf] %vm687, %v662
  %696 = vst.msk [vmem:[%s3 + $0x20] sm:$0xf] %vm687, %v663
  %697 = vst.msk [vmem:[%s3 + $0x24] sm:$0xf] %vm687, %v664
  %698 = vst.msk [vmem:[%s3 + $0x28] sm:$0xf] %vm687, %v665
  %699 = vst.msk [vmem:[%s3 + $0x2c] sm:$0xf] %vm687, %v666
  %700 = vst.msk [vmem:[%s3 + $0x30] sm:$0xf] %vm687, %v667
  %701 = vst.msk [vmem:[%s3 + $0x34] sm:$0xf] %vm687, %v668
  %702 = vst.msk [vmem:[%s3 + $0x38] sm:$0xf] %vm687, %v669
  %703 = vst.msk [vmem:[%s3 + $0x3c] sm:$0xf] %vm687, %v670
  // Predicated region
  $region14: #{vae1_forward.42} parent=0 // pred_check
    _
  $region15: #{vae1_forward.42} parent=0 // pred_check_branch
    %705 = sbr.rel (0) target = $region17
  $region16: #{vae1_forward.42} parent=0 // pred_region
    _
  $region17: #{vae1_forward.42} parent=0 // pred_fallthru
    _
  // Predicated region
  $region18: #{vae1_forward.42} parent=0 // pred_check
    _
  $region19: #{vae1_forward.42} parent=0 // pred_check_branch
    %707 = sbr.rel (0) target = $region21
  $region20: #{vae1_forward.42} parent=0 // pred_region
    _
  $region21: #{vae1_forward.42} parent=0 // pred_fallthru
    _

// kernel: vae1_forward.43
$region0: #{vae1_forward.43}
  #allocation0 [shape = 'u32[]', space=smem, size = 0x4, offset = 0x4, fixed_abs, tag = 'smem constant byte address 0x4 - core index']
  #allocation1 [shape = 'u32[144,128]{1,0:T(1,128)}', space=vmem, size = 0x12000, scoped, tag = 'internal scratch']
  %s0 = inlined_call_operand.vmem [shape: bf16[128,64], index: 0, kind: input, shape index: {}]
  %s1 = inlined_call_operand.vmem [shape: bf16[64,16], index: 1, kind: input, shape index: {}]
  %s2 = inlined_call_operand.vmem [shape: f32[3,16], index: 2, kind: input, shape index: {}]
  %s3 = inlined_call_operand.vmem [shape: bf16[128,16], index: 3, kind: output, shape index: {}]
  %s4 = sld [smem:[#allocation0]]
  $region22: #{vae1_forward.43} parent=0
    _
  %s6 = ssub.s32 1, %s4
  %s7 = scalar_select 0, %s6, %s4
  // Predicated region
  $region2: #{vae1_forward.43} parent=0 // pred_check
    _
  $region3: #{vae1_forward.43} parent=0 // pred_check_branch
    %9 = sbr.rel (0) target = $region5
  $region4: #{vae1_forward.43} parent=0 // pred_region
    _
  $region5: #{vae1_forward.43} parent=0 // pred_fallthru
    _
  // Predicated region
  $region6: #{vae1_forward.43} parent=0 // pred_check
    _
  $region7: #{vae1_forward.43} parent=0 // pred_check_branch
    %11 = sbr.rel (0) target = $region9
  $region8: #{vae1_forward.43} parent=0 // pred_region
    _
  $region9: #{vae1_forward.43} parent=0 // pred_fallthru
    _
  // Predicated region
  $region10: #{vae1_forward.43} parent=0 // pred_check
    _
  $region11: #{vae1_forward.43} parent=0 // pred_check_branch
    %13 = sbr.rel (0) target = $region13
  $region12: #{vae1_forward.43} parent=0 // pred_region
    _
  $region13: #{vae1_forward.43} parent=0 // pred_fallthru
    _
  %v15 = vld [vmem:[%s0] sm:$0xf]
  %v16 = vld [vmem:[%s0 + $0x4] sm:$0xf]
  %v17 = vld [vmem:[%s0 + $0x8] sm:$0xf]
  %v18 = vld [vmem:[%s0 + $0xc] sm:$0xf]
  %v19 = vld [vmem:[%s0 + $0x10] sm:$0xf]
  %v20 = vld [vmem:[%s0 + $0x14] sm:$0xf]
  %v21 = vld [vmem:[%s0 + $0x18] sm:$0xf]
  %v22 = vld [vmem:[%s0 + $0x1c] sm:$0xf]
  %v23 = vld [vmem:[%s0 + $0x20] sm:$0xf]
  %v24 = vld [vmem:[%s0 + $0x24] sm:$0xf]
  %v25 = vld [vmem:[%s0 + $0x28] sm:$0xf]
  %v26 = vld [vmem:[%s0 + $0x2c] sm:$0xf]
  %v27 = vld [vmem:[%s0 + $0x30] sm:$0xf]
  %v28 = vld [vmem:[%s0 + $0x34] sm:$0xf]
  %v29 = vld [vmem:[%s0 + $0x38] sm:$0xf]
  %v30 = vld [vmem:[%s0 + $0x3c] sm:$0xf]
  %v31 = vld [vmem:[%s1] sm:$0xf]
  %v32 = vld [vmem:[%s1 + $0x4] sm:$0xf]
  %v33 = vld [vmem:[%s1 + $0x8] sm:$0xf]
  %v34 = vld [vmem:[%s1 + $0xc] sm:$0xf]
  %v35 = vld [vmem:[%s1 + $0x10] sm:$0xf]
  %v36 = vld [vmem:[%s1 + $0x14] sm:$0xf]
  %v37 = vld [vmem:[%s1 + $0x18] sm:$0xf]
  %v38 = vld [vmem:[%s1 + $0x1c] sm:$0xf]
  %v39 = vld [vmem:[%s2] sm:$0x7]
  %v40 = vlaneseq
  %v41 = vshrl.u32 %v40, 7
  %v42 = vsub.s32 0, %v41
  %v43 = vrot.slane %v39, %v42
  %v60 = vunpack.c.l.b16 %v15
  %v61 = vunpack.c.l.b16 %v16
  %v62 = vunpack.c.l.b16 %v17
  %v63 = vunpack.c.l.b16 %v18
  %v64 = vunpack.c.l.b16 %v19
  %v65 = vunpack.c.l.b16 %v20
  %v66 = vunpack.c.l.b16 %v21
  %v67 = vunpack.c.l.b16 %v22
  %v68 = vunpack.c.l.b16 %v23
  %v69 = vunpack.c.l.b16 %v24
  %v70 = vunpack.c.l.b16 %v25
  %v71 = vunpack.c.l.b16 %v26
  %v72 = vunpack.c.l.b16 %v27
  %v73 = vunpack.c.l.b16 %v28
  %v74 = vunpack.c.l.b16 %v29
  %v75 = vunpack.c.l.b16 %v30
  %v76 = vpack.c.b16 %v61, %v60
  %v77 = vpack.c.b16 %v63, %v62
  %v78 = vpack.c.b16 %v65, %v64
  %v79 = vpack.c.b16 %v67, %v66
  %v80 = vpack.c.b16 %v69, %v68
  %v81 = vpack.c.b16 %v71, %v70
  %v82 = vpack.c.b16 %v73, %v72
  %v83 = vpack.c.b16 %v75, %v74
  %v92 = vunpack.c.l.b16 %v31
  %v93 = vunpack.c.l.b16 %v32
  %v94 = vunpack.c.l.b16 %v33
  %v95 = vunpack.c.l.b16 %v34
  %v96 = vunpack.c.l.b16 %v35
  %v97 = vunpack.c.l.b16 %v36
  %v98 = vunpack.c.l.b16 %v37
  %v99 = vunpack.c.l.b16 %v38
  %v100 = vpack.c.b16 %v93, %v92
  %v101 = vpack.c.b16 %v95, %v94
  %v102 = vpack.c.b16 %v97, %v96
  %v103 = vpack.c.b16 %v99, %v98
  %vm108 = vcmask 523264
  %v110 = vsel %vm108, %v76, 0
  %v113 = vsel %vm108, %v77, 0
  %v116 = vsel %vm108, %v78, 0
  %v119 = vsel %vm108, %v79, 0
  %v122 = vsel %vm108, %v80, 0
  %v125 = vsel %vm108, %v81, 0
  %v128 = vsel %vm108, %v82, 0
  %v131 = vsel %vm108, %v83, 0
  %133 = vmatprep.subr.bf16.mxu0 0
  %134 = vmatpush1.bf16.msra.mxu0 %v100
  %135 = vmatprep.subr.bf16.mxu0 0
  %136 = vmatpush1.bf16.msra.mxu0 %v101
  %137 = vmatprep.subr.bf16.mxu0 0
  %138 = vmatpush1.bf16.msra.mxu0 %v102
  %139 = vmatprep.subr.bf16.mxu0 0
  %140 = vmatpush1.bf16.msra.mxu0 %v103
  %141 = vmatprep.subr.bf16.mxu0 0
  %142 = vmatpush1.bf16.msra.mxu0 0
  %143 = vmatprep.subr.bf16.mxu0 0
  %144 = vmatpush1.bf16.msra.mxu0 0
  %145 = vmatprep.subr.bf16.mxu0 0
  %146 = vmatpush1.bf16.msra.mxu0 0
  %147 = vmatprep.subr.bf16.mxu0 0
  %148 = vmatpush1.bf16.msra.mxu0 0
  %149 = vmatprep.subr.bf16.mxu0 0
  %150 = vmatpush1.bf16.msra.mxu0 0
  %151 = vmatprep.subr.bf16.mxu0 0
  %152 = vmatpush1.bf16.msra.mxu0 0
  %153 = vmatprep.subr.bf16.mxu0 0
  %154 = vmatpush1.bf16.msra.mxu0 0
  %155 = vmatprep.subr.bf16.mxu0 0
  %156 = vmatpush1.bf16.msra.mxu0 0
  %157 = vmatprep.subr.bf16.mxu0 0
  %158 = vmatpush1.bf16.msra.mxu0 0
  %159 = vmatprep.subr.bf16.mxu0 0
  %160 = vmatpush1.bf16.msra.mxu0 0
  %161 = vmatprep.subr.bf16.mxu0 0
  %162 = vmatpush1.bf16.msra.mxu0 0
  %163 = vmatprep.subr.bf16.mxu0 0
  %164 = vmatpush1.bf16.msra.mxu0 0
  %165 = vmatprep.mubr.bf16.mxu0 0
  %166 = vmatmul.mubr.bf16.gmra.mrb[0].mxu0 %v110
  %v167 = vpop.f32.mrb[0].mxu0
  %v168 = vadd.f32 %v43, %v167
  %v169 = vpop.f32.mrb[0].mxu0
  %v170 = vpop.f32.mrb[0].mxu0
  %v171 = vadd.f32 %v43, %v170
  %v172 = vpop.f32.mrb[0].mxu0
  %173 = vmatprep.mubr.bf16.mxu0 0
  %174 = vmatmul.mubr.bf16.gmra.mrb[0].mxu0 %v113
  %v175 = vpop.f32.mrb[0].mxu0
  %v176 = vadd.f32 %v43, %v175
  %v177 = vpop.f32.mrb[0].mxu0
  %v178 = vpop.f32.mrb[0].mxu0
  %v179 = vadd.f32 %v43, %v178
  %v180 = vpop.f32.mrb[0].mxu0
  %181 = vmatprep.mubr.bf16.mxu0 0
  %182 = vmatmul.mubr.bf16.gmra.mrb[0].mxu0 %v116
  %v183 = vpop.f32.mrb[0].mxu0
  %v184 = vadd.f32 %v43, %v183
  %v185 = vpop.f32.mrb[0].mxu0
  %v186 = vpop.f32.mrb[0].mxu0
  %v187 = vadd.f32 %v43, %v186
  %v188 = vpop.f32.mrb[0].mxu0
  %189 = vmatprep.mubr.bf16.mxu0 0
  %190 = vmatmul.mubr.bf16.gmra.mrb[0].mxu0 %v119
  %v191 = vpop.f32.mrb[0].mxu0
  %v192 = vadd.f32 %v43, %v191
  %v193 = vpop.f32.mrb[0].mxu0
  %v194 = vpop.f32.mrb[0].mxu0
  %v195 = vadd.f32 %v43, %v194
  %v196 = vpop.f32.mrb[0].mxu0
  %197 = vmatprep.mubr.bf16.mxu0 0
  %198 = vmatmul.mubr.bf16.gmra.mrb[0].mxu0 %v122
  %v199 = vpop.f32.mrb[0].mxu0
  %v200 = vadd.f32 %v43, %v199
  %v201 = vpop.f32.mrb[0].mxu0
  %v202 = vpop.f32.mrb[0].mxu0
  %v203 = vadd.f32 %v43, %v202
  %v204 = vpop.f32.mrb[0].mxu0
  %205 = vmatprep.mubr.bf16.mxu0 0
  %206 = vmatmul.mubr.bf16.gmra.mrb[0].mxu0 %v125
  %v207 = vpop.f32.mrb[0].mxu0
  %v208 = vadd.f32 %v43, %v207
  %v209 = vpop.f32.mrb[0].mxu0
  %v210 = vpop.f32.mrb[0].mxu0
  %v211 = vadd.f32 %v43, %v210
  %v212 = vpop.f32.mrb[0].mxu0
  %213 = vmatprep.mubr.bf16.mxu0 0
  %214 = vmatmul.mubr.bf16.gmra.mrb[0].mxu0 %v128
  %v215 = vpop.f32.mrb[0].mxu0
  %v216 = vadd.f32 %v43, %v215
  %v217 = vpop.f32.mrb[0].mxu0
  %v218 = vpop.f32.mrb[0].mxu0
  %v219 = vadd.f32 %v43, %v218
  %v220 = vpop.f32.mrb[0].mxu0
  %221 = vmatprep.mubr.bf16.mxu0 0
  %222 = vmatmul.mubr.bf16.gmra.mrb[0].mxu0 %v131
  %v223 = vpop.f32.mrb[0].mxu0
  %v224 = vadd.f32 %v43, %v223
  %v225 = vpop.f32.mrb[0].mxu0
  %v226 = vpop.f32.mrb[0].mxu0
  %v227 = vadd.f32 %v43, %v226
  %v228 = vpop.f32.mrb[0].mxu0
  %229 = vdwg.mxu0
  %vm230 = vcmp.ge.f32.partialorder %v168, 0.0
  %vm231 = vcmp.ge.f32.partialorder %v171, 0.0
  %vm232 = vcmp.ge.f32.partialorder %v176, 0.0
  %vm233 = vcmp.ge.f32.partialorder %v179, 0.0
  %vm234 = vcmp.ge.f32.partialorder %v184, 0.0
  %vm235 = vcmp.ge.f32.partialorder %v187, 0.0
  %vm236 = vcmp.ge.f32.partialorder %v192, 0.0
  %vm237 = vcmp.ge.f32.partialorder %v195, 0.0
  %vm238 = vcmp.ge.f32.partialorder %v200, 0.0
  %vm239 = vcmp.ge.f32.partialorder %v203, 0.0
  %vm240 = vcmp.ge.f32.partialorder %v208, 0.0
  %vm241 = vcmp.ge.f32.partialorder %v211, 0.0
  %vm242 = vcmp.ge.f32.partialorder %v216, 0.0
  %vm243 = vcmp.ge.f32.partialorder %v219, 0.0
  %vm244 = vcmp.ge.f32.partialorder %v224, 0.0
  %vm245 = vcmp.ge.f32.partialorder %v227, 0.0
  %v246 = vmul.f32 %v168, 0.2
  %v247 = vmul.f32 %v171, 0.2
  %v248 = vmul.f32 %v176, 0.2
  %v249 = vmul.f32 %v179, 0.2
  %v250 = vmul.f32 %v184, 0.2
  %v251 = vmul.f32 %v187, 0.2
  %v252 = vmul.f32 %v192, 0.2
  %v253 = vmul.f32 %v195, 0.2
  %v254 = vmul.f32 %v200, 0.2
  %v255 = vmul.f32 %v203, 0.2
  %v256 = vmul.f32 %v208, 0.2
  %v257 = vmul.f32 %v211, 0.2
  %v258 = vmul.f32 %v216, 0.2
  %v259 = vmul.f32 %v219, 0.2
  %v260 = vmul.f32 %v224, 0.2
  %v261 = vmul.f32 %v227, 0.2
  %v262 = vsel %vm230, %v168, %v246
  %v263 = vsel %vm231, %v171, %v247
  %v264 = vsel %vm232, %v176, %v248
  %v265 = vsel %vm233, %v179, %v249
  %v266 = vsel %vm234, %v184, %v250
  %v267 = vsel %vm235, %v187, %v251
  %v268 = vsel %vm236, %v192, %v252
  %v269 = vsel %vm237, %v195, %v253
  %v270 = vsel %vm238, %v200, %v254
  %v271 = vsel %vm239, %v203, %v255
  %v272 = vsel %vm240, %v208, %v256
  %v273 = vsel %vm241, %v211, %v257
  %v274 = vsel %vm242, %v216, %v258
  %v275 = vsel %vm243, %v219, %v259
  %v276 = vsel %vm244, %v224, %v260
  %v277 = vsel %vm245, %v227, %v261
  %v278 = vlaneseq
  %v279 = vshrl.u32 %v278, 7
  %v280 = vsub.s32 1, %v279
  %v281 = vrot.slane %v39, %v280
  %v282 = vmul.f32 %v262, %v281
  %v283 = vmul.f32 %v263, %v281
  %v284 = vmul.f32 %v264, %v281
  %v285 = vmul.f32 %v265, %v281
  %v286 = vmul.f32 %v266, %v281
  %v287 = vmul.f32 %v267, %v281
  %v288 = vmul.f32 %v268, %v281
  %v289 = vmul.f32 %v269, %v281
  %v290 = vmul.f32 %v270, %v281
  %v291 = vmul.f32 %v271, %v281
  %v292 = vmul.f32 %v272, %v281
  %v293 = vmul.f32 %v273, %v281
  %v294 = vmul.f32 %v274, %v281
  %v295 = vmul.f32 %v275, %v281
  %v296 = vmul.f32 %v276, %v281
  %v297 = vmul.f32 %v277, %v281
  %v298 = vlaneseq
  %v299 = vshrl.u32 %v298, 7
  %v300 = vsub.s32 2, %v299
  %v301 = vrot.slane %v39, %v300
  %v302 = vadd.f32 %v282, %v301
  %v303 = vadd.f32 %v283, %v301
  %v304 = vadd.f32 %v284, %v301
  %v305 = vadd.f32 %v285, %v301
  %v306 = vadd.f32 %v286, %v301
  %v307 = vadd.f32 %v287, %v301
  %v308 = vadd.f32 %v288, %v301
  %v309 = vadd.f32 %v289, %v301
  %v310 = vadd.f32 %v290, %v301
  %v311 = vadd.f32 %v291, %v301
  %v312 = vadd.f32 %v292, %v301
  %v313 = vadd.f32 %v293, %v301
  %v314 = vadd.f32 %v294, %v301
  %v315 = vadd.f32 %v295, %v301
  %v316 = vadd.f32 %v296, %v301
  %v317 = vadd.f32 %v297, %v301
  %v318 = vpack.c.bf16 %v303, %v302
  %v319 = vpack.c.bf16 %v305, %v304
  %v320 = vpack.c.bf16 %v307, %v306
  %v321 = vpack.c.bf16 %v309, %v308
  %v322 = vpack.c.bf16 %v311, %v310
  %v323 = vpack.c.bf16 %v313, %v312
  %v324 = vpack.c.bf16 %v315, %v314
  %v325 = vpack.c.bf16 %v317, %v316
  %v334 = vunpack.c.l.b16 %v318
  %v335 = vunpack.c.h.b16 %v318
  %v336 = vunpack.c.l.b16 %v319
  %v337 = vunpack.c.h.b16 %v319
  %v338 = vunpack.c.l.b16 %v320
  %v339 = vunpack.c.h.b16 %v320
  %v340 = vunpack.c.l.b16 %v321
  %v341 = vunpack.c.h.b16 %v321
  %v342 = vunpack.c.l.b16 %v322
  %v343 = vunpack.c.h.b16 %v322
  %v344 = vunpack.c.l.b16 %v323
  %v345 = vunpack.c.h.b16 %v323
  %v346 = vunpack.c.l.b16 %v324
  %v347 = vunpack.c.h.b16 %v324
  %v348 = vunpack.c.l.b16 %v325
  %v349 = vunpack.c.h.b16 %v325
  %v350 = vpack.c.b16 %v334, %v334
  %v351 = vpack.c.b16 %v335, %v335
  %v352 = vpack.c.b16 %v336, %v336
  %v353 = vpack.c.b16 %v337, %v337
  %v354 = vpack.c.b16 %v338, %v338
  %v355 = vpack.c.b16 %v339, %v339
  %v356 = vpack.c.b16 %v340, %v340
  %v357 = vpack.c.b16 %v341, %v341
  %v358 = vpack.c.b16 %v342, %v342
  %v359 = vpack.c.b16 %v343, %v343
  %v360 = vpack.c.b16 %v344, %v344
  %v361 = vpack.c.b16 %v345, %v345
  %v362 = vpack.c.b16 %v346, %v346
  %v363 = vpack.c.b16 %v347, %v347
  %v364 = vpack.c.b16 %v348, %v348
  %v365 = vpack.c.b16 %v349, %v349
  %vm382 = vcmask 125952
  %383 = vst.msk [vmem:[%s3] sm:$0xf] %vm382, %v350
  %384 = vst.msk [vmem:[%s3 + $0x4] sm:$0xf] %vm382, %v351
  %385 = vst.msk [vmem:[%s3 + $0x8] sm:$0xf] %vm382, %v352
  %386 = vst.msk [vmem:[%s3 + $0xc] sm:$0xf] %vm382, %v353
  %387 = vst.msk [vmem:[%s3 + $0x10] sm:$0xf] %vm382, %v354
  %388 = vst.msk [vmem:[%s3 + $0x14] sm:$0xf] %vm382, %v355
  %389 = vst.msk [vmem:[%s3 + $0x18] sm:$0xf] %vm382, %v356
  %390 = vst.msk [vmem:[%s3 + $0x1c] sm:$0xf] %vm382, %v357
  %391 = vst.msk [vmem:[%s3 + $0x20] sm:$0xf] %vm382, %v358
  %392 = vst.msk [vmem:[%s3 + $0x24] sm:$0xf] %vm382, %v359
  %393 = vst.msk [vmem:[%s3 + $0x28] sm:$0xf] %vm382, %v360
  %394 = vst.msk [vmem:[%s3 + $0x2c] sm:$0xf] %vm382, %v361
  %395 = vst.msk [vmem:[%s3 + $0x30] sm:$0xf] %vm382, %v362
  %396 = vst.msk [vmem:[%s3 + $0x34] sm:$0xf] %vm382, %v363
  %397 = vst.msk [vmem:[%s3 + $0x38] sm:$0xf] %vm382, %v364
  %398 = vst.msk [vmem:[%s3 + $0x3c] sm:$0xf] %vm382, %v365
  // Predicated region
  $region14: #{vae1_forward.43} parent=0 // pred_check
    _
  $region15: #{vae1_forward.43} parent=0 // pred_check_branch
    %400 = sbr.rel (0) target = $region17
  $region16: #{vae1_forward.43} parent=0 // pred_region
    _
  $region17: #{vae1_forward.43} parent=0 // pred_fallthru
    _
  // Predicated region
  $region18: #{vae1_forward.43} parent=0 // pred_check
    _
  $region19: #{vae1_forward.43} parent=0 // pred_check_branch
    %402 = sbr.rel (0) target = $region21
  $region20: #{vae1_forward.43} parent=0 // pred_region
    _
  $region21: #{vae1_forward.43} parent=0 // pred_fallthru
    _

// kernel: vae1_forward.47
$region0: #{vae1_forward.47}
  #allocation0 [shape = 'u32[]', space=smem, size = 0x4, offset = 0x4, fixed_abs, tag = 'smem constant byte address 0x4 - core index']
  #allocation1 [shape = 'u32[144,128]{1,0:T(1,128)}', space=vmem, size = 0x12000, scoped, tag = 'internal scratch']
  %s0 = inlined_call_operand.vmem [shape: bf16[512,64], index: 0, kind: input, shape index: {}]
  %s1 = inlined_call_operand.vmem [shape: bf16[64,8], index: 1, kind: input, shape index: {}]
  %s2 = inlined_call_operand.vmem [shape: f32[3,8], index: 2, kind: input, shape index: {}]
  %s3 = inlined_call_operand.vmem [shape: bf16[512,8], index: 3, kind: output, shape index: {}]
  %s4 = sld [smem:[#allocation0]]
  $region22: #{vae1_forward.47} parent=0
    _
  %s6 = ssub.s32 1, %s4
  %s7 = scalar_select 0, %s6, %s4
  // Predicated region
  $region2: #{vae1_forward.47} parent=0 // pred_check
    _
  $region3: #{vae1_forward.47} parent=0 // pred_check_branch
    %9 = sbr.rel (0) target = $region5
  $region4: #{vae1_forward.47} parent=0 // pred_region
    _
  $region5: #{vae1_forward.47} parent=0 // pred_fallthru
    _
  // Predicated region
  $region6: #{vae1_forward.47} parent=0 // pred_check
    _
  $region7: #{vae1_forward.47} parent=0 // pred_check_branch
    %11 = sbr.rel (0) target = $region9
  $region8: #{vae1_forward.47} parent=0 // pred_region
    _
  $region9: #{vae1_forward.47} parent=0 // pred_fallthru
    _
  // Predicated region
  $region10: #{vae1_forward.47} parent=0 // pred_check
    _
  $region11: #{vae1_forward.47} parent=0 // pred_check_branch
    %13 = sbr.rel (0) target = $region13
  $region12: #{vae1_forward.47} parent=0 // pred_region
    _
  $region13: #{vae1_forward.47} parent=0 // pred_fallthru
    _
  %v15 = vld [vmem:[%s0] sm:$0xf]
  %v16 = vld [vmem:[%s0 + $0x4] sm:$0xf]
  %v17 = vld [vmem:[%s0 + $0x8] sm:$0xf]
  %v18 = vld [vmem:[%s0 + $0xc] sm:$0xf]
  %v19 = vld [vmem:[%s0 + $0x10] sm:$0xf]
  %v20 = vld [vmem:[%s0 + $0x14] sm:$0xf]
  %v21 = vld [vmem:[%s0 + $0x18] sm:$0xf]
  %v22 = vld [vmem:[%s0 + $0x1c] sm:$0xf]
  %v23 = vld [vmem:[%s0 + $0x20] sm:$0xf]
  %v24 = vld [vmem:[%s0 + $0x24] sm:$0xf]
  %v25 = vld [vmem:[%s0 + $0x28] sm:$0xf]
  %v26 = vld [vmem:[%s0 + $0x2c] sm:$0xf]
  %v27 = vld [vmem:[%s0 + $0x30] sm:$0xf]
  %v28 = vld [vmem:[%s0 + $0x34] sm:$0xf]
  %v29 = vld [vmem:[%s0 + $0x38] sm:$0xf]
  %v30 = vld [vmem:[%s0 + $0x3c] sm:$0xf]
  %v31 = vld [vmem:[%s0 + $0x40] sm:$0xf]
  %v32 = vld [vmem:[%s0 + $0x44] sm:$0xf]
  %v33 = vld [vmem:[%s0 + $0x48] sm:$0xf]
  %v34 = vld [vmem:[%s0 + $0x4c] sm:$0xf]
  %v35 = vld [vmem:[%s0 + $0x50] sm:$0xf]
  %v36 = vld [vmem:[%s0 + $0x54] sm:$0xf]
  %v37 = vld [vmem:[%s0 + $0x58] sm:$0xf]
  %v38 = vld [vmem:[%s0 + $0x5c] sm:$0xf]
  %v39 = vld [vmem:[%s0 + $0x60] sm:$0xf]
  %v40 = vld [vmem:[%s0 + $0x64] sm:$0xf]
  %v41 = vld [vmem:[%s0 + $0x68] sm:$0xf]
  %v42 = vld [vmem:[%s0 + $0x6c] sm:$0xf]
  %v43 = vld [vmem:[%s0 + $0x70] sm:$0xf]
  %v44 = vld [vmem:[%s0 + $0x74] sm:$0xf]
  %v45 = vld [vmem:[%s0 + $0x78] sm:$0xf]
  %v46 = vld [vmem:[%s0 + $0x7c] sm:$0xf]
  %v47 = vld [vmem:[%s0 + $0x80] sm:$0xf]
  %v48 = vld [vmem:[%s0 + $0x84] sm:$0xf]
  %v49 = vld [vmem:[%s0 + $0x88] sm:$0xf]
  %v50 = vld [vmem:[%s0 + $0x8c] sm:$0xf]
  %v51 = vld [vmem:[%s0 + $0x90] sm:$0xf]
  %v52 = vld [vmem:[%s0 + $0x94] sm:$0xf]
  %v53 = vld [vmem:[%s0 + $0x98] sm:$0xf]
  %v54 = vld [vmem:[%s0 + $0x9c] sm:$0xf]
  %v55 = vld [vmem:[%s0 + $0xa0] sm:$0xf]
  %v56 = vld [vmem:[%s0 + $0xa4] sm:$0xf]
  %v57 = vld [vmem:[%s0 + $0xa8] sm:$0xf]
  %v58 = vld [vmem:[%s0 + $0xac] sm:$0xf]
  %v59 = vld [vmem:[%s0 + $0xb0] sm:$0xf]
  %v60 = vld [vmem:[%s0 + $0xb4] sm:$0xf]
  %v61 = vld [vmem:[%s0 + $0xb8] sm:$0xf]
  %v62 = vld [vmem:[%s0 + $0xbc] sm:$0xf]
  %v63 = vld [vmem:[%s0 + $0xc0] sm:$0xf]
  %v64 = vld [vmem:[%s0 + $0xc4] sm:$0xf]
  %v65 = vld [vmem:[%s0 + $0xc8] sm:$0xf]
  %v66 = vld [vmem:[%s0 + $0xcc] sm:$0xf]
  %v67 = vld [vmem:[%s0 + $0xd0] sm:$0xf]
  %v68 = vld [vmem:[%s0 + $0xd4] sm:$0xf]
  %v69 = vld [vmem:[%s0 + $0xd8] sm:$0xf]
  %v70 = vld [vmem:[%s0 + $0xdc] sm:$0xf]
  %v71 = vld [vmem:[%s0 + $0xe0] sm:$0xf]
  %v72 = vld [vmem:[%s0 + $0xe4] sm:$0xf]
  %v73 = vld [vmem:[%s0 + $0xe8] sm:$0xf]
  %v74 = vld [vmem:[%s0 + $0xec] sm:$0xf]
  %v75 = vld [vmem:[%s0 + $0xf0] sm:$0xf]
  %v76 = vld [vmem:[%s0 + $0xf4] sm:$0xf]
  %v77 = vld [vmem:[%s0 + $0xf8] sm:$0xf]
  %v78 = vld [vmem:[%s0 + $0xfc] sm:$0xf]
  %v79 = vld [vmem:[%s1] sm:$0xf]
  %v80 = vld [vmem:[%s1 + $0x4] sm:$0xf]
  %v81 = vld [vmem:[%s1 + $0x8] sm:$0xf]
  %v82 = vld [vmem:[%s1 + $0xc] sm:$0xf]
  %v83 = vld [vmem:[%s1 + $0x10] sm:$0xf]
  %v84 = vld [vmem:[%s1 + $0x14] sm:$0xf]
  %v85 = vld [vmem:[%s1 + $0x18] sm:$0xf]
  %v86 = vld [vmem:[%s1 + $0x1c] sm:$0xf]
  %v87 = vld [vmem:[%s2] sm:$0x7]
  %v88 = vlaneseq
  %v89 = vshrl.u32 %v88, 7
  %v90 = vsub.s32 0, %v89
  %v91 = vrot.slane %v87, %v90
  %v156 = vunpack.c.l.b16 %v15
  %v157 = vunpack.c.l.b16 %v16
  %v158 = vunpack.c.l.b16 %v17
  %v159 = vunpack.c.l.b16 %v18
  %v160 = vunpack.c.l.b16 %v19
  %v161 = vunpack.c.l.b16 %v20
  %v162 = vunpack.c.l.b16 %v21
  %v163 = vunpack.c.l.b16 %v22
  %v164 = vunpack.c.l.b16 %v23
  %v165 = vunpack.c.l.b16 %v24
  %v166 = vunpack.c.l.b16 %v25
  %v167 = vunpack.c.l.b16 %v26
  %v168 = vunpack.c.l.b16 %v27
  %v169 = vunpack.c.l.b16 %v28
  %v170 = vunpack.c.l.b16 %v29
  %v171 = vunpack.c.l.b16 %v30
  %v172 = vunpack.c.l.b16 %v31
  %v173 = vunpack.c.l.b16 %v32
  %v174 = vunpack.c.l.b16 %v33
  %v175 = vunpack.c.l.b16 %v34
  %v176 = vunpack.c.l.b16 %v35
  %v177 = vunpack.c.l.b16 %v36
  %v178 = vunpack.c.l.b16 %v37
  %v179 = vunpack.c.l.b16 %v38
  %v180 = vunpack.c.l.b16 %v39
  %v181 = vunpack.c.l.b16 %v40
  %v182 = vunpack.c.l.b16 %v41
  %v183 = vunpack.c.l.b16 %v42
  %v184 = vunpack.c.l.b16 %v43
  %v185 = vunpack.c.l.b16 %v44
  %v186 = vunpack.c.l.b16 %v45
  %v187 = vunpack.c.l.b16 %v46
  %v188 = vunpack.c.l.b16 %v47
  %v189 = vunpack.c.l.b16 %v48
  %v190 = vunpack.c.l.b16 %v49
  %v191 = vunpack.c.l.b16 %v50
  %v192 = vunpack.c.l.b16 %v51
  %v193 = vunpack.c.l.b16 %v52
  %v194 = vunpack.c.l.b16 %v53
  %v195 = vunpack.c.l.b16 %v54
  %v196 = vunpack.c.l.b16 %v55
  %v197 = vunpack.c.l.b16 %v56
  %v198 = vunpack.c.l.b16 %v57
  %v199 = vunpack.c.l.b16 %v58
  %v200 = vunpack.c.l.b16 %v59
  %v201 = vunpack.c.l.b16 %v60
  %v202 = vunpack.c.l.b16 %v61
  %v203 = vunpack.c.l.b16 %v62
  %v204 = vunpack.c.l.b16 %v63
  %v205 = vunpack.c.l.b16 %v64
  %v206 = vunpack.c.l.b16 %v65
  %v207 = vunpack.c.l.b16 %v66
  %v208 = vunpack.c.l.b16 %v67
  %v209 = vunpack.c.l.b16 %v68
  %v210 = vunpack.c.l.b16 %v69
  %v211 = vunpack.c.l.b16 %v70
  %v212 = vunpack.c.l.b16 %v71
  %v213 = vunpack.c.l.b16 %v72
  %v214 = vunpack.c.l.b16 %v73
  %v215 = vunpack.c.l.b16 %v74
  %v216 = vunpack.c.l.b16 %v75
  %v217 = vunpack.c.l.b16 %v76
  %v218 = vunpack.c.l.b16 %v77
  %v219 = vunpack.c.l.b16 %v78
  %v220 = vpack.c.b16 %v157, %v156
  %v221 = vpack.c.b16 %v159, %v158
  %v222 = vpack.c.b16 %v161, %v160
  %v223 = vpack.c.b16 %v163, %v162
  %v224 = vpack.c.b16 %v165, %v164
  %v225 = vpack.c.b16 %v167, %v166
  %v226 = vpack.c.b16 %v169, %v168
  %v227 = vpack.c.b16 %v171, %v170
  %v228 = vpack.c.b16 %v173, %v172
  %v229 = vpack.c.b16 %v175, %v174
  %v230 = vpack.c.b16 %v177, %v176
  %v231 = vpack.c.b16 %v179, %v178
  %v232 = vpack.c.b16 %v181, %v180
  %v233 = vpack.c.b16 %v183, %v182
  %v234 = vpack.c.b16 %v185, %v184
  %v235 = vpack.c.b16 %v187, %v186
  %v236 = vpack.c.b16 %v189, %v188
  %v237 = vpack.c.b16 %v191, %v190
  %v238 = vpack.c.b16 %v193, %v192
  %v239 = vpack.c.b16 %v195, %v194
  %v240 = vpack.c.b16 %v197, %v196
  %v241 = vpack.c.b16 %v199, %v198
  %v242 = vpack.c.b16 %v201, %v200
  %v243 = vpack.c.b16 %v203, %v202
  %v244 = vpack.c.b16 %v205, %v204
  %v245 = vpack.c.b16 %v207, %v206
  %v246 = vpack.c.b16 %v209, %v208
  %v247 = vpack.c.b16 %v211, %v210
  %v248 = vpack.c.b16 %v213, %v212
  %v249 = vpack.c.b16 %v215, %v214
  %v250 = vpack.c.b16 %v217, %v216
  %v251 = vpack.c.b16 %v219, %v218
  %v260 = vunpack.c.l.b16 %v79
  %v261 = vunpack.c.l.b16 %v80
  %v262 = vunpack.c.l.b16 %v81
  %v263 = vunpack.c.l.b16 %v82
  %v264 = vunpack.c.l.b16 %v83
  %v265 = vunpack.c.l.b16 %v84
  %v266 = vunpack.c.l.b16 %v85
  %v267 = vunpack.c.l.b16 %v86
  %v268 = vpack.c.b16 %v261, %v260
  %v269 = vpack.c.b16 %v263, %v262
  %v270 = vpack.c.b16 %v265, %v264
  %v271 = vpack.c.b16 %v267, %v266
  %vm276 = vcmask 523264
  %v278 = vsel %vm276, %v220, 0
  %v281 = vsel %vm276, %v221, 0
  %v284 = vsel %vm276, %v222, 0
  %v287 = vsel %vm276, %v223, 0
  %v290 = vsel %vm276, %v224, 0
  %v293 = vsel %vm276, %v225, 0
  %v296 = vsel %vm276, %v226, 0
  %v299 = vsel %vm276, %v227, 0
  %v302 = vsel %vm276, %v228, 0
  %v305 = vsel %vm276, %v229, 0
  %v308 = vsel %vm276, %v230, 0
  %v311 = vsel %vm276, %v231, 0
  %v314 = vsel %vm276, %v232, 0
  %v317 = vsel %vm276, %v233, 0
  %v320 = vsel %vm276, %v234, 0
  %v323 = vsel %vm276, %v235, 0
  %v326 = vsel %vm276, %v236, 0
  %v329 = vsel %vm276, %v237, 0
  %v332 = vsel %vm276, %v238, 0
  %v335 = vsel %vm276, %v239, 0
  %v338 = vsel %vm276, %v240, 0
  %v341 = vsel %vm276, %v241, 0
  %v344 = vsel %vm276, %v242, 0
  %v347 = vsel %vm276, %v243, 0
  %v350 = vsel %vm276, %v244, 0
  %v353 = vsel %vm276, %v245, 0
  %v356 = vsel %vm276, %v246, 0
  %v359 = vsel %vm276, %v247, 0
  %v362 = vsel %vm276, %v248, 0
  %v365 = vsel %vm276, %v249, 0
  %v368 = vsel %vm276, %v250, 0
  %v371 = vsel %vm276, %v251, 0
  %373 = vmatprep.subr.bf16.mxu0 0
  %374 = vmatpush1.bf16.msra.mxu0 %v268
  %375 = vmatprep.subr.bf16.mxu0 0
  %376 = vmatpush1.bf16.msra.mxu0 %v269
  %377 = vmatprep.subr.bf16.mxu0 0
  %378 = vmatpush1.bf16.msra.mxu0 %v270
  %379 = vmatprep.subr.bf16.mxu0 0
  %380 = vmatpush1.bf16.msra.mxu0 %v271
  %381 = vmatprep.subr.bf16.mxu0 0
  %382 = vmatpush1.bf16.msra.mxu0 0
  %383 = vmatprep.subr.bf16.mxu0 0
  %384 = vmatpush1.bf16.msra.mxu0 0
  %385 = vmatprep.subr.bf16.mxu0 0
  %386 = vmatpush1.bf16.msra.mxu0 0
  %387 = vmatprep.subr.bf16.mxu0 0
  %388 = vmatpush1.bf16.msra.mxu0 0
  %389 = vmatprep.subr.bf16.mxu0 0
  %390 = vmatpush1.bf16.msra.mxu0 0
  %391 = vmatprep.subr.bf16.mxu0 0
  %392 = vmatpush1.bf16.msra.mxu0 0
  %393 = vmatprep.subr.bf16.mxu0 0
  %394 = vmatpush1.bf16.msra.mxu0 0
  %395 = vmatprep.subr.bf16.mxu0 0
  %396 = vmatpush1.bf16.msra.mxu0 0
  %397 = vmatprep.subr.bf16.mxu0 0
  %398 = vmatpush1.bf16.msra.mxu0 0
  %399 = vmatprep.subr.bf16.mxu0 0
  %400 = vmatpush1.bf16.msra.mxu0 0
  %401 = vmatprep.subr.bf16.mxu0 0
  %402 = vmatpush1.bf16.msra.mxu0 0
  %403 = vmatprep.subr.bf16.mxu0 0
  %404 = vmatpush1.bf16.msra.mxu0 0
  %405 = vmatprep.mubr.bf16.mxu0 0
  %406 = vmatmul.mubr.bf16.gmra.mrb[0].mxu0 %v278
  %v407 = vpop.f32.mrb[0].mxu0
  %v408 = vadd.f32 %v91, %v407
  %v409 = vpop.f32.mrb[0].mxu0
  %v410 = vpop.f32.mrb[0].mxu0
  %v411 = vadd.f32 %v91, %v410
  %v412 = vpop.f32.mrb[0].mxu0
  %413 = vmatprep.mubr.bf16.mxu0 0
  %414 = vmatmul.mubr.bf16.gmra.mrb[0].mxu0 %v281
  %v415 = vpop.f32.mrb[0].mxu0
  %v416 = vadd.f32 %v91, %v415
  %v417 = vpop.f32.mrb[0].mxu0
  %v418 = vpop.f32.mrb[0].mxu0
  %v419 = vadd.f32 %v91, %v418
  %v420 = vpop.f32.mrb[0].mxu0
  %421 = vmatprep.mubr.bf16.mxu0 0
  %422 = vmatmul.mubr.bf16.gmra.mrb[0].mxu0 %v284
  %v423 = vpop.f32.mrb[0].mxu0
  %v424 = vadd.f32 %v91, %v423
  %v425 = vpop.f32.mrb[0].mxu0
  %v426 = vpop.f32.mrb[0].mxu0
  %v427 = vadd.f32 %v91, %v426
  %v428 = vpop.f32.mrb[0].mxu0
  %429 = vmatprep.mubr.bf16.mxu0 0
  %430 = vmatmul.mubr.bf16.gmra.mrb[0].mxu0 %v287
  %v431 = vpop.f32.mrb[0].mxu0
  %v432 = vadd.f32 %v91, %v431
  %v433 = vpop.f32.mrb[0].mxu0
  %v434 = vpop.f32.mrb[0].mxu0
  %v435 = vadd.f32 %v91, %v434
  %v436 = vpop.f32.mrb[0].mxu0
  %437 = vmatprep.mubr.bf16.mxu0 0
  %438 = vmatmul.mubr.bf16.gmra.mrb[0].mxu0 %v290
  %v439 = vpop.f32.mrb[0].mxu0
  %v440 = vadd.f32 %v91, %v439
  %v441 = vpop.f32.mrb[0].mxu0
  %v442 = vpop.f32.mrb[0].mxu0
  %v443 = vadd.f32 %v91, %v442
  %v444 = vpop.f32.mrb[0].mxu0
  %445 = vmatprep.mubr.bf16.mxu0 0
  %446 = vmatmul.mubr.bf16.gmra.mrb[0].mxu0 %v293
  %v447 = vpop.f32.mrb[0].mxu0
  %v448 = vadd.f32 %v91, %v447
  %v449 = vpop.f32.mrb[0].mxu0
  %v450 = vpop.f32.mrb[0].mxu0
  %v451 = vadd.f32 %v91, %v450
  %v452 = vpop.f32.mrb[0].mxu0
  %453 = vmatprep.mubr.bf16.mxu0 0
  %454 = vmatmul.mubr.bf16.gmra.mrb[0].mxu0 %v296
  %v455 = vpop.f32.mrb[0].mxu0
  %v456 = vadd.f32 %v91, %v455
  %v457 = vpop.f32.mrb[0].mxu0
  %v458 = vpop.f32.mrb[0].mxu0
  %v459 = vadd.f32 %v91, %v458
  %v460 = vpop.f32.mrb[0].mxu0
  %461 = vmatprep.mubr.bf16.mxu0 0
  %462 = vmatmul.mubr.bf16.gmra.mrb[0].mxu0 %v299
  %v463 = vpop.f32.mrb[0].mxu0
  %v464 = vadd.f32 %v91, %v463
  %v465 = vpop.f32.mrb[0].mxu0
  %v466 = vpop.f32.mrb[0].mxu0
  %v467 = vadd.f32 %v91, %v466
  %v468 = vpop.f32.mrb[0].mxu0
  %469 = vmatprep.mubr.bf16.mxu0 0
  %470 = vmatmul.mubr.bf16.gmra.mrb[0].mxu0 %v302
  %v471 = vpop.f32.mrb[0].mxu0
  %v472 = vadd.f32 %v91, %v471
  %v473 = vpop.f32.mrb[0].mxu0
  %v474 = vpop.f32.mrb[0].mxu0
  %v475 = vadd.f32 %v91, %v474
  %v476 = vpop.f32.mrb[0].mxu0
  %477 = vmatprep.mubr.bf16.mxu0 0
  %478 = vmatmul.mubr.bf16.gmra.mrb[0].mxu0 %v305
  %v479 = vpop.f32.mrb[0].mxu0
  %v480 = vadd.f32 %v91, %v479
  %v481 = vpop.f32.mrb[0].mxu0
  %v482 = vpop.f32.mrb[0].mxu0
  %v483 = vadd.f32 %v91, %v482
  %v484 = vpop.f32.mrb[0].mxu0
  %485 = vmatprep.mubr.bf16.mxu0 0
  %486 = vmatmul.mubr.bf16.gmra.mrb[0].mxu0 %v308
  %v487 = vpop.f32.mrb[0].mxu0
  %v488 = vadd.f32 %v91, %v487
  %v489 = vpop.f32.mrb[0].mxu0
  %v490 = vpop.f32.mrb[0].mxu0
  %v491 = vadd.f32 %v91, %v490
  %v492 = vpop.f32.mrb[0].mxu0
  %493 = vmatprep.mubr.bf16.mxu0 0
  %494 = vmatmul.mubr.bf16.gmra.mrb[0].mxu0 %v311
  %v495 = vpop.f32.mrb[0].mxu0
  %v496 = vadd.f32 %v91, %v495
  %v497 = vpop.f32.mrb[0].mxu0
  %v498 = vpop.f32.mrb[0].mxu0
  %v499 = vadd.f32 %v91, %v498
  %v500 = vpop.f32.mrb[0].mxu0
  %501 = vmatprep.mubr.bf16.mxu0 0
  %502 = vmatmul.mubr.bf16.gmra.mrb[0].mxu0 %v314
  %v503 = vpop.f32.mrb[0].mxu0
  %v504 = vadd.f32 %v91, %v503
  %v505 = vpop.f32.mrb[0].mxu0
  %v506 = vpop.f32.mrb[0].mxu0
  %v507 = vadd.f32 %v91, %v506
  %v508 = vpop.f32.mrb[0].mxu0
  %509 = vmatprep.mubr.bf16.mxu0 0
  %510 = vmatmul.mubr.bf16.gmra.mrb[0].mxu0 %v317
  %v511 = vpop.f32.mrb[0].mxu0
  %v512 = vadd.f32 %v91, %v511
  %v513 = vpop.f32.mrb[0].mxu0
  %v514 = vpop.f32.mrb[0].mxu0
  %v515 = vadd.f32 %v91, %v514
  %v516 = vpop.f32.mrb[0].mxu0
  %517 = vmatprep.mubr.bf16.mxu0 0
  %518 = vmatmul.mubr.bf16.gmra.mrb[0].mxu0 %v320
  %v519 = vpop.f32.mrb[0].mxu0
  %v520 = vadd.f32 %v91, %v519
  %v521 = vpop.f32.mrb[0].mxu0
  %v522 = vpop.f32.mrb[0].mxu0
  %v523 = vadd.f32 %v91, %v522
  %v524 = vpop.f32.mrb[0].mxu0
  %525 = vmatprep.mubr.bf16.mxu0 0
  %526 = vmatmul.mubr.bf16.gmra.mrb[0].mxu0 %v323
  %v527 = vpop.f32.mrb[0].mxu0
  %v528 = vadd.f32 %v91, %v527
  %v529 = vpop.f32.mrb[0].mxu0
  %v530 = vpop.f32.mrb[0].mxu0
  %v531 = vadd.f32 %v91, %v530
  %v532 = vpop.f32.mrb[0].mxu0
  %533 = vmatprep.mubr.bf16.mxu0 0
  %534 = vmatmul.mubr.bf16.gmra.mrb[0].mxu0 %v326
  %v535 = vpop.f32.mrb[0].mxu0
  %v536 = vadd.f32 %v91, %v535
  %v537 = vpop.f32.mrb[0].mxu0
  %v538 = vpop.f32.mrb[0].mxu0
  %v539 = vadd.f32 %v91, %v538
  %v540 = vpop.f32.mrb[0].mxu0
  %541 = vmatprep.mubr.bf16.mxu0 0
  %542 = vmatmul.mubr.bf16.gmra.mrb[0].mxu0 %v329
  %v543 = vpop.f32.mrb[0].mxu0
  %v544 = vadd.f32 %v91, %v543
  %v545 = vpop.f32.mrb[0].mxu0
  %v546 = vpop.f32.mrb[0].mxu0
  %v547 = vadd.f32 %v91, %v546
  %v548 = vpop.f32.mrb[0].mxu0
  %549 = vmatprep.mubr.bf16.mxu0 0
  %550 = vmatmul.mubr.bf16.gmra.mrb[0].mxu0 %v332
  %v551 = vpop.f32.mrb[0].mxu0
  %v552 = vadd.f32 %v91, %v551
  %v553 = vpop.f32.mrb[0].mxu0
  %v554 = vpop.f32.mrb[0].mxu0
  %v555 = vadd.f32 %v91, %v554
  %v556 = vpop.f32.mrb[0].mxu0
  %557 = vmatprep.mubr.bf16.mxu0 0
  %558 = vmatmul.mubr.bf16.gmra.mrb[0].mxu0 %v335
  %v559 = vpop.f32.mrb[0].mxu0
  %v560 = vadd.f32 %v91, %v559
  %v561 = vpop.f32.mrb[0].mxu0
  %v562 = vpop.f32.mrb[0].mxu0
  %v563 = vadd.f32 %v91, %v562
  %v564 = vpop.f32.mrb[0].mxu0
  %565 = vmatprep.mubr.bf16.mxu0 0
  %566 = vmatmul.mubr.bf16.gmra.mrb[0].mxu0 %v338
  %v567 = vpop.f32.mrb[0].mxu0
  %v568 = vadd.f32 %v91, %v567
  %v569 = vpop.f32.mrb[0].mxu0
  %v570 = vpop.f32.mrb[0].mxu0
  %v571 = vadd.f32 %v91, %v570
  %v572 = vpop.f32.mrb[0].mxu0
  %573 = vmatprep.mubr.bf16.mxu0 0
  %574 = vmatmul.mubr.bf16.gmra.mrb[0].mxu0 %v341
  %v575 = vpop.f32.mrb[0].mxu0
  %v576 = vadd.f32 %v91, %v575
  %v577 = vpop.f32.mrb[0].mxu0
  %v578 = vpop.f32.mrb[0].mxu0
  %v579 = vadd.f32 %v91, %v578
  %v580 = vpop.f32.mrb[0].mxu0
  %581 = vmatprep.mubr.bf16.mxu0 0
  %582 = vmatmul.mubr.bf16.gmra.mrb[0].mxu0 %v344
  %v583 = vpop.f32.mrb[0].mxu0
  %v584 = vadd.f32 %v91, %v583
  %v585 = vpop.f32.mrb[0].mxu0
  %v586 = vpop.f32.mrb[0].mxu0
  %v587 = vadd.f32 %v91, %v586
  %v588 = vpop.f32.mrb[0].mxu0
  %589 = vmatprep.mubr.bf16.mxu0 0
  %590 = vmatmul.mubr.bf16.gmra.mrb[0].mxu0 %v347
  %v591 = vpop.f32.mrb[0].mxu0
  %v592 = vadd.f32 %v91, %v591
  %v593 = vpop.f32.mrb[0].mxu0
  %v594 = vpop.f32.mrb[0].mxu0
  %v595 = vadd.f32 %v91, %v594
  %v596 = vpop.f32.mrb[0].mxu0
  %597 = vmatprep.mubr.bf16.mxu0 0
  %598 = vmatmul.mubr.bf16.gmra.mrb[0].mxu0 %v350
  %v599 = vpop.f32.mrb[0].mxu0
  %v600 = vadd.f32 %v91, %v599
  %v601 = vpop.f32.mrb[0].mxu0
  %v602 = vpop.f32.mrb[0].mxu0
  %v603 = vadd.f32 %v91, %v602
  %v604 = vpop.f32.mrb[0].mxu0
  %605 = vmatprep.mubr.bf16.mxu0 0
  %606 = vmatmul.mubr.bf16.gmra.mrb[0].mxu0 %v353
  %v607 = vpop.f32.mrb[0].mxu0
  %v608 = vadd.f32 %v91, %v607
  %v609 = vpop.f32.mrb[0].mxu0
  %v610 = vpop.f32.mrb[0].mxu0
  %v611 = vadd.f32 %v91, %v610
  %v612 = vpop.f32.mrb[0].mxu0
  %613 = vmatprep.mubr.bf16.mxu0 0
  %614 = vmatmul.mubr.bf16.gmra.mrb[0].mxu0 %v356
  %v615 = vpop.f32.mrb[0].mxu0
  %v616 = vadd.f32 %v91, %v615
  %v617 = vpop.f32.mrb[0].mxu0
  %v618 = vpop.f32.mrb[0].mxu0
  %v619 = vadd.f32 %v91, %v618
  %v620 = vpop.f32.mrb[0].mxu0
  %621 = vmatprep.mubr.bf16.mxu0 0
  %622 = vmatmul.mubr.bf16.gmra.mrb[0].mxu0 %v359
  %v623 = vpop.f32.mrb[0].mxu0
  %v624 = vadd.f32 %v91, %v623
  %v625 = vpop.f32.mrb[0].mxu0
  %v626 = vpop.f32.mrb[0].mxu0
  %v627 = vadd.f32 %v91, %v626
  %v628 = vpop.f32.mrb[0].mxu0
  %629 = vmatprep.mubr.bf16.mxu0 0
  %630 = vmatmul.mubr.bf16.gmra.mrb[0].mxu0 %v362
  %v631 = vpop.f32.mrb[0].mxu0
  %v632 = vadd.f32 %v91, %v631
  %v633 = vpop.f32.mrb[0].mxu0
  %v634 = vpop.f32.mrb[0].mxu0
  %v635 = vadd.f32 %v91, %v634
  %v636 = vpop.f32.mrb[0].mxu0
  %637 = vmatprep.mubr.bf16.mxu0 0
  %638 = vmatmul.mubr.bf16.gmra.mrb[0].mxu0 %v365
  %v639 = vpop.f32.mrb[0].mxu0
  %v640 = vadd.f32 %v91, %v639
  %v641 = vpop.f32.mrb[0].mxu0
  %v642 = vpop.f32.mrb[0].mxu0
  %v643 = vadd.f32 %v91, %v642
  %v644 = vpop.f32.mrb[0].mxu0
  %645 = vmatprep.mubr.bf16.mxu0 0
  %646 = vmatmul.mubr.bf16.gmra.mrb[0].mxu0 %v368
  %v647 = vpop.f32.mrb[0].mxu0
  %v648 = vadd.f32 %v91, %v647
  %v649 = vpop.f32.mrb[0].mxu0
  %v650 = vpop.f32.mrb[0].mxu0
  %v651 = vadd.f32 %v91, %v650
  %v652 = vpop.f32.mrb[0].mxu0
  %653 = vmatprep.mubr.bf16.mxu0 0
  %654 = vmatmul.mubr.bf16.gmra.mrb[0].mxu0 %v371
  %v655 = vpop.f32.mrb[0].mxu0
  %v656 = vadd.f32 %v91, %v655
  %v657 = vpop.f32.mrb[0].mxu0
  %v658 = vpop.f32.mrb[0].mxu0
  %v659 = vadd.f32 %v91, %v658
  %v660 = vpop.f32.mrb[0].mxu0
  %661 = vdwg.mxu0
  %vm662 = vcmp.ge.f32.partialorder %v408, 0.0
  %vm663 = vcmp.ge.f32.partialorder %v411, 0.0
  %vm664 = vcmp.ge.f32.partialorder %v416, 0.0
  %vm665 = vcmp.ge.f32.partialorder %v419, 0.0
  %vm666 = vcmp.ge.f32.partialorder %v424, 0.0
  %vm667 = vcmp.ge.f32.partialorder %v427, 0.0
  %vm668 = vcmp.ge.f32.partialorder %v432, 0.0
  %vm669 = vcmp.ge.f32.partialorder %v435, 0.0
  %vm670 = vcmp.ge.f32.partialorder %v440, 0.0
  %vm671 = vcmp.ge.f32.partialorder %v443, 0.0
  %vm672 = vcmp.ge.f32.partialorder %v448, 0.0
  %vm673 = vcmp.ge.f32.partialorder %v451, 0.0
  %vm674 = vcmp.ge.f32.partialorder %v456, 0.0
  %vm675 = vcmp.ge.f32.partialorder %v459, 0.0
  %vm676 = vcmp.ge.f32.partialorder %v464, 0.0
  %vm677 = vcmp.ge.f32.partialorder %v467, 0.0
  %vm678 = vcmp.ge.f32.partialorder %v472, 0.0
  %vm679 = vcmp.ge.f32.partialorder %v475, 0.0
  %vm680 = vcmp.ge.f32.partialorder %v480, 0.0
  %vm681 = vcmp.ge.f32.partialorder %v483, 0.0
  %vm682 = vcmp.ge.f32.partialorder %v488, 0.0
  %vm683 = vcmp.ge.f32.partialorder %v491, 0.0
  %vm684 = vcmp.ge.f32.partialorder %v496, 0.0
  %vm685 = vcmp.ge.f32.partialorder %v499, 0.0
  %vm686 = vcmp.ge.f32.partialorder %v504, 0.0
  %vm687 = vcmp.ge.f32.partialorder %v507, 0.0
  %vm688 = vcmp.ge.f32.partialorder %v512, 0.0
  %vm689 = vcmp.ge.f32.partialorder %v515, 0.0
  %vm690 = vcmp.ge.f32.partialorder %v520, 0.0
  %vm691 = vcmp.ge.f32.partialorder %v523, 0.0
  %vm692 = vcmp.ge.f32.partialorder %v528, 0.0
  %vm693 = vcmp.ge.f32.partialorder %v531, 0.0
  %vm694 = vcmp.ge.f32.partialorder %v536, 0.0
  %vm695 = vcmp.ge.f32.partialorder %v539, 0.0
  %vm696 = vcmp.ge.f32.partialorder %v544, 0.0
  %vm697 = vcmp.ge.f32.partialorder %v547, 0.0
  %vm698 = vcmp.ge.f32.partialorder %v552, 0.0
  %vm699 = vcmp.ge.f32.partialorder %v555, 0.0
  %vm700 = vcmp.ge.f32.partialorder %v560, 0.0
  %vm701 = vcmp.ge.f32.partialorder %v563, 0.0
  %vm702 = vcmp.ge.f32.partialorder %v568, 0.0
  %vm703 = vcmp.ge.f32.partialorder %v571, 0.0
  %vm704 = vcmp.ge.f32.partialorder %v576, 0.0
  %vm705 = vcmp.ge.f32.partialorder %v579, 0.0
  %vm706 = vcmp.ge.f32.partialorder %v584, 0.0
  %vm707 = vcmp.ge.f32.partialorder %v587, 0.0
  %vm708 = vcmp.ge.f32.partialorder %v592, 0.0
  %vm709 = vcmp.ge.f32.partialorder %v595, 0.0
  %vm710 = vcmp.ge.f32.partialorder %v600, 0.0
  %vm711 = vcmp.ge.f32.partialorder %v603, 0.0
  %vm712 = vcmp.ge.f32.partialorder %v608, 0.0
  %vm713 = vcmp.ge.f32.partialorder %v611, 0.0
  %vm714 = vcmp.ge.f32.partialorder %v616, 0.0
  %vm715 = vcmp.ge.f32.partialorder %v619, 0.0
  %vm716 = vcmp.ge.f32.partialorder %v624, 0.0
  %vm717 = vcmp.ge.f32.partialorder %v627, 0.0
  %vm718 = vcmp.ge.f32.partialorder %v632, 0.0
  %vm719 = vcmp.ge.f32.partialorder %v635, 0.0
  %vm720 = vcmp.ge.f32.partialorder %v640, 0.0
  %vm721 = vcmp.ge.f32.partialorder %v643, 0.0
  %vm722 = vcmp.ge.f32.partialorder %v648, 0.0
  %vm723 = vcmp.ge.f32.partialorder %v651, 0.0
  %vm724 = vcmp.ge.f32.partialorder %v656, 0.0
  %vm725 = vcmp.ge.f32.partialorder %v659, 0.0
  %v726 = vmul.f32 %v408, 0.2
  %v727 = vmul.f32 %v411, 0.2
  %v728 = vmul.f32 %v416, 0.2
  %v729 = vmul.f32 %v419, 0.2
  %v730 = vmul.f32 %v424, 0.2
  %v731 = vmul.f32 %v427, 0.2
  %v732 = vmul.f32 %v432, 0.2
  %v733 = vmul.f32 %v435, 0.2
  %v734 = vmul.f32 %v440, 0.2
  %v735 = vmul.f32 %v443, 0.2
  %v736 = vmul.f32 %v448, 0.2
  %v737 = vmul.f32 %v451, 0.2
  %v738 = vmul.f32 %v456, 0.2
  %v739 = vmul.f32 %v459, 0.2
  %v740 = vmul.f32 %v464, 0.2
  %v741 = vmul.f32 %v467, 0.2
  %v742 = vmul.f32 %v472, 0.2
  %v743 = vmul.f32 %v475, 0.2
  %v744 = vmul.f32 %v480, 0.2
  %v745 = vmul.f32 %v483, 0.2
  %v746 = vmul.f32 %v488, 0.2
  %v747 = vmul.f32 %v491, 0.2
  %v748 = vmul.f32 %v496, 0.2
  %v749 = vmul.f32 %v499, 0.2
  %v750 = vmul.f32 %v504, 0.2
  %v751 = vmul.f32 %v507, 0.2
  %v752 = vmul.f32 %v512, 0.2
  %v753 = vmul.f32 %v515, 0.2
  %v754 = vmul.f32 %v520, 0.2
  %v755 = vmul.f32 %v523, 0.2
  %v756 = vmul.f32 %v528, 0.2
  %v757 = vmul.f32 %v531, 0.2
  %v758 = vmul.f32 %v536, 0.2
  %v759 = vmul.f32 %v539, 0.2
  %v760 = vmul.f32 %v544, 0.2
  %v761 = vmul.f32 %v547, 0.2
  %v762 = vmul.f32 %v552, 0.2
  %v763 = vmul.f32 %v555, 0.2
  %v764 = vmul.f32 %v560, 0.2
  %v765 = vmul.f32 %v563, 0.2
  %v766 = vmul.f32 %v568, 0.2
  %v767 = vmul.f32 %v571, 0.2
  %v768 = vmul.f32 %v576, 0.2
  %v769 = vmul.f32 %v579, 0.2
  %v770 = vmul.f32 %v584, 0.2
  %v771 = vmul.f32 %v587, 0.2
  %v772 = vmul.f32 %v592, 0.2
  %v773 = vmul.f32 %v595, 0.2
  %v774 = vmul.f32 %v600, 0.2
  %v775 = vmul.f32 %v603, 0.2
  %v776 = vmul.f32 %v608, 0.2
  %v777 = vmul.f32 %v611, 0.2
  %v778 = vmul.f32 %v616, 0.2
  %v779 = vmul.f32 %v619, 0.2
  %v780 = vmul.f32 %v624, 0.2
  %v781 = vmul.f32 %v627, 0.2
  %v782 = vmul.f32 %v632, 0.2
  %v783 = vmul.f32 %v635, 0.2
  %v784 = vmul.f32 %v640, 0.2
  %v785 = vmul.f32 %v643, 0.2
  %v786 = vmul.f32 %v648, 0.2
  %v787 = vmul.f32 %v651, 0.2
  %v788 = vmul.f32 %v656, 0.2
  %v789 = vmul.f32 %v659, 0.2
  %v790 = vsel %vm662, %v408, %v726
  %v791 = vsel %vm663, %v411, %v727
  %v792 = vsel %vm664, %v416, %v728
  %v793 = vsel %vm665, %v419, %v729
  %v794 = vsel %vm666, %v424, %v730
  %v795 = vsel %vm667, %v427, %v731
  %v796 = vsel %vm668, %v432, %v732
  %v797 = vsel %vm669, %v435, %v733
  %v798 = vsel %vm670, %v440, %v734
  %v799 = vsel %vm671, %v443, %v735
  %v800 = vsel %vm672, %v448, %v736
  %v801 = vsel %vm673, %v451, %v737
  %v802 = vsel %vm674, %v456, %v738
  %v803 = vsel %vm675, %v459, %v739
  %v804 = vsel %vm676, %v464, %v740
  %v805 = vsel %vm677, %v467, %v741
  %v806 = vsel %vm678, %v472, %v742
  %v807 = vsel %vm679, %v475, %v743
  %v808 = vsel %vm680, %v480, %v744
  %v809 = vsel %vm681, %v483, %v745
  %v810 = vsel %vm682, %v488, %v746
  %v811 = vsel %vm683, %v491, %v747
  %v812 = vsel %vm684, %v496, %v748
  %v813 = vsel %vm685, %v499, %v749
  %v814 = vsel %vm686, %v504, %v750
  %v815 = vsel %vm687, %v507, %v751
  %v816 = vsel %vm688, %v512, %v752
  %v817 = vsel %vm689, %v515, %v753
  %v818 = vsel %vm690, %v520, %v754
  %v819 = vsel %vm691, %v523, %v755
  %v820 = vsel %vm692, %v528, %v756
  %v821 = vsel %vm693, %v531, %v757
  %v822 = vsel %vm694, %v536, %v758
  %v823 = vsel %vm695, %v539, %v759
  %v824 = vsel %vm696, %v544, %v760
  %v825 = vsel %vm697, %v547, %v761
  %v826 = vsel %vm698, %v552, %v762
  %v827 = vsel %vm699, %v555, %v763
  %v828 = vsel %vm700, %v560, %v764
  %v829 = vsel %vm701, %v563, %v765
  %v830 = vsel %vm702, %v568, %v766
  %v831 = vsel %vm703, %v571, %v767
  %v832 = vsel %vm704, %v576, %v768
  %v833 = vsel %vm705, %v579, %v769
  %v834 = vsel %vm706, %v584, %v770
  %v835 = vsel %vm707, %v587, %v771
  %v836 = vsel %vm708, %v592, %v772
  %v837 = vsel %vm709, %v595, %v773
  %v838 = vsel %vm710, %v600, %v774
  %v839 = vsel %vm711, %v603, %v775
  %v840 = vsel %vm712, %v608, %v776
  %v841 = vsel %vm713, %v611, %v777
  %v842 = vsel %vm714, %v616, %v778
  %v843 = vsel %vm715, %v619, %v779
  %v844 = vsel %vm716, %v624, %v780
  %v845 = vsel %vm717, %v627, %v781
  %v846 = vsel %vm718, %v632, %v782
  %v847 = vsel %vm719, %v635, %v783
  %v848 = vsel %vm720, %v640, %v784
  %v849 = vsel %vm721, %v643, %v785
  %v850 = vsel %vm722, %v648, %v786
  %v851 = vsel %vm723, %v651, %v787
  %v852 = vsel %vm724, %v656, %v788
  %v853 = vsel %vm725, %v659, %v789
  %v854 = vlaneseq
  %v855 = vshrl.u32 %v854, 7
  %v856 = vsub.s32 1, %v855
  %v857 = vrot.slane %v87, %v856
  %v858 = vmul.f32 %v790, %v857
  %v859 = vmul.f32 %v791, %v857
  %v860 = vmul.f32 %v792, %v857
  %v861 = vmul.f32 %v793, %v857
  %v862 = vmul.f32 %v794, %v857
  %v863 = vmul.f32 %v795, %v857
  %v864 = vmul.f32 %v796, %v857
  %v865 = vmul.f32 %v797, %v857
  %v866 = vmul.f32 %v798, %v857
  %v867 = vmul.f32 %v799, %v857
  %v868 = vmul.f32 %v800, %v857
  %v869 = vmul.f32 %v801, %v857
  %v870 = vmul.f32 %v802, %v857
  %v871 = vmul.f32 %v803, %v857
  %v872 = vmul.f32 %v804, %v857
  %v873 = vmul.f32 %v805, %v857
  %v874 = vmul.f32 %v806, %v857
  %v875 = vmul.f32 %v807, %v857
  %v876 = vmul.f32 %v808, %v857
  %v877 = vmul.f32 %v809, %v857
  %v878 = vmul.f32 %v810, %v857
  %v879 = vmul.f32 %v811, %v857
  %v880 = vmul.f32 %v812, %v857
  %v881 = vmul.f32 %v813, %v857
  %v882 = vmul.f32 %v814, %v857
  %v883 = vmul.f32 %v815, %v857
  %v884 = vmul.f32 %v816, %v857
  %v885 = vmul.f32 %v817, %v857
  %v886 = vmul.f32 %v818, %v857
  %v887 = vmul.f32 %v819, %v857
  %v888 = vmul.f32 %v820, %v857
  %v889 = vmul.f32 %v821, %v857
  %v890 = vmul.f32 %v822, %v857
  %v891 = vmul.f32 %v823, %v857
  %v892 = vmul.f32 %v824, %v857
  %v893 = vmul.f32 %v825, %v857
  %v894 = vmul.f32 %v826, %v857
  %v895 = vmul.f32 %v827, %v857
  %v896 = vmul.f32 %v828, %v857
  %v897 = vmul.f32 %v829, %v857
  %v898 = vmul.f32 %v830, %v857
  %v899 = vmul.f32 %v831, %v857
  %v900 = vmul.f32 %v832, %v857
  %v901 = vmul.f32 %v833, %v857
  %v902 = vmul.f32 %v834, %v857
  %v903 = vmul.f32 %v835, %v857
  %v904 = vmul.f32 %v836, %v857
  %v905 = vmul.f32 %v837, %v857
  %v906 = vmul.f32 %v838, %v857
  %v907 = vmul.f32 %v839, %v857
  %v908 = vmul.f32 %v840, %v857
  %v909 = vmul.f32 %v841, %v857
  %v910 = vmul.f32 %v842, %v857
  %v911 = vmul.f32 %v843, %v857
  %v912 = vmul.f32 %v844, %v857
  %v913 = vmul.f32 %v845, %v857
  %v914 = vmul.f32 %v846, %v857
  %v915 = vmul.f32 %v847, %v857
  %v916 = vmul.f32 %v848, %v857
  %v917 = vmul.f32 %v849, %v857
  %v918 = vmul.f32 %v850, %v857
  %v919 = vmul.f32 %v851, %v857
  %v920 = vmul.f32 %v852, %v857
  %v921 = vmul.f32 %v853, %v857
  %v922 = vlaneseq
  %v923 = vshrl.u32 %v922, 7
  %v924 = vsub.s32 2, %v923
  %v925 = vrot.slane %v87, %v924
  %v926 = vadd.f32 %v858, %v925
  %v927 = vadd.f32 %v859, %v925
  %v928 = vadd.f32 %v860, %v925
  %v929 = vadd.f32 %v861, %v925
  %v930 = vadd.f32 %v862, %v925
  %v931 = vadd.f32 %v863, %v925
  %v932 = vadd.f32 %v864, %v925
  %v933 = vadd.f32 %v865, %v925
  %v934 = vadd.f32 %v866, %v925
  %v935 = vadd.f32 %v867, %v925
  %v936 = vadd.f32 %v868, %v925
  %v937 = vadd.f32 %v869, %v925
  %v938 = vadd.f32 %v870, %v925
  %v939 = vadd.f32 %v871, %v925
  %v940 = vadd.f32 %v872, %v925
  %v941 = vadd.f32 %v873, %v925
  %v942 = vadd.f32 %v874, %v925
  %v943 = vadd.f32 %v875, %v925
  %v944 = vadd.f32 %v876, %v925
  %v945 = vadd.f32 %v877, %v925
  %v946 = vadd.f32 %v878, %v925
  %v947 = vadd.f32 %v879, %v925
  %v948 = vadd.f32 %v880, %v925
  %v949 = vadd.f32 %v881, %v925
  %v950 = vadd.f32 %v882, %v925
  %v951 = vadd.f32 %v883, %v925
  %v952 = vadd.f32 %v884, %v925
  %v953 = vadd.f32 %v885, %v925
  %v954 = vadd.f32 %v886, %v925
  %v955 = vadd.f32 %v887, %v925
  %v956 = vadd.f32 %v888, %v925
  %v957 = vadd.f32 %v889, %v925
  %v958 = vadd.f32 %v890, %v925
  %v959 = vadd.f32 %v891, %v925
  %v960 = vadd.f32 %v892, %v925
  %v961 = vadd.f32 %v893, %v925
  %v962 = vadd.f32 %v894, %v925
  %v963 = vadd.f32 %v895, %v925
  %v964 = vadd.f32 %v896, %v925
  %v965 = vadd.f32 %v897, %v925
  %v966 = vadd.f32 %v898, %v925
  %v967 = vadd.f32 %v899, %v925
  %v968 = vadd.f32 %v900, %v925
  %v969 = vadd.f32 %v901, %v925
  %v970 = vadd.f32 %v902, %v925
  %v971 = vadd.f32 %v903, %v925
  %v972 = vadd.f32 %v904, %v925
  %v973 = vadd.f32 %v905, %v925
  %v974 = vadd.f32 %v906, %v925
  %v975 = vadd.f32 %v907, %v925
  %v976 = vadd.f32 %v908, %v925
  %v977 = vadd.f32 %v909, %v925
  %v978 = vadd.f32 %v910, %v925
  %v979 = vadd.f32 %v911, %v925
  %v980 = vadd.f32 %v912, %v925
  %v981 = vadd.f32 %v913, %v925
  %v982 = vadd.f32 %v914, %v925
  %v983 = vadd.f32 %v915, %v925
  %v984 = vadd.f32 %v916, %v925
  %v985 = vadd.f32 %v917, %v925
  %v986 = vadd.f32 %v918, %v925
  %v987 = vadd.f32 %v919, %v925
  %v988 = vadd.f32 %v920, %v925
  %v989 = vadd.f32 %v921, %v925
  %v990 = vpack.c.bf16 %v927, %v926
  %v991 = vpack.c.bf16 %v929, %v928
  %v992 = vpack.c.bf16 %v931, %v930
  %v993 = vpack.c.bf16 %v933, %v932
  %v994 = vpack.c.bf16 %v935, %v934
  %v995 = vpack.c.bf16 %v937, %v936
  %v996 = vpack.c.bf16 %v939, %v938
  %v997 = vpack.c.bf16 %v941, %v940
  %v998 = vpack.c.bf16 %v943, %v942
  %v999 = vpack.c.bf16 %v945, %v944
  %v1000 = vpack.c.bf16 %v947, %v946
  %v1001 = vpack.c.bf16 %v949, %v948
  %v1002 = vpack.c.bf16 %v951, %v950
  %v1003 = vpack.c.bf16 %v953, %v952
  %v1004 = vpack.c.bf16 %v955, %v954
  %v1005 = vpack.c.bf16 %v957, %v956
  %v1006 = vpack.c.bf16 %v959, %v958
  %v1007 = vpack.c.bf16 %v961, %v960
  %v1008 = vpack.c.bf16 %v963, %v962
  %v1009 = vpack.c.bf16 %v965, %v964
  %v1010 = vpack.c.bf16 %v967, %v966
  %v1011 = vpack.c.bf16 %v969, %v968
  %v1012 = vpack.c.bf16 %v971, %v970
  %v1013 = vpack.c.bf16 %v973, %v972
  %v1014 = vpack.c.bf16 %v975, %v974
  %v1015 = vpack.c.bf16 %v977, %v976
  %v1016 = vpack.c.bf16 %v979, %v978
  %v1017 = vpack.c.bf16 %v981, %v980
  %v1018 = vpack.c.bf16 %v983, %v982
  %v1019 = vpack.c.bf16 %v985, %v984
  %v1020 = vpack.c.bf16 %v987, %v986
  %v1021 = vpack.c.bf16 %v989, %v988
  %v1054 = vunpack.c.l.b16 %v990
  %v1055 = vunpack.c.h.b16 %v990
  %v1056 = vunpack.c.l.b16 %v991
  %v1057 = vunpack.c.h.b16 %v991
  %v1058 = vunpack.c.l.b16 %v992
  %v1059 = vunpack.c.h.b16 %v992
  %v1060 = vunpack.c.l.b16 %v993
  %v1061 = vunpack.c.h.b16 %v993
  %v1062 = vunpack.c.l.b16 %v994
  %v1063 = vunpack.c.h.b16 %v994
  %v1064 = vunpack.c.l.b16 %v995
  %v1065 = vunpack.c.h.b16 %v995
  %v1066 = vunpack.c.l.b16 %v996
  %v1067 = vunpack.c.h.b16 %v996
  %v1068 = vunpack.c.l.b16 %v997
  %v1069 = vunpack.c.h.b16 %v997
  %v1070 = vunpack.c.l.b16 %v998
  %v1071 = vunpack.c.h.b16 %v998
  %v1072 = vunpack.c.l.b16 %v999
  %v1073 = vunpack.c.h.b16 %v999
  %v1074 = vunpack.c.l.b16 %v1000
  %v1075 = vunpack.c.h.b16 %v1000
  %v1076 = vunpack.c.l.b16 %v1001
  %v1077 = vunpack.c.h.b16 %v1001
  %v1078 = vunpack.c.l.b16 %v1002
  %v1079 = vunpack.c.h.b16 %v1002
  %v1080 = vunpack.c.l.b16 %v1003
  %v1081 = vunpack.c.h.b16 %v1003
  %v1082 = vunpack.c.l.b16 %v1004
  %v1083 = vunpack.c.h.b16 %v1004
  %v1084 = vunpack.c.l.b16 %v1005
  %v1085 = vunpack.c.h.b16 %v1005
  %v1086 = vunpack.c.l.b16 %v1006
  %v1087 = vunpack.c.h.b16 %v1006
  %v1088 = vunpack.c.l.b16 %v1007
  %v1089 = vunpack.c.h.b16 %v1007
  %v1090 = vunpack.c.l.b16 %v1008
  %v1091 = vunpack.c.h.b16 %v1008
  %v1092 = vunpack.c.l.b16 %v1009
  %v1093 = vunpack.c.h.b16 %v1009
  %v1094 = vunpack.c.l.b16 %v1010
  %v1095 = vunpack.c.h.b16 %v1010
  %v1096 = vunpack.c.l.b16 %v1011
  %v1097 = vunpack.c.h.b16 %v1011
  %v1098 = vunpack.c.l.b16 %v1012
  %v1099 = vunpack.c.h.b16 %v1012
  %v1100 = vunpack.c.l.b16 %v1013
  %v1101 = vunpack.c.h.b16 %v1013
  %v1102 = vunpack.c.l.b16 %v1014
  %v1103 = vunpack.c.h.b16 %v1014
  %v1104 = vunpack.c.l.b16 %v1015
  %v1105 = vunpack.c.h.b16 %v1015
  %v1106 = vunpack.c.l.b16 %v1016
  %v1107 = vunpack.c.h.b16 %v1016
  %v1108 = vunpack.c.l.b16 %v1017
  %v1109 = vunpack.c.h.b16 %v1017
  %v1110 = vunpack.c.l.b16 %v1018
  %v1111 = vunpack.c.h.b16 %v1018
  %v1112 = vunpack.c.l.b16 %v1019
  %v1113 = vunpack.c.h.b16 %v1019
  %v1114 = vunpack.c.l.b16 %v1020
  %v1115 = vunpack.c.h.b16 %v1020
  %v1116 = vunpack.c.l.b16 %v1021
  %v1117 = vunpack.c.h.b16 %v1021
  %v1118 = vpack.c.b16 %v1054, %v1054
  %v1119 = vpack.c.b16 %v1055, %v1055
  %v1120 = vpack.c.b16 %v1056, %v1056
  %v1121 = vpack.c.b16 %v1057, %v1057
  %v1122 = vpack.c.b16 %v1058, %v1058
  %v1123 = vpack.c.b16 %v1059, %v1059
  %v1124 = vpack.c.b16 %v1060, %v1060
  %v1125 = vpack.c.b16 %v1061, %v1061
  %v1126 = vpack.c.b16 %v1062, %v1062
  %v1127 = vpack.c.b16 %v1063, %v1063
  %v1128 = vpack.c.b16 %v1064, %v1064
  %v1129 = vpack.c.b16 %v1065, %v1065
  %v1130 = vpack.c.b16 %v1066, %v1066
  %v1131 = vpack.c.b16 %v1067, %v1067
  %v1132 = vpack.c.b16 %v1068, %v1068
  %v1133 = vpack.c.b16 %v1069, %v1069
  %v1134 = vpack.c.b16 %v1070, %v1070
  %v1135 = vpack.c.b16 %v1071, %v1071
  %v1136 = vpack.c.b16 %v1072, %v1072
  %v1137 = vpack.c.b16 %v1073, %v1073
  %v1138 = vpack.c.b16 %v1074, %v1074
  %v1139 = vpack.c.b16 %v1075, %v1075
  %v1140 = vpack.c.b16 %v1076, %v1076
  %v1141 = vpack.c.b16 %v1077, %v1077
  %v1142 = vpack.c.b16 %v1078, %v1078
  %v1143 = vpack.c.b16 %v1079, %v1079
  %v1144 = vpack.c.b16 %v1080, %v1080
  %v1145 = vpack.c.b16 %v1081, %v1081
  %v1146 = vpack.c.b16 %v1082, %v1082
  %v1147 = vpack.c.b16 %v1083, %v1083
  %v1148 = vpack.c.b16 %v1084, %v1084
  %v1149 = vpack.c.b16 %v1085, %v1085
  %v1150 = vpack.c.b16 %v1086, %v1086
  %v1151 = vpack.c.b16 %v1087, %v1087
  %v1152 = vpack.c.b16 %v1088, %v1088
  %v1153 = vpack.c.b16 %v1089, %v1089
  %v1154 = vpack.c.b16 %v1090, %v1090
  %v1155 = vpack.c.b16 %v1091, %v1091
  %v1156 = vpack.c.b16 %v1092, %v1092
  %v1157 = vpack.c.b16 %v1093, %v1093
  %v1158 = vpack.c.b16 %v1094, %v1094
  %v1159 = vpack.c.b16 %v1095, %v1095
  %v1160 = vpack.c.b16 %v1096, %v1096
  %v1161 = vpack.c.b16 %v1097, %v1097
  %v1162 = vpack.c.b16 %v1098, %v1098
  %v1163 = vpack.c.b16 %v1099, %v1099
  %v1164 = vpack.c.b16 %v1100, %v1100
  %v1165 = vpack.c.b16 %v1101, %v1101
  %v1166 = vpack.c.b16 %v1102, %v1102
  %v1167 = vpack.c.b16 %v1103, %v1103
  %v1168 = vpack.c.b16 %v1104, %v1104
  %v1169 = vpack.c.b16 %v1105, %v1105
  %v1170 = vpack.c.b16 %v1106, %v1106
  %v1171 = vpack.c.b16 %v1107, %v1107
  %v1172 = vpack.c.b16 %v1108, %v1108
  %v1173 = vpack.c.b16 %v1109, %v1109
  %v1174 = vpack.c.b16 %v1110, %v1110
  %v1175 = vpack.c.b16 %v1111, %v1111
  %v1176 = vpack.c.b16 %v1112, %v1112
  %v1177 = vpack.c.b16 %v1113, %v1113
  %v1178 = vpack.c.b16 %v1114, %v1114
  %v1179 = vpack.c.b16 %v1115, %v1115
  %v1180 = vpack.c.b16 %v1116, %v1116
  %v1181 = vpack.c.b16 %v1117, %v1117
  %vm1246 = vcmask 60416
  %1247 = vst.msk [vmem:[%s3] sm:$0xf] %vm1246, %v1118
  %1248 = vst.msk [vmem:[%s3 + $0x4] sm:$0xf] %vm1246, %v1119
  %1249 = vst.msk [vmem:[%s3 + $0x8] sm:$0xf] %vm1246, %v1120
  %1250 = vst.msk [vmem:[%s3 + $0xc] sm:$0xf] %vm1246, %v1121
  %1251 = vst.msk [vmem:[%s3 + $0x10] sm:$0xf] %vm1246, %v1122
  %1252 = vst.msk [vmem:[%s3 + $0x14] sm:$0xf] %vm1246, %v1123
  %1253 = vst.msk [vmem:[%s3 + $0x18] sm:$0xf] %vm1246, %v1124
  %1254 = vst.msk [vmem:[%s3 + $0x1c] sm:$0xf] %vm1246, %v1125
  %1255 = vst.msk [vmem:[%s3 + $0x20] sm:$0xf] %vm1246, %v1126
  %1256 = vst.msk [vmem:[%s3 + $0x24] sm:$0xf] %vm1246, %v1127
  %1257 = vst.msk [vmem:[%s3 + $0x28] sm:$0xf] %vm1246, %v1128
  %1258 = vst.msk [vmem:[%s3 + $0x2c] sm:$0xf] %vm1246, %v1129
  %1259 = vst.msk [vmem:[%s3 + $0x30] sm:$0xf] %vm1246, %v1130
  %1260 = vst.msk [vmem:[%s3 + $0x34] sm:$0xf] %vm1246, %v1131
  %1261 = vst.msk [vmem:[%s3 + $0x38] sm:$0xf] %vm1246, %v1132
  %1262 = vst.msk [vmem:[%s3 + $0x3c] sm:$0xf] %vm1246, %v1133
  %1263 = vst.msk [vmem:[%s3 + $0x40] sm:$0xf] %vm1246, %v1134
  %1264 = vst.msk [vmem:[%s3 + $0x44] sm:$0xf] %vm1246, %v1135
  %1265 = vst.msk [vmem:[%s3 + $0x48] sm:$0xf] %vm1246, %v1136
  %1266 = vst.msk [vmem:[%s3 + $0x4c] sm:$0xf] %vm1246, %v1137
  %1267 = vst.msk [vmem:[%s3 + $0x50] sm:$0xf] %vm1246, %v1138
  %1268 = vst.msk [vmem:[%s3 + $0x54] sm:$0xf] %vm1246, %v1139
  %1269 = vst.msk [vmem:[%s3 + $0x58] sm:$0xf] %vm1246, %v1140
  %1270 = vst.msk [vmem:[%s3 + $0x5c] sm:$0xf] %vm1246, %v1141
  %1271 = vst.msk [vmem:[%s3 + $0x60] sm:$0xf] %vm1246, %v1142
  %1272 = vst.msk [vmem:[%s3 + $0x64] sm:$0xf] %vm1246, %v1143
  %1273 = vst.msk [vmem:[%s3 + $0x68] sm:$0xf] %vm1246, %v1144
  %1274 = vst.msk [vmem:[%s3 + $0x6c] sm:$0xf] %vm1246, %v1145
  %1275 = vst.msk [vmem:[%s3 + $0x70] sm:$0xf] %vm1246, %v1146
  %1276 = vst.msk [vmem:[%s3 + $0x74] sm:$0xf] %vm1246, %v1147
  %1277 = vst.msk [vmem:[%s3 + $0x78] sm:$0xf] %vm1246, %v1148
  %1278 = vst.msk [vmem:[%s3 + $0x7c] sm:$0xf] %vm1246, %v1149
  %1279 = vst.msk [vmem:[%s3 + $0x80] sm:$0xf] %vm1246, %v1150
  %1280 = vst.msk [vmem:[%s3 + $0x84] sm:$0xf] %vm1246, %v1151
  %1281 = vst.msk [vmem:[%s3 + $0x88] sm:$0xf] %vm1246, %v1152
  %1282 = vst.msk [vmem:[%s3 + $0x8c] sm:$0xf] %vm1246, %v1153
  %1283 = vst.msk [vmem:[%s3 + $0x90] sm:$0xf] %vm1246, %v1154
  %1284 = vst.msk [vmem:[%s3 + $0x94] sm:$0xf] %vm1246, %v1155
  %1285 = vst.msk [vmem:[%s3 + $0x98] sm:$0xf] %vm1246, %v1156
  %1286 = vst.msk [vmem:[%s3 + $0x9c] sm:$0xf] %vm1246, %v1157
  %1287 = vst.msk [vmem:[%s3 + $0xa0] sm:$0xf] %vm1246, %v1158
  %1288 = vst.msk [vmem:[%s3 + $0xa4] sm:$0xf] %vm1246, %v1159
  %1289 = vst.msk [vmem:[%s3 + $0xa8] sm:$0xf] %vm1246, %v1160
  %1290 = vst.msk [vmem:[%s3 + $0xac] sm:$0xf] %vm1246, %v1161
  %1291 = vst.msk [vmem:[%s3 + $0xb0] sm:$0xf] %vm1246, %v1162
  %1292 = vst.msk [vmem:[%s3 + $0xb4] sm:$0xf] %vm1246, %v1163
  %1293 = vst.msk [vmem:[%s3 + $0xb8] sm:$0xf] %vm1246, %v1164
  %1294 = vst.msk [vmem:[%s3 + $0xbc] sm:$0xf] %vm1246, %v1165
  %1295 = vst.msk [vmem:[%s3 + $0xc0] sm:$0xf] %vm1246, %v1166
  %1296 = vst.msk [vmem:[%s3 + $0xc4] sm:$0xf] %vm1246, %v1167
  %1297 = vst.msk [vmem:[%s3 + $0xc8] sm:$0xf] %vm1246, %v1168
  %1298 = vst.msk [vmem:[%s3 + $0xcc] sm:$0xf] %vm1246, %v1169
  %1299 = vst.msk [vmem:[%s3 + $0xd0] sm:$0xf] %vm1246, %v1170
  %1300 = vst.msk [vmem:[%s3 + $0xd4] sm:$0xf] %vm1246, %v1171
  %1301 = vst.msk [vmem:[%s3 + $0xd8] sm:$0xf] %vm1246, %v1172
  %1302 = vst.msk [vmem:[%s3 + $0xdc] sm:$0xf] %vm1246, %v1173
  %1303 = vst.msk [vmem:[%s3 + $0xe0] sm:$0xf] %vm1246, %v1174
  %1304 = vst.msk [vmem:[%s3 + $0xe4] sm:$0xf] %vm1246, %v1175
  %1305 = vst.msk [vmem:[%s3 + $0xe8] sm:$0xf] %vm1246, %v1176
  %1306 = vst.msk [vmem:[%s3 + $0xec] sm:$0xf] %vm1246, %v1177
  %1307 = vst.msk [vmem:[%s3 + $0xf0] sm:$0xf] %vm1246, %v1178
  %1308 = vst.msk [vmem:[%s3 + $0xf4] sm:$0xf] %vm1246, %v1179
  %1309 = vst.msk [vmem:[%s3 + $0xf8] sm:$0xf] %vm1246, %v1180
  %1310 = vst.msk [vmem:[%s3 + $0xfc] sm:$0xf] %vm1246, %v1181
  // Predicated region
  $region14: #{vae1_forward.47} parent=0 // pred_check
    _
  $region15: #{vae1_forward.47} parent=0 // pred_check_branch
    %1312 = sbr.rel (0) target = $region17
  $region16: #{vae1_forward.47} parent=0 // pred_region
    _
  $region17: #{vae1_forward.47} parent=0 // pred_fallthru
    _
  // Predicated region
  $region18: #{vae1_forward.47} parent=0 // pred_check
    _
  $region19: #{vae1_forward.47} parent=0 // pred_check_branch
    %1314 = sbr.rel (0) target = $region21
  $region20: #{vae1_forward.47} parent=0 // pred_region
    _
  $region21: #{vae1_forward.47} parent=0 // pred_fallthru
    _

// kernel: vae1_forward.51
$region0: #{vae1_forward.51}
  #allocation0 [shape = 'u32[]', space=smem, size = 0x4, offset = 0x4, fixed_abs, tag = 'smem constant byte address 0x4 - core index']
  #allocation1 [shape = 'u32[144,128]{1,0:T(1,128)}', space=vmem, size = 0x12000, scoped, tag = 'internal scratch']
  %s0 = inlined_call_operand.vmem [shape: bf16[2048,32], index: 0, kind: input, shape index: {}]
  %s1 = inlined_call_operand.vmem [shape: bf16[32,8], index: 1, kind: input, shape index: {}]
  %s2 = inlined_call_operand.vmem [shape: f32[3,8], index: 2, kind: input, shape index: {}]
  %s3 = inlined_call_operand.vmem [shape: bf16[2048,8], index: 3, kind: output, shape index: {}]
  %s4 = sld [smem:[#allocation0]]
  $region45: #{vae1_forward.51} parent=0
    _
  %s6 = ssub.s32 1, %s4
  %s7 = scalar_select 0, %s6, %s4
  loop: start=0, step=1, limit=6
  $region2: #{vae1_forward.51} parent=0 // loop_pre_header
    _
  $region3: #{vae1_forward.51} parent=0 // loop_header
    %s9 = sphi 0, %s13
    %p10 = scmp.ge.s32.totalorder %s9, 6
    %s19 = sphi 0, %s21
    %s22 = sphi 0, %s19
    %s23 = sphi 0, %s22
    %s39 = sphi 0, %s23
    %s43 = sphi 0, %s43
    %s45 = sphi 0, %s43
    %s46 = sphi 0, %s45
    %s60 = sphi 0, %s46
    %s64 = sphi 0, %s64
    %s66 = sphi 0, %s64
    %s67 = sphi 0, %s66
    %s81 = sphi 0, %s67
    %s87 = sphi 0, %s89
    %s90 = sphi 0, %s87
    %s91 = sphi 0, %s90
    %s107 = sphi 0, %s91
  $region4: #{vae1_forward.51} parent=0 // loop_header_branch
    %12 = sbr.rel (%p10) target = $region8
  $region5: #{vae1_forward.51} parent=0 // loop_body
    %s14 = ssub.s32 %s9, 1
    %s15 = ssub.s32 %s9, 2
    %s16 = sadd.s32 %s9, 1
    %s17 = ssub.s32 %s9, %s16
    %p18 = scmp.eq.s32.totalorder %s17, 0
    %s20 = sadd.s32 %s19, 1
    %s21 = scalar_select %p18, %s19, %s20
    %p24 = pneg %p18
    %p25 = scmp.eq.s32.totalorder %s9, 3
    %p26 = por %p24, %p25
    %p27 = scmp.ne.s32.totalorder %s19, %s22
    %p28 = scmp.eq.s32.totalorder %s9, 0
    %p29 = por %p27, %p28
    %p30 = scmp.ne.s32.totalorder %s19, %s22
    %p31 = scmp.eq.s32.totalorder %s14, 3
    %p32 = por %p30, %p31
    %p33 = scmp.ne.s32.totalorder %s22, %s23
    %p34 = scmp.eq.s32.totalorder %s14, 0
    %p35 = por %p33, %p34
    %p36 = scmp.ne.s32.totalorder %s22, %s23
    %p37 = scmp.eq.s32.totalorder %s15, 3
    %p38 = por %p36, %p37
    %p40 = scmp.ne.s32.totalorder %s23, %s39
    %p41 = scmp.eq.s32.totalorder %s15, 0
    %p42 = por %p40, %p41
    %s44 = sadd.s32 %s43, 1
    %p47 = scmp.eq.s32.totalorder %s9, 3
    %p48 = scmp.ne.s32.totalorder %s43, %s45
    %p49 = scmp.eq.s32.totalorder %s9, 0
    %p50 = por %p48, %p49
    %p51 = scmp.ne.s32.totalorder %s43, %s45
    %p52 = scmp.eq.s32.totalorder %s14, 3
    %p53 = por %p51, %p52
    %p54 = scmp.ne.s32.totalorder %s45, %s46
    %p55 = scmp.eq.s32.totalorder %s14, 0
    %p56 = por %p54, %p55
    %p57 = scmp.ne.s32.totalorder %s45, %s46
    %p58 = scmp.eq.s32.totalorder %s15, 3
    %p59 = por %p57, %p58
    %p61 = scmp.ne.s32.totalorder %s46, %s60
    %p62 = scmp.eq.s32.totalorder %s15, 0
    %p63 = por %p61, %p62
    %s65 = sadd.s32 %s64, 1
    %p68 = scmp.eq.s32.totalorder %s9, 3
    %p69 = scmp.ne.s32.totalorder %s64, %s66
    %p70 = scmp.eq.s32.totalorder %s9, 0
    %p71 = por %p69, %p70
    %p72 = scmp.ne.s32.totalorder %s64, %s66
    %p73 = scmp.eq.s32.totalorder %s14, 3
    %p74 = por %p72, %p73
    %p75 = scmp.ne.s32.totalorder %s66, %s67
    %p76 = scmp.eq.s32.totalorder %s14, 0
    %p77 = por %p75, %p76
    %p78 = scmp.ne.s32.totalorder %s66, %s67
    %p79 = scmp.eq.s32.totalorder %s15, 3
    %p80 = por %p78, %p79
    %p82 = scmp.ne.s32.totalorder %s67, %s81
    %p83 = scmp.eq.s32.totalorder %s15, 0
    %p84 = por %p82, %p83
    %s85 = ssub.s32 %s9, %s16
    %p86 = scmp.eq.s32.totalorder %s85, 0
    %s88 = sadd.s32 %s87, 1
    %s89 = scalar_select %p86, %s87, %s88
    %p92 = pneg %p86
    %p93 = scmp.eq.s32.totalorder %s9, 3
    %p94 = por %p92, %p93
    %p95 = scmp.ne.s32.totalorder %s87, %s90
    %p96 = scmp.eq.s32.totalorder %s9, 0
    %p97 = por %p95, %p96
    %p98 = scmp.ne.s32.totalorder %s87, %s90
    %p99 = scmp.eq.s32.totalorder %s14, 3
    %p100 = por %p98, %p99
    %p101 = scmp.ne.s32.totalorder %s90, %s91
    %p102 = scmp.eq.s32.totalorder %s14, 0
    %p103 = por %p101, %p102
    %p104 = scmp.ne.s32.totalorder %s90, %s91
    %p105 = scmp.eq.s32.totalorder %s15, 3
    %p106 = por %p104, %p105
    %p108 = scmp.ne.s32.totalorder %s91, %s107
    %p109 = scmp.eq.s32.totalorder %s15, 0
    %p110 = por %p108, %p109
    %p111 = scmp.le.s32.totalorder 1, %s9
    %p112 = scmp.lt.s32.totalorder %s9, 5
    %p113 = pnand %p111, %p112
    %p114 = pneg %p113
    // Predicated region
    $region9: #{vae1_forward.51} parent=5 // pred_check
      _
    $region10: #{vae1_forward.51} parent=5 // pred_check_branch
      %116 = sbr.rel (%p113) target = $region12
    $region11: #{vae1_forward.51} parent=5 // pred_region
      %s117 = ssub.s32 %s9, 1
      // Predicated region
      $region13: #{vae1_forward.51} parent=11 // pred_check
        %p118 = pneg %p56
      $region14: #{vae1_forward.51} parent=11 // pred_check_branch
        %120 = sbr.rel (%p118) target = $region16
      $region15: #{vae1_forward.51} parent=11 // pred_region
        _
      $region16: #{vae1_forward.51} parent=11 // pred_fallthru
        _
      // Predicated region
      $region17: #{vae1_forward.51} parent=11 // pred_check
        %p121 = pneg %p77
      $region18: #{vae1_forward.51} parent=11 // pred_check_branch
        %123 = sbr.rel (%p121) target = $region20
      $region19: #{vae1_forward.51} parent=11 // pred_region
        _
      $region20: #{vae1_forward.51} parent=11 // pred_fallthru
        _
    $region12: #{vae1_forward.51} parent=5 // pred_fallthru
      _
    %p124 = scmp.lt.s32.totalorder %s9, 4
    // Predicated region
    $region21: #{vae1_forward.51} parent=5 // pred_check
      %p125 = pneg %p124
    $region22: #{vae1_forward.51} parent=5 // pred_check_branch
      %127 = sbr.rel (%p125) target = $region24
    $region23: #{vae1_forward.51} parent=5 // pred_region
      // Predicated region
      $region25: #{vae1_forward.51} parent=23 // pred_check
        %p128 = pneg %p29
      $region26: #{vae1_forward.51} parent=23 // pred_check_branch
        %130 = sbr.rel (%p128) target = $region28
      $region27: #{vae1_forward.51} parent=23 // pred_region
        %s131 = smul.u32 64, %s9
        %p132 = scmp.lt.s32.totalorder %s131, 255
        %s133 = scalar_select %p132, %s131, 255
        %s134 = smul.addr %s133, 4
        %s135 = scalar_lea.vmem %s0, %s134
        %s136 = smul.u32 64, %s9
      $region28: #{vae1_forward.51} parent=23 // pred_fallthru
        _
    $region24: #{vae1_forward.51} parent=5 // pred_fallthru
      _
    %p137 = scmp.le.s32.totalorder 1, %s9
    %p138 = scmp.lt.s32.totalorder %s9, 5
    %p139 = pnand %p137, %p138
    %p140 = pneg %p139
    // Predicated region
    $region29: #{vae1_forward.51} parent=5 // pred_check
      _
    $region30: #{vae1_forward.51} parent=5 // pred_check_branch
      %142 = sbr.rel (%p139) target = $region32
    $region31: #{vae1_forward.51} parent=5 // pred_region
      %s143 = ssub.s32 %s9, 1
      %s144 = smul.u32 64, %s14
      %p145 = scmp.lt.s32.totalorder %s144, 255
      %s146 = scalar_select %p145, %s144, 255
      %s147 = smul.addr %s146, 4
      %s148 = scalar_lea.vmem %s0, %s147
      %p149 = pneg %p35
      %p150 = pneg %p32
      %p151 = pneg %p56
      %p152 = pneg %p53
      %p153 = pneg %p77
      %p154 = pneg %p74
      %p155 = pneg %p103
      %p156 = pneg %p100
      %s157 = smul.u32 64, %s14
      %p158 = scmp.lt.s32.totalorder %s157, 255
      %s159 = scalar_select %p158, %s157, 255
      %s160 = smul.addr %s159, 4
      %s161 = scalar_lea.vmem %s3, %s160
      %s162 = smul.u32 64, %s14
      %p163 = scmp.lt.s32.totalorder %s162, 255
      %s164 = scalar_select %p163, %s162, 255
      %s165 = smul.addr %s164, 4
      %s166 = scalar_lea.vmem %s0, %s165
      %s167 = smul.u32 64, %s14
      %s168 = smul.u32 64, %s14
      %p169 = scmp.lt.s32.totalorder %s168, 255
      %s170 = scalar_select %p169, %s168, 255
      %s171 = smul.addr %s170, 4
      %s172 = scalar_lea.vmem %s3, %s171
      %s173 = smul.u32 64, %s14
      %v175 = vld [vmem:[%s166] sm:$0xf]
      %v176 = vld [vmem:[%s166 + $0x4] sm:$0xf]
      %v177 = vld [vmem:[%s166 + $0x8] sm:$0xf]
      %v178 = vld [vmem:[%s166 + $0xc] sm:$0xf]
      %v179 = vld [vmem:[%s166 + $0x10] sm:$0xf]
      %v180 = vld [vmem:[%s166 + $0x14] sm:$0xf]
      %v181 = vld [vmem:[%s166 + $0x18] sm:$0xf]
      %v182 = vld [vmem:[%s166 + $0x1c] sm:$0xf]
      %v183 = vld [vmem:[%s166 + $0x20] sm:$0xf]
      %v184 = vld [vmem:[%s166 + $0x24] sm:$0xf]
      %v185 = vld [vmem:[%s166 + $0x28] sm:$0xf]
      %v186 = vld [vmem:[%s166 + $0x2c] sm:$0xf]
      %v187 = vld [vmem:[%s166 + $0x30] sm:$0xf]
      %v188 = vld [vmem:[%s166 + $0x34] sm:$0xf]
      %v189 = vld [vmem:[%s166 + $0x38] sm:$0xf]
      %v190 = vld [vmem:[%s166 + $0x3c] sm:$0xf]
      %v191 = vld [vmem:[%s166 + $0x40] sm:$0xf]
      %v192 = vld [vmem:[%s166 + $0x44] sm:$0xf]
      %v193 = vld [vmem:[%s166 + $0x48] sm:$0xf]
      %v194 = vld [vmem:[%s166 + $0x4c] sm:$0xf]
      %v195 = vld [vmem:[%s166 + $0x50] sm:$0xf]
      %v196 = vld [vmem:[%s166 + $0x54] sm:$0xf]
      %v197 = vld [vmem:[%s166 + $0x58] sm:$0xf]
      %v198 = vld [vmem:[%s166 + $0x5c] sm:$0xf]
      %v199 = vld [vmem:[%s166 + $0x60] sm:$0xf]
      %v200 = vld [vmem:[%s166 + $0x64] sm:$0xf]
      %v201 = vld [vmem:[%s166 + $0x68] sm:$0xf]
      %v202 = vld [vmem:[%s166 + $0x6c] sm:$0xf]
      %v203 = vld [vmem:[%s166 + $0x70] sm:$0xf]
      %v204 = vld [vmem:[%s166 + $0x74] sm:$0xf]
      %v205 = vld [vmem:[%s166 + $0x78] sm:$0xf]
      %v206 = vld [vmem:[%s166 + $0x7c] sm:$0xf]
      %v207 = vld [vmem:[%s166 + $0x80] sm:$0xf]
      %v208 = vld [vmem:[%s166 + $0x84] sm:$0xf]
      %v209 = vld [vmem:[%s166 + $0x88] sm:$0xf]
      %v210 = vld [vmem:[%s166 + $0x8c] sm:$0xf]
      %v211 = vld [vmem:[%s166 + $0x90] sm:$0xf]
      %v212 = vld [vmem:[%s166 + $0x94] sm:$0xf]
      %v213 = vld [vmem:[%s166 + $0x98] sm:$0xf]
      %v214 = vld [vmem:[%s166 + $0x9c] sm:$0xf]
      %v215 = vld [vmem:[%s166 + $0xa0] sm:$0xf]
      %v216 = vld [vmem:[%s166 + $0xa4] sm:$0xf]
      %v217 = vld [vmem:[%s166 + $0xa8] sm:$0xf]
      %v218 = vld [vmem:[%s166 + $0xac] sm:$0xf]
      %v219 = vld [vmem:[%s166 + $0xb0] sm:$0xf]
      %v220 = vld [vmem:[%s166 + $0xb4] sm:$0xf]
      %v221 = vld [vmem:[%s166 + $0xb8] sm:$0xf]
      %v222 = vld [vmem:[%s166 + $0xbc] sm:$0xf]
      %v223 = vld [vmem:[%s166 + $0xc0] sm:$0xf]
      %v224 = vld [vmem:[%s166 + $0xc4] sm:$0xf]
      %v225 = vld [vmem:[%s166 + $0xc8] sm:$0xf]
      %v226 = vld [vmem:[%s166 + $0xcc] sm:$0xf]
      %v227 = vld [vmem:[%s166 + $0xd0] sm:$0xf]
      %v228 = vld [vmem:[%s166 + $0xd4] sm:$0xf]
      %v229 = vld [vmem:[%s166 + $0xd8] sm:$0xf]
      %v230 = vld [vmem:[%s166 + $0xdc] sm:$0xf]
      %v231 = vld [vmem:[%s166 + $0xe0] sm:$0xf]
      %v232 = vld [vmem:[%s166 + $0xe4] sm:$0xf]
      %v233 = vld [vmem:[%s166 + $0xe8] sm:$0xf]
      %v234 = vld [vmem:[%s166 + $0xec] sm:$0xf]
      %v235 = vld [vmem:[%s166 + $0xf0] sm:$0xf]
      %v236 = vld [vmem:[%s166 + $0xf4] sm:$0xf]
      %v237 = vld [vmem:[%s166 + $0xf8] sm:$0xf]
      %v238 = vld [vmem:[%s166 + $0xfc] sm:$0xf]
      %v239 = vld [vmem:[%s1] sm:$0xf]
      %v240 = vld [vmem:[%s1 + $0x4] sm:$0xf]
      %v241 = vld [vmem:[%s1 + $0x8] sm:$0xf]
      %v242 = vld [vmem:[%s1 + $0xc] sm:$0xf]
      %v243 = vld [vmem:[%s2] sm:$0x7]
      %v244 = vlaneseq
      %v245 = vshrl.u32 %v244, 7
      %v246 = vsub.s32 0, %v245
      %v247 = vrot.slane %v243, %v246
      %v312 = vunpack.c.l.b16 %v175
      %v313 = vunpack.c.l.b16 %v176
      %v314 = vunpack.c.l.b16 %v177
      %v315 = vunpack.c.l.b16 %v178
      %v316 = vunpack.c.l.b16 %v179
      %v317 = vunpack.c.l.b16 %v180
      %v318 = vunpack.c.l.b16 %v181
      %v319 = vunpack.c.l.b16 %v182
      %v320 = vunpack.c.l.b16 %v183
      %v321 = vunpack.c.l.b16 %v184
      %v322 = vunpack.c.l.b16 %v185
      %v323 = vunpack.c.l.b16 %v186
      %v324 = vunpack.c.l.b16 %v187
      %v325 = vunpack.c.l.b16 %v188
      %v326 = vunpack.c.l.b16 %v189
      %v327 = vunpack.c.l.b16 %v190
      %v328 = vunpack.c.l.b16 %v191
      %v329 = vunpack.c.l.b16 %v192
      %v330 = vunpack.c.l.b16 %v193
      %v331 = vunpack.c.l.b16 %v194
      %v332 = vunpack.c.l.b16 %v195
      %v333 = vunpack.c.l.b16 %v196
      %v334 = vunpack.c.l.b16 %v197
      %v335 = vunpack.c.l.b16 %v198
      %v336 = vunpack.c.l.b16 %v199
      %v337 = vunpack.c.l.b16 %v200
      %v338 = vunpack.c.l.b16 %v201
      %v339 = vunpack.c.l.b16 %v202
      %v340 = vunpack.c.l.b16 %v203
      %v341 = vunpack.c.l.b16 %v204
      %v342 = vunpack.c.l.b16 %v205
      %v343 = vunpack.c.l.b16 %v206
      %v344 = vunpack.c.l.b16 %v207
      %v345 = vunpack.c.l.b16 %v208
      %v346 = vunpack.c.l.b16 %v209
      %v347 = vunpack.c.l.b16 %v210
      %v348 = vunpack.c.l.b16 %v211
      %v349 = vunpack.c.l.b16 %v212
      %v350 = vunpack.c.l.b16 %v213
      %v351 = vunpack.c.l.b16 %v214
      %v352 = vunpack.c.l.b16 %v215
      %v353 = vunpack.c.l.b16 %v216
      %v354 = vunpack.c.l.b16 %v217
      %v355 = vunpack.c.l.b16 %v218
      %v356 = vunpack.c.l.b16 %v219
      %v357 = vunpack.c.l.b16 %v220
      %v358 = vunpack.c.l.b16 %v221
      %v359 = vunpack.c.l.b16 %v222
      %v360 = vunpack.c.l.b16 %v223
      %v361 = vunpack.c.l.b16 %v224
      %v362 = vunpack.c.l.b16 %v225
      %v363 = vunpack.c.l.b16 %v226
      %v364 = vunpack.c.l.b16 %v227
      %v365 = vunpack.c.l.b16 %v228
      %v366 = vunpack.c.l.b16 %v229
      %v367 = vunpack.c.l.b16 %v230
      %v368 = vunpack.c.l.b16 %v231
      %v369 = vunpack.c.l.b16 %v232
      %v370 = vunpack.c.l.b16 %v233
      %v371 = vunpack.c.l.b16 %v234
      %v372 = vunpack.c.l.b16 %v235
      %v373 = vunpack.c.l.b16 %v236
      %v374 = vunpack.c.l.b16 %v237
      %v375 = vunpack.c.l.b16 %v238
      %v376 = vpack.c.b16 %v313, %v312
      %v377 = vpack.c.b16 %v315, %v314
      %v378 = vpack.c.b16 %v317, %v316
      %v379 = vpack.c.b16 %v319, %v318
      %v380 = vpack.c.b16 %v321, %v320
      %v381 = vpack.c.b16 %v323, %v322
      %v382 = vpack.c.b16 %v325, %v324
      %v383 = vpack.c.b16 %v327, %v326
      %v384 = vpack.c.b16 %v329, %v328
      %v385 = vpack.c.b16 %v331, %v330
      %v386 = vpack.c.b16 %v333, %v332
      %v387 = vpack.c.b16 %v335, %v334
      %v388 = vpack.c.b16 %v337, %v336
      %v389 = vpack.c.b16 %v339, %v338
      %v390 = vpack.c.b16 %v341, %v340
      %v391 = vpack.c.b16 %v343, %v342
      %v392 = vpack.c.b16 %v345, %v344
      %v393 = vpack.c.b16 %v347, %v346
      %v394 = vpack.c.b16 %v349, %v348
      %v395 = vpack.c.b16 %v351, %v350
      %v396 = vpack.c.b16 %v353, %v352
      %v397 = vpack.c.b16 %v355, %v354
      %v398 = vpack.c.b16 %v357, %v356
      %v399 = vpack.c.b16 %v359, %v358
      %v400 = vpack.c.b16 %v361, %v360
      %v401 = vpack.c.b16 %v363, %v362
      %v402 = vpack.c.b16 %v365, %v364
      %v403 = vpack.c.b16 %v367, %v366
      %v404 = vpack.c.b16 %v369, %v368
      %v405 = vpack.c.b16 %v371, %v370
      %v406 = vpack.c.b16 %v373, %v372
      %v407 = vpack.c.b16 %v375, %v374
      %v412 = vunpack.c.l.b16 %v239
      %v413 = vunpack.c.l.b16 %v240
      %v414 = vunpack.c.l.b16 %v241
      %v415 = vunpack.c.l.b16 %v242
      %v416 = vpack.c.b16 %v413, %v412
      %v417 = vpack.c.b16 %v415, %v414
      %vm420 = vcmask 261120
      %v422 = vsel %vm420, %v376, 0
      %v425 = vsel %vm420, %v377, 0
      %v428 = vsel %vm420, %v378, 0
      %v431 = vsel %vm420, %v379, 0
      %v434 = vsel %vm420, %v380, 0
      %v437 = vsel %vm420, %v381, 0
      %v440 = vsel %vm420, %v382, 0
      %v443 = vsel %vm420, %v383, 0
      %v446 = vsel %vm420, %v384, 0
      %v449 = vsel %vm420, %v385, 0
      %v452 = vsel %vm420, %v386, 0
      %v455 = vsel %vm420, %v387, 0
      %v458 = vsel %vm420, %v388, 0
      %v461 = vsel %vm420, %v389, 0
      %v464 = vsel %vm420, %v390, 0
      %v467 = vsel %vm420, %v391, 0
      %v470 = vsel %vm420, %v392, 0
      %v473 = vsel %vm420, %v393, 0
      %v476 = vsel %vm420, %v394, 0
      %v479 = vsel %vm420, %v395, 0
      %v482 = vsel %vm420, %v396, 0
      %v485 = vsel %vm420, %v397, 0
      %v488 = vsel %vm420, %v398, 0
      %v491 = vsel %vm420, %v399, 0
      %v494 = vsel %vm420, %v400, 0
      %v497 = vsel %vm420, %v401, 0
      %v500 = vsel %vm420, %v402, 0
      %v503 = vsel %vm420, %v403, 0
      %v506 = vsel %vm420, %v404, 0
      %v509 = vsel %vm420, %v405, 0
      %v512 = vsel %vm420, %v406, 0
      %v515 = vsel %vm420, %v407, 0
      %517 = vmatprep.subr.bf16.mxu0 0
      %518 = vmatpush1.bf16.msra.mxu0 %v416
      %519 = vmatprep.subr.bf16.mxu0 0
      %520 = vmatpush1.bf16.msra.mxu0 %v417
      %521 = vmatprep.subr.bf16.mxu0 0
      %522 = vmatpush1.bf16.msra.mxu0 0
      %523 = vmatprep.subr.bf16.mxu0 0
      %524 = vmatpush1.bf16.msra.mxu0 0
      %525 = vmatprep.subr.bf16.mxu0 0
      %526 = vmatpush1.bf16.msra.mxu0 0
      %527 = vmatprep.subr.bf16.mxu0 0
      %528 = vmatpush1.bf16.msra.mxu0 0
      %529 = vmatprep.subr.bf16.mxu0 0
      %530 = vmatpush1.bf16.msra.mxu0 0
      %531 = vmatprep.subr.bf16.mxu0 0
      %532 = vmatpush1.bf16.msra.mxu0 0
      %533 = vmatprep.subr.bf16.mxu0 0
      %534 = vmatpush1.bf16.msra.mxu0 0
      %535 = vmatprep.subr.bf16.mxu0 0
      %536 = vmatpush1.bf16.msra.mxu0 0
      %537 = vmatprep.subr.bf16.mxu0 0
      %538 = vmatpush1.bf16.msra.mxu0 0
      %539 = vmatprep.subr.bf16.mxu0 0
      %540 = vmatpush1.bf16.msra.mxu0 0
      %541 = vmatprep.subr.bf16.mxu0 0
      %542 = vmatpush1.bf16.msra.mxu0 0
      %543 = vmatprep.subr.bf16.mxu0 0
      %544 = vmatpush1.bf16.msra.mxu0 0
      %545 = vmatprep.subr.bf16.mxu0 0
      %546 = vmatpush1.bf16.msra.mxu0 0
      %547 = vmatprep.subr.bf16.mxu0 0
      %548 = vmatpush1.bf16.msra.mxu0 0
      %549 = vmatprep.mubr.bf16.mxu0 0
      %550 = vmatmul.mubr.bf16.gmra.mrb[0].mxu0 %v422
      %v551 = vpop.f32.mrb[0].mxu0
      %v552 = vadd.f32 %v247, %v551
      %v553 = vpop.f32.mrb[0].mxu0
      %v554 = vpop.f32.mrb[0].mxu0
      %v555 = vadd.f32 %v247, %v554
      %v556 = vpop.f32.mrb[0].mxu0
      %557 = vmatprep.mubr.bf16.mxu0 0
      %558 = vmatmul.mubr.bf16.gmra.mrb[0].mxu0 %v425
      %v559 = vpop.f32.mrb[0].mxu0
      %v560 = vadd.f32 %v247, %v559
      %v561 = vpop.f32.mrb[0].mxu0
      %v562 = vpop.f32.mrb[0].mxu0
      %v563 = vadd.f32 %v247, %v562
      %v564 = vpop.f32.mrb[0].mxu0
      %565 = vmatprep.mubr.bf16.mxu0 0
      %566 = vmatmul.mubr.bf16.gmra.mrb[0].mxu0 %v428
      %v567 = vpop.f32.mrb[0].mxu0
      %v568 = vadd.f32 %v247, %v567
      %v569 = vpop.f32.mrb[0].mxu0
      %v570 = vpop.f32.mrb[0].mxu0
      %v571 = vadd.f32 %v247, %v570
      %v572 = vpop.f32.mrb[0].mxu0
      %573 = vmatprep.mubr.bf16.mxu0 0
      %574 = vmatmul.mubr.bf16.gmra.mrb[0].mxu0 %v431
      %v575 = vpop.f32.mrb[0].mxu0
      %v576 = vadd.f32 %v247, %v575
      %v577 = vpop.f32.mrb[0].mxu0
      %v578 = vpop.f32.mrb[0].mxu0
      %v579 = vadd.f32 %v247, %v578
      %v580 = vpop.f32.mrb[0].mxu0
      %581 = vmatprep.mubr.bf16.mxu0 0
      %582 = vmatmul.mubr.bf16.gmra.mrb[0].mxu0 %v434
      %v583 = vpop.f32.mrb[0].mxu0
      %v584 = vadd.f32 %v247, %v583
      %v585 = vpop.f32.mrb[0].mxu0
      %v586 = vpop.f32.mrb[0].mxu0
      %v587 = vadd.f32 %v247, %v586
      %v588 = vpop.f32.mrb[0].mxu0
      %589 = vmatprep.mubr.bf16.mxu0 0
      %590 = vmatmul.mubr.bf16.gmra.mrb[0].mxu0 %v437
      %v591 = vpop.f32.mrb[0].mxu0
      %v592 = vadd.f32 %v247, %v591
      %v593 = vpop.f32.mrb[0].mxu0
      %v594 = vpop.f32.mrb[0].mxu0
      %v595 = vadd.f32 %v247, %v594
      %v596 = vpop.f32.mrb[0].mxu0
      %597 = vmatprep.mubr.bf16.mxu0 0
      %598 = vmatmul.mubr.bf16.gmra.mrb[0].mxu0 %v440
      %v599 = vpop.f32.mrb[0].mxu0
      %v600 = vadd.f32 %v247, %v599
      %v601 = vpop.f32.mrb[0].mxu0
      %v602 = vpop.f32.mrb[0].mxu0
      %v603 = vadd.f32 %v247, %v602
      %v604 = vpop.f32.mrb[0].mxu0
      %605 = vmatprep.mubr.bf16.mxu0 0
      %606 = vmatmul.mubr.bf16.gmra.mrb[0].mxu0 %v443
      %v607 = vpop.f32.mrb[0].mxu0
      %v608 = vadd.f32 %v247, %v607
      %v609 = vpop.f32.mrb[0].mxu0
      %v610 = vpop.f32.mrb[0].mxu0
      %v611 = vadd.f32 %v247, %v610
      %v612 = vpop.f32.mrb[0].mxu0
      %613 = vmatprep.mubr.bf16.mxu0 0
      %614 = vmatmul.mubr.bf16.gmra.mrb[0].mxu0 %v446
      %v615 = vpop.f32.mrb[0].mxu0
      %v616 = vadd.f32 %v247, %v615
      %v617 = vpop.f32.mrb[0].mxu0
      %v618 = vpop.f32.mrb[0].mxu0
      %v619 = vadd.f32 %v247, %v618
      %v620 = vpop.f32.mrb[0].mxu0
      %621 = vmatprep.mubr.bf16.mxu0 0
      %622 = vmatmul.mubr.bf16.gmra.mrb[0].mxu0 %v449
      %v623 = vpop.f32.mrb[0].mxu0
      %v624 = vadd.f32 %v247, %v623
      %v625 = vpop.f32.mrb[0].mxu0
      %v626 = vpop.f32.mrb[0].mxu0
      %v627 = vadd.f32 %v247, %v626
      %v628 = vpop.f32.mrb[0].mxu0
      %629 = vmatprep.mubr.bf16.mxu0 0
      %630 = vmatmul.mubr.bf16.gmra.mrb[0].mxu0 %v452
      %v631 = vpop.f32.mrb[0].mxu0
      %v632 = vadd.f32 %v247, %v631
      %v633 = vpop.f32.mrb[0].mxu0
      %v634 = vpop.f32.mrb[0].mxu0
      %v635 = vadd.f32 %v247, %v634
      %v636 = vpop.f32.mrb[0].mxu0
      %637 = vmatprep.mubr.bf16.mxu0 0
      %638 = vmatmul.mubr.bf16.gmra.mrb[0].mxu0 %v455
      %v639 = vpop.f32.mrb[0].mxu0
      %v640 = vadd.f32 %v247, %v639
      %v641 = vpop.f32.mrb[0].mxu0
      %v642 = vpop.f32.mrb[0].mxu0
      %v643 = vadd.f32 %v247, %v642
      %v644 = vpop.f32.mrb[0].mxu0
      %645 = vmatprep.mubr.bf16.mxu0 0
      %646 = vmatmul.mubr.bf16.gmra.mrb[0].mxu0 %v458
      %v647 = vpop.f32.mrb[0].mxu0
      %v648 = vadd.f32 %v247, %v647
      %v649 = vpop.f32.mrb[0].mxu0
      %v650 = vpop.f32.mrb[0].mxu0
      %v651 = vadd.f32 %v247, %v650
      %v652 = vpop.f32.mrb[0].mxu0
      %653 = vmatprep.mubr.bf16.mxu0 0
      %654 = vmatmul.mubr.bf16.gmra.mrb[0].mxu0 %v461
      %v655 = vpop.f32.mrb[0].mxu0
      %v656 = vadd.f32 %v247, %v655
      %v657 = vpop.f32.mrb[0].mxu0
      %v658 = vpop.f32.mrb[0].mxu0
      %v659 = vadd.f32 %v247, %v658
      %v660 = vpop.f32.mrb[0].mxu0
      %661 = vmatprep.mubr.bf16.mxu0 0
      %662 = vmatmul.mubr.bf16.gmra.mrb[0].mxu0 %v464
      %v663 = vpop.f32.mrb[0].mxu0
      %v664 = vadd.f32 %v247, %v663
      %v665 = vpop.f32.mrb[0].mxu0
      %v666 = vpop.f32.mrb[0].mxu0
      %v667 = vadd.f32 %v247, %v666
      %v668 = vpop.f32.mrb[0].mxu0
      %669 = vmatprep.mubr.bf16.mxu0 0
      %670 = vmatmul.mubr.bf16.gmra.mrb[0].mxu0 %v467
      %v671 = vpop.f32.mrb[0].mxu0
      %v672 = vadd.f32 %v247, %v671
      %v673 = vpop.f32.mrb[0].mxu0
      %v674 = vpop.f32.mrb[0].mxu0
      %v675 = vadd.f32 %v247, %v674
      %v676 = vpop.f32.mrb[0].mxu0
      %677 = vmatprep.mubr.bf16.mxu0 0
      %678 = vmatmul.mubr.bf16.gmra.mrb[0].mxu0 %v470
      %v679 = vpop.f32.mrb[0].mxu0
      %v680 = vadd.f32 %v247, %v679
      %v681 = vpop.f32.mrb[0].mxu0
      %v682 = vpop.f32.mrb[0].mxu0
      %v683 = vadd.f32 %v247, %v682
      %v684 = vpop.f32.mrb[0].mxu0
      %685 = vmatprep.mubr.bf16.mxu0 0
      %686 = vmatmul.mubr.bf16.gmra.mrb[0].mxu0 %v473
      %v687 = vpop.f32.mrb[0].mxu0
      %v688 = vadd.f32 %v247, %v687
      %v689 = vpop.f32.mrb[0].mxu0
      %v690 = vpop.f32.mrb[0].mxu0
      %v691 = vadd.f32 %v247, %v690
      %v692 = vpop.f32.mrb[0].mxu0
      %693 = vmatprep.mubr.bf16.mxu0 0
      %694 = vmatmul.mubr.bf16.gmra.mrb[0].mxu0 %v476
      %v695 = vpop.f32.mrb[0].mxu0
      %v696 = vadd.f32 %v247, %v695
      %v697 = vpop.f32.mrb[0].mxu0
      %v698 = vpop.f32.mrb[0].mxu0
      %v699 = vadd.f32 %v247, %v698
      %v700 = vpop.f32.mrb[0].mxu0
      %701 = vmatprep.mubr.bf16.mxu0 0
      %702 = vmatmul.mubr.bf16.gmra.mrb[0].mxu0 %v479
      %v703 = vpop.f32.mrb[0].mxu0
      %v704 = vadd.f32 %v247, %v703
      %v705 = vpop.f32.mrb[0].mxu0
      %v706 = vpop.f32.mrb[0].mxu0
      %v707 = vadd.f32 %v247, %v706
      %v708 = vpop.f32.mrb[0].mxu0
      %709 = vmatprep.mubr.bf16.mxu0 0
      %710 = vmatmul.mubr.bf16.gmra.mrb[0].mxu0 %v482
      %v711 = vpop.f32.mrb[0].mxu0
      %v712 = vadd.f32 %v247, %v711
      %v713 = vpop.f32.mrb[0].mxu0
      %v714 = vpop.f32.mrb[0].mxu0
      %v715 = vadd.f32 %v247, %v714
      %v716 = vpop.f32.mrb[0].mxu0
      %717 = vmatprep.mubr.bf16.mxu0 0
      %718 = vmatmul.mubr.bf16.gmra.mrb[0].mxu0 %v485
      %v719 = vpop.f32.mrb[0].mxu0
      %v720 = vadd.f32 %v247, %v719
      %v721 = vpop.f32.mrb[0].mxu0
      %v722 = vpop.f32.mrb[0].mxu0
      %v723 = vadd.f32 %v247, %v722
      %v724 = vpop.f32.mrb[0].mxu0
      %725 = vmatprep.mubr.bf16.mxu0 0
      %726 = vmatmul.mubr.bf16.gmra.mrb[0].mxu0 %v488
      %v727 = vpop.f32.mrb[0].mxu0
      %v728 = vadd.f32 %v247, %v727
      %v729 = vpop.f32.mrb[0].mxu0
      %v730 = vpop.f32.mrb[0].mxu0
      %v731 = vadd.f32 %v247, %v730
      %v732 = vpop.f32.mrb[0].mxu0
      %733 = vmatprep.mubr.bf16.mxu0 0
      %734 = vmatmul.mubr.bf16.gmra.mrb[0].mxu0 %v491
      %v735 = vpop.f32.mrb[0].mxu0
      %v736 = vadd.f32 %v247, %v735
      %v737 = vpop.f32.mrb[0].mxu0
      %v738 = vpop.f32.mrb[0].mxu0
      %v739 = vadd.f32 %v247, %v738
      %v740 = vpop.f32.mrb[0].mxu0
      %741 = vmatprep.mubr.bf16.mxu0 0
      %742 = vmatmul.mubr.bf16.gmra.mrb[0].mxu0 %v494
      %v743 = vpop.f32.mrb[0].mxu0
      %v744 = vadd.f32 %v247, %v743
      %v745 = vpop.f32.mrb[0].mxu0
      %v746 = vpop.f32.mrb[0].mxu0
      %v747 = vadd.f32 %v247, %v746
      %v748 = vpop.f32.mrb[0].mxu0
      %749 = vmatprep.mubr.bf16.mxu0 0
      %750 = vmatmul.mubr.bf16.gmra.mrb[0].mxu0 %v497
      %v751 = vpop.f32.mrb[0].mxu0
      %v752 = vadd.f32 %v247, %v751
      %v753 = vpop.f32.mrb[0].mxu0
      %v754 = vpop.f32.mrb[0].mxu0
      %v755 = vadd.f32 %v247, %v754
      %v756 = vpop.f32.mrb[0].mxu0
      %757 = vmatprep.mubr.bf16.mxu0 0
      %758 = vmatmul.mubr.bf16.gmra.mrb[0].mxu0 %v500
      %v759 = vpop.f32.mrb[0].mxu0
      %v760 = vadd.f32 %v247, %v759
      %v761 = vpop.f32.mrb[0].mxu0
      %v762 = vpop.f32.mrb[0].mxu0
      %v763 = vadd.f32 %v247, %v762
      %v764 = vpop.f32.mrb[0].mxu0
      %765 = vmatprep.mubr.bf16.mxu0 0
      %766 = vmatmul.mubr.bf16.gmra.mrb[0].mxu0 %v503
      %v767 = vpop.f32.mrb[0].mxu0
      %v768 = vadd.f32 %v247, %v767
      %v769 = vpop.f32.mrb[0].mxu0
      %v770 = vpop.f32.mrb[0].mxu0
      %v771 = vadd.f32 %v247, %v770
      %v772 = vpop.f32.mrb[0].mxu0
      %773 = vmatprep.mubr.bf16.mxu0 0
      %774 = vmatmul.mubr.bf16.gmra.mrb[0].mxu0 %v506
      %v775 = vpop.f32.mrb[0].mxu0
      %v776 = vadd.f32 %v247, %v775
      %v777 = vpop.f32.mrb[0].mxu0
      %v778 = vpop.f32.mrb[0].mxu0
      %v779 = vadd.f32 %v247, %v778
      %v780 = vpop.f32.mrb[0].mxu0
      %781 = vmatprep.mubr.bf16.mxu0 0
      %782 = vmatmul.mubr.bf16.gmra.mrb[0].mxu0 %v509
      %v783 = vpop.f32.mrb[0].mxu0
      %v784 = vadd.f32 %v247, %v783
      %v785 = vpop.f32.mrb[0].mxu0
      %v786 = vpop.f32.mrb[0].mxu0
      %v787 = vadd.f32 %v247, %v786
      %v788 = vpop.f32.mrb[0].mxu0
      %789 = vmatprep.mubr.bf16.mxu0 0
      %790 = vmatmul.mubr.bf16.gmra.mrb[0].mxu0 %v512
      %v791 = vpop.f32.mrb[0].mxu0
      %v792 = vadd.f32 %v247, %v791
      %v793 = vpop.f32.mrb[0].mxu0
      %v794 = vpop.f32.mrb[0].mxu0
      %v795 = vadd.f32 %v247, %v794
      %v796 = vpop.f32.mrb[0].mxu0
      %797 = vmatprep.mubr.bf16.mxu0 0
      %798 = vmatmul.mubr.bf16.gmra.mrb[0].mxu0 %v515
      %v799 = vpop.f32.mrb[0].mxu0
      %v800 = vadd.f32 %v247, %v799
      %v801 = vpop.f32.mrb[0].mxu0
      %v802 = vpop.f32.mrb[0].mxu0
      %v803 = vadd.f32 %v247, %v802
      %v804 = vpop.f32.mrb[0].mxu0
      %805 = vdwg.mxu0
      %vm806 = vcmp.ge.f32.partialorder %v552, 0.0
      %vm807 = vcmp.ge.f32.partialorder %v555, 0.0
      %vm808 = vcmp.ge.f32.partialorder %v560, 0.0
      %vm809 = vcmp.ge.f32.partialorder %v563, 0.0
      %vm810 = vcmp.ge.f32.partialorder %v568, 0.0
      %vm811 = vcmp.ge.f32.partialorder %v571, 0.0
      %vm812 = vcmp.ge.f32.partialorder %v576, 0.0
      %vm813 = vcmp.ge.f32.partialorder %v579, 0.0
      %vm814 = vcmp.ge.f32.partialorder %v584, 0.0
      %vm815 = vcmp.ge.f32.partialorder %v587, 0.0
      %vm816 = vcmp.ge.f32.partialorder %v592, 0.0
      %vm817 = vcmp.ge.f32.partialorder %v595, 0.0
      %vm818 = vcmp.ge.f32.partialorder %v600, 0.0
      %vm819 = vcmp.ge.f32.partialorder %v603, 0.0
      %vm820 = vcmp.ge.f32.partialorder %v608, 0.0
      %vm821 = vcmp.ge.f32.partialorder %v611, 0.0
      %vm822 = vcmp.ge.f32.partialorder %v616, 0.0
      %vm823 = vcmp.ge.f32.partialorder %v619, 0.0
      %vm824 = vcmp.ge.f32.partialorder %v624, 0.0
      %vm825 = vcmp.ge.f32.partialorder %v627, 0.0
      %vm826 = vcmp.ge.f32.partialorder %v632, 0.0
      %vm827 = vcmp.ge.f32.partialorder %v635, 0.0
      %vm828 = vcmp.ge.f32.partialorder %v640, 0.0
      %vm829 = vcmp.ge.f32.partialorder %v643, 0.0
      %vm830 = vcmp.ge.f32.partialorder %v648, 0.0
      %vm831 = vcmp.ge.f32.partialorder %v651, 0.0
      %vm832 = vcmp.ge.f32.partialorder %v656, 0.0
      %vm833 = vcmp.ge.f32.partialorder %v659, 0.0
      %vm834 = vcmp.ge.f32.partialorder %v664, 0.0
      %vm835 = vcmp.ge.f32.partialorder %v667, 0.0
      %vm836 = vcmp.ge.f32.partialorder %v672, 0.0
      %vm837 = vcmp.ge.f32.partialorder %v675, 0.0
      %vm838 = vcmp.ge.f32.partialorder %v680, 0.0
      %vm839 = vcmp.ge.f32.partialorder %v683, 0.0
      %vm840 = vcmp.ge.f32.partialorder %v688, 0.0
      %vm841 = vcmp.ge.f32.partialorder %v691, 0.0
      %vm842 = vcmp.ge.f32.partialorder %v696, 0.0
      %vm843 = vcmp.ge.f32.partialorder %v699, 0.0
      %vm844 = vcmp.ge.f32.partialorder %v704, 0.0
      %vm845 = vcmp.ge.f32.partialorder %v707, 0.0
      %vm846 = vcmp.ge.f32.partialorder %v712, 0.0
      %vm847 = vcmp.ge.f32.partialorder %v715, 0.0
      %vm848 = vcmp.ge.f32.partialorder %v720, 0.0
      %vm849 = vcmp.ge.f32.partialorder %v723, 0.0
      %vm850 = vcmp.ge.f32.partialorder %v728, 0.0
      %vm851 = vcmp.ge.f32.partialorder %v731, 0.0
      %vm852 = vcmp.ge.f32.partialorder %v736, 0.0
      %vm853 = vcmp.ge.f32.partialorder %v739, 0.0
      %vm854 = vcmp.ge.f32.partialorder %v744, 0.0
      %vm855 = vcmp.ge.f32.partialorder %v747, 0.0
      %vm856 = vcmp.ge.f32.partialorder %v752, 0.0
      %vm857 = vcmp.ge.f32.partialorder %v755, 0.0
      %vm858 = vcmp.ge.f32.partialorder %v760, 0.0
      %vm859 = vcmp.ge.f32.partialorder %v763, 0.0
      %vm860 = vcmp.ge.f32.partialorder %v768, 0.0
      %vm861 = vcmp.ge.f32.partialorder %v771, 0.0
      %vm862 = vcmp.ge.f32.partialorder %v776, 0.0
      %vm863 = vcmp.ge.f32.partialorder %v779, 0.0
      %vm864 = vcmp.ge.f32.partialorder %v784, 0.0
      %vm865 = vcmp.ge.f32.partialorder %v787, 0.0
      %vm866 = vcmp.ge.f32.partialorder %v792, 0.0
      %vm867 = vcmp.ge.f32.partialorder %v795, 0.0
      %vm868 = vcmp.ge.f32.partialorder %v800, 0.0
      %vm869 = vcmp.ge.f32.partialorder %v803, 0.0
      %v870 = vmul.f32 %v552, 0.2
      %v871 = vmul.f32 %v555, 0.2
      %v872 = vmul.f32 %v560, 0.2
      %v873 = vmul.f32 %v563, 0.2
      %v874 = vmul.f32 %v568, 0.2
      %v875 = vmul.f32 %v571, 0.2
      %v876 = vmul.f32 %v576, 0.2
      %v877 = vmul.f32 %v579, 0.2
      %v878 = vmul.f32 %v584, 0.2
      %v879 = vmul.f32 %v587, 0.2
      %v880 = vmul.f32 %v592, 0.2
      %v881 = vmul.f32 %v595, 0.2
      %v882 = vmul.f32 %v600, 0.2
      %v883 = vmul.f32 %v603, 0.2
      %v884 = vmul.f32 %v608, 0.2
      %v885 = vmul.f32 %v611, 0.2
      %v886 = vmul.f32 %v616, 0.2
      %v887 = vmul.f32 %v619, 0.2
      %v888 = vmul.f32 %v624, 0.2
      %v889 = vmul.f32 %v627, 0.2
      %v890 = vmul.f32 %v632, 0.2
      %v891 = vmul.f32 %v635, 0.2
      %v892 = vmul.f32 %v640, 0.2
      %v893 = vmul.f32 %v643, 0.2
      %v894 = vmul.f32 %v648, 0.2
      %v895 = vmul.f32 %v651, 0.2
      %v896 = vmul.f32 %v656, 0.2
      %v897 = vmul.f32 %v659, 0.2
      %v898 = vmul.f32 %v664, 0.2
      %v899 = vmul.f32 %v667, 0.2
      %v900 = vmul.f32 %v672, 0.2
      %v901 = vmul.f32 %v675, 0.2
      %v902 = vmul.f32 %v680, 0.2
      %v903 = vmul.f32 %v683, 0.2
      %v904 = vmul.f32 %v688, 0.2
      %v905 = vmul.f32 %v691, 0.2
      %v906 = vmul.f32 %v696, 0.2
      %v907 = vmul.f32 %v699, 0.2
      %v908 = vmul.f32 %v704, 0.2
      %v909 = vmul.f32 %v707, 0.2
      %v910 = vmul.f32 %v712, 0.2
      %v911 = vmul.f32 %v715, 0.2
      %v912 = vmul.f32 %v720, 0.2
      %v913 = vmul.f32 %v723, 0.2
      %v914 = vmul.f32 %v728, 0.2
      %v915 = vmul.f32 %v731, 0.2
      %v916 = vmul.f32 %v736, 0.2
      %v917 = vmul.f32 %v739, 0.2
      %v918 = vmul.f32 %v744, 0.2
      %v919 = vmul.f32 %v747, 0.2
      %v920 = vmul.f32 %v752, 0.2
      %v921 = vmul.f32 %v755, 0.2
      %v922 = vmul.f32 %v760, 0.2
      %v923 = vmul.f32 %v763, 0.2
      %v924 = vmul.f32 %v768, 0.2
      %v925 = vmul.f32 %v771, 0.2
      %v926 = vmul.f32 %v776, 0.2
      %v927 = vmul.f32 %v779, 0.2
      %v928 = vmul.f32 %v784, 0.2
      %v929 = vmul.f32 %v787, 0.2
      %v930 = vmul.f32 %v792, 0.2
      %v931 = vmul.f32 %v795, 0.2
      %v932 = vmul.f32 %v800, 0.2
      %v933 = vmul.f32 %v803, 0.2
      %v934 = vsel %vm806, %v552, %v870
      %v935 = vsel %vm807, %v555, %v871
      %v936 = vsel %vm808, %v560, %v872
      %v937 = vsel %vm809, %v563, %v873
      %v938 = vsel %vm810, %v568, %v874
      %v939 = vsel %vm811, %v571, %v875
      %v940 = vsel %vm812, %v576, %v876
      %v941 = vsel %vm813, %v579, %v877
      %v942 = vsel %vm814, %v584, %v878
      %v943 = vsel %vm815, %v587, %v879
      %v944 = vsel %vm816, %v592, %v880
      %v945 = vsel %vm817, %v595, %v881
      %v946 = vsel %vm818, %v600, %v882
      %v947 = vsel %vm819, %v603, %v883
      %v948 = vsel %vm820, %v608, %v884
      %v949 = vsel %vm821, %v611, %v885
      %v950 = vsel %vm822, %v616, %v886
      %v951 = vsel %vm823, %v619, %v887
      %v952 = vsel %vm824, %v624, %v888
      %v953 = vsel %vm825, %v627, %v889
      %v954 = vsel %vm826, %v632, %v890
      %v955 = vsel %vm827, %v635, %v891
      %v956 = vsel %vm828, %v640, %v892
      %v957 = vsel %vm829, %v643, %v893
      %v958 = vsel %vm830, %v648, %v894
      %v959 = vsel %vm831, %v651, %v895
      %v960 = vsel %vm832, %v656, %v896
      %v961 = vsel %vm833, %v659, %v897
      %v962 = vsel %vm834, %v664, %v898
      %v963 = vsel %vm835, %v667, %v899
      %v964 = vsel %vm836, %v672, %v900
      %v965 = vsel %vm837, %v675, %v901
      %v966 = vsel %vm838, %v680, %v902
      %v967 = vsel %vm839, %v683, %v903
      %v968 = vsel %vm840, %v688, %v904
      %v969 = vsel %vm841, %v691, %v905
      %v970 = vsel %vm842, %v696, %v906
      %v971 = vsel %vm843, %v699, %v907
      %v972 = vsel %vm844, %v704, %v908
      %v973 = vsel %vm845, %v707, %v909
      %v974 = vsel %vm846, %v712, %v910
      %v975 = vsel %vm847, %v715, %v911
      %v976 = vsel %vm848, %v720, %v912
      %v977 = vsel %vm849, %v723, %v913
      %v978 = vsel %vm850, %v728, %v914
      %v979 = vsel %vm851, %v731, %v915
      %v980 = vsel %vm852, %v736, %v916
      %v981 = vsel %vm853, %v739, %v917
      %v982 = vsel %vm854, %v744, %v918
      %v983 = vsel %vm855, %v747, %v919
      %v984 = vsel %vm856, %v752, %v920
      %v985 = vsel %vm857, %v755, %v921
      %v986 = vsel %vm858, %v760, %v922
      %v987 = vsel %vm859, %v763, %v923
      %v988 = vsel %vm860, %v768, %v924
      %v989 = vsel %vm861, %v771, %v925
      %v990 = vsel %vm862, %v776, %v926
      %v991 = vsel %vm863, %v779, %v927
      %v992 = vsel %vm864, %v784, %v928
      %v993 = vsel %vm865, %v787, %v929
      %v994 = vsel %vm866, %v792, %v930
      %v995 = vsel %vm867, %v795, %v931
      %v996 = vsel %vm868, %v800, %v932
      %v997 = vsel %vm869, %v803, %v933
      %v998 = vlaneseq
      %v999 = vshrl.u32 %v998, 7
      %v1000 = vsub.s32 1, %v999
      %v1001 = vrot.slane %v243, %v1000
      %v1002 = vmul.f32 %v934, %v1001
      %v1003 = vmul.f32 %v935, %v1001
      %v1004 = vmul.f32 %v936, %v1001
      %v1005 = vmul.f32 %v937, %v1001
      %v1006 = vmul.f32 %v938, %v1001
      %v1007 = vmul.f32 %v939, %v1001
      %v1008 = vmul.f32 %v940, %v1001
      %v1009 = vmul.f32 %v941, %v1001
      %v1010 = vmul.f32 %v942, %v1001
      %v1011 = vmul.f32 %v943, %v1001
      %v1012 = vmul.f32 %v944, %v1001
      %v1013 = vmul.f32 %v945, %v1001
      %v1014 = vmul.f32 %v946, %v1001
      %v1015 = vmul.f32 %v947, %v1001
      %v1016 = vmul.f32 %v948, %v1001
      %v1017 = vmul.f32 %v949, %v1001
      %v1018 = vmul.f32 %v950, %v1001
      %v1019 = vmul.f32 %v951, %v1001
      %v1020 = vmul.f32 %v952, %v1001
      %v1021 = vmul.f32 %v953, %v1001
      %v1022 = vmul.f32 %v954, %v1001
      %v1023 = vmul.f32 %v955, %v1001
      %v1024 = vmul.f32 %v956, %v1001
      %v1025 = vmul.f32 %v957, %v1001
      %v1026 = vmul.f32 %v958, %v1001
      %v1027 = vmul.f32 %v959, %v1001
      %v1028 = vmul.f32 %v960, %v1001
      %v1029 = vmul.f32 %v961, %v1001
      %v1030 = vmul.f32 %v962, %v1001
      %v1031 = vmul.f32 %v963, %v1001
      %v1032 = vmul.f32 %v964, %v1001
      %v1033 = vmul.f32 %v965, %v1001
      %v1034 = vmul.f32 %v966, %v1001
      %v1035 = vmul.f32 %v967, %v1001
      %v1036 = vmul.f32 %v968, %v1001
      %v1037 = vmul.f32 %v969, %v1001
      %v1038 = vmul.f32 %v970, %v1001
      %v1039 = vmul.f32 %v971, %v1001
      %v1040 = vmul.f32 %v972, %v1001
      %v1041 = vmul.f32 %v973, %v1001
      %v1042 = vmul.f32 %v974, %v1001
      %v1043 = vmul.f32 %v975, %v1001
      %v1044 = vmul.f32 %v976, %v1001
      %v1045 = vmul.f32 %v977, %v1001
      %v1046 = vmul.f32 %v978, %v1001
      %v1047 = vmul.f32 %v979, %v1001
      %v1048 = vmul.f32 %v980, %v1001
      %v1049 = vmul.f32 %v981, %v1001
      %v1050 = vmul.f32 %v982, %v1001
      %v1051 = vmul.f32 %v983, %v1001
      %v1052 = vmul.f32 %v984, %v1001
      %v1053 = vmul.f32 %v985, %v1001
      %v1054 = vmul.f32 %v986, %v1001
      %v1055 = vmul.f32 %v987, %v1001
      %v1056 = vmul.f32 %v988, %v1001
      %v1057 = vmul.f32 %v989, %v1001
      %v1058 = vmul.f32 %v990, %v1001
      %v1059 = vmul.f32 %v991, %v1001
      %v1060 = vmul.f32 %v992, %v1001
      %v1061 = vmul.f32 %v993, %v1001
      %v1062 = vmul.f32 %v994, %v1001
      %v1063 = vmul.f32 %v995, %v1001
      %v1064 = vmul.f32 %v996, %v1001
      %v1065 = vmul.f32 %v997, %v1001
      %v1066 = vlaneseq
      %v1067 = vshrl.u32 %v1066, 7
      %v1068 = vsub.s32 2, %v1067
      %v1069 = vrot.slane %v243, %v1068
      %v1070 = vadd.f32 %v1002, %v1069
      %v1071 = vadd.f32 %v1003, %v1069
      %v1072 = vadd.f32 %v1004, %v1069
      %v1073 = vadd.f32 %v1005, %v1069
      %v1074 = vadd.f32 %v1006, %v1069
      %v1075 = vadd.f32 %v1007, %v1069
      %v1076 = vadd.f32 %v1008, %v1069
      %v1077 = vadd.f32 %v1009, %v1069
      %v1078 = vadd.f32 %v1010, %v1069
      %v1079 = vadd.f32 %v1011, %v1069
      %v1080 = vadd.f32 %v1012, %v1069
      %v1081 = vadd.f32 %v1013, %v1069
      %v1082 = vadd.f32 %v1014, %v1069
      %v1083 = vadd.f32 %v1015, %v1069
      %v1084 = vadd.f32 %v1016, %v1069
      %v1085 = vadd.f32 %v1017, %v1069
      %v1086 = vadd.f32 %v1018, %v1069
      %v1087 = vadd.f32 %v1019, %v1069
      %v1088 = vadd.f32 %v1020, %v1069
      %v1089 = vadd.f32 %v1021, %v1069
      %v1090 = vadd.f32 %v1022, %v1069
      %v1091 = vadd.f32 %v1023, %v1069
      %v1092 = vadd.f32 %v1024, %v1069
      %v1093 = vadd.f32 %v1025, %v1069
      %v1094 = vadd.f32 %v1026, %v1069
      %v1095 = vadd.f32 %v1027, %v1069
      %v1096 = vadd.f32 %v1028, %v1069
      %v1097 = vadd.f32 %v1029, %v1069
      %v1098 = vadd.f32 %v1030, %v1069
      %v1099 = vadd.f32 %v1031, %v1069
      %v1100 = vadd.f32 %v1032, %v1069
      %v1101 = vadd.f32 %v1033, %v1069
      %v1102 = vadd.f32 %v1034, %v1069
      %v1103 = vadd.f32 %v1035, %v1069
      %v1104 = vadd.f32 %v1036, %v1069
      %v1105 = vadd.f32 %v1037, %v1069
      %v1106 = vadd.f32 %v1038, %v1069
      %v1107 = vadd.f32 %v1039, %v1069
      %v1108 = vadd.f32 %v1040, %v1069
      %v1109 = vadd.f32 %v1041, %v1069
      %v1110 = vadd.f32 %v1042, %v1069
      %v1111 = vadd.f32 %v1043, %v1069
      %v1112 = vadd.f32 %v1044, %v1069
      %v1113 = vadd.f32 %v1045, %v1069
      %v1114 = vadd.f32 %v1046, %v1069
      %v1115 = vadd.f32 %v1047, %v1069
      %v1116 = vadd.f32 %v1048, %v1069
      %v1117 = vadd.f32 %v1049, %v1069
      %v1118 = vadd.f32 %v1050, %v1069
      %v1119 = vadd.f32 %v1051, %v1069
      %v1120 = vadd.f32 %v1052, %v1069
      %v1121 = vadd.f32 %v1053, %v1069
      %v1122 = vadd.f32 %v1054, %v1069
      %v1123 = vadd.f32 %v1055, %v1069
      %v1124 = vadd.f32 %v1056, %v1069
      %v1125 = vadd.f32 %v1057, %v1069
      %v1126 = vadd.f32 %v1058, %v1069
      %v1127 = vadd.f32 %v1059, %v1069
      %v1128 = vadd.f32 %v1060, %v1069
      %v1129 = vadd.f32 %v1061, %v1069
      %v1130 = vadd.f32 %v1062, %v1069
      %v1131 = vadd.f32 %v1063, %v1069
      %v1132 = vadd.f32 %v1064, %v1069
      %v1133 = vadd.f32 %v1065, %v1069
      %v1134 = vpack.c.bf16 %v1071, %v1070
      %v1135 = vpack.c.bf16 %v1073, %v1072
      %v1136 = vpack.c.bf16 %v1075, %v1074
      %v1137 = vpack.c.bf16 %v1077, %v1076
      %v1138 = vpack.c.bf16 %v1079, %v1078
      %v1139 = vpack.c.bf16 %v1081, %v1080
      %v1140 = vpack.c.bf16 %v1083, %v1082
      %v1141 = vpack.c.bf16 %v1085, %v1084
      %v1142 = vpack.c.bf16 %v1087, %v1086
      %v1143 = vpack.c.bf16 %v1089, %v1088
      %v1144 = vpack.c.bf16 %v1091, %v1090
      %v1145 = vpack.c.bf16 %v1093, %v1092
      %v1146 = vpack.c.bf16 %v1095, %v1094
      %v1147 = vpack.c.bf16 %v1097, %v1096
      %v1148 = vpack.c.bf16 %v1099, %v1098
      %v1149 = vpack.c.bf16 %v1101, %v1100
      %v1150 = vpack.c.bf16 %v1103, %v1102
      %v1151 = vpack.c.bf16 %v1105, %v1104
      %v1152 = vpack.c.bf16 %v1107, %v1106
      %v1153 = vpack.c.bf16 %v1109, %v1108
      %v1154 = vpack.c.bf16 %v1111, %v1110
      %v1155 = vpack.c.bf16 %v1113, %v1112
      %v1156 = vpack.c.bf16 %v1115, %v1114
      %v1157 = vpack.c.bf16 %v1117, %v1116
      %v1158 = vpack.c.bf16 %v1119, %v1118
      %v1159 = vpack.c.bf16 %v1121, %v1120
      %v1160 = vpack.c.bf16 %v1123, %v1122
      %v1161 = vpack.c.bf16 %v1125, %v1124
      %v1162 = vpack.c.bf16 %v1127, %v1126
      %v1163 = vpack.c.bf16 %v1129, %v1128
      %v1164 = vpack.c.bf16 %v1131, %v1130
      %v1165 = vpack.c.bf16 %v1133, %v1132
      %v1198 = vunpack.c.l.b16 %v1134
      %v1199 = vunpack.c.h.b16 %v1134
      %v1200 = vunpack.c.l.b16 %v1135
      %v1201 = vunpack.c.h.b16 %v1135
      %v1202 = vunpack.c.l.b16 %v1136
      %v1203 = vunpack.c.h.b16 %v1136
      %v1204 = vunpack.c.l.b16 %v1137
      %v1205 = vunpack.c.h.b16 %v1137
      %v1206 = vunpack.c.l.b16 %v1138
      %v1207 = vunpack.c.h.b16 %v1138
      %v1208 = vunpack.c.l.b16 %v1139
      %v1209 = vunpack.c.h.b16 %v1139
      %v1210 = vunpack.c.l.b16 %v1140
      %v1211 = vunpack.c.h.b16 %v1140
      %v1212 = vunpack.c.l.b16 %v1141
      %v1213 = vunpack.c.h.b16 %v1141
      %v1214 = vunpack.c.l.b16 %v1142
      %v1215 = vunpack.c.h.b16 %v1142
      %v1216 = vunpack.c.l.b16 %v1143
      %v1217 = vunpack.c.h.b16 %v1143
      %v1218 = vunpack.c.l.b16 %v1144
      %v1219 = vunpack.c.h.b16 %v1144
      %v1220 = vunpack.c.l.b16 %v1145
      %v1221 = vunpack.c.h.b16 %v1145
      %v1222 = vunpack.c.l.b16 %v1146
      %v1223 = vunpack.c.h.b16 %v1146
      %v1224 = vunpack.c.l.b16 %v1147
      %v1225 = vunpack.c.h.b16 %v1147
      %v1226 = vunpack.c.l.b16 %v1148
      %v1227 = vunpack.c.h.b16 %v1148
      %v1228 = vunpack.c.l.b16 %v1149
      %v1229 = vunpack.c.h.b16 %v1149
      %v1230 = vunpack.c.l.b16 %v1150
      %v1231 = vunpack.c.h.b16 %v1150
      %v1232 = vunpack.c.l.b16 %v1151
      %v1233 = vunpack.c.h.b16 %v1151
      %v1234 = vunpack.c.l.b16 %v1152
      %v1235 = vunpack.c.h.b16 %v1152
      %v1236 = vunpack.c.l.b16 %v1153
      %v1237 = vunpack.c.h.b16 %v1153
      %v1238 = vunpack.c.l.b16 %v1154
      %v1239 = vunpack.c.h.b16 %v1154
      %v1240 = vunpack.c.l.b16 %v1155
      %v1241 = vunpack.c.h.b16 %v1155
      %v1242 = vunpack.c.l.b16 %v1156
      %v1243 = vunpack.c.h.b16 %v1156
      %v1244 = vunpack.c.l.b16 %v1157
      %v1245 = vunpack.c.h.b16 %v1157
      %v1246 = vunpack.c.l.b16 %v1158
      %v1247 = vunpack.c.h.b16 %v1158
      %v1248 = vunpack.c.l.b16 %v1159
      %v1249 = vunpack.c.h.b16 %v1159
      %v1250 = vunpack.c.l.b16 %v1160
      %v1251 = vunpack.c.h.b16 %v1160
      %v1252 = vunpack.c.l.b16 %v1161
      %v1253 = vunpack.c.h.b16 %v1161
      %v1254 = vunpack.c.l.b16 %v1162
      %v1255 = vunpack.c.h.b16 %v1162
      %v1256 = vunpack.c.l.b16 %v1163
      %v1257 = vunpack.c.h.b16 %v1163
      %v1258 = vunpack.c.l.b16 %v1164
      %v1259 = vunpack.c.h.b16 %v1164
      %v1260 = vunpack.c.l.b16 %v1165
      %v1261 = vunpack.c.h.b16 %v1165
      %v1262 = vpack.c.b16 %v1198, %v1198
      %v1263 = vpack.c.b16 %v1199, %v1199
      %v1264 = vpack.c.b16 %v1200, %v1200
      %v1265 = vpack.c.b16 %v1201, %v1201
      %v1266 = vpack.c.b16 %v1202, %v1202
      %v1267 = vpack.c.b16 %v1203, %v1203
      %v1268 = vpack.c.b16 %v1204, %v1204
      %v1269 = vpack.c.b16 %v1205, %v1205
      %v1270 = vpack.c.b16 %v1206, %v1206
      %v1271 = vpack.c.b16 %v1207, %v1207
      %v1272 = vpack.c.b16 %v1208, %v1208
      %v1273 = vpack.c.b16 %v1209, %v1209
      %v1274 = vpack.c.b16 %v1210, %v1210
      %v1275 = vpack.c.b16 %v1211, %v1211
      %v1276 = vpack.c.b16 %v1212, %v1212
      %v1277 = vpack.c.b16 %v1213, %v1213
      %v1278 = vpack.c.b16 %v1214, %v1214
      %v1279 = vpack.c.b16 %v1215, %v1215
      %v1280 = vpack.c.b16 %v1216, %v1216
      %v1281 = vpack.c.b16 %v1217, %v1217
      %v1282 = vpack.c.b16 %v1218, %v1218
      %v1283 = vpack.c.b16 %v1219, %v1219
      %v1284 = vpack.c.b16 %v1220, %v1220
      %v1285 = vpack.c.b16 %v1221, %v1221
      %v1286 = vpack.c.b16 %v1222, %v1222
      %v1287 = vpack.c.b16 %v1223, %v1223
      %v1288 = vpack.c.b16 %v1224, %v1224
      %v1289 = vpack.c.b16 %v1225, %v1225
      %v1290 = vpack.c.b16 %v1226, %v1226
      %v1291 = vpack.c.b16 %v1227, %v1227
      %v1292 = vpack.c.b16 %v1228, %v1228
      %v1293 = vpack.c.b16 %v1229, %v1229
      %v1294 = vpack.c.b16 %v1230, %v1230
      %v1295 = vpack.c.b16 %v1231, %v1231
      %v1296 = vpack.c.b16 %v1232, %v1232
      %v1297 = vpack.c.b16 %v1233, %v1233
      %v1298 = vpack.c.b16 %v1234, %v1234
      %v1299 = vpack.c.b16 %v1235, %v1235
      %v1300 = vpack.c.b16 %v1236, %v1236
      %v1301 = vpack.c.b16 %v1237, %v1237
      %v1302 = vpack.c.b16 %v1238, %v1238
      %v1303 = vpack.c.b16 %v1239, %v1239
      %v1304 = vpack.c.b16 %v1240, %v1240
      %v1305 = vpack.c.b16 %v1241, %v1241
      %v1306 = vpack.c.b16 %v1242, %v1242
      %v1307 = vpack.c.b16 %v1243, %v1243
      %v1308 = vpack.c.b16 %v1244, %v1244
      %v1309 = vpack.c.b16 %v1245, %v1245
      %v1310 = vpack.c.b16 %v1246, %v1246
      %v1311 = vpack.c.b16 %v1247, %v1247
      %v1312 = vpack.c.b16 %v1248, %v1248
      %v1313 = vpack.c.b16 %v1249, %v1249
      %v1314 = vpack.c.b16 %v1250, %v1250
      %v1315 = vpack.c.b16 %v1251, %v1251
      %v1316 = vpack.c.b16 %v1252, %v1252
      %v1317 = vpack.c.b16 %v1253, %v1253
      %v1318 = vpack.c.b16 %v1254, %v1254
      %v1319 = vpack.c.b16 %v1255, %v1255
      %v1320 = vpack.c.b16 %v1256, %v1256
      %v1321 = vpack.c.b16 %v1257, %v1257
      %v1322 = vpack.c.b16 %v1258, %v1258
      %v1323 = vpack.c.b16 %v1259, %v1259
      %v1324 = vpack.c.b16 %v1260, %v1260
      %v1325 = vpack.c.b16 %v1261, %v1261
      %vm1390 = vcmask 60416
      %1391 = vst.msk [vmem:[%s172] sm:$0xf] %vm1390, %v1262
      %1392 = vst.msk [vmem:[%s172 + $0x4] sm:$0xf] %vm1390, %v1263
      %1393 = vst.msk [vmem:[%s172 + $0x8] sm:$0xf] %vm1390, %v1264
      %1394 = vst.msk [vmem:[%s172 + $0xc] sm:$0xf] %vm1390, %v1265
      %1395 = vst.msk [vmem:[%s172 + $0x10] sm:$0xf] %vm1390, %v1266
      %1396 = vst.msk [vmem:[%s172 + $0x14] sm:$0xf] %vm1390, %v1267
      %1397 = vst.msk [vmem:[%s172 + $0x18] sm:$0xf] %vm1390, %v1268
      %1398 = vst.msk [vmem:[%s172 + $0x1c] sm:$0xf] %vm1390, %v1269
      %1399 = vst.msk [vmem:[%s172 + $0x20] sm:$0xf] %vm1390, %v1270
      %1400 = vst.msk [vmem:[%s172 + $0x24] sm:$0xf] %vm1390, %v1271
      %1401 = vst.msk [vmem:[%s172 + $0x28] sm:$0xf] %vm1390, %v1272
      %1402 = vst.msk [vmem:[%s172 + $0x2c] sm:$0xf] %vm1390, %v1273
      %1403 = vst.msk [vmem:[%s172 + $0x30] sm:$0xf] %vm1390, %v1274
      %1404 = vst.msk [vmem:[%s172 + $0x34] sm:$0xf] %vm1390, %v1275
      %1405 = vst.msk [vmem:[%s172 + $0x38] sm:$0xf] %vm1390, %v1276
      %1406 = vst.msk [vmem:[%s172 + $0x3c] sm:$0xf] %vm1390, %v1277
      %1407 = vst.msk [vmem:[%s172 + $0x40] sm:$0xf] %vm1390, %v1278
      %1408 = vst.msk [vmem:[%s172 + $0x44] sm:$0xf] %vm1390, %v1279
      %1409 = vst.msk [vmem:[%s172 + $0x48] sm:$0xf] %vm1390, %v1280
      %1410 = vst.msk [vmem:[%s172 + $0x4c] sm:$0xf] %vm1390, %v1281
      %1411 = vst.msk [vmem:[%s172 + $0x50] sm:$0xf] %vm1390, %v1282
      %1412 = vst.msk [vmem:[%s172 + $0x54] sm:$0xf] %vm1390, %v1283
      %1413 = vst.msk [vmem:[%s172 + $0x58] sm:$0xf] %vm1390, %v1284
      %1414 = vst.msk [vmem:[%s172 + $0x5c] sm:$0xf] %vm1390, %v1285
      %1415 = vst.msk [vmem:[%s172 + $0x60] sm:$0xf] %vm1390, %v1286
      %1416 = vst.msk [vmem:[%s172 + $0x64] sm:$0xf] %vm1390, %v1287
      %1417 = vst.msk [vmem:[%s172 + $0x68] sm:$0xf] %vm1390, %v1288
      %1418 = vst.msk [vmem:[%s172 + $0x6c] sm:$0xf] %vm1390, %v1289
      %1419 = vst.msk [vmem:[%s172 + $0x70] sm:$0xf] %vm1390, %v1290
      %1420 = vst.msk [vmem:[%s172 + $0x74] sm:$0xf] %vm1390, %v1291
      %1421 = vst.msk [vmem:[%s172 + $0x78] sm:$0xf] %vm1390, %v1292
      %1422 = vst.msk [vmem:[%s172 + $0x7c] sm:$0xf] %vm1390, %v1293
      %1423 = vst.msk [vmem:[%s172 + $0x80] sm:$0xf] %vm1390, %v1294
      %1424 = vst.msk [vmem:[%s172 + $0x84] sm:$0xf] %vm1390, %v1295
      %1425 = vst.msk [vmem:[%s172 + $0x88] sm:$0xf] %vm1390, %v1296
      %1426 = vst.msk [vmem:[%s172 + $0x8c] sm:$0xf] %vm1390, %v1297
      %1427 = vst.msk [vmem:[%s172 + $0x90] sm:$0xf] %vm1390, %v1298
      %1428 = vst.msk [vmem:[%s172 + $0x94] sm:$0xf] %vm1390, %v1299
      %1429 = vst.msk [vmem:[%s172 + $0x98] sm:$0xf] %vm1390, %v1300
      %1430 = vst.msk [vmem:[%s172 + $0x9c] sm:$0xf] %vm1390, %v1301
      %1431 = vst.msk [vmem:[%s172 + $0xa0] sm:$0xf] %vm1390, %v1302
      %1432 = vst.msk [vmem:[%s172 + $0xa4] sm:$0xf] %vm1390, %v1303
      %1433 = vst.msk [vmem:[%s172 + $0xa8] sm:$0xf] %vm1390, %v1304
      %1434 = vst.msk [vmem:[%s172 + $0xac] sm:$0xf] %vm1390, %v1305
      %1435 = vst.msk [vmem:[%s172 + $0xb0] sm:$0xf] %vm1390, %v1306
      %1436 = vst.msk [vmem:[%s172 + $0xb4] sm:$0xf] %vm1390, %v1307
      %1437 = vst.msk [vmem:[%s172 + $0xb8] sm:$0xf] %vm1390, %v1308
      %1438 = vst.msk [vmem:[%s172 + $0xbc] sm:$0xf] %vm1390, %v1309
      %1439 = vst.msk [vmem:[%s172 + $0xc0] sm:$0xf] %vm1390, %v1310
      %1440 = vst.msk [vmem:[%s172 + $0xc4] sm:$0xf] %vm1390, %v1311
      %1441 = vst.msk [vmem:[%s172 + $0xc8] sm:$0xf] %vm1390, %v1312
      %1442 = vst.msk [vmem:[%s172 + $0xcc] sm:$0xf] %vm1390, %v1313
      %1443 = vst.msk [vmem:[%s172 + $0xd0] sm:$0xf] %vm1390, %v1314
      %1444 = vst.msk [vmem:[%s172 + $0xd4] sm:$0xf] %vm1390, %v1315
      %1445 = vst.msk [vmem:[%s172 + $0xd8] sm:$0xf] %vm1390, %v1316
      %1446 = vst.msk [vmem:[%s172 + $0xdc] sm:$0xf] %vm1390, %v1317
      %1447 = vst.msk [vmem:[%s172 + $0xe0] sm:$0xf] %vm1390, %v1318
      %1448 = vst.msk [vmem:[%s172 + $0xe4] sm:$0xf] %vm1390, %v1319
      %1449 = vst.msk [vmem:[%s172 + $0xe8] sm:$0xf] %vm1390, %v1320
      %1450 = vst.msk [vmem:[%s172 + $0xec] sm:$0xf] %vm1390, %v1321
      %1451 = vst.msk [vmem:[%s172 + $0xf0] sm:$0xf] %vm1390, %v1322
      %1452 = vst.msk [vmem:[%s172 + $0xf4] sm:$0xf] %vm1390, %v1323
      %1453 = vst.msk [vmem:[%s172 + $0xf8] sm:$0xf] %vm1390, %v1324
      %1454 = vst.msk [vmem:[%s172 + $0xfc] sm:$0xf] %vm1390, %v1325
      %s1455 = smul.u32 64, %s14
      %p1456 = scmp.lt.s32.totalorder %s1455, 255
      %s1457 = scalar_select %p1456, %s1455, 255
      %s1458 = smul.addr %s1457, 4
      %s1459 = scalar_lea.vmem %s3, %s1458
      // Predicated region
      $region33: #{vae1_forward.51} parent=31 // pred_check
        %p1460 = pneg %p100
      $region34: #{vae1_forward.51} parent=31 // pred_check_branch
        %1462 = sbr.rel (%p1460) target = $region36
      $region35: #{vae1_forward.51} parent=31 // pred_region
        %s1463 = smul.u32 64, %s14
      $region36: #{vae1_forward.51} parent=31 // pred_fallthru
        _
    $region32: #{vae1_forward.51} parent=5 // pred_fallthru
      _
    %p1464 = scmp.le.s32.totalorder 2, %s9
    // Predicated region
    $region37: #{vae1_forward.51} parent=5 // pred_check
      %p1465 = pneg %p1464
    $region38: #{vae1_forward.51} parent=5 // pred_check_branch
      %1467 = sbr.rel (%p1465) target = $region40
    $region39: #{vae1_forward.51} parent=5 // pred_region
      %s1468 = ssub.s32 %s9, 2
      // Predicated region
      $region41: #{vae1_forward.51} parent=39 // pred_check
        %p1469 = pneg %p106
      $region42: #{vae1_forward.51} parent=39 // pred_check_branch
        %1471 = sbr.rel (%p1469) target = $region44
      $region43: #{vae1_forward.51} parent=39 // pred_region
        %s1472 = smul.u32 64, %s15
        %p1473 = scmp.lt.s32.totalorder %s1472, 255
        %s1474 = scalar_select %p1473, %s1472, 255
        %s1475 = smul.addr %s1474, 4
        %s1476 = scalar_lea.vmem %s3, %s1475
      $region44: #{vae1_forward.51} parent=39 // pred_fallthru
        _
    $region40: #{vae1_forward.51} parent=5 // pred_fallthru
      _
  $region6: #{vae1_forward.51} parent=0 // loop_footer
    %s13 = sadd.s32 1, %s9
  $region7: #{vae1_forward.51} parent=0 // loop_footer_branch
    %8 = sbr.rel target = $region3
  $region8: #{vae1_forward.51} parent=0 // loop_exit
    _

// kernel: vae1_forward.55
$region0: #{vae1_forward.55}
  #allocation0 [shape = 'u32[]', space=smem, size = 0x4, offset = 0x4, fixed_abs, tag = 'smem constant byte address 0x4 - core index']
  #allocation1 [shape = 'u32[144,128]{1,0:T(1,128)}', space=vmem, size = 0x12000, scoped, tag = 'internal scratch']
  %s0 = inlined_call_operand.vmem [shape: bf16[8192,72], index: 0, kind: input, shape index: {}]
  %s1 = inlined_call_operand.vmem [shape: bf16[72,3], index: 1, kind: input, shape index: {}]
  %s2 = inlined_call_operand.vmem [shape: f32[3,3], index: 2, kind: input, shape index: {}]
  %s3 = inlined_call_operand.vmem [shape: f32[8192,3], index: 3, kind: output, shape index: {}]
  %s4 = sld [smem:[#allocation0]]
  $region45: #{vae1_forward.55} parent=0
    _
  %s6 = ssub.s32 1, %s4
  %s7 = scalar_select 0, %s6, %s4
  loop: start=0, step=1, limit=18
  $region2: #{vae1_forward.55} parent=0 // loop_pre_header
    _
  $region3: #{vae1_forward.55} parent=0 // loop_header
    %s9 = sphi 0, %s13
    %p10 = scmp.ge.s32.totalorder %s9, 18
    %s19 = sphi 0, %s21
    %s22 = sphi 0, %s19
    %s23 = sphi 0, %s22
    %s39 = sphi 0, %s23
    %s43 = sphi 0, %s43
    %s45 = sphi 0, %s43
    %s46 = sphi 0, %s45
    %s60 = sphi 0, %s46
    %s64 = sphi 0, %s64
    %s66 = sphi 0, %s64
    %s67 = sphi 0, %s66
    %s81 = sphi 0, %s67
    %s87 = sphi 0, %s89
    %s90 = sphi 0, %s87
    %s91 = sphi 0, %s90
    %s107 = sphi 0, %s91
  $region4: #{vae1_forward.55} parent=0 // loop_header_branch
    %12 = sbr.rel (%p10) target = $region8
  $region5: #{vae1_forward.55} parent=0 // loop_body
    %s14 = ssub.s32 %s9, 1
    %s15 = ssub.s32 %s9, 2
    %s16 = sadd.s32 %s9, 1
    %s17 = ssub.s32 %s9, %s16
    %p18 = scmp.eq.s32.totalorder %s17, 0
    %s20 = sadd.s32 %s19, 1
    %s21 = scalar_select %p18, %s19, %s20
    %p24 = pneg %p18
    %p25 = scmp.eq.s32.totalorder %s9, 15
    %p26 = por %p24, %p25
    %p27 = scmp.ne.s32.totalorder %s19, %s22
    %p28 = scmp.eq.s32.totalorder %s9, 0
    %p29 = por %p27, %p28
    %p30 = scmp.ne.s32.totalorder %s19, %s22
    %p31 = scmp.eq.s32.totalorder %s14, 15
    %p32 = por %p30, %p31
    %p33 = scmp.ne.s32.totalorder %s22, %s23
    %p34 = scmp.eq.s32.totalorder %s14, 0
    %p35 = por %p33, %p34
    %p36 = scmp.ne.s32.totalorder %s22, %s23
    %p37 = scmp.eq.s32.totalorder %s15, 15
    %p38 = por %p36, %p37
    %p40 = scmp.ne.s32.totalorder %s23, %s39
    %p41 = scmp.eq.s32.totalorder %s15, 0
    %p42 = por %p40, %p41
    %s44 = sadd.s32 %s43, 1
    %p47 = scmp.eq.s32.totalorder %s9, 15
    %p48 = scmp.ne.s32.totalorder %s43, %s45
    %p49 = scmp.eq.s32.totalorder %s9, 0
    %p50 = por %p48, %p49
    %p51 = scmp.ne.s32.totalorder %s43, %s45
    %p52 = scmp.eq.s32.totalorder %s14, 15
    %p53 = por %p51, %p52
    %p54 = scmp.ne.s32.totalorder %s45, %s46
    %p55 = scmp.eq.s32.totalorder %s14, 0
    %p56 = por %p54, %p55
    %p57 = scmp.ne.s32.totalorder %s45, %s46
    %p58 = scmp.eq.s32.totalorder %s15, 15
    %p59 = por %p57, %p58
    %p61 = scmp.ne.s32.totalorder %s46, %s60
    %p62 = scmp.eq.s32.totalorder %s15, 0
    %p63 = por %p61, %p62
    %s65 = sadd.s32 %s64, 1
    %p68 = scmp.eq.s32.totalorder %s9, 15
    %p69 = scmp.ne.s32.totalorder %s64, %s66
    %p70 = scmp.eq.s32.totalorder %s9, 0
    %p71 = por %p69, %p70
    %p72 = scmp.ne.s32.totalorder %s64, %s66
    %p73 = scmp.eq.s32.totalorder %s14, 15
    %p74 = por %p72, %p73
    %p75 = scmp.ne.s32.totalorder %s66, %s67
    %p76 = scmp.eq.s32.totalorder %s14, 0
    %p77 = por %p75, %p76
    %p78 = scmp.ne.s32.totalorder %s66, %s67
    %p79 = scmp.eq.s32.totalorder %s15, 15
    %p80 = por %p78, %p79
    %p82 = scmp.ne.s32.totalorder %s67, %s81
    %p83 = scmp.eq.s32.totalorder %s15, 0
    %p84 = por %p82, %p83
    %s85 = ssub.s32 %s9, %s16
    %p86 = scmp.eq.s32.totalorder %s85, 0
    %s88 = sadd.s32 %s87, 1
    %s89 = scalar_select %p86, %s87, %s88
    %p92 = pneg %p86
    %p93 = scmp.eq.s32.totalorder %s9, 15
    %p94 = por %p92, %p93
    %p95 = scmp.ne.s32.totalorder %s87, %s90
    %p96 = scmp.eq.s32.totalorder %s9, 0
    %p97 = por %p95, %p96
    %p98 = scmp.ne.s32.totalorder %s87, %s90
    %p99 = scmp.eq.s32.totalorder %s14, 15
    %p100 = por %p98, %p99
    %p101 = scmp.ne.s32.totalorder %s90, %s91
    %p102 = scmp.eq.s32.totalorder %s14, 0
    %p103 = por %p101, %p102
    %p104 = scmp.ne.s32.totalorder %s90, %s91
    %p105 = scmp.eq.s32.totalorder %s15, 15
    %p106 = por %p104, %p105
    %p108 = scmp.ne.s32.totalorder %s91, %s107
    %p109 = scmp.eq.s32.totalorder %s15, 0
    %p110 = por %p108, %p109
    %p111 = scmp.le.s32.totalorder 1, %s9
    %p112 = scmp.lt.s32.totalorder %s9, 17
    %p113 = pnand %p111, %p112
    %p114 = pneg %p113
    // Predicated region
    $region9: #{vae1_forward.55} parent=5 // pred_check
      _
    $region10: #{vae1_forward.55} parent=5 // pred_check_branch
      %116 = sbr.rel (%p113) target = $region12
    $region11: #{vae1_forward.55} parent=5 // pred_region
      %s117 = ssub.s32 %s9, 1
      // Predicated region
      $region13: #{vae1_forward.55} parent=11 // pred_check
        %p118 = pneg %p56
      $region14: #{vae1_forward.55} parent=11 // pred_check_branch
        %120 = sbr.rel (%p118) target = $region16
      $region15: #{vae1_forward.55} parent=11 // pred_region
        _
      $region16: #{vae1_forward.55} parent=11 // pred_fallthru
        _
      // Predicated region
      $region17: #{vae1_forward.55} parent=11 // pred_check
        %p121 = pneg %p77
      $region18: #{vae1_forward.55} parent=11 // pred_check_branch
        %123 = sbr.rel (%p121) target = $region20
      $region19: #{vae1_forward.55} parent=11 // pred_region
        _
      $region20: #{vae1_forward.55} parent=11 // pred_fallthru
        _
    $region12: #{vae1_forward.55} parent=5 // pred_fallthru
      _
    %p124 = scmp.lt.s32.totalorder %s9, 16
    // Predicated region
    $region21: #{vae1_forward.55} parent=5 // pred_check
      %p125 = pneg %p124
    $region22: #{vae1_forward.55} parent=5 // pred_check_branch
      %127 = sbr.rel (%p125) target = $region24
    $region23: #{vae1_forward.55} parent=5 // pred_region
      // Predicated region
      $region25: #{vae1_forward.55} parent=23 // pred_check
        %p128 = pneg %p29
      $region26: #{vae1_forward.55} parent=23 // pred_check_branch
        %130 = sbr.rel (%p128) target = $region28
      $region27: #{vae1_forward.55} parent=23 // pred_region
        %s131 = smul.u32 64, %s9
        %p132 = scmp.lt.s32.totalorder %s131, 1023
        %s133 = scalar_select %p132, %s131, 1023
        %s134 = smul.addr %s133, 4
        %s135 = scalar_lea.vmem %s0, %s134
        %s136 = smul.u32 64, %s9
      $region28: #{vae1_forward.55} parent=23 // pred_fallthru
        _
    $region24: #{vae1_forward.55} parent=5 // pred_fallthru
      _
    %p137 = scmp.le.s32.totalorder 1, %s9
    %p138 = scmp.lt.s32.totalorder %s9, 17
    %p139 = pnand %p137, %p138
    %p140 = pneg %p139
    // Predicated region
    $region29: #{vae1_forward.55} parent=5 // pred_check
      _
    $region30: #{vae1_forward.55} parent=5 // pred_check_branch
      %142 = sbr.rel (%p139) target = $region32
    $region31: #{vae1_forward.55} parent=5 // pred_region
      %s143 = ssub.s32 %s9, 1
      %s144 = smul.u32 64, %s14
      %p145 = scmp.lt.s32.totalorder %s144, 1023
      %s146 = scalar_select %p145, %s144, 1023
      %s147 = smul.addr %s146, 4
      %s148 = scalar_lea.vmem %s0, %s147
      %p149 = pneg %p35
      %p150 = pneg %p32
      %p151 = pneg %p56
      %p152 = pneg %p53
      %p153 = pneg %p77
      %p154 = pneg %p74
      %p155 = pneg %p103
      %p156 = pneg %p100
      %s157 = smul.u32 64, %s14
      %p158 = scmp.lt.s32.totalorder %s157, 1023
      %s159 = scalar_select %p158, %s157, 1023
      %s160 = smul.addr %s159, 8
      %s161 = scalar_lea.vmem %s3, %s160
      %s162 = smul.u32 64, %s14
      %p163 = scmp.lt.s32.totalorder %s162, 1023
      %s164 = scalar_select %p163, %s162, 1023
      %s165 = smul.addr %s164, 4
      %s166 = scalar_lea.vmem %s0, %s165
      %s167 = smul.u32 64, %s14
      %s168 = smul.u32 64, %s14
      %p169 = scmp.lt.s32.totalorder %s168, 1023
      %s170 = scalar_select %p169, %s168, 1023
      %s171 = smul.addr %s170, 8
      %s172 = scalar_lea.vmem %s3, %s171
      %s173 = smul.u32 64, %s14
      %v175 = vld [vmem:[%s166] sm:$0xf]
      %v176 = vld [vmem:[%s166 + $0x4] sm:$0xf]
      %v177 = vld [vmem:[%s166 + $0x8] sm:$0xf]
      %v178 = vld [vmem:[%s166 + $0xc] sm:$0xf]
      %v179 = vld [vmem:[%s166 + $0x10] sm:$0xf]
      %v180 = vld [vmem:[%s166 + $0x14] sm:$0xf]
      %v181 = vld [vmem:[%s166 + $0x18] sm:$0xf]
      %v182 = vld [vmem:[%s166 + $0x1c] sm:$0xf]
      %v183 = vld [vmem:[%s166 + $0x20] sm:$0xf]
      %v184 = vld [vmem:[%s166 + $0x24] sm:$0xf]
      %v185 = vld [vmem:[%s166 + $0x28] sm:$0xf]
      %v186 = vld [vmem:[%s166 + $0x2c] sm:$0xf]
      %v187 = vld [vmem:[%s166 + $0x30] sm:$0xf]
      %v188 = vld [vmem:[%s166 + $0x34] sm:$0xf]
      %v189 = vld [vmem:[%s166 + $0x38] sm:$0xf]
      %v190 = vld [vmem:[%s166 + $0x3c] sm:$0xf]
      %v191 = vld [vmem:[%s166 + $0x40] sm:$0xf]
      %v192 = vld [vmem:[%s166 + $0x44] sm:$0xf]
      %v193 = vld [vmem:[%s166 + $0x48] sm:$0xf]
      %v194 = vld [vmem:[%s166 + $0x4c] sm:$0xf]
      %v195 = vld [vmem:[%s166 + $0x50] sm:$0xf]
      %v196 = vld [vmem:[%s166 + $0x54] sm:$0xf]
      %v197 = vld [vmem:[%s166 + $0x58] sm:$0xf]
      %v198 = vld [vmem:[%s166 + $0x5c] sm:$0xf]
      %v199 = vld [vmem:[%s166 + $0x60] sm:$0xf]
      %v200 = vld [vmem:[%s166 + $0x64] sm:$0xf]
      %v201 = vld [vmem:[%s166 + $0x68] sm:$0xf]
      %v202 = vld [vmem:[%s166 + $0x6c] sm:$0xf]
      %v203 = vld [vmem:[%s166 + $0x70] sm:$0xf]
      %v204 = vld [vmem:[%s166 + $0x74] sm:$0xf]
      %v205 = vld [vmem:[%s166 + $0x78] sm:$0xf]
      %v206 = vld [vmem:[%s166 + $0x7c] sm:$0xf]
      %v207 = vld [vmem:[%s166 + $0x80] sm:$0xf]
      %v208 = vld [vmem:[%s166 + $0x84] sm:$0xf]
      %v209 = vld [vmem:[%s166 + $0x88] sm:$0xf]
      %v210 = vld [vmem:[%s166 + $0x8c] sm:$0xf]
      %v211 = vld [vmem:[%s166 + $0x90] sm:$0xf]
      %v212 = vld [vmem:[%s166 + $0x94] sm:$0xf]
      %v213 = vld [vmem:[%s166 + $0x98] sm:$0xf]
      %v214 = vld [vmem:[%s166 + $0x9c] sm:$0xf]
      %v215 = vld [vmem:[%s166 + $0xa0] sm:$0xf]
      %v216 = vld [vmem:[%s166 + $0xa4] sm:$0xf]
      %v217 = vld [vmem:[%s166 + $0xa8] sm:$0xf]
      %v218 = vld [vmem:[%s166 + $0xac] sm:$0xf]
      %v219 = vld [vmem:[%s166 + $0xb0] sm:$0xf]
      %v220 = vld [vmem:[%s166 + $0xb4] sm:$0xf]
      %v221 = vld [vmem:[%s166 + $0xb8] sm:$0xf]
      %v222 = vld [vmem:[%s166 + $0xbc] sm:$0xf]
      %v223 = vld [vmem:[%s166 + $0xc0] sm:$0xf]
      %v224 = vld [vmem:[%s166 + $0xc4] sm:$0xf]
      %v225 = vld [vmem:[%s166 + $0xc8] sm:$0xf]
      %v226 = vld [vmem:[%s166 + $0xcc] sm:$0xf]
      %v227 = vld [vmem:[%s166 + $0xd0] sm:$0xf]
      %v228 = vld [vmem:[%s166 + $0xd4] sm:$0xf]
      %v229 = vld [vmem:[%s166 + $0xd8] sm:$0xf]
      %v230 = vld [vmem:[%s166 + $0xdc] sm:$0xf]
      %v231 = vld [vmem:[%s166 + $0xe0] sm:$0xf]
      %v232 = vld [vmem:[%s166 + $0xe4] sm:$0xf]
      %v233 = vld [vmem:[%s166 + $0xe8] sm:$0xf]
      %v234 = vld [vmem:[%s166 + $0xec] sm:$0xf]
      %v235 = vld [vmem:[%s166 + $0xf0] sm:$0xf]
      %v236 = vld [vmem:[%s166 + $0xf4] sm:$0xf]
      %v237 = vld [vmem:[%s166 + $0xf8] sm:$0xf]
      %v238 = vld [vmem:[%s166 + $0xfc] sm:$0xf]
      %v239 = vld [vmem:[%s1] sm:$0xf]
      %v240 = vld [vmem:[%s1 + $0x4] sm:$0xf]
      %v241 = vld [vmem:[%s1 + $0x8] sm:$0xf]
      %v242 = vld [vmem:[%s1 + $0xc] sm:$0xf]
      %v243 = vld [vmem:[%s1 + $0x10] sm:$0xf]
      %v244 = vld [vmem:[%s1 + $0x14] sm:$0xf]
      %v245 = vld [vmem:[%s1 + $0x18] sm:$0xf]
      %v246 = vld [vmem:[%s1 + $0x1c] sm:$0xf]
      %v247 = vld [vmem:[%s1 + $0x20] sm:$0xf]
      %v248 = vld [vmem:[%s2] sm:$0x7]
      %v249 = vlaneseq
      %v250 = vshrl.u32 %v249, 7
      %v251 = vsub.s32 0, %v250
      %v252 = vrot.slane %v248, %v251
      %v317 = vunpack.c.l.b16 %v175
      %v318 = vunpack.c.l.b16 %v176
      %v319 = vunpack.c.l.b16 %v177
      %v320 = vunpack.c.l.b16 %v178
      %v321 = vunpack.c.l.b16 %v179
      %v322 = vunpack.c.l.b16 %v180
      %v323 = vunpack.c.l.b16 %v181
      %v324 = vunpack.c.l.b16 %v182
      %v325 = vunpack.c.l.b16 %v183
      %v326 = vunpack.c.l.b16 %v184
      %v327 = vunpack.c.l.b16 %v185
      %v328 = vunpack.c.l.b16 %v186
      %v329 = vunpack.c.l.b16 %v187
      %v330 = vunpack.c.l.b16 %v188
      %v331 = vunpack.c.l.b16 %v189
      %v332 = vunpack.c.l.b16 %v190
      %v333 = vunpack.c.l.b16 %v191
      %v334 = vunpack.c.l.b16 %v192
      %v335 = vunpack.c.l.b16 %v193
      %v336 = vunpack.c.l.b16 %v194
      %v337 = vunpack.c.l.b16 %v195
      %v338 = vunpack.c.l.b16 %v196
      %v339 = vunpack.c.l.b16 %v197
      %v340 = vunpack.c.l.b16 %v198
      %v341 = vunpack.c.l.b16 %v199
      %v342 = vunpack.c.l.b16 %v200
      %v343 = vunpack.c.l.b16 %v201
      %v344 = vunpack.c.l.b16 %v202
      %v345 = vunpack.c.l.b16 %v203
      %v346 = vunpack.c.l.b16 %v204
      %v347 = vunpack.c.l.b16 %v205
      %v348 = vunpack.c.l.b16 %v206
      %v349 = vunpack.c.l.b16 %v207
      %v350 = vunpack.c.l.b16 %v208
      %v351 = vunpack.c.l.b16 %v209
      %v352 = vunpack.c.l.b16 %v210
      %v353 = vunpack.c.l.b16 %v211
      %v354 = vunpack.c.l.b16 %v212
      %v355 = vunpack.c.l.b16 %v213
      %v356 = vunpack.c.l.b16 %v214
      %v357 = vunpack.c.l.b16 %v215
      %v358 = vunpack.c.l.b16 %v216
      %v359 = vunpack.c.l.b16 %v217
      %v360 = vunpack.c.l.b16 %v218
      %v361 = vunpack.c.l.b16 %v219
      %v362 = vunpack.c.l.b16 %v220
      %v363 = vunpack.c.l.b16 %v221
      %v364 = vunpack.c.l.b16 %v222
      %v365 = vunpack.c.l.b16 %v223
      %v366 = vunpack.c.l.b16 %v224
      %v367 = vunpack.c.l.b16 %v225
      %v368 = vunpack.c.l.b16 %v226
      %v369 = vunpack.c.l.b16 %v227
      %v370 = vunpack.c.l.b16 %v228
      %v371 = vunpack.c.l.b16 %v229
      %v372 = vunpack.c.l.b16 %v230
      %v373 = vunpack.c.l.b16 %v231
      %v374 = vunpack.c.l.b16 %v232
      %v375 = vunpack.c.l.b16 %v233
      %v376 = vunpack.c.l.b16 %v234
      %v377 = vunpack.c.l.b16 %v235
      %v378 = vunpack.c.l.b16 %v236
      %v379 = vunpack.c.l.b16 %v237
      %v380 = vunpack.c.l.b16 %v238
      %v381 = vpack.c.b16 %v318, %v317
      %v382 = vpack.c.b16 %v320, %v319
      %v383 = vpack.c.b16 %v322, %v321
      %v384 = vpack.c.b16 %v324, %v323
      %v385 = vpack.c.b16 %v326, %v325
      %v386 = vpack.c.b16 %v328, %v327
      %v387 = vpack.c.b16 %v330, %v329
      %v388 = vpack.c.b16 %v332, %v331
      %v389 = vpack.c.b16 %v334, %v333
      %v390 = vpack.c.b16 %v336, %v335
      %v391 = vpack.c.b16 %v338, %v337
      %v392 = vpack.c.b16 %v340, %v339
      %v393 = vpack.c.b16 %v342, %v341
      %v394 = vpack.c.b16 %v344, %v343
      %v395 = vpack.c.b16 %v346, %v345
      %v396 = vpack.c.b16 %v348, %v347
      %v397 = vpack.c.b16 %v350, %v349
      %v398 = vpack.c.b16 %v352, %v351
      %v399 = vpack.c.b16 %v354, %v353
      %v400 = vpack.c.b16 %v356, %v355
      %v401 = vpack.c.b16 %v358, %v357
      %v402 = vpack.c.b16 %v360, %v359
      %v403 = vpack.c.b16 %v362, %v361
      %v404 = vpack.c.b16 %v364, %v363
      %v405 = vpack.c.b16 %v366, %v365
      %v406 = vpack.c.b16 %v368, %v367
      %v407 = vpack.c.b16 %v370, %v369
      %v408 = vpack.c.b16 %v372, %v371
      %v409 = vpack.c.b16 %v374, %v373
      %v410 = vpack.c.b16 %v376, %v375
      %v411 = vpack.c.b16 %v378, %v377
      %v412 = vpack.c.b16 %v380, %v379
      %v422 = vunpack.c.l.b16 %v239
      %v423 = vunpack.c.l.b16 %v240
      %v424 = vunpack.c.l.b16 %v241
      %v425 = vunpack.c.l.b16 %v242
      %v426 = vunpack.c.l.b16 %v243
      %v427 = vunpack.c.l.b16 %v244
      %v428 = vunpack.c.l.b16 %v245
      %v429 = vunpack.c.l.b16 %v246
      %v430 = vunpack.c.l.b16 %v247
      %v431 = vpack.c.b16 %v423, %v422
      %v432 = vpack.c.b16 %v425, %v424
      %v433 = vpack.c.b16 %v427, %v426
      %v434 = vpack.c.b16 %v429, %v428
      %v435 = vpack.c.b16 %v430, %v430
      %vm440 = vcmask 588800
      %v442 = vsel %vm440, %v381, 0
      %v445 = vsel %vm440, %v382, 0
      %v448 = vsel %vm440, %v383, 0
      %v451 = vsel %vm440, %v384, 0
      %v454 = vsel %vm440, %v385, 0
      %v457 = vsel %vm440, %v386, 0
      %v460 = vsel %vm440, %v387, 0
      %v463 = vsel %vm440, %v388, 0
      %v466 = vsel %vm440, %v389, 0
      %v469 = vsel %vm440, %v390, 0
      %v472 = vsel %vm440, %v391, 0
      %v475 = vsel %vm440, %v392, 0
      %v478 = vsel %vm440, %v393, 0
      %v481 = vsel %vm440, %v394, 0
      %v484 = vsel %vm440, %v395, 0
      %v487 = vsel %vm440, %v396, 0
      %v490 = vsel %vm440, %v397, 0
      %v493 = vsel %vm440, %v398, 0
      %v496 = vsel %vm440, %v399, 0
      %v499 = vsel %vm440, %v400, 0
      %v502 = vsel %vm440, %v401, 0
      %v505 = vsel %vm440, %v402, 0
      %v508 = vsel %vm440, %v403, 0
      %v511 = vsel %vm440, %v404, 0
      %v514 = vsel %vm440, %v405, 0
      %v517 = vsel %vm440, %v406, 0
      %v520 = vsel %vm440, %v407, 0
      %v523 = vsel %vm440, %v408, 0
      %v526 = vsel %vm440, %v409, 0
      %v529 = vsel %vm440, %v410, 0
      %v532 = vsel %vm440, %v411, 0
      %v535 = vsel %vm440, %v412, 0
      %vm537 = vcmask 1043456
      %v539 = vsel %vm537, %v435, 0
      %541 = vmatprep.subr.bf16.mxu0 0
      %542 = vmatpush1.bf16.msra.mxu0 %v431
      %543 = vmatprep.subr.bf16.mxu0 0
      %544 = vmatpush1.bf16.msra.mxu0 %v432
      %545 = vmatprep.subr.bf16.mxu0 0
      %546 = vmatpush1.bf16.msra.mxu0 %v433
      %547 = vmatprep.subr.bf16.mxu0 0
      %548 = vmatpush1.bf16.msra.mxu0 %v434
      %549 = vmatprep.subr.bf16.mxu0 0
      %550 = vmatpush1.bf16.msra.mxu0 %v539
      %551 = vmatprep.subr.bf16.mxu0 0
      %552 = vmatpush1.bf16.msra.mxu0 0
      %553 = vmatprep.subr.bf16.mxu0 0
      %554 = vmatpush1.bf16.msra.mxu0 0
      %555 = vmatprep.subr.bf16.mxu0 0
      %556 = vmatpush1.bf16.msra.mxu0 0
      %557 = vmatprep.subr.bf16.mxu0 0
      %558 = vmatpush1.bf16.msra.mxu0 0
      %559 = vmatprep.subr.bf16.mxu0 0
      %560 = vmatpush1.bf16.msra.mxu0 0
      %561 = vmatprep.subr.bf16.mxu0 0
      %562 = vmatpush1.bf16.msra.mxu0 0
      %563 = vmatprep.subr.bf16.mxu0 0
      %564 = vmatpush1.bf16.msra.mxu0 0
      %565 = vmatprep.subr.bf16.mxu0 0
      %566 = vmatpush1.bf16.msra.mxu0 0
      %567 = vmatprep.subr.bf16.mxu0 0
      %568 = vmatpush1.bf16.msra.mxu0 0
      %569 = vmatprep.subr.bf16.mxu0 0
      %570 = vmatpush1.bf16.msra.mxu0 0
      %571 = vmatprep.subr.bf16.mxu0 0
      %572 = vmatpush1.bf16.msra.mxu0 0
      %573 = vmatprep.mubr.bf16.mxu0 0
      %574 = vmatmul.mubr.bf16.gmra.mrb[0].mxu0 %v442
      %v575 = vpop.f32.mrb[0].mxu0
      %v576 = vadd.f32 %v252, %v575
      %v577 = vpop.f32.mrb[0].mxu0
      %v578 = vpop.f32.mrb[0].mxu0
      %v579 = vadd.f32 %v252, %v578
      %v580 = vpop.f32.mrb[0].mxu0
      %581 = vmatprep.mubr.bf16.mxu0 0
      %582 = vmatmul.mubr.bf16.gmra.mrb[0].mxu0 %v445
      %v583 = vpop.f32.mrb[0].mxu0
      %v584 = vadd.f32 %v252, %v583
      %v585 = vpop.f32.mrb[0].mxu0
      %v586 = vpop.f32.mrb[0].mxu0
      %v587 = vadd.f32 %v252, %v586
      %v588 = vpop.f32.mrb[0].mxu0
      %589 = vmatprep.mubr.bf16.mxu0 0
      %590 = vmatmul.mubr.bf16.gmra.mrb[0].mxu0 %v448
      %v591 = vpop.f32.mrb[0].mxu0
      %v592 = vadd.f32 %v252, %v591
      %v593 = vpop.f32.mrb[0].mxu0
      %v594 = vpop.f32.mrb[0].mxu0
      %v595 = vadd.f32 %v252, %v594
      %v596 = vpop.f32.mrb[0].mxu0
      %597 = vmatprep.mubr.bf16.mxu0 0
      %598 = vmatmul.mubr.bf16.gmra.mrb[0].mxu0 %v451
      %v599 = vpop.f32.mrb[0].mxu0
      %v600 = vadd.f32 %v252, %v599
      %v601 = vpop.f32.mrb[0].mxu0
      %v602 = vpop.f32.mrb[0].mxu0
      %v603 = vadd.f32 %v252, %v602
      %v604 = vpop.f32.mrb[0].mxu0
      %605 = vmatprep.mubr.bf16.mxu0 0
      %606 = vmatmul.mubr.bf16.gmra.mrb[0].mxu0 %v454
      %v607 = vpop.f32.mrb[0].mxu0
      %v608 = vadd.f32 %v252, %v607
      %v609 = vpop.f32.mrb[0].mxu0
      %v610 = vpop.f32.mrb[0].mxu0
      %v611 = vadd.f32 %v252, %v610
      %v612 = vpop.f32.mrb[0].mxu0
      %613 = vmatprep.mubr.bf16.mxu0 0
      %614 = vmatmul.mubr.bf16.gmra.mrb[0].mxu0 %v457
      %v615 = vpop.f32.mrb[0].mxu0
      %v616 = vadd.f32 %v252, %v615
      %v617 = vpop.f32.mrb[0].mxu0
      %v618 = vpop.f32.mrb[0].mxu0
      %v619 = vadd.f32 %v252, %v618
      %v620 = vpop.f32.mrb[0].mxu0
      %621 = vmatprep.mubr.bf16.mxu0 0
      %622 = vmatmul.mubr.bf16.gmra.mrb[0].mxu0 %v460
      %v623 = vpop.f32.mrb[0].mxu0
      %v624 = vadd.f32 %v252, %v623
      %v625 = vpop.f32.mrb[0].mxu0
      %v626 = vpop.f32.mrb[0].mxu0
      %v627 = vadd.f32 %v252, %v626
      %v628 = vpop.f32.mrb[0].mxu0
      %629 = vmatprep.mubr.bf16.mxu0 0
      %630 = vmatmul.mubr.bf16.gmra.mrb[0].mxu0 %v463
      %v631 = vpop.f32.mrb[0].mxu0
      %v632 = vadd.f32 %v252, %v631
      %v633 = vpop.f32.mrb[0].mxu0
      %v634 = vpop.f32.mrb[0].mxu0
      %v635 = vadd.f32 %v252, %v634
      %v636 = vpop.f32.mrb[0].mxu0
      %637 = vmatprep.mubr.bf16.mxu0 0
      %638 = vmatmul.mubr.bf16.gmra.mrb[0].mxu0 %v466
      %v639 = vpop.f32.mrb[0].mxu0
      %v640 = vadd.f32 %v252, %v639
      %v641 = vpop.f32.mrb[0].mxu0
      %v642 = vpop.f32.mrb[0].mxu0
      %v643 = vadd.f32 %v252, %v642
      %v644 = vpop.f32.mrb[0].mxu0
      %645 = vmatprep.mubr.bf16.mxu0 0
      %646 = vmatmul.mubr.bf16.gmra.mrb[0].mxu0 %v469
      %v647 = vpop.f32.mrb[0].mxu0
      %v648 = vadd.f32 %v252, %v647
      %v649 = vpop.f32.mrb[0].mxu0
      %v650 = vpop.f32.mrb[0].mxu0
      %v651 = vadd.f32 %v252, %v650
      %v652 = vpop.f32.mrb[0].mxu0
      %653 = vmatprep.mubr.bf16.mxu0 0
      %654 = vmatmul.mubr.bf16.gmra.mrb[0].mxu0 %v472
      %v655 = vpop.f32.mrb[0].mxu0
      %v656 = vadd.f32 %v252, %v655
      %v657 = vpop.f32.mrb[0].mxu0
      %v658 = vpop.f32.mrb[0].mxu0
      %v659 = vadd.f32 %v252, %v658
      %v660 = vpop.f32.mrb[0].mxu0
      %661 = vmatprep.mubr.bf16.mxu0 0
      %662 = vmatmul.mubr.bf16.gmra.mrb[0].mxu0 %v475
      %v663 = vpop.f32.mrb[0].mxu0
      %v664 = vadd.f32 %v252, %v663
      %v665 = vpop.f32.mrb[0].mxu0
      %v666 = vpop.f32.mrb[0].mxu0
      %v667 = vadd.f32 %v252, %v666
      %v668 = vpop.f32.mrb[0].mxu0
      %669 = vmatprep.mubr.bf16.mxu0 0
      %670 = vmatmul.mubr.bf16.gmra.mrb[0].mxu0 %v478
      %v671 = vpop.f32.mrb[0].mxu0
      %v672 = vadd.f32 %v252, %v671
      %v673 = vpop.f32.mrb[0].mxu0
      %v674 = vpop.f32.mrb[0].mxu0
      %v675 = vadd.f32 %v252, %v674
      %v676 = vpop.f32.mrb[0].mxu0
      %677 = vmatprep.mubr.bf16.mxu0 0
      %678 = vmatmul.mubr.bf16.gmra.mrb[0].mxu0 %v481
      %v679 = vpop.f32.mrb[0].mxu0
      %v680 = vadd.f32 %v252, %v679
      %v681 = vpop.f32.mrb[0].mxu0
      %v682 = vpop.f32.mrb[0].mxu0
      %v683 = vadd.f32 %v252, %v682
      %v684 = vpop.f32.mrb[0].mxu0
      %685 = vmatprep.mubr.bf16.mxu0 0
      %686 = vmatmul.mubr.bf16.gmra.mrb[0].mxu0 %v484
      %v687 = vpop.f32.mrb[0].mxu0
      %v688 = vadd.f32 %v252, %v687
      %v689 = vpop.f32.mrb[0].mxu0
      %v690 = vpop.f32.mrb[0].mxu0
      %v691 = vadd.f32 %v252, %v690
      %v692 = vpop.f32.mrb[0].mxu0
      %693 = vmatprep.mubr.bf16.mxu0 0
      %694 = vmatmul.mubr.bf16.gmra.mrb[0].mxu0 %v487
      %v695 = vpop.f32.mrb[0].mxu0
      %v696 = vadd.f32 %v252, %v695
      %v697 = vpop.f32.mrb[0].mxu0
      %v698 = vpop.f32.mrb[0].mxu0
      %v699 = vadd.f32 %v252, %v698
      %v700 = vpop.f32.mrb[0].mxu0
      %701 = vmatprep.mubr.bf16.mxu0 0
      %702 = vmatmul.mubr.bf16.gmra.mrb[0].mxu0 %v490
      %v703 = vpop.f32.mrb[0].mxu0
      %v704 = vadd.f32 %v252, %v703
      %v705 = vpop.f32.mrb[0].mxu0
      %v706 = vpop.f32.mrb[0].mxu0
      %v707 = vadd.f32 %v252, %v706
      %v708 = vpop.f32.mrb[0].mxu0
      %709 = vmatprep.mubr.bf16.mxu0 0
      %710 = vmatmul.mubr.bf16.gmra.mrb[0].mxu0 %v493
      %v711 = vpop.f32.mrb[0].mxu0
      %v712 = vadd.f32 %v252, %v711
      %v713 = vpop.f32.mrb[0].mxu0
      %v714 = vpop.f32.mrb[0].mxu0
      %v715 = vadd.f32 %v252, %v714
      %v716 = vpop.f32.mrb[0].mxu0
      %717 = vmatprep.mubr.bf16.mxu0 0
      %718 = vmatmul.mubr.bf16.gmra.mrb[0].mxu0 %v496
      %v719 = vpop.f32.mrb[0].mxu0
      %v720 = vadd.f32 %v252, %v719
      %v721 = vpop.f32.mrb[0].mxu0
      %v722 = vpop.f32.mrb[0].mxu0
      %v723 = vadd.f32 %v252, %v722
      %v724 = vpop.f32.mrb[0].mxu0
      %725 = vmatprep.mubr.bf16.mxu0 0
      %726 = vmatmul.mubr.bf16.gmra.mrb[0].mxu0 %v499
      %v727 = vpop.f32.mrb[0].mxu0
      %v728 = vadd.f32 %v252, %v727
      %v729 = vpop.f32.mrb[0].mxu0
      %v730 = vpop.f32.mrb[0].mxu0
      %v731 = vadd.f32 %v252, %v730
      %v732 = vpop.f32.mrb[0].mxu0
      %733 = vmatprep.mubr.bf16.mxu0 0
      %734 = vmatmul.mubr.bf16.gmra.mrb[0].mxu0 %v502
      %v735 = vpop.f32.mrb[0].mxu0
      %v736 = vadd.f32 %v252, %v735
      %v737 = vpop.f32.mrb[0].mxu0
      %v738 = vpop.f32.mrb[0].mxu0
      %v739 = vadd.f32 %v252, %v738
      %v740 = vpop.f32.mrb[0].mxu0
      %741 = vmatprep.mubr.bf16.mxu0 0
      %742 = vmatmul.mubr.bf16.gmra.mrb[0].mxu0 %v505
      %v743 = vpop.f32.mrb[0].mxu0
      %v744 = vadd.f32 %v252, %v743
      %v745 = vpop.f32.mrb[0].mxu0
      %v746 = vpop.f32.mrb[0].mxu0
      %v747 = vadd.f32 %v252, %v746
      %v748 = vpop.f32.mrb[0].mxu0
      %749 = vmatprep.mubr.bf16.mxu0 0
      %750 = vmatmul.mubr.bf16.gmra.mrb[0].mxu0 %v508
      %v751 = vpop.f32.mrb[0].mxu0
      %v752 = vadd.f32 %v252, %v751
      %v753 = vpop.f32.mrb[0].mxu0
      %v754 = vpop.f32.mrb[0].mxu0
      %v755 = vadd.f32 %v252, %v754
      %v756 = vpop.f32.mrb[0].mxu0
      %757 = vmatprep.mubr.bf16.mxu0 0
      %758 = vmatmul.mubr.bf16.gmra.mrb[0].mxu0 %v511
      %v759 = vpop.f32.mrb[0].mxu0
      %v760 = vadd.f32 %v252, %v759
      %v761 = vpop.f32.mrb[0].mxu0
      %v762 = vpop.f32.mrb[0].mxu0
      %v763 = vadd.f32 %v252, %v762
      %v764 = vpop.f32.mrb[0].mxu0
      %765 = vmatprep.mubr.bf16.mxu0 0
      %766 = vmatmul.mubr.bf16.gmra.mrb[0].mxu0 %v514
      %v767 = vpop.f32.mrb[0].mxu0
      %v768 = vadd.f32 %v252, %v767
      %v769 = vpop.f32.mrb[0].mxu0
      %v770 = vpop.f32.mrb[0].mxu0
      %v771 = vadd.f32 %v252, %v770
      %v772 = vpop.f32.mrb[0].mxu0
      %773 = vmatprep.mubr.bf16.mxu0 0
      %774 = vmatmul.mubr.bf16.gmra.mrb[0].mxu0 %v517
      %v775 = vpop.f32.mrb[0].mxu0
      %v776 = vadd.f32 %v252, %v775
      %v777 = vpop.f32.mrb[0].mxu0
      %v778 = vpop.f32.mrb[0].mxu0
      %v779 = vadd.f32 %v252, %v778
      %v780 = vpop.f32.mrb[0].mxu0
      %781 = vmatprep.mubr.bf16.mxu0 0
      %782 = vmatmul.mubr.bf16.gmra.mrb[0].mxu0 %v520
      %v783 = vpop.f32.mrb[0].mxu0
      %v784 = vadd.f32 %v252, %v783
      %v785 = vpop.f32.mrb[0].mxu0
      %v786 = vpop.f32.mrb[0].mxu0
      %v787 = vadd.f32 %v252, %v786
      %v788 = vpop.f32.mrb[0].mxu0
      %789 = vmatprep.mubr.bf16.mxu0 0
      %790 = vmatmul.mubr.bf16.gmra.mrb[0].mxu0 %v523
      %v791 = vpop.f32.mrb[0].mxu0
      %v792 = vadd.f32 %v252, %v791
      %v793 = vpop.f32.mrb[0].mxu0
      %v794 = vpop.f32.mrb[0].mxu0
      %v795 = vadd.f32 %v252, %v794
      %v796 = vpop.f32.mrb[0].mxu0
      %797 = vmatprep.mubr.bf16.mxu0 0
      %798 = vmatmul.mubr.bf16.gmra.mrb[0].mxu0 %v526
      %v799 = vpop.f32.mrb[0].mxu0
      %v800 = vadd.f32 %v252, %v799
      %v801 = vpop.f32.mrb[0].mxu0
      %v802 = vpop.f32.mrb[0].mxu0
      %v803 = vadd.f32 %v252, %v802
      %v804 = vpop.f32.mrb[0].mxu0
      %805 = vmatprep.mubr.bf16.mxu0 0
      %806 = vmatmul.mubr.bf16.gmra.mrb[0].mxu0 %v529
      %v807 = vpop.f32.mrb[0].mxu0
      %v808 = vadd.f32 %v252, %v807
      %v809 = vpop.f32.mrb[0].mxu0
      %v810 = vpop.f32.mrb[0].mxu0
      %v811 = vadd.f32 %v252, %v810
      %v812 = vpop.f32.mrb[0].mxu0
      %813 = vmatprep.mubr.bf16.mxu0 0
      %814 = vmatmul.mubr.bf16.gmra.mrb[0].mxu0 %v532
      %v815 = vpop.f32.mrb[0].mxu0
      %v816 = vadd.f32 %v252, %v815
      %v817 = vpop.f32.mrb[0].mxu0
      %v818 = vpop.f32.mrb[0].mxu0
      %v819 = vadd.f32 %v252, %v818
      %v820 = vpop.f32.mrb[0].mxu0
      %821 = vmatprep.mubr.bf16.mxu0 0
      %822 = vmatmul.mubr.bf16.gmra.mrb[0].mxu0 %v535
      %v823 = vpop.f32.mrb[0].mxu0
      %v824 = vadd.f32 %v252, %v823
      %v825 = vpop.f32.mrb[0].mxu0
      %v826 = vpop.f32.mrb[0].mxu0
      %v827 = vadd.f32 %v252, %v826
      %v828 = vpop.f32.mrb[0].mxu0
      %829 = vdwg.mxu0
      %v830 = vlaneseq
      %v831 = vshrl.u32 %v830, 7
      %v832 = vsub.s32 1, %v831
      %v833 = vrot.slane %v248, %v832
      %v834 = vmul.f32 %v576, %v833
      %v835 = vmul.f32 %v579, %v833
      %v836 = vmul.f32 %v584, %v833
      %v837 = vmul.f32 %v587, %v833
      %v838 = vmul.f32 %v592, %v833
      %v839 = vmul.f32 %v595, %v833
      %v840 = vmul.f32 %v600, %v833
      %v841 = vmul.f32 %v603, %v833
      %v842 = vmul.f32 %v608, %v833
      %v843 = vmul.f32 %v611, %v833
      %v844 = vmul.f32 %v616, %v833
      %v845 = vmul.f32 %v619, %v833
      %v846 = vmul.f32 %v624, %v833
      %v847 = vmul.f32 %v627, %v833
      %v848 = vmul.f32 %v632, %v833
      %v849 = vmul.f32 %v635, %v833
      %v850 = vmul.f32 %v640, %v833
      %v851 = vmul.f32 %v643, %v833
      %v852 = vmul.f32 %v648, %v833
      %v853 = vmul.f32 %v651, %v833
      %v854 = vmul.f32 %v656, %v833
      %v855 = vmul.f32 %v659, %v833
      %v856 = vmul.f32 %v664, %v833
      %v857 = vmul.f32 %v667, %v833
      %v858 = vmul.f32 %v672, %v833
      %v859 = vmul.f32 %v675, %v833
      %v860 = vmul.f32 %v680, %v833
      %v861 = vmul.f32 %v683, %v833
      %v862 = vmul.f32 %v688, %v833
      %v863 = vmul.f32 %v691, %v833
      %v864 = vmul.f32 %v696, %v833
      %v865 = vmul.f32 %v699, %v833
      %v866 = vmul.f32 %v704, %v833
      %v867 = vmul.f32 %v707, %v833
      %v868 = vmul.f32 %v712, %v833
      %v869 = vmul.f32 %v715, %v833
      %v870 = vmul.f32 %v720, %v833
      %v871 = vmul.f32 %v723, %v833
      %v872 = vmul.f32 %v728, %v833
      %v873 = vmul.f32 %v731, %v833
      %v874 = vmul.f32 %v736, %v833
      %v875 = vmul.f32 %v739, %v833
      %v876 = vmul.f32 %v744, %v833
      %v877 = vmul.f32 %v747, %v833
      %v878 = vmul.f32 %v752, %v833
      %v879 = vmul.f32 %v755, %v833
      %v880 = vmul.f32 %v760, %v833
      %v881 = vmul.f32 %v763, %v833
      %v882 = vmul.f32 %v768, %v833
      %v883 = vmul.f32 %v771, %v833
      %v884 = vmul.f32 %v776, %v833
      %v885 = vmul.f32 %v779, %v833
      %v886 = vmul.f32 %v784, %v833
      %v887 = vmul.f32 %v787, %v833
      %v888 = vmul.f32 %v792, %v833
      %v889 = vmul.f32 %v795, %v833
      %v890 = vmul.f32 %v800, %v833
      %v891 = vmul.f32 %v803, %v833
      %v892 = vmul.f32 %v808, %v833
      %v893 = vmul.f32 %v811, %v833
      %v894 = vmul.f32 %v816, %v833
      %v895 = vmul.f32 %v819, %v833
      %v896 = vmul.f32 %v824, %v833
      %v897 = vmul.f32 %v827, %v833
      %v898 = vlaneseq
      %v899 = vshrl.u32 %v898, 7
      %v900 = vsub.s32 2, %v899
      %v901 = vrot.slane %v248, %v900
      %v902 = vadd.f32 %v834, %v901
      %v903 = vadd.f32 %v835, %v901
      %v904 = vadd.f32 %v836, %v901
      %v905 = vadd.f32 %v837, %v901
      %v906 = vadd.f32 %v838, %v901
      %v907 = vadd.f32 %v839, %v901
      %v908 = vadd.f32 %v840, %v901
      %v909 = vadd.f32 %v841, %v901
      %v910 = vadd.f32 %v842, %v901
      %v911 = vadd.f32 %v843, %v901
      %v912 = vadd.f32 %v844, %v901
      %v913 = vadd.f32 %v845, %v901
      %v914 = vadd.f32 %v846, %v901
      %v915 = vadd.f32 %v847, %v901
      %v916 = vadd.f32 %v848, %v901
      %v917 = vadd.f32 %v849, %v901
      %v918 = vadd.f32 %v850, %v901
      %v919 = vadd.f32 %v851, %v901
      %v920 = vadd.f32 %v852, %v901
      %v921 = vadd.f32 %v853, %v901
      %v922 = vadd.f32 %v854, %v901
      %v923 = vadd.f32 %v855, %v901
      %v924 = vadd.f32 %v856, %v901
      %v925 = vadd.f32 %v857, %v901
      %v926 = vadd.f32 %v858, %v901
      %v927 = vadd.f32 %v859, %v901
      %v928 = vadd.f32 %v860, %v901
      %v929 = vadd.f32 %v861, %v901
      %v930 = vadd.f32 %v862, %v901
      %v931 = vadd.f32 %v863, %v901
      %v932 = vadd.f32 %v864, %v901
      %v933 = vadd.f32 %v865, %v901
      %v934 = vadd.f32 %v866, %v901
      %v935 = vadd.f32 %v867, %v901
      %v936 = vadd.f32 %v868, %v901
      %v937 = vadd.f32 %v869, %v901
      %v938 = vadd.f32 %v870, %v901
      %v939 = vadd.f32 %v871, %v901
      %v940 = vadd.f32 %v872, %v901
      %v941 = vadd.f32 %v873, %v901
      %v942 = vadd.f32 %v874, %v901
      %v943 = vadd.f32 %v875, %v901
      %v944 = vadd.f32 %v876, %v901
      %v945 = vadd.f32 %v877, %v901
      %v946 = vadd.f32 %v878, %v901
      %v947 = vadd.f32 %v879, %v901
      %v948 = vadd.f32 %v880, %v901
      %v949 = vadd.f32 %v881, %v901
      %v950 = vadd.f32 %v882, %v901
      %v951 = vadd.f32 %v883, %v901
      %v952 = vadd.f32 %v884, %v901
      %v953 = vadd.f32 %v885, %v901
      %v954 = vadd.f32 %v886, %v901
      %v955 = vadd.f32 %v887, %v901
      %v956 = vadd.f32 %v888, %v901
      %v957 = vadd.f32 %v889, %v901
      %v958 = vadd.f32 %v890, %v901
      %v959 = vadd.f32 %v891, %v901
      %v960 = vadd.f32 %v892, %v901
      %v961 = vadd.f32 %v893, %v901
      %v962 = vadd.f32 %v894, %v901
      %v963 = vadd.f32 %v895, %v901
      %v964 = vadd.f32 %v896, %v901
      %v965 = vadd.f32 %v897, %v901
      %vm966 = vcmask 23552
      %967 = vst.msk [vmem:[%s172] sm:$0xff] %vm966, %v902
      %968 = vst.msk [vmem:[%s172 + $0x8] sm:$0xff] %vm966, %v903
      %969 = vst.msk [vmem:[%s172 + $0x10] sm:$0xff] %vm966, %v904
      %970 = vst.msk [vmem:[%s172 + $0x18] sm:$0xff] %vm966, %v905
      %971 = vst.msk [vmem:[%s172 + $0x20] sm:$0xff] %vm966, %v906
      %972 = vst.msk [vmem:[%s172 + $0x28] sm:$0xff] %vm966, %v907
      %973 = vst.msk [vmem:[%s172 + $0x30] sm:$0xff] %vm966, %v908
      %974 = vst.msk [vmem:[%s172 + $0x38] sm:$0xff] %vm966, %v909
      %975 = vst.msk [vmem:[%s172 + $0x40] sm:$0xff] %vm966, %v910
      %976 = vst.msk [vmem:[%s172 + $0x48] sm:$0xff] %vm966, %v911
      %977 = vst.msk [vmem:[%s172 + $0x50] sm:$0xff] %vm966, %v912
      %978 = vst.msk [vmem:[%s172 + $0x58] sm:$0xff] %vm966, %v913
      %979 = vst.msk [vmem:[%s172 + $0x60] sm:$0xff] %vm966, %v914
      %980 = vst.msk [vmem:[%s172 + $0x68] sm:$0xff] %vm966, %v915
      %981 = vst.msk [vmem:[%s172 + $0x70] sm:$0xff] %vm966, %v916
      %982 = vst.msk [vmem:[%s172 + $0x78] sm:$0xff] %vm966, %v917
      %983 = vst.msk [vmem:[%s172 + $0x80] sm:$0xff] %vm966, %v918
      %984 = vst.msk [vmem:[%s172 + $0x88] sm:$0xff] %vm966, %v919
      %985 = vst.msk [vmem:[%s172 + $0x90] sm:$0xff] %vm966, %v920
      %986 = vst.msk [vmem:[%s172 + $0x98] sm:$0xff] %vm966, %v921
      %987 = vst.msk [vmem:[%s172 + $0xa0] sm:$0xff] %vm966, %v922
      %988 = vst.msk [vmem:[%s172 + $0xa8] sm:$0xff] %vm966, %v923
      %989 = vst.msk [vmem:[%s172 + $0xb0] sm:$0xff] %vm966, %v924
      %990 = vst.msk [vmem:[%s172 + $0xb8] sm:$0xff] %vm966, %v925
      %991 = vst.msk [vmem:[%s172 + $0xc0] sm:$0xff] %vm966, %v926
      %992 = vst.msk [vmem:[%s172 + $0xc8] sm:$0xff] %vm966, %v927
      %993 = vst.msk [vmem:[%s172 + $0xd0] sm:$0xff] %vm966, %v928
      %994 = vst.msk [vmem:[%s172 + $0xd8] sm:$0xff] %vm966, %v929
      %995 = vst.msk [vmem:[%s172 + $0xe0] sm:$0xff] %vm966, %v930
      %996 = vst.msk [vmem:[%s172 + $0xe8] sm:$0xff] %vm966, %v931
      %997 = vst.msk [vmem:[%s172 + $0xf0] sm:$0xff] %vm966, %v932
      %998 = vst.msk [vmem:[%s172 + $0xf8] sm:$0xff] %vm966, %v933
      %999 = vst.msk [vmem:[%s172 + $0x100] sm:$0xff] %vm966, %v934
      %1000 = vst.msk [vmem:[%s172 + $0x108] sm:$0xff] %vm966, %v935
      %1001 = vst.msk [vmem:[%s172 + $0x110] sm:$0xff] %vm966, %v936
      %1002 = vst.msk [vmem:[%s172 + $0x118] sm:$0xff] %vm966, %v937
      %1003 = vst.msk [vmem:[%s172 + $0x120] sm:$0xff] %vm966, %v938
      %1004 = vst.msk [vmem:[%s172 + $0x128] sm:$0xff] %vm966, %v939
      %1005 = vst.msk [vmem:[%s172 + $0x130] sm:$0xff] %vm966, %v940
      %1006 = vst.msk [vmem:[%s172 + $0x138] sm:$0xff] %vm966, %v941
      %1007 = vst.msk [vmem:[%s172 + $0x140] sm:$0xff] %vm966, %v942
      %1008 = vst.msk [vmem:[%s172 + $0x148] sm:$0xff] %vm966, %v943
      %1009 = vst.msk [vmem:[%s172 + $0x150] sm:$0xff] %vm966, %v944
      %1010 = vst.msk [vmem:[%s172 + $0x158] sm:$0xff] %vm966, %v945
      %1011 = vst.msk [vmem:[%s172 + $0x160] sm:$0xff] %vm966, %v946
      %1012 = vst.msk [vmem:[%s172 + $0x168] sm:$0xff] %vm966, %v947
      %1013 = vst.msk [vmem:[%s172 + $0x170] sm:$0xff] %vm966, %v948
      %1014 = vst.msk [vmem:[%s172 + $0x178] sm:$0xff] %vm966, %v949
      %1015 = vst.msk [vmem:[%s172 + $0x180] sm:$0xff] %vm966, %v950
      %1016 = vst.msk [vmem:[%s172 + $0x188] sm:$0xff] %vm966, %v951
      %1017 = vst.msk [vmem:[%s172 + $0x190] sm:$0xff] %vm966, %v952
      %1018 = vst.msk [vmem:[%s172 + $0x198] sm:$0xff] %vm966, %v953
      %1019 = vst.msk [vmem:[%s172 + $0x1a0] sm:$0xff] %vm966, %v954
      %1020 = vst.msk [vmem:[%s172 + $0x1a8] sm:$0xff] %vm966, %v955
      %1021 = vst.msk [vmem:[%s172 + $0x1b0] sm:$0xff] %vm966, %v956
      %1022 = vst.msk [vmem:[%s172 + $0x1b8] sm:$0xff] %vm966, %v957
      %1023 = vst.msk [vmem:[%s172 + $0x1c0] sm:$0xff] %vm966, %v958
      %1024 = vst.msk [vmem:[%s172 + $0x1c8] sm:$0xff] %vm966, %v959
      %1025 = vst.msk [vmem:[%s172 + $0x1d0] sm:$0xff] %vm966, %v960
      %1026 = vst.msk [vmem:[%s172 + $0x1d8] sm:$0xff] %vm966, %v961
      %1027 = vst.msk [vmem:[%s172 + $0x1e0] sm:$0xff] %vm966, %v962
      %1028 = vst.msk [vmem:[%s172 + $0x1e8] sm:$0xff] %vm966, %v963
      %1029 = vst.msk [vmem:[%s172 + $0x1f0] sm:$0xff] %vm966, %v964
      %1030 = vst.msk [vmem:[%s172 + $0x1f8] sm:$0xff] %vm966, %v965
      %s1031 = smul.u32 64, %s14
      %p1032 = scmp.lt.s32.totalorder %s1031, 1023
      %s1033 = scalar_select %p1032, %s1031, 1023
      %s1034 = smul.addr %s1033, 8
      %s1035 = scalar_lea.vmem %s3, %s1034
      // Predicated region
      $region33: #{vae1_forward.55} parent=31 // pred_check
        %p1036 = pneg %p100
      $region34: #{vae1_forward.55} parent=31 // pred_check_branch
        %1038 = sbr.rel (%p1036) target = $region36
      $region35: #{vae1_forward.55} parent=31 // pred_region
        %s1039 = smul.u32 64, %s14
      $region36: #{vae1_forward.55} parent=31 // pred_fallthru
        _
    $region32: #{vae1_forward.55} parent=5 // pred_fallthru
      _
    %p1040 = scmp.le.s32.totalorder 2, %s9
    // Predicated region
    $region37: #{vae1_forward.55} parent=5 // pred_check
      %p1041 = pneg %p1040
    $region38: #{vae1_forward.55} parent=5 // pred_check_branch
      %1043 = sbr.rel (%p1041) target = $region40
    $region39: #{vae1_forward.55} parent=5 // pred_region
      %s1044 = ssub.s32 %s9, 2
      // Predicated region
      $region41: #{vae1_forward.55} parent=39 // pred_check
        %p1045 = pneg %p106
      $region42: #{vae1_forward.55} parent=39 // pred_check_branch
        %1047 = sbr.rel (%p1045) target = $region44
      $region43: #{vae1_forward.55} parent=39 // pred_region
        %s1048 = smul.u32 64, %s15
        %p1049 = scmp.lt.s32.totalorder %s1048, 1023
        %s1050 = scalar_select %p1049, %s1048, 1023
        %s1051 = smul.addr %s1050, 8
        %s1052 = scalar_lea.vmem %s3, %s1051
      $region44: #{vae1_forward.55} parent=39 // pred_fallthru
        _
    $region40: #{vae1_forward.55} parent=5 // pred_fallthru
      _
  $region6: #{vae1_forward.55} parent=0 // loop_footer
    %s13 = sadd.s32 1, %s9
  $region7: #{vae1_forward.55} parent=0 // loop_footer_branch
    %8 = sbr.rel target = $region3
  $region8: #{vae1_forward.55} parent=0 // loop_exit
    _

</llo_original>
